<compile_context>
chip_gen: v6e
topology: v6e:2x2x1
jax: 0.10.0
libtpu: 0.0.40
codegen_flags: <defaults>
</compile_context>

<pallas_src>
import jax
import jax.numpy as jnp
from jax import lax
from jax.experimental import pallas as pl
from jax.experimental.pallas import tpu as pltpu

EPS = 1e-5


# ----------------------------------------------------------------------------- kernels
def _zero_halo(pad_ref, Bt, H, W, C):
    """Zero only the 1-pixel halo of the persistent padded scratch (done once, step 0)."""
    zr = jnp.zeros((W + 2, C), pad_ref.dtype)
    zc = jnp.zeros((H, 1, C), pad_ref.dtype)
    for b in range(Bt):
        pad_ref[b, 0, :, :] = zr
        pad_ref[b, H + 1, :, :] = zr
        pad_ref[b, 1:H + 1, 0:1, :] = zc
        pad_ref[b, 1:H + 1, W + 1:W + 2, :] = zc


def _im2col_conv(h, w_ref, pad_ref, col_ref):
    """3x3 'same' conv of a (Bt, H, W, C) activation as ONE fused MXU matmul.

    Writes the activation (cast to bf16) into the interior of the padded scratch (halo is
    already zero), builds the (Bt, H*W, 9C) bf16 im2col buffer with 9 strided VMEM copies
    per image, then does a single (Bt*H*W, 9C) x (9C, C) matmul with f32 accumulation.
    Returns the f32 (Bt*H*W, C) result."""
    Bt, H, W, C = h.shape
    HW = H * W
    for b in range(Bt):
        pad_ref[b, 1:H + 1, 1:W + 1, :] = h[b].astype(pad_ref.dtype)
        # Overlapping dx windows force one copy per tap; bf16 halves the bytes moved.
        for k in range(9):
            dy, dx = k // 3, k % 3
            col_ref[b, :, k * C:(k + 1) * C] = (
                pad_ref[b, dy:dy + H, dx:dx + W, :].reshape(HW, C))
    col = col_ref[...].reshape(Bt * HW, 9 * C)
    return jnp.dot(col, w_ref[...], preferred_element_type=jnp.float32)


def _conv_stats_kernel(x_ref, w_ref, y_ref, s_ref, pad_ref, col_ref):
    """Pass 1: conv1 on Bt images + partial BN1 stats (sum, sumsq) from the f32 result."""
    Bt, H, W, C = x_ref.shape

    @pl.when(pl.program_id(0) == 0)
    def _():
        _zero_halo(pad_ref, Bt, H, W, C)

    y = _im2col_conv(x_ref[...], w_ref, pad_ref, col_ref)            # (Bt*H*W, C) f32
    s_ref[0, 0:1, :] = jnp.sum(y, axis=0, keepdims=True)
    s_ref[0, 1:2, :] = jnp.sum(y * y, axis=0, keepdims=True)
    y_ref[...] = y.reshape(Bt, H, W, C).astype(y_ref.dtype)          # bf16 store


def _bn_relu_conv_stats_kernel(y1_ref, sc_ref, sh_ref, w_ref, y2_ref, s_ref,
                               pad_ref, col_ref):
    """Pass 2: folded BN1 (scale/shift, f32) + ReLU, then conv2 + partial BN2 stats."""
    Bt, H, W, C = y1_ref.shape

    @pl.when(pl.program_id(0) == 0)
    def _():
        _zero_halo(pad_ref, Bt, H, W, C)

    h = jnp.maximum(y1_ref[...].astype(jnp.float32) * sc_ref[...] + sh_ref[...], 0.0)
    y = _im2col_conv(h, w_ref, pad_ref, col_ref)                     # (Bt*H*W, C) f32
    s_ref[0, 0:1, :] = jnp.sum(y, axis=0, keepdims=True)
    s_ref[0, 1:2, :] = jnp.sum(y * y, axis=0, keepdims=True)
    y2_ref[...] = y.reshape(Bt, H, W, C).astype(y2_ref.dtype)        # bf16 store


def _bn_add_relu_kernel(y2_ref, x_ref, sc_ref, sh_ref, o_ref):
    """Pass 3: folded BN2 + residual + ReLU, flat lane-dense pointwise (in place over y2)."""
    y = y2_ref[...].astype(jnp.float32)
    r = x_ref[...].astype(jnp.float32)
    o_ref[...] = jnp.maximum(y * sc_ref[...] + sh_ref[...] + r, 0.0).astype(o_ref.dtype)


# ------------------------------------------------------------------------------- glue
def _bn_scale_shift(stats, gamma, beta, n):
    """Fold training-mode BN (batch mean/var, biased) into per-channel scale/shift (f32)."""
    total = jnp.sum(stats, axis=0)                       # (2, C): [sum, sumsq]
    mean = total[0] / n
    var = jnp.maximum(total[1] / n - mean * mean, 0.0)   # one-pass, f32 accumulations
    inv = lax.rsqrt(var + EPS)
    g = gamma.astype(jnp.float32)
    scale = (g * inv).reshape(1, -1)
    shift = (beta.astype(jnp.float32) - mean * g * inv).reshape(1, -1)
    return scale, shift


def _choose_subbatch(B, H, W, C):
    """Largest divisor Bt of B whose per-step bf16 scratch + blocks fit ~20 MiB, stopping
    once the fused matmul has M = Bt*H*W >= 512 rows (fills a 256-wide MXU)."""
    hw = H * W
    per_img = ((hw * 9 * C)                    # im2col scratch
               + (H + 2) * (W + 2) * C         # padded scratch
               + 4 * hw * C) * 2               # double-buffered in + out blocks (bf16)
    budget = 20 << 20
    best = 1
    for bt in range(1, B + 1):
        if B % bt:
            continue
        if bt * per_img > budget:
            break
        best = bt
        if bt * hw >= 512:
            break
    return best


def _choose_row_tile(n, max_rows=1024):
    """Largest lane-dense row tile (multiple of 8, divisor of n) up to max_rows."""
    if n <= max_rows:
        return n
    for t in range(max_rows - max_rows % 8, 7, -8):
        if n % t == 0:
            return t
    return n


@jax.jit
def residual_layer(x_nchw, w1_oihw, w2_oihw, g1, b1, g2, b2):
    """Pallas-backed forward. x_nchw: (B, C, H, W) f32; weights OIHW like PyTorch."""
    B, C, H, W = x_nchw.shape
    HW = H * W
    n_total = B * HW

    # NHWC so channels sit on the 128-wide lane axis; cast to bf16 BEFORE the transpose so
    # the XLA layout round trip moves half the bytes.
    x = jnp.transpose(x_nchw.astype(jnp.bfloat16), (0, 2, 3, 1))      # (B, H, W, C) bf16

    def fuse_weight(w):  # OIHW -> (ky, kx, i, o) -> (9*Cin, Cout); row = (ky*3+kx)*C + i
        return jnp.transpose(w, (2, 3, 1, 0)).reshape(9 * C, C).astype(jnp.bfloat16)

    w1k, w2k = fuse_weight(w1_oihw), fuse_weight(w2_oihw)

    Bt = _choose_subbatch(B, H, W, C)
    gB = B // Bt

    # VMEM budget: scratch + double-buffered blocks, 2x headroom, capped for v7x (64 MiB).
    col_bytes = Bt * HW * 9 * C * 2
    pad_bytes = Bt * (H + 2) * (W + 2) * C * 2
    blk_bytes = Bt * HW * C * 2
    w_bytes = 9 * C * C * 2
    step_bytes = col_bytes + pad_bytes + 4 * blk_bytes + 2 * w_bytes + (1 << 18)
    vmem_limit = int(min(48 << 20, max(16 << 20, 2 * step_bytes)))

    cparams = pltpu.CompilerParams(
        dimension_semantics=("parallel",),          # batch-tile axis -> megacore on v7x
        vmem_limit_bytes=vmem_limit,
    )
    conv_scratch = [pltpu.VMEM((Bt, H + 2, W + 2, C), jnp.bfloat16),   # padded activation
                    pltpu.VMEM((Bt, HW, 9 * C), jnp.bfloat16)]         # im2col buffer
    img_spec = pl.BlockSpec((Bt, H, W, C), lambda b: (b, 0, 0, 0))
    w_spec = pl.BlockSpec((9 * C, C), lambda b: (0, 0))
    vec_spec = pl.BlockSpec((1, C), lambda b: (0, 0))
    stats_spec = pl.BlockSpec((1, 2, C), lambda b: (b, 0, 0))
    img_shape = jax.ShapeDtypeStruct((B, H, W, C), jnp.bfloat16)
    stats_shape = jax.ShapeDtypeStruct((gB, 2, C), jnp.float32)

    # pass 1: conv1 + partial BN1 stats
    y1, s1 = pl.pallas_call(
        _conv_stats_kernel,
        grid=(gB,),
        in_specs=[img_spec, w_spec],
        out_specs=(img_spec, stats_spec),
        out_shape=(img_shape, stats_shape),
        scratch_shapes=conv_scratch,
        compiler_params=cparams,
    )(x, w1k)
    scale1, shift1 = _bn_scale_shift(s1, g1, b1, n_total)

    # pass 2: BN1 + ReLU + conv2 + partial BN2 stats
    y2, s2 = pl.pallas_call(
        _bn_relu_conv_stats_kernel,
        grid=(gB,),
        in_specs=[img_spec, vec_spec, vec_spec, w_spec],
        out_specs=(img_spec, stats_spec),
        out_shape=(img_shape, stats_shape),
        scratch_shapes=conv_scratch,
        compiler_params=cparams,
    )(y1, scale1, shift1, w2k)
    scale2, shift2 = _bn_scale_shift(s2, g2, b2, n_total)

    # pass 3: BN2 + residual + ReLU over flat (B*H*W, C), written in place over y2
    TR = _choose_row_tile(n_total)
    flat_spec = pl.BlockSpec((TR, C), lambda i: (i, 0))
    out_flat = pl.pallas_call(
        _bn_add_relu_kernel,
        grid=(n_total // TR,),
        in_specs=[flat_spec, flat_spec,
                  pl.BlockSpec((1, C), lambda i: (0, 0)),
                  pl.BlockSpec((1, C), lambda i: (0, 0))],
        out_specs=flat_spec,
        out_shape=jax.ShapeDtypeStruct((n_total, C), jnp.bfloat16),
        input_output_aliases={0: 0},                # y2 is dead after this pass
        compiler_params=pltpu.CompilerParams(
            dimension_semantics=("parallel",),
            vmem_limit_bytes=32 * 1024 * 1024),
    )(y2.reshape(n_total, C), x.reshape(n_total, C), scale2, shift2)

    out = out_flat.reshape(B, H, W, C)
    return jnp.transpose(out, (0, 3, 1, 2)).astype(jnp.float32)


# -------------------------------------------------------------------------- reference
def residual_layer_ref(x, w1, w2, g1, b1, g2, b2, eps=EPS):
    """Pure-JAX reference matching the PyTorch forward (training-mode BN), f32 HIGHEST."""
    def conv(x, w):
        return lax.conv_general_dilated(
            x, w, (1, 1), "SAME",
            dimension_numbers=("NCHW", "OIHW", "NCHW"),
            precision=lax.Precision.HIGHEST)

    def bn(y, g, b):
        mean = jnp.mean(y, axis=(0, 2, 3), keepdims=True)
        var = jnp.var(y, axis=(0, 2, 3), keepdims=True)  # biased
        return ((y - mean) * lax.rsqrt(var + eps) * g.reshape(1, -1, 1, 1)
                + b.reshape(1, -1, 1, 1))

    h = jax.nn.relu(bn(conv(x, w1), g1, b1))
    h = bn(conv(h, w2), g2, b2)
    return jax.nn.relu(h + x)


if __name__ == "__main__":
    # channels = 128 (the module's default) so C maps exactly to one lane row.
    B, C, H, W = 2, 128, 8, 8
    key = jax.random.PRNGKey(0)
    ks = jax.random.split(key, 7)

    x = jax.random.normal(ks[0], (B, C, H, W), jnp.float32)
    w1 = jax.random.normal(ks[1], (C, C, 3, 3), jnp.float32) * 0.1   # conv1.weight (OIHW, no bias)
    w2 = jax.random.normal(ks[2], (C, C, 3, 3), jnp.float32) * 0.1   # conv2.weight
    g1 = 1.0 + 0.1 * jax.random.normal(ks[3], (C,), jnp.float32)     # batch_norm1.weight
    b1 = 0.1 * jax.random.normal(ks[4], (C,), jnp.float32)           # batch_norm1.bias
    g2 = 1.0 + 0.1 * jax.random.normal(ks[5], (C,), jnp.float32)     # batch_norm2.weight
    b2 = 0.1 * jax.random.normal(ks[6], (C,), jnp.float32)           # batch_norm2.bias

    out = jax.block_until_ready(residual_layer(x, w1, w2, g1, b1, g2, b2))
    ref = jax.block_until_ready(residual_layer_ref(x, w1, w2, g1, b1, g2, b2))

    assert out.shape == x.shape and out.dtype == x.dtype
    # tolerance covers end-to-end bf16 storage of activations/weights (MXU accumulation and
    # BN statistics stay f32) against the f32-HIGHEST reference; structural errors are O(1).
    max_err = float(jnp.max(jnp.abs(out - ref)))
    assert jnp.allclose(out, ref, atol=6e-2, rtol=6e-2), f"max err {max_err}"
    print("KERNEL_OK")
</pallas_src>

<mosaic_0001>
module attributes {stable_mosaic.version = 11 : i64} {
  func.func @_conv_stats_kernel(%arg0: i32, %arg1: memref<2x8x8x128xbf16, #tpu.memory_space<vmem>>, %arg2: memref<1152x128xbf16, #tpu.memory_space<vmem>>, %arg3: memref<2x8x8x128xbf16, #tpu.memory_space<vmem>>, %arg4: memref<1x2x128xf32, #tpu.memory_space<vmem>>, %arg5: memref<2x10x10x128xbf16, #tpu.memory_space<vmem>>, %arg6: memref<2x64x1152xbf16, #tpu.memory_space<vmem>>) attributes {dimension_semantics = [#tpu.dimension_semantics<parallel>], iteration_bounds = array<i64: 1>, scalar_prefetch = 0 : i64, scratch_operands = 2 : i64, tpu.core_type = #tpu.core_type<tc>, window_params = [{transform_indices = @transform_0, window_bounds = array<i64: 2, 8, 8, 128>}, {pipeline_mode = #tpu.pipeline_mode<synchronous>, transform_indices = @transform_1, window_bounds = array<i64: 1152, 128>}, {transform_indices = @transform_2, window_bounds = array<i64: 2, 8, 8, 128>}, {transform_indices = @transform_3, window_bounds = array<i64: 1, 2, 128>}]} {
    %c0_i32 = arith.constant 0 : i32
    %0 = arith.cmpi eq, %arg0, %c0_i32 : i32
    %1 = arith.extui %0 : i1 to i32
    %c0_i32_0 = arith.constant 0 : i32
    %2 = arith.cmpi ne, %1, %c0_i32_0 : i32
    scf.if %2 {
      %cst_145 = arith.constant 0.000000e+00 : bf16
      %140 = vector.broadcast %cst_145 : bf16 to vector<10x128xbf16>
      %cst_146 = arith.constant 0.000000e+00 : bf16
      %141 = vector.broadcast %cst_146 : bf16 to vector<8x1x128xbf16>
      %c0_147 = arith.constant 0 : index
      %c0_148 = arith.constant 0 : index
      %c0_149 = arith.constant 0 : index
      %c0_150 = arith.constant 0 : index
      %142 = vector.load %arg5[%c0_147, %c0_148, %c0_149, %c0_150] : memref<2x10x10x128xbf16, #tpu.memory_space<vmem>>, vector<1x1x10x128xbf16>
      %143 = vector.shape_cast %142 : vector<1x1x10x128xbf16> to vector<10x128xbf16>
      %144 = vector.shape_cast %140 : vector<10x128xbf16> to vector<1x1x10x128xbf16>
      tpu.vector_store %arg5[%c0_147, %c0_148, %c0_149, %c0_150], %144 {strides = array<i32>} : memref<2x10x10x128xbf16, #tpu.memory_space<vmem>>, vector<1x1x10x128xbf16>,
      %c0_151 = arith.constant 0 : index
      %c9 = arith.constant 9 : index
      %c0_152 = arith.constant 0 : index
      %c0_153 = arith.constant 0 : index
      %145 = vector.load %arg5[%c0_151, %c9, %c0_152, %c0_153] : memref<2x10x10x128xbf16, #tpu.memory_space<vmem>>, vector<1x1x10x128xbf16>
      %146 = vector.shape_cast %145 : vector<1x1x10x128xbf16> to vector<10x128xbf16>
      %147 = vector.shape_cast %140 : vector<10x128xbf16> to vector<1x1x10x128xbf16>
      tpu.vector_store %arg5[%c0_151, %c9, %c0_152, %c0_153], %147 {strides = array<i32>} : memref<2x10x10x128xbf16, #tpu.memory_space<vmem>>, vector<1x1x10x128xbf16>,
      %c0_154 = arith.constant 0 : index
      %c1_155 = arith.constant 1 : index
      %c0_156 = arith.constant 0 : index
      %c0_157 = arith.constant 0 : index
      %148 = vector.load %arg5[%c0_154, %c1_155, %c0_156, %c0_157] : memref<2x10x10x128xbf16, #tpu.memory_space<vmem>>, vector<1x8x1x128xbf16>
      %149 = vector.shape_cast %148 : vector<1x8x1x128xbf16> to vector<8x1x128xbf16>
      %150 = vector.shape_cast %141 : vector<8x1x128xbf16> to vector<1x8x1x128xbf16>
      tpu.vector_store %arg5[%c0_154, %c1_155, %c0_156, %c0_157], %150 {strides = array<i32>} : memref<2x10x10x128xbf16, #tpu.memory_space<vmem>>, vector<1x8x1x128xbf16>,
      %c0_158 = arith.constant 0 : index
      %c1_159 = arith.constant 1 : index
      %c9_160 = arith.constant 9 : index
      %c0_161 = arith.constant 0 : index
      %151 = vector.load %arg5[%c0_158, %c1_159, %c9_160, %c0_161] : memref<2x10x10x128xbf16, #tpu.memory_space<vmem>>, vector<1x8x1x128xbf16>
      %152 = vector.shape_cast %151 : vector<1x8x1x128xbf16> to vector<8x1x128xbf16>
      %153 = vector.shape_cast %141 : vector<8x1x128xbf16> to vector<1x8x1x128xbf16>
      tpu.vector_store %arg5[%c0_158, %c1_159, %c9_160, %c0_161], %153 {strides = array<i32>} : memref<2x10x10x128xbf16, #tpu.memory_space<vmem>>, vector<1x8x1x128xbf16>,
      %c1_162 = arith.constant 1 : index
      %c0_163 = arith.constant 0 : index
      %c0_164 = arith.constant 0 : index
      %c0_165 = arith.constant 0 : index
      %154 = vector.load %arg5[%c1_162, %c0_163, %c0_164, %c0_165] : memref<2x10x10x128xbf16, #tpu.memory_space<vmem>>, vector<1x1x10x128xbf16>
      %155 = vector.shape_cast %154 : vector<1x1x10x128xbf16> to vector<10x128xbf16>
      %156 = vector.shape_cast %140 : vector<10x128xbf16> to vector<1x1x10x128xbf16>
      tpu.vector_store %arg5[%c1_162, %c0_163, %c0_164, %c0_165], %156 {strides = array<i32>} : memref<2x10x10x128xbf16, #tpu.memory_space<vmem>>, vector<1x1x10x128xbf16>,
      %c1_166 = arith.constant 1 : index
      %c9_167 = arith.constant 9 : index
      %c0_168 = arith.constant 0 : index
      %c0_169 = arith.constant 0 : index
      %157 = vector.load %arg5[%c1_166, %c9_167, %c0_168, %c0_169] : memref<2x10x10x128xbf16, #tpu.memory_space<vmem>>, vector<1x1x10x128xbf16>
      %158 = vector.shape_cast %157 : vector<1x1x10x128xbf16> to vector<10x128xbf16>
      %159 = vector.shape_cast %140 : vector<10x128xbf16> to vector<1x1x10x128xbf16>
      tpu.vector_store %arg5[%c1_166, %c9_167, %c0_168, %c0_169], %159 {strides = array<i32>} : memref<2x10x10x128xbf16, #tpu.memory_space<vmem>>, vector<1x1x10x128xbf16>,
      %c1_170 = arith.constant 1 : index
      %c1_171 = arith.constant 1 : index
      %c0_172 = arith.constant 0 : index
      %c0_173 = arith.constant 0 : index
      %160 = vector.load %arg5[%c1_170, %c1_171, %c0_172, %c0_173] : memref<2x10x10x128xbf16, #tpu.memory_space<vmem>>, vector<1x8x1x128xbf16>
      %161 = vector.shape_cast %160 : vector<1x8x1x128xbf16> to vector<8x1x128xbf16>
      %162 = vector.shape_cast %141 : vector<8x1x128xbf16> to vector<1x8x1x128xbf16>
      tpu.vector_store %arg5[%c1_170, %c1_171, %c0_172, %c0_173], %162 {strides = array<i32>} : memref<2x10x10x128xbf16, #tpu.memory_space<vmem>>, vector<1x8x1x128xbf16>,
      %c1_174 = arith.constant 1 : index
      %c1_175 = arith.constant 1 : index
      %c9_176 = arith.constant 9 : index
      %c0_177 = arith.constant 0 : index
      %163 = vector.load %arg5[%c1_174, %c1_175, %c9_176, %c0_177] : memref<2x10x10x128xbf16, #tpu.memory_space<vmem>>, vector<1x8x1x128xbf16>
      %164 = vector.shape_cast %163 : vector<1x8x1x128xbf16> to vector<8x1x128xbf16>
      %165 = vector.shape_cast %141 : vector<8x1x128xbf16> to vector<1x8x1x128xbf16>
      tpu.vector_store %arg5[%c1_174, %c1_175, %c9_176, %c0_177], %165 {strides = array<i32>} : memref<2x10x10x128xbf16, #tpu.memory_space<vmem>>, vector<1x8x1x128xbf16>,
    } else {
    }
    %c0 = arith.constant 0 : index
    %c0_1 = arith.constant 0 : index
    %c0_2 = arith.constant 0 : index
    %c0_3 = arith.constant 0 : index
    %3 = vector.load %arg1[%c0, %c0_1, %c0_2, %c0_3] : memref<2x8x8x128xbf16, #tpu.memory_space<vmem>>, vector<2x8x8x128xbf16>
    %4 = vector.extract_strided_slice %3 {offsets = [0, 0, 0, 0], sizes = [1, 8, 8, 128], strides = [1, 1, 1, 1]} : vector<2x8x8x128xbf16> to vector<1x8x8x128xbf16>
    %5 = vector.shape_cast %4 : vector<1x8x8x128xbf16> to vector<8x8x128xbf16>
    %c0_4 = arith.constant 0 : index
    %c1 = arith.constant 1 : index
    %c1_5 = arith.constant 1 : index
    %c0_6 = arith.constant 0 : index
    %6 = vector.load %arg5[%c0_4, %c1, %c1_5, %c0_6] : memref<2x10x10x128xbf16, #tpu.memory_space<vmem>>, vector<1x8x8x128xbf16>
    %7 = vector.shape_cast %6 : vector<1x8x8x128xbf16> to vector<8x8x128xbf16>
    %8 = vector.shape_cast %5 : vector<8x8x128xbf16> to vector<1x8x8x128xbf16>
    tpu.vector_store %arg5[%c0_4, %c1, %c1_5, %c0_6], %8 {strides = array<i32>} : memref<2x10x10x128xbf16, #tpu.memory_space<vmem>>, vector<1x8x8x128xbf16>,
    %c0_7 = arith.constant 0 : index
    %c0_8 = arith.constant 0 : index
    %c0_9 = arith.constant 0 : index
    %c0_10 = arith.constant 0 : index
    %9 = vector.load %arg5[%c0_7, %c0_8, %c0_9, %c0_10] : memref<2x10x10x128xbf16, #tpu.memory_space<vmem>>, vector<1x8x8x128xbf16>
    %10 = vector.shape_cast %9 : vector<1x8x8x128xbf16> to vector<8x8x128xbf16>
    %11 = vector.shape_cast %10 : vector<8x8x128xbf16> to vector<64x128xbf16>
    %c0_11 = arith.constant 0 : index
    %c0_12 = arith.constant 0 : index
    %c0_13 = arith.constant 0 : index
    %12 = vector.load %arg6[%c0_11, %c0_12, %c0_13] : memref<2x64x1152xbf16, #tpu.memory_space<vmem>>, vector<1x64x128xbf16>
    %13 = vector.shape_cast %12 : vector<1x64x128xbf16> to vector<64x128xbf16>
    %14 = vector.shape_cast %11 : vector<64x128xbf16> to vector<1x64x128xbf16>
    tpu.vector_store %arg6[%c0_11, %c0_12, %c0_13], %14 {strides = array<i32>} : memref<2x64x1152xbf16, #tpu.memory_space<vmem>>, vector<1x64x128xbf16>,
    %c0_14 = arith.constant 0 : index
    %c0_15 = arith.constant 0 : index
    %c1_16 = arith.constant 1 : index
    %c0_17 = arith.constant 0 : index
    %15 = vector.load %arg5[%c0_14, %c0_15, %c1_16, %c0_17] : memref<2x10x10x128xbf16, #tpu.memory_space<vmem>>, vector<1x8x8x128xbf16>
    %16 = vector.shape_cast %15 : vector<1x8x8x128xbf16> to vector<8x8x128xbf16>
    %17 = vector.shape_cast %16 : vector<8x8x128xbf16> to vector<64x128xbf16>
    %c0_18 = arith.constant 0 : index
    %c0_19 = arith.constant 0 : index
    %c128 = arith.constant 128 : index
    %18 = vector.load %arg6[%c0_18, %c0_19, %c128] : memref<2x64x1152xbf16, #tpu.memory_space<vmem>>, vector<1x64x128xbf16>
    %19 = vector.shape_cast %18 : vector<1x64x128xbf16> to vector<64x128xbf16>
    %20 = vector.shape_cast %17 : vector<64x128xbf16> to vector<1x64x128xbf16>
    tpu.vector_store %arg6[%c0_18, %c0_19, %c128], %20 {strides = array<i32>} : memref<2x64x1152xbf16, #tpu.memory_space<vmem>>, vector<1x64x128xbf16>,
    %c0_20 = arith.constant 0 : index
    %c0_21 = arith.constant 0 : index
    %c2 = arith.constant 2 : index
    %c0_22 = arith.constant 0 : index
    %21 = vector.load %arg5[%c0_20, %c0_21, %c2, %c0_22] : memref<2x10x10x128xbf16, #tpu.memory_space<vmem>>, vector<1x8x8x128xbf16>
    %22 = vector.shape_cast %21 : vector<1x8x8x128xbf16> to vector<8x8x128xbf16>
    %23 = vector.shape_cast %22 : vector<8x8x128xbf16> to vector<64x128xbf16>
    %c0_23 = arith.constant 0 : index
    %c0_24 = arith.constant 0 : index
    %c256 = arith.constant 256 : index
    %24 = vector.load %arg6[%c0_23, %c0_24, %c256] : memref<2x64x1152xbf16, #tpu.memory_space<vmem>>, vector<1x64x128xbf16>
    %25 = vector.shape_cast %24 : vector<1x64x128xbf16> to vector<64x128xbf16>
    %26 = vector.shape_cast %23 : vector<64x128xbf16> to vector<1x64x128xbf16>
    tpu.vector_store %arg6[%c0_23, %c0_24, %c256], %26 {strides = array<i32>} : memref<2x64x1152xbf16, #tpu.memory_space<vmem>>, vector<1x64x128xbf16>,
    %c0_25 = arith.constant 0 : index
    %c1_26 = arith.constant 1 : index
    %c0_27 = arith.constant 0 : index
    %c0_28 = arith.constant 0 : index
    %27 = vector.load %arg5[%c0_25, %c1_26, %c0_27, %c0_28] : memref<2x10x10x128xbf16, #tpu.memory_space<vmem>>, vector<1x8x8x128xbf16>
    %28 = vector.shape_cast %27 : vector<1x8x8x128xbf16> to vector<8x8x128xbf16>
    %29 = vector.shape_cast %28 : vector<8x8x128xbf16> to vector<64x128xbf16>
    %c0_29 = arith.constant 0 : index
    %c0_30 = arith.constant 0 : index
    %c384 = arith.constant 384 : index
    %30 = vector.load %arg6[%c0_29, %c0_30, %c384] : memref<2x64x1152xbf16, #tpu.memory_space<vmem>>, vector<1x64x128xbf16>
    %31 = vector.shape_cast %30 : vector<1x64x128xbf16> to vector<64x128xbf16>
    %32 = vector.shape_cast %29 : vector<64x128xbf16> to vector<1x64x128xbf16>
    tpu.vector_store %arg6[%c0_29, %c0_30, %c384], %32 {strides = array<i32>} : memref<2x64x1152xbf16, #tpu.memory_space<vmem>>, vector<1x64x128xbf16>,
    %c0_31 = arith.constant 0 : index
    %c1_32 = arith.constant 1 : index
    %c1_33 = arith.constant 1 : index
    %c0_34 = arith.constant 0 : index
    %33 = vector.load %arg5[%c0_31, %c1_32, %c1_33, %c0_34] : memref<2x10x10x128xbf16, #tpu.memory_space<vmem>>, vector<1x8x8x128xbf16>
    %34 = vector.shape_cast %33 : vector<1x8x8x128xbf16> to vector<8x8x128xbf16>
    %35 = vector.shape_cast %34 : vector<8x8x128xbf16> to vector<64x128xbf16>
    %c0_35 = arith.constant 0 : index
    %c0_36 = arith.constant 0 : index
    %c512 = arith.constant 512 : index
    %36 = vector.load %arg6[%c0_35, %c0_36, %c512] : memref<2x64x1152xbf16, #tpu.memory_space<vmem>>, vector<1x64x128xbf16>
    %37 = vector.shape_cast %36 : vector<1x64x128xbf16> to vector<64x128xbf16>
    %38 = vector.shape_cast %35 : vector<64x128xbf16> to vector<1x64x128xbf16>
    tpu.vector_store %arg6[%c0_35, %c0_36, %c512], %38 {strides = array<i32>} : memref<2x64x1152xbf16, #tpu.memory_space<vmem>>, vector<1x64x128xbf16>,
    %c0_37 = arith.constant 0 : index
    %c1_38 = arith.constant 1 : index
    %c2_39 = arith.constant 2 : index
    %c0_40 = arith.constant 0 : index
    %39 = vector.load %arg5[%c0_37, %c1_38, %c2_39, %c0_40] : memref<2x10x10x128xbf16, #tpu.memory_space<vmem>>, vector<1x8x8x128xbf16>
    %40 = vector.shape_cast %39 : vector<1x8x8x128xbf16> to vector<8x8x128xbf16>
    %41 = vector.shape_cast %40 : vector<8x8x128xbf16> to vector<64x128xbf16>
    %c0_41 = arith.constant 0 : index
    %c0_42 = arith.constant 0 : index
    %c640 = arith.constant 640 : index
    %42 = vector.load %arg6[%c0_41, %c0_42, %c640] : memref<2x64x1152xbf16, #tpu.memory_space<vmem>>, vector<1x64x128xbf16>
    %43 = vector.shape_cast %42 : vector<1x64x128xbf16> to vector<64x128xbf16>
    %44 = vector.shape_cast %41 : vector<64x128xbf16> to vector<1x64x128xbf16>
    tpu.vector_store %arg6[%c0_41, %c0_42, %c640], %44 {strides = array<i32>} : memref<2x64x1152xbf16, #tpu.memory_space<vmem>>, vector<1x64x128xbf16>,
    %c0_43 = arith.constant 0 : index
    %c2_44 = arith.constant 2 : index
    %c0_45 = arith.constant 0 : index
    %c0_46 = arith.constant 0 : index
    %45 = vector.load %arg5[%c0_43, %c2_44, %c0_45, %c0_46] : memref<2x10x10x128xbf16, #tpu.memory_space<vmem>>, vector<1x8x8x128xbf16>
    %46 = vector.shape_cast %45 : vector<1x8x8x128xbf16> to vector<8x8x128xbf16>
    %47 = vector.shape_cast %46 : vector<8x8x128xbf16> to vector<64x128xbf16>
    %c0_47 = arith.constant 0 : index
    %c0_48 = arith.constant 0 : index
    %c768 = arith.constant 768 : index
    %48 = vector.load %arg6[%c0_47, %c0_48, %c768] : memref<2x64x1152xbf16, #tpu.memory_space<vmem>>, vector<1x64x128xbf16>
    %49 = vector.shape_cast %48 : vector<1x64x128xbf16> to vector<64x128xbf16>
    %50 = vector.shape_cast %47 : vector<64x128xbf16> to vector<1x64x128xbf16>
    tpu.vector_store %arg6[%c0_47, %c0_48, %c768], %50 {strides = array<i32>} : memref<2x64x1152xbf16, #tpu.memory_space<vmem>>, vector<1x64x128xbf16>,
    %c0_49 = arith.constant 0 : index
    %c2_50 = arith.constant 2 : index
    %c1_51 = arith.constant 1 : index
    %c0_52 = arith.constant 0 : index
    %51 = vector.load %arg5[%c0_49, %c2_50, %c1_51, %c0_52] : memref<2x10x10x128xbf16, #tpu.memory_space<vmem>>, vector<1x8x8x128xbf16>
    %52 = vector.shape_cast %51 : vector<1x8x8x128xbf16> to vector<8x8x128xbf16>
    %53 = vector.shape_cast %52 : vector<8x8x128xbf16> to vector<64x128xbf16>
    %c0_53 = arith.constant 0 : index
    %c0_54 = arith.constant 0 : index
    %c896 = arith.constant 896 : index
    %54 = vector.load %arg6[%c0_53, %c0_54, %c896] : memref<2x64x1152xbf16, #tpu.memory_space<vmem>>, vector<1x64x128xbf16>
    %55 = vector.shape_cast %54 : vector<1x64x128xbf16> to vector<64x128xbf16>
    %56 = vector.shape_cast %53 : vector<64x128xbf16> to vector<1x64x128xbf16>
    tpu.vector_store %arg6[%c0_53, %c0_54, %c896], %56 {strides = array<i32>} : memref<2x64x1152xbf16, #tpu.memory_space<vmem>>, vector<1x64x128xbf16>,
    %c0_55 = arith.constant 0 : index
    %c2_56 = arith.constant 2 : index
    %c2_57 = arith.constant 2 : index
    %c0_58 = arith.constant 0 : index
    %57 = vector.load %arg5[%c0_55, %c2_56, %c2_57, %c0_58] : memref<2x10x10x128xbf16, #tpu.memory_space<vmem>>, vector<1x8x8x128xbf16>
    %58 = vector.shape_cast %57 : vector<1x8x8x128xbf16> to vector<8x8x128xbf16>
    %59 = vector.shape_cast %58 : vector<8x8x128xbf16> to vector<64x128xbf16>
    %c0_59 = arith.constant 0 : index
    %c0_60 = arith.constant 0 : index
    %c1024 = arith.constant 1024 : index
    %60 = vector.load %arg6[%c0_59, %c0_60, %c1024] : memref<2x64x1152xbf16, #tpu.memory_space<vmem>>, vector<1x64x128xbf16>
    %61 = vector.shape_cast %60 : vector<1x64x128xbf16> to vector<64x128xbf16>
    %62 = vector.shape_cast %59 : vector<64x128xbf16> to vector<1x64x128xbf16>
    tpu.vector_store %arg6[%c0_59, %c0_60, %c1024], %62 {strides = array<i32>} : memref<2x64x1152xbf16, #tpu.memory_space<vmem>>, vector<1x64x128xbf16>,
    %63 = vector.extract_strided_slice %3 {offsets = [1, 0, 0, 0], sizes = [1, 8, 8, 128], strides = [1, 1, 1, 1]} : vector<2x8x8x128xbf16> to vector<1x8x8x128xbf16>
    %64 = vector.shape_cast %63 : vector<1x8x8x128xbf16> to vector<8x8x128xbf16>
    %c1_61 = arith.constant 1 : index
    %c1_62 = arith.constant 1 : index
    %c1_63 = arith.constant 1 : index
    %c0_64 = arith.constant 0 : index
    %65 = vector.load %arg5[%c1_61, %c1_62, %c1_63, %c0_64] : memref<2x10x10x128xbf16, #tpu.memory_space<vmem>>, vector<1x8x8x128xbf16>
    %66 = vector.shape_cast %65 : vector<1x8x8x128xbf16> to vector<8x8x128xbf16>
    %67 = vector.shape_cast %64 : vector<8x8x128xbf16> to vector<1x8x8x128xbf16>
    tpu.vector_store %arg5[%c1_61, %c1_62, %c1_63, %c0_64], %67 {strides = array<i32>} : memref<2x10x10x128xbf16, #tpu.memory_space<vmem>>, vector<1x8x8x128xbf16>,
    %c1_65 = arith.constant 1 : index
    %c0_66 = arith.constant 0 : index
    %c0_67 = arith.constant 0 : index
    %c0_68 = arith.constant 0 : index
    %68 = vector.load %arg5[%c1_65, %c0_66, %c0_67, %c0_68] : memref<2x10x10x128xbf16, #tpu.memory_space<vmem>>, vector<1x8x8x128xbf16>
    %69 = vector.shape_cast %68 : vector<1x8x8x128xbf16> to vector<8x8x128xbf16>
    %70 = vector.shape_cast %69 : vector<8x8x128xbf16> to vector<64x128xbf16>
    %c1_69 = arith.constant 1 : index
    %c0_70 = arith.constant 0 : index
    %c0_71 = arith.constant 0 : index
    %71 = vector.load %arg6[%c1_69, %c0_70, %c0_71] : memref<2x64x1152xbf16, #tpu.memory_space<vmem>>, vector<1x64x128xbf16>
    %72 = vector.shape_cast %71 : vector<1x64x128xbf16> to vector<64x128xbf16>
    %73 = vector.shape_cast %70 : vector<64x128xbf16> to vector<1x64x128xbf16>
    tpu.vector_store %arg6[%c1_69, %c0_70, %c0_71], %73 {strides = array<i32>} : memref<2x64x1152xbf16, #tpu.memory_space<vmem>>, vector<1x64x128xbf16>,
    %c1_72 = arith.constant 1 : index
    %c0_73 = arith.constant 0 : index
    %c1_74 = arith.constant 1 : index
    %c0_75 = arith.constant 0 : index
    %74 = vector.load %arg5[%c1_72, %c0_73, %c1_74, %c0_75] : memref<2x10x10x128xbf16, #tpu.memory_space<vmem>>, vector<1x8x8x128xbf16>
    %75 = vector.shape_cast %74 : vector<1x8x8x128xbf16> to vector<8x8x128xbf16>
    %76 = vector.shape_cast %75 : vector<8x8x128xbf16> to vector<64x128xbf16>
    %c1_76 = arith.constant 1 : index
    %c0_77 = arith.constant 0 : index
    %c128_78 = arith.constant 128 : index
    %77 = vector.load %arg6[%c1_76, %c0_77, %c128_78] : memref<2x64x1152xbf16, #tpu.memory_space<vmem>>, vector<1x64x128xbf16>
    %78 = vector.shape_cast %77 : vector<1x64x128xbf16> to vector<64x128xbf16>
    %79 = vector.shape_cast %76 : vector<64x128xbf16> to vector<1x64x128xbf16>
    tpu.vector_store %arg6[%c1_76, %c0_77, %c128_78], %79 {strides = array<i32>} : memref<2x64x1152xbf16, #tpu.memory_space<vmem>>, vector<1x64x128xbf16>,
    %c1_79 = arith.constant 1 : index
    %c0_80 = arith.constant 0 : index
    %c2_81 = arith.constant 2 : index
    %c0_82 = arith.constant 0 : index
    %80 = vector.load %arg5[%c1_79, %c0_80, %c2_81, %c0_82] : memref<2x10x10x128xbf16, #tpu.memory_space<vmem>>, vector<1x8x8x128xbf16>
    %81 = vector.shape_cast %80 : vector<1x8x8x128xbf16> to vector<8x8x128xbf16>
    %82 = vector.shape_cast %81 : vector<8x8x128xbf16> to vector<64x128xbf16>
    %c1_83 = arith.constant 1 : index
    %c0_84 = arith.constant 0 : index
    %c256_85 = arith.constant 256 : index
    %83 = vector.load %arg6[%c1_83, %c0_84, %c256_85] : memref<2x64x1152xbf16, #tpu.memory_space<vmem>>, vector<1x64x128xbf16>
    %84 = vector.shape_cast %83 : vector<1x64x128xbf16> to vector<64x128xbf16>
    %85 = vector.shape_cast %82 : vector<64x128xbf16> to vector<1x64x128xbf16>
    tpu.vector_store %arg6[%c1_83, %c0_84, %c256_85], %85 {strides = array<i32>} : memref<2x64x1152xbf16, #tpu.memory_space<vmem>>, vector<1x64x128xbf16>,
    %c1_86 = arith.constant 1 : index
    %c1_87 = arith.constant 1 : index
    %c0_88 = arith.constant 0 : index
    %c0_89 = arith.constant 0 : index
    %86 = vector.load %arg5[%c1_86, %c1_87, %c0_88, %c0_89] : memref<2x10x10x128xbf16, #tpu.memory_space<vmem>>, vector<1x8x8x128xbf16>
    %87 = vector.shape_cast %86 : vector<1x8x8x128xbf16> to vector<8x8x128xbf16>
    %88 = vector.shape_cast %87 : vector<8x8x128xbf16> to vector<64x128xbf16>
    %c1_90 = arith.constant 1 : index
    %c0_91 = arith.constant 0 : index
    %c384_92 = arith.constant 384 : index
    %89 = vector.load %arg6[%c1_90, %c0_91, %c384_92] : memref<2x64x1152xbf16, #tpu.memory_space<vmem>>, vector<1x64x128xbf16>
    %90 = vector.shape_cast %89 : vector<1x64x128xbf16> to vector<64x128xbf16>
    %91 = vector.shape_cast %88 : vector<64x128xbf16> to vector<1x64x128xbf16>
    tpu.vector_store %arg6[%c1_90, %c0_91, %c384_92], %91 {strides = array<i32>} : memref<2x64x1152xbf16, #tpu.memory_space<vmem>>, vector<1x64x128xbf16>,
    %c1_93 = arith.constant 1 : index
    %c1_94 = arith.constant 1 : index
    %c1_95 = arith.constant 1 : index
    %c0_96 = arith.constant 0 : index
    %92 = vector.load %arg5[%c1_93, %c1_94, %c1_95, %c0_96] : memref<2x10x10x128xbf16, #tpu.memory_space<vmem>>, vector<1x8x8x128xbf16>
    %93 = vector.shape_cast %92 : vector<1x8x8x128xbf16> to vector<8x8x128xbf16>
    %94 = vector.shape_cast %93 : vector<8x8x128xbf16> to vector<64x128xbf16>
    %c1_97 = arith.constant 1 : index
    %c0_98 = arith.constant 0 : index
    %c512_99 = arith.constant 512 : index
    %95 = vector.load %arg6[%c1_97, %c0_98, %c512_99] : memref<2x64x1152xbf16, #tpu.memory_space<vmem>>, vector<1x64x128xbf16>
    %96 = vector.shape_cast %95 : vector<1x64x128xbf16> to vector<64x128xbf16>
    %97 = vector.shape_cast %94 : vector<64x128xbf16> to vector<1x64x128xbf16>
    tpu.vector_store %arg6[%c1_97, %c0_98, %c512_99], %97 {strides = array<i32>} : memref<2x64x1152xbf16, #tpu.memory_space<vmem>>, vector<1x64x128xbf16>,
    %c1_100 = arith.constant 1 : index
    %c1_101 = arith.constant 1 : index
    %c2_102 = arith.constant 2 : index
    %c0_103 = arith.constant 0 : index
    %98 = vector.load %arg5[%c1_100, %c1_101, %c2_102, %c0_103] : memref<2x10x10x128xbf16, #tpu.memory_space<vmem>>, vector<1x8x8x128xbf16>
    %99 = vector.shape_cast %98 : vector<1x8x8x128xbf16> to vector<8x8x128xbf16>
    %100 = vector.shape_cast %99 : vector<8x8x128xbf16> to vector<64x128xbf16>
    %c1_104 = arith.constant 1 : index
    %c0_105 = arith.constant 0 : index
    %c640_106 = arith.constant 640 : index
    %101 = vector.load %arg6[%c1_104, %c0_105, %c640_106] : memref<2x64x1152xbf16, #tpu.memory_space<vmem>>, vector<1x64x128xbf16>
    %102 = vector.shape_cast %101 : vector<1x64x128xbf16> to vector<64x128xbf16>
    %103 = vector.shape_cast %100 : vector<64x128xbf16> to vector<1x64x128xbf16>
    tpu.vector_store %arg6[%c1_104, %c0_105, %c640_106], %103 {strides = array<i32>} : memref<2x64x1152xbf16, #tpu.memory_space<vmem>>, vector<1x64x128xbf16>,
    %c1_107 = arith.constant 1 : index
    %c2_108 = arith.constant 2 : index
    %c0_109 = arith.constant 0 : index
    %c0_110 = arith.constant 0 : index
    %104 = vector.load %arg5[%c1_107, %c2_108, %c0_109, %c0_110] : memref<2x10x10x128xbf16, #tpu.memory_space<vmem>>, vector<1x8x8x128xbf16>
    %105 = vector.shape_cast %104 : vector<1x8x8x128xbf16> to vector<8x8x128xbf16>
    %106 = vector.shape_cast %105 : vector<8x8x128xbf16> to vector<64x128xbf16>
    %c1_111 = arith.constant 1 : index
    %c0_112 = arith.constant 0 : index
    %c768_113 = arith.constant 768 : index
    %107 = vector.load %arg6[%c1_111, %c0_112, %c768_113] : memref<2x64x1152xbf16, #tpu.memory_space<vmem>>, vector<1x64x128xbf16>
    %108 = vector.shape_cast %107 : vector<1x64x128xbf16> to vector<64x128xbf16>
    %109 = vector.shape_cast %106 : vector<64x128xbf16> to vector<1x64x128xbf16>
    tpu.vector_store %arg6[%c1_111, %c0_112, %c768_113], %109 {strides = array<i32>} : memref<2x64x1152xbf16, #tpu.memory_space<vmem>>, vector<1x64x128xbf16>,
    %c1_114 = arith.constant 1 : index
    %c2_115 = arith.constant 2 : index
    %c1_116 = arith.constant 1 : index
    %c0_117 = arith.constant 0 : index
    %110 = vector.load %arg5[%c1_114, %c2_115, %c1_116, %c0_117] : memref<2x10x10x128xbf16, #tpu.memory_space<vmem>>, vector<1x8x8x128xbf16>
    %111 = vector.shape_cast %110 : vector<1x8x8x128xbf16> to vector<8x8x128xbf16>
    %112 = vector.shape_cast %111 : vector<8x8x128xbf16> to vector<64x128xbf16>
    %c1_118 = arith.constant 1 : index
    %c0_119 = arith.constant 0 : index
    %c896_120 = arith.constant 896 : index
    %113 = vector.load %arg6[%c1_118, %c0_119, %c896_120] : memref<2x64x1152xbf16, #tpu.memory_space<vmem>>, vector<1x64x128xbf16>
    %114 = vector.shape_cast %113 : vector<1x64x128xbf16> to vector<64x128xbf16>
    %115 = vector.shape_cast %112 : vector<64x128xbf16> to vector<1x64x128xbf16>
    tpu.vector_store %arg6[%c1_118, %c0_119, %c896_120], %115 {strides = array<i32>} : memref<2x64x1152xbf16, #tpu.memory_space<vmem>>, vector<1x64x128xbf16>,
    %c1_121 = arith.constant 1 : index
    %c2_122 = arith.constant 2 : index
    %c2_123 = arith.constant 2 : index
    %c0_124 = arith.constant 0 : index
    %116 = vector.load %arg5[%c1_121, %c2_122, %c2_123, %c0_124] : memref<2x10x10x128xbf16, #tpu.memory_space<vmem>>, vector<1x8x8x128xbf16>
    %117 = vector.shape_cast %116 : vector<1x8x8x128xbf16> to vector<8x8x128xbf16>
    %118 = vector.shape_cast %117 : vector<8x8x128xbf16> to vector<64x128xbf16>
    %c1_125 = arith.constant 1 : index
    %c0_126 = arith.constant 0 : index
    %c1024_127 = arith.constant 1024 : index
    %119 = vector.load %arg6[%c1_125, %c0_126, %c1024_127] : memref<2x64x1152xbf16, #tpu.memory_space<vmem>>, vector<1x64x128xbf16>
    %120 = vector.shape_cast %119 : vector<1x64x128xbf16> to vector<64x128xbf16>
    %121 = vector.shape_cast %118 : vector<64x128xbf16> to vector<1x64x128xbf16>
    tpu.vector_store %arg6[%c1_125, %c0_126, %c1024_127], %121 {strides = array<i32>} : memref<2x64x1152xbf16, #tpu.memory_space<vmem>>, vector<1x64x128xbf16>,
    %c0_128 = arith.constant 0 : index
    %c0_129 = arith.constant 0 : index
    %c0_130 = arith.constant 0 : index
    %122 = vector.load %arg6[%c0_128, %c0_129, %c0_130] : memref<2x64x1152xbf16, #tpu.memory_space<vmem>>, vector<2x64x1152xbf16>
    %123 = vector.shape_cast %122 : vector<2x64x1152xbf16> to vector<128x1152xbf16>
    %c0_131 = arith.constant 0 : index
    %c0_132 = arith.constant 0 : index
    %124 = vector.load %arg2[%c0_131, %c0_132] : memref<1152x128xbf16, #tpu.memory_space<vmem>>, vector<1152x128xbf16>
    %cst = arith.constant dense<0.000000e+00> : vector<128x128xf32>
    %125 = tpu.matmul %123, %124, %cst {dimension_numbers = #tpu.dot_dimension_numbers<[1], [0], [0], [1], [0, 0, 1, 1], [], []>} : vector<128x1152xbf16>, vector<1152x128xbf16>, vector<128x128xf32> -> vector<128x128xf32>
    %cst_133 = arith.constant dense<0.000000e+00> : vector<128xf32>
    %126 = vector.multi_reduction <add>, %125, %cst_133 [0] : vector<128x128xf32> to vector<128xf32>
    %127 = vector.shape_cast %126 : vector<128xf32> to vector<1x128xf32>
    %c0_134 = arith.constant 0 : index
    %c0_135 = arith.constant 0 : index
    %c0_136 = arith.constant 0 : index
    %128 = vector.load %arg4[%c0_134, %c0_135, %c0_136] : memref<1x2x128xf32, #tpu.memory_space<vmem>>, vector<1x1x128xf32>
    %129 = vector.shape_cast %128 : vector<1x1x128xf32> to vector<1x128xf32>
    %130 = vector.shape_cast %127 : vector<1x128xf32> to vector<1x1x128xf32>
    tpu.vector_store %arg4[%c0_134, %c0_135, %c0_136], %130 {strides = array<i32>} : memref<1x2x128xf32, #tpu.memory_space<vmem>>, vector<1x1x128xf32>,
    %131 = arith.mulf %125, %125 : vector<128x128xf32>
    %cst_137 = arith.constant dense<0.000000e+00> : vector<128xf32>
    %132 = vector.multi_reduction <add>, %131, %cst_137 [0] : vector<128x128xf32> to vector<128xf32>
    %133 = vector.shape_cast %132 : vector<128xf32> to vector<1x128xf32>
    %c0_138 = arith.constant 0 : index
    %c1_139 = arith.constant 1 : index
    %c0_140 = arith.constant 0 : index
    %134 = vector.load %arg4[%c0_138, %c1_139, %c0_140] : memref<1x2x128xf32, #tpu.memory_space<vmem>>, vector<1x1x128xf32>
    %135 = vector.shape_cast %134 : vector<1x1x128xf32> to vector<1x128xf32>
    %136 = vector.shape_cast %133 : vector<1x128xf32> to vector<1x1x128xf32>
    tpu.vector_store %arg4[%c0_138, %c1_139, %c0_140], %136 {strides = array<i32>} : memref<1x2x128xf32, #tpu.memory_space<vmem>>, vector<1x1x128xf32>,
    %137 = vector.shape_cast %125 : vector<128x128xf32> to vector<2x8x8x128xf32>
    %138 = arith.truncf %137 : vector<2x8x8x128xf32> to vector<2x8x8x128xbf16>
    %c0_141 = arith.constant 0 : index
    %c0_142 = arith.constant 0 : index
    %c0_143 = arith.constant 0 : index
    %c0_144 = arith.constant 0 : index
    %139 = vector.load %arg3[%c0_141, %c0_142, %c0_143, %c0_144] : memref<2x8x8x128xbf16, #tpu.memory_space<vmem>>, vector<2x8x8x128xbf16>
    tpu.vector_store %arg3[%c0_141, %c0_142, %c0_143, %c0_144], %138 {strides = array<i32>} : memref<2x8x8x128xbf16, #tpu.memory_space<vmem>>, vector<2x8x8x128xbf16>,
    return
  }
  func.func @transform_0(%arg0: i32) -> (i32, i32, i32, i32) {
    %c0_i32 = arith.constant 0 : i32
    %c0_i32_0 = arith.constant 0 : i32
    %c0_i32_1 = arith.constant 0 : i32
    %c0_i32_2 = arith.constant 0 : i32
    return %arg0, %c0_i32, %c0_i32_0, %c0_i32_1 : i32, i32, i32, i32
  }
  func.func @transform_1(%arg0: i32) -> (i32, i32) {
    %c0_i32 = arith.constant 0 : i32
    %c0_i32_0 = arith.constant 0 : i32
    %c0_i32_1 = arith.constant 0 : i32
    return %c0_i32, %c0_i32_0 : i32, i32
  }
  func.func @transform_2(%arg0: i32) -> (i32, i32, i32, i32) {
    %c0_i32 = arith.constant 0 : i32
    %c0_i32_0 = arith.constant 0 : i32
    %c0_i32_1 = arith.constant 0 : i32
    %c0_i32_2 = arith.constant 0 : i32
    return %arg0, %c0_i32, %c0_i32_0, %c0_i32_1 : i32, i32, i32, i32
  }
  func.func @transform_3(%arg0: i32) -> (i32, i32, i32) {
    %c0_i32 = arith.constant 0 : i32
    %c0_i32_0 = arith.constant 0 : i32
    %c0_i32_1 = arith.constant 0 : i32
    return %arg0, %c0_i32, %c0_i32_0 : i32, i32, i32
  }
}

module attributes {stable_mosaic.version = 11 : i64} {
  func.func @_bn_relu_conv_stats_kernel(%arg0: i32, %arg1: memref<2x8x8x128xbf16, #tpu.memory_space<vmem>>, %arg2: memref<1x128xf32, #tpu.memory_space<vmem>>, %arg3: memref<1x128xf32, #tpu.memory_space<vmem>>, %arg4: memref<1152x128xbf16, #tpu.memory_space<vmem>>, %arg5: memref<2x8x8x128xbf16, #tpu.memory_space<vmem>>, %arg6: memref<1x2x128xf32, #tpu.memory_space<vmem>>, %arg7: memref<2x10x10x128xbf16, #tpu.memory_space<vmem>>, %arg8: memref<2x64x1152xbf16, #tpu.memory_space<vmem>>) attributes {dimension_semantics = [#tpu.dimension_semantics<parallel>], iteration_bounds = array<i64: 1>, scalar_prefetch = 0 : i64, scratch_operands = 2 : i64, tpu.core_type = #tpu.core_type<tc>, window_params = [{transform_indices = @transform_0, window_bounds = array<i64: 2, 8, 8, 128>}, {pipeline_mode = #tpu.pipeline_mode<synchronous>, transform_indices = @transform_1, window_bounds = array<i64: 1, 128>}, {pipeline_mode = #tpu.pipeline_mode<synchronous>, transform_indices = @transform_2, window_bounds = array<i64: 1, 128>}, {pipeline_mode = #tpu.pipeline_mode<synchronous>, transform_indices = @transform_3, window_bounds = array<i64: 1152, 128>}, {transform_indices = @transform_4, window_bounds = array<i64: 2, 8, 8, 128>}, {transform_indices = @transform_5, window_bounds = array<i64: 1, 2, 128>}]} {
    %c0_i32 = arith.constant 0 : i32
    %0 = arith.cmpi eq, %arg0, %c0_i32 : i32
    %1 = arith.extui %0 : i1 to i32
    %c0_i32_0 = arith.constant 0 : i32
    %2 = arith.cmpi ne, %1, %c0_i32_0 : i32
    scf.if %2 {
      %cst_150 = arith.constant 0.000000e+00 : bf16
      %153 = vector.broadcast %cst_150 : bf16 to vector<10x128xbf16>
      %cst_151 = arith.constant 0.000000e+00 : bf16
      %154 = vector.broadcast %cst_151 : bf16 to vector<8x1x128xbf16>
      %c0_152 = arith.constant 0 : index
      %c0_153 = arith.constant 0 : index
      %c0_154 = arith.constant 0 : index
      %c0_155 = arith.constant 0 : index
      %155 = vector.load %arg7[%c0_152, %c0_153, %c0_154, %c0_155] : memref<2x10x10x128xbf16, #tpu.memory_space<vmem>>, vector<1x1x10x128xbf16>
      %156 = vector.shape_cast %155 : vector<1x1x10x128xbf16> to vector<10x128xbf16>
      %157 = vector.shape_cast %153 : vector<10x128xbf16> to vector<1x1x10x128xbf16>
      tpu.vector_store %arg7[%c0_152, %c0_153, %c0_154, %c0_155], %157 {strides = array<i32>} : memref<2x10x10x128xbf16, #tpu.memory_space<vmem>>, vector<1x1x10x128xbf16>,
      %c0_156 = arith.constant 0 : index
      %c9 = arith.constant 9 : index
      %c0_157 = arith.constant 0 : index
      %c0_158 = arith.constant 0 : index
      %158 = vector.load %arg7[%c0_156, %c9, %c0_157, %c0_158] : memref<2x10x10x128xbf16, #tpu.memory_space<vmem>>, vector<1x1x10x128xbf16>
      %159 = vector.shape_cast %158 : vector<1x1x10x128xbf16> to vector<10x128xbf16>
      %160 = vector.shape_cast %153 : vector<10x128xbf16> to vector<1x1x10x128xbf16>
      tpu.vector_store %arg7[%c0_156, %c9, %c0_157, %c0_158], %160 {strides = array<i32>} : memref<2x10x10x128xbf16, #tpu.memory_space<vmem>>, vector<1x1x10x128xbf16>,
      %c0_159 = arith.constant 0 : index
      %c1_160 = arith.constant 1 : index
      %c0_161 = arith.constant 0 : index
      %c0_162 = arith.constant 0 : index
      %161 = vector.load %arg7[%c0_159, %c1_160, %c0_161, %c0_162] : memref<2x10x10x128xbf16, #tpu.memory_space<vmem>>, vector<1x8x1x128xbf16>
      %162 = vector.shape_cast %161 : vector<1x8x1x128xbf16> to vector<8x1x128xbf16>
      %163 = vector.shape_cast %154 : vector<8x1x128xbf16> to vector<1x8x1x128xbf16>
      tpu.vector_store %arg7[%c0_159, %c1_160, %c0_161, %c0_162], %163 {strides = array<i32>} : memref<2x10x10x128xbf16, #tpu.memory_space<vmem>>, vector<1x8x1x128xbf16>,
      %c0_163 = arith.constant 0 : index
      %c1_164 = arith.constant 1 : index
      %c9_165 = arith.constant 9 : index
      %c0_166 = arith.constant 0 : index
      %164 = vector.load %arg7[%c0_163, %c1_164, %c9_165, %c0_166] : memref<2x10x10x128xbf16, #tpu.memory_space<vmem>>, vector<1x8x1x128xbf16>
      %165 = vector.shape_cast %164 : vector<1x8x1x128xbf16> to vector<8x1x128xbf16>
      %166 = vector.shape_cast %154 : vector<8x1x128xbf16> to vector<1x8x1x128xbf16>
      tpu.vector_store %arg7[%c0_163, %c1_164, %c9_165, %c0_166], %166 {strides = array<i32>} : memref<2x10x10x128xbf16, #tpu.memory_space<vmem>>, vector<1x8x1x128xbf16>,
      %c1_167 = arith.constant 1 : index
      %c0_168 = arith.constant 0 : index
      %c0_169 = arith.constant 0 : index
      %c0_170 = arith.constant 0 : index
      %167 = vector.load %arg7[%c1_167, %c0_168, %c0_169, %c0_170] : memref<2x10x10x128xbf16, #tpu.memory_space<vmem>>, vector<1x1x10x128xbf16>
      %168 = vector.shape_cast %167 : vector<1x1x10x128xbf16> to vector<10x128xbf16>
      %169 = vector.shape_cast %153 : vector<10x128xbf16> to vector<1x1x10x128xbf16>
      tpu.vector_store %arg7[%c1_167, %c0_168, %c0_169, %c0_170], %169 {strides = array<i32>} : memref<2x10x10x128xbf16, #tpu.memory_space<vmem>>, vector<1x1x10x128xbf16>,
      %c1_171 = arith.constant 1 : index
      %c9_172 = arith.constant 9 : index
      %c0_173 = arith.constant 0 : index
      %c0_174 = arith.constant 0 : index
      %170 = vector.load %arg7[%c1_171, %c9_172, %c0_173, %c0_174] : memref<2x10x10x128xbf16, #tpu.memory_space<vmem>>, vector<1x1x10x128xbf16>
      %171 = vector.shape_cast %170 : vector<1x1x10x128xbf16> to vector<10x128xbf16>
      %172 = vector.shape_cast %153 : vector<10x128xbf16> to vector<1x1x10x128xbf16>
      tpu.vector_store %arg7[%c1_171, %c9_172, %c0_173, %c0_174], %172 {strides = array<i32>} : memref<2x10x10x128xbf16, #tpu.memory_space<vmem>>, vector<1x1x10x128xbf16>,
      %c1_175 = arith.constant 1 : index
      %c1_176 = arith.constant 1 : index
      %c0_177 = arith.constant 0 : index
      %c0_178 = arith.constant 0 : index
      %173 = vector.load %arg7[%c1_175, %c1_176, %c0_177, %c0_178] : memref<2x10x10x128xbf16, #tpu.memory_space<vmem>>, vector<1x8x1x128xbf16>
      %174 = vector.shape_cast %173 : vector<1x8x1x128xbf16> to vector<8x1x128xbf16>
      %175 = vector.shape_cast %154 : vector<8x1x128xbf16> to vector<1x8x1x128xbf16>
      tpu.vector_store %arg7[%c1_175, %c1_176, %c0_177, %c0_178], %175 {strides = array<i32>} : memref<2x10x10x128xbf16, #tpu.memory_space<vmem>>, vector<1x8x1x128xbf16>,
      %c1_179 = arith.constant 1 : index
      %c1_180 = arith.constant 1 : index
      %c9_181 = arith.constant 9 : index
      %c0_182 = arith.constant 0 : index
      %176 = vector.load %arg7[%c1_179, %c1_180, %c9_181, %c0_182] : memref<2x10x10x128xbf16, #tpu.memory_space<vmem>>, vector<1x8x1x128xbf16>
      %177 = vector.shape_cast %176 : vector<1x8x1x128xbf16> to vector<8x1x128xbf16>
      %178 = vector.shape_cast %154 : vector<8x1x128xbf16> to vector<1x8x1x128xbf16>
      tpu.vector_store %arg7[%c1_179, %c1_180, %c9_181, %c0_182], %178 {strides = array<i32>} : memref<2x10x10x128xbf16, #tpu.memory_space<vmem>>, vector<1x8x1x128xbf16>,
    } else {
    }
    %c0 = arith.constant 0 : index
    %c0_1 = arith.constant 0 : index
    %c0_2 = arith.constant 0 : index
    %c0_3 = arith.constant 0 : index
    %3 = vector.load %arg1[%c0, %c0_1, %c0_2, %c0_3] : memref<2x8x8x128xbf16, #tpu.memory_space<vmem>>, vector<2x8x8x128xbf16>
    %4 = arith.extf %3 : vector<2x8x8x128xbf16> to vector<2x8x8x128xf32>
    %c0_4 = arith.constant 0 : index
    %c0_5 = arith.constant 0 : index
    %5 = vector.load %arg2[%c0_4, %c0_5] : memref<1x128xf32, #tpu.memory_space<vmem>>, vector<1x128xf32>
    %6 = vector.shape_cast %5 : vector<1x128xf32> to vector<1x1x1x128xf32>
    %7 = vector.broadcast %6 : vector<1x1x1x128xf32> to vector<2x8x8x128xf32>
    %8 = arith.mulf %4, %7 : vector<2x8x8x128xf32>
    %c0_6 = arith.constant 0 : index
    %c0_7 = arith.constant 0 : index
    %9 = vector.load %arg3[%c0_6, %c0_7] : memref<1x128xf32, #tpu.memory_space<vmem>>, vector<1x128xf32>
    %10 = vector.shape_cast %9 : vector<1x128xf32> to vector<1x1x1x128xf32>
    %11 = vector.broadcast %10 : vector<1x1x1x128xf32> to vector<2x8x8x128xf32>
    %12 = arith.addf %8, %11 : vector<2x8x8x128xf32>
    %cst = arith.constant 0.000000e+00 : f32
    %13 = vector.broadcast %cst : f32 to vector<2x8x8x128xf32>
    %14 = arith.maximumf %12, %13 : vector<2x8x8x128xf32>
    %15 = vector.extract_strided_slice %14 {offsets = [0, 0, 0, 0], sizes = [1, 8, 8, 128], strides = [1, 1, 1, 1]} : vector<2x8x8x128xf32> to vector<1x8x8x128xf32>
    %16 = vector.shape_cast %15 : vector<1x8x8x128xf32> to vector<8x8x128xf32>
    %17 = arith.truncf %16 : vector<8x8x128xf32> to vector<8x8x128xbf16>
    %c0_8 = arith.constant 0 : index
    %c1 = arith.constant 1 : index
    %c1_9 = arith.constant 1 : index
    %c0_10 = arith.constant 0 : index
    %18 = vector.load %arg7[%c0_8, %c1, %c1_9, %c0_10] : memref<2x10x10x128xbf16, #tpu.memory_space<vmem>>, vector<1x8x8x128xbf16>
    %19 = vector.shape_cast %18 : vector<1x8x8x128xbf16> to vector<8x8x128xbf16>
    %20 = vector.shape_cast %17 : vector<8x8x128xbf16> to vector<1x8x8x128xbf16>
    tpu.vector_store %arg7[%c0_8, %c1, %c1_9, %c0_10], %20 {strides = array<i32>} : memref<2x10x10x128xbf16, #tpu.memory_space<vmem>>, vector<1x8x8x128xbf16>,
    %c0_11 = arith.constant 0 : index
    %c0_12 = arith.constant 0 : index
    %c0_13 = arith.constant 0 : index
    %c0_14 = arith.constant 0 : index
    %21 = vector.load %arg7[%c0_11, %c0_12, %c0_13, %c0_14] : memref<2x10x10x128xbf16, #tpu.memory_space<vmem>>, vector<1x8x8x128xbf16>
    %22 = vector.shape_cast %21 : vector<1x8x8x128xbf16> to vector<8x8x128xbf16>
    %23 = vector.shape_cast %22 : vector<8x8x128xbf16> to vector<64x128xbf16>
    %c0_15 = arith.constant 0 : index
    %c0_16 = arith.constant 0 : index
    %c0_17 = arith.constant 0 : index
    %24 = vector.load %arg8[%c0_15, %c0_16, %c0_17] : memref<2x64x1152xbf16, #tpu.memory_space<vmem>>, vector<1x64x128xbf16>
    %25 = vector.shape_cast %24 : vector<1x64x128xbf16> to vector<64x128xbf16>
    %26 = vector.shape_cast %23 : vector<64x128xbf16> to vector<1x64x128xbf16>
    tpu.vector_store %arg8[%c0_15, %c0_16, %c0_17], %26 {strides = array<i32>} : memref<2x64x1152xbf16, #tpu.memory_space<vmem>>, vector<1x64x128xbf16>,
    %c0_18 = arith.constant 0 : index
    %c0_19 = arith.constant 0 : index
    %c1_20 = arith.constant 1 : index
    %c0_21 = arith.constant 0 : index
    %27 = vector.load %arg7[%c0_18, %c0_19, %c1_20, %c0_21] : memref<2x10x10x128xbf16, #tpu.memory_space<vmem>>, vector<1x8x8x128xbf16>
    %28 = vector.shape_cast %27 : vector<1x8x8x128xbf16> to vector<8x8x128xbf16>
    %29 = vector.shape_cast %28 : vector<8x8x128xbf16> to vector<64x128xbf16>
    %c0_22 = arith.constant 0 : index
    %c0_23 = arith.constant 0 : index
    %c128 = arith.constant 128 : index
    %30 = vector.load %arg8[%c0_22, %c0_23, %c128] : memref<2x64x1152xbf16, #tpu.memory_space<vmem>>, vector<1x64x128xbf16>
    %31 = vector.shape_cast %30 : vector<1x64x128xbf16> to vector<64x128xbf16>
    %32 = vector.shape_cast %29 : vector<64x128xbf16> to vector<1x64x128xbf16>
    tpu.vector_store %arg8[%c0_22, %c0_23, %c128], %32 {strides = array<i32>} : memref<2x64x1152xbf16, #tpu.memory_space<vmem>>, vector<1x64x128xbf16>,
    %c0_24 = arith.constant 0 : index
    %c0_25 = arith.constant 0 : index
    %c2 = arith.constant 2 : index
    %c0_26 = arith.constant 0 : index
    %33 = vector.load %arg7[%c0_24, %c0_25, %c2, %c0_26] : memref<2x10x10x128xbf16, #tpu.memory_space<vmem>>, vector<1x8x8x128xbf16>
    %34 = vector.shape_cast %33 : vector<1x8x8x128xbf16> to vector<8x8x128xbf16>
    %35 = vector.shape_cast %34 : vector<8x8x128xbf16> to vector<64x128xbf16>
    %c0_27 = arith.constant 0 : index
    %c0_28 = arith.constant 0 : index
    %c256 = arith.constant 256 : index
    %36 = vector.load %arg8[%c0_27, %c0_28, %c256] : memref<2x64x1152xbf16, #tpu.memory_space<vmem>>, vector<1x64x128xbf16>
    %37 = vector.shape_cast %36 : vector<1x64x128xbf16> to vector<64x128xbf16>
    %38 = vector.shape_cast %35 : vector<64x128xbf16> to vector<1x64x128xbf16>
    tpu.vector_store %arg8[%c0_27, %c0_28, %c256], %38 {strides = array<i32>} : memref<2x64x1152xbf16, #tpu.memory_space<vmem>>, vector<1x64x128xbf16>,
    %c0_29 = arith.constant 0 : index
    %c1_30 = arith.constant 1 : index
    %c0_31 = arith.constant 0 : index
    %c0_32 = arith.constant 0 : index
    %39 = vector.load %arg7[%c0_29, %c1_30, %c0_31, %c0_32] : memref<2x10x10x128xbf16, #tpu.memory_space<vmem>>, vector<1x8x8x128xbf16>
    %40 = vector.shape_cast %39 : vector<1x8x8x128xbf16> to vector<8x8x128xbf16>
    %41 = vector.shape_cast %40 : vector<8x8x128xbf16> to vector<64x128xbf16>
    %c0_33 = arith.constant 0 : index
    %c0_34 = arith.constant 0 : index
    %c384 = arith.constant 384 : index
    %42 = vector.load %arg8[%c0_33, %c0_34, %c384] : memref<2x64x1152xbf16, #tpu.memory_space<vmem>>, vector<1x64x128xbf16>
    %43 = vector.shape_cast %42 : vector<1x64x128xbf16> to vector<64x128xbf16>
    %44 = vector.shape_cast %41 : vector<64x128xbf16> to vector<1x64x128xbf16>
    tpu.vector_store %arg8[%c0_33, %c0_34, %c384], %44 {strides = array<i32>} : memref<2x64x1152xbf16, #tpu.memory_space<vmem>>, vector<1x64x128xbf16>,
    %c0_35 = arith.constant 0 : index
    %c1_36 = arith.constant 1 : index
    %c1_37 = arith.constant 1 : index
    %c0_38 = arith.constant 0 : index
    %45 = vector.load %arg7[%c0_35, %c1_36, %c1_37, %c0_38] : memref<2x10x10x128xbf16, #tpu.memory_space<vmem>>, vector<1x8x8x128xbf16>
    %46 = vector.shape_cast %45 : vector<1x8x8x128xbf16> to vector<8x8x128xbf16>
    %47 = vector.shape_cast %46 : vector<8x8x128xbf16> to vector<64x128xbf16>
    %c0_39 = arith.constant 0 : index
    %c0_40 = arith.constant 0 : index
    %c512 = arith.constant 512 : index
    %48 = vector.load %arg8[%c0_39, %c0_40, %c512] : memref<2x64x1152xbf16, #tpu.memory_space<vmem>>, vector<1x64x128xbf16>
    %49 = vector.shape_cast %48 : vector<1x64x128xbf16> to vector<64x128xbf16>
    %50 = vector.shape_cast %47 : vector<64x128xbf16> to vector<1x64x128xbf16>
    tpu.vector_store %arg8[%c0_39, %c0_40, %c512], %50 {strides = array<i32>} : memref<2x64x1152xbf16, #tpu.memory_space<vmem>>, vector<1x64x128xbf16>,
    %c0_41 = arith.constant 0 : index
    %c1_42 = arith.constant 1 : index
    %c2_43 = arith.constant 2 : index
    %c0_44 = arith.constant 0 : index
    %51 = vector.load %arg7[%c0_41, %c1_42, %c2_43, %c0_44] : memref<2x10x10x128xbf16, #tpu.memory_space<vmem>>, vector<1x8x8x128xbf16>
    %52 = vector.shape_cast %51 : vector<1x8x8x128xbf16> to vector<8x8x128xbf16>
    %53 = vector.shape_cast %52 : vector<8x8x128xbf16> to vector<64x128xbf16>
    %c0_45 = arith.constant 0 : index
    %c0_46 = arith.constant 0 : index
    %c640 = arith.constant 640 : index
    %54 = vector.load %arg8[%c0_45, %c0_46, %c640] : memref<2x64x1152xbf16, #tpu.memory_space<vmem>>, vector<1x64x128xbf16>
    %55 = vector.shape_cast %54 : vector<1x64x128xbf16> to vector<64x128xbf16>
    %56 = vector.shape_cast %53 : vector<64x128xbf16> to vector<1x64x128xbf16>
    tpu.vector_store %arg8[%c0_45, %c0_46, %c640], %56 {strides = array<i32>} : memref<2x64x1152xbf16, #tpu.memory_space<vmem>>, vector<1x64x128xbf16>,
    %c0_47 = arith.constant 0 : index
    %c2_48 = arith.constant 2 : index
    %c0_49 = arith.constant 0 : index
    %c0_50 = arith.constant 0 : index
    %57 = vector.load %arg7[%c0_47, %c2_48, %c0_49, %c0_50] : memref<2x10x10x128xbf16, #tpu.memory_space<vmem>>, vector<1x8x8x128xbf16>
    %58 = vector.shape_cast %57 : vector<1x8x8x128xbf16> to vector<8x8x128xbf16>
    %59 = vector.shape_cast %58 : vector<8x8x128xbf16> to vector<64x128xbf16>
    %c0_51 = arith.constant 0 : index
    %c0_52 = arith.constant 0 : index
    %c768 = arith.constant 768 : index
    %60 = vector.load %arg8[%c0_51, %c0_52, %c768] : memref<2x64x1152xbf16, #tpu.memory_space<vmem>>, vector<1x64x128xbf16>
    %61 = vector.shape_cast %60 : vector<1x64x128xbf16> to vector<64x128xbf16>
    %62 = vector.shape_cast %59 : vector<64x128xbf16> to vector<1x64x128xbf16>
    tpu.vector_store %arg8[%c0_51, %c0_52, %c768], %62 {strides = array<i32>} : memref<2x64x1152xbf16, #tpu.memory_space<vmem>>, vector<1x64x128xbf16>,
    %c0_53 = arith.constant 0 : index
    %c2_54 = arith.constant 2 : index
    %c1_55 = arith.constant 1 : index
    %c0_56 = arith.constant 0 : index
    %63 = vector.load %arg7[%c0_53, %c2_54, %c1_55, %c0_56] : memref<2x10x10x128xbf16, #tpu.memory_space<vmem>>, vector<1x8x8x128xbf16>
    %64 = vector.shape_cast %63 : vector<1x8x8x128xbf16> to vector<8x8x128xbf16>
    %65 = vector.shape_cast %64 : vector<8x8x128xbf16> to vector<64x128xbf16>
    %c0_57 = arith.constant 0 : index
    %c0_58 = arith.constant 0 : index
    %c896 = arith.constant 896 : index
    %66 = vector.load %arg8[%c0_57, %c0_58, %c896] : memref<2x64x1152xbf16, #tpu.memory_space<vmem>>, vector<1x64x128xbf16>
    %67 = vector.shape_cast %66 : vector<1x64x128xbf16> to vector<64x128xbf16>
    %68 = vector.shape_cast %65 : vector<64x128xbf16> to vector<1x64x128xbf16>
    tpu.vector_store %arg8[%c0_57, %c0_58, %c896], %68 {strides = array<i32>} : memref<2x64x1152xbf16, #tpu.memory_space<vmem>>, vector<1x64x128xbf16>,
    %c0_59 = arith.constant 0 : index
    %c2_60 = arith.constant 2 : index
    %c2_61 = arith.constant 2 : index
    %c0_62 = arith.constant 0 : index
    %69 = vector.load %arg7[%c0_59, %c2_60, %c2_61, %c0_62] : memref<2x10x10x128xbf16, #tpu.memory_space<vmem>>, vector<1x8x8x128xbf16>
    %70 = vector.shape_cast %69 : vector<1x8x8x128xbf16> to vector<8x8x128xbf16>
    %71 = vector.shape_cast %70 : vector<8x8x128xbf16> to vector<64x128xbf16>
    %c0_63 = arith.constant 0 : index
    %c0_64 = arith.constant 0 : index
    %c1024 = arith.constant 1024 : index
    %72 = vector.load %arg8[%c0_63, %c0_64, %c1024] : memref<2x64x1152xbf16, #tpu.memory_space<vmem>>, vector<1x64x128xbf16>
    %73 = vector.shape_cast %72 : vector<1x64x128xbf16> to vector<64x128xbf16>
    %74 = vector.shape_cast %71 : vector<64x128xbf16> to vector<1x64x128xbf16>
    tpu.vector_store %arg8[%c0_63, %c0_64, %c1024], %74 {strides = array<i32>} : memref<2x64x1152xbf16, #tpu.memory_space<vmem>>, vector<1x64x128xbf16>,
    %75 = vector.extract_strided_slice %14 {offsets = [1, 0, 0, 0], sizes = [1, 8, 8, 128], strides = [1, 1, 1, 1]} : vector<2x8x8x128xf32> to vector<1x8x8x128xf32>
    %76 = vector.shape_cast %75 : vector<1x8x8x128xf32> to vector<8x8x128xf32>
    %77 = arith.truncf %76 : vector<8x8x128xf32> to vector<8x8x128xbf16>
    %c1_65 = arith.constant 1 : index
    %c1_66 = arith.constant 1 : index
    %c1_67 = arith.constant 1 : index
    %c0_68 = arith.constant 0 : index
    %78 = vector.load %arg7[%c1_65, %c1_66, %c1_67, %c0_68] : memref<2x10x10x128xbf16, #tpu.memory_space<vmem>>, vector<1x8x8x128xbf16>
    %79 = vector.shape_cast %78 : vector<1x8x8x128xbf16> to vector<8x8x128xbf16>
    %80 = vector.shape_cast %77 : vector<8x8x128xbf16> to vector<1x8x8x128xbf16>
    tpu.vector_store %arg7[%c1_65, %c1_66, %c1_67, %c0_68], %80 {strides = array<i32>} : memref<2x10x10x128xbf16, #tpu.memory_space<vmem>>, vector<1x8x8x128xbf16>,
    %c1_69 = arith.constant 1 : index
    %c0_70 = arith.constant 0 : index
    %c0_71 = arith.constant 0 : index
    %c0_72 = arith.constant 0 : index
    %81 = vector.load %arg7[%c1_69, %c0_70, %c0_71, %c0_72] : memref<2x10x10x128xbf16, #tpu.memory_space<vmem>>, vector<1x8x8x128xbf16>
    %82 = vector.shape_cast %81 : vector<1x8x8x128xbf16> to vector<8x8x128xbf16>
    %83 = vector.shape_cast %82 : vector<8x8x128xbf16> to vector<64x128xbf16>
    %c1_73 = arith.constant 1 : index
    %c0_74 = arith.constant 0 : index
    %c0_75 = arith.constant 0 : index
    %84 = vector.load %arg8[%c1_73, %c0_74, %c0_75] : memref<2x64x1152xbf16, #tpu.memory_space<vmem>>, vector<1x64x128xbf16>
    %85 = vector.shape_cast %84 : vector<1x64x128xbf16> to vector<64x128xbf16>
    %86 = vector.shape_cast %83 : vector<64x128xbf16> to vector<1x64x128xbf16>
    tpu.vector_store %arg8[%c1_73, %c0_74, %c0_75], %86 {strides = array<i32>} : memref<2x64x1152xbf16, #tpu.memory_space<vmem>>, vector<1x64x128xbf16>,
    %c1_76 = arith.constant 1 : index
    %c0_77 = arith.constant 0 : index
    %c1_78 = arith.constant 1 : index
    %c0_79 = arith.constant 0 : index
    %87 = vector.load %arg7[%c1_76, %c0_77, %c1_78, %c0_79] : memref<2x10x10x128xbf16, #tpu.memory_space<vmem>>, vector<1x8x8x128xbf16>
    %88 = vector.shape_cast %87 : vector<1x8x8x128xbf16> to vector<8x8x128xbf16>
    %89 = vector.shape_cast %88 : vector<8x8x128xbf16> to vector<64x128xbf16>
    %c1_80 = arith.constant 1 : index
    %c0_81 = arith.constant 0 : index
    %c128_82 = arith.constant 128 : index
    %90 = vector.load %arg8[%c1_80, %c0_81, %c128_82] : memref<2x64x1152xbf16, #tpu.memory_space<vmem>>, vector<1x64x128xbf16>
    %91 = vector.shape_cast %90 : vector<1x64x128xbf16> to vector<64x128xbf16>
    %92 = vector.shape_cast %89 : vector<64x128xbf16> to vector<1x64x128xbf16>
    tpu.vector_store %arg8[%c1_80, %c0_81, %c128_82], %92 {strides = array<i32>} : memref<2x64x1152xbf16, #tpu.memory_space<vmem>>, vector<1x64x128xbf16>,
    %c1_83 = arith.constant 1 : index
    %c0_84 = arith.constant 0 : index
    %c2_85 = arith.constant 2 : index
    %c0_86 = arith.constant 0 : index
    %93 = vector.load %arg7[%c1_83, %c0_84, %c2_85, %c0_86] : memref<2x10x10x128xbf16, #tpu.memory_space<vmem>>, vector<1x8x8x128xbf16>
    %94 = vector.shape_cast %93 : vector<1x8x8x128xbf16> to vector<8x8x128xbf16>
    %95 = vector.shape_cast %94 : vector<8x8x128xbf16> to vector<64x128xbf16>
    %c1_87 = arith.constant 1 : index
    %c0_88 = arith.constant 0 : index
    %c256_89 = arith.constant 256 : index
    %96 = vector.load %arg8[%c1_87, %c0_88, %c256_89] : memref<2x64x1152xbf16, #tpu.memory_space<vmem>>, vector<1x64x128xbf16>
    %97 = vector.shape_cast %96 : vector<1x64x128xbf16> to vector<64x128xbf16>
    %98 = vector.shape_cast %95 : vector<64x128xbf16> to vector<1x64x128xbf16>
    tpu.vector_store %arg8[%c1_87, %c0_88, %c256_89], %98 {strides = array<i32>} : memref<2x64x1152xbf16, #tpu.memory_space<vmem>>, vector<1x64x128xbf16>,
    %c1_90 = arith.constant 1 : index
    %c1_91 = arith.constant 1 : index
    %c0_92 = arith.constant 0 : index
    %c0_93 = arith.constant 0 : index
    %99 = vector.load %arg7[%c1_90, %c1_91, %c0_92, %c0_93] : memref<2x10x10x128xbf16, #tpu.memory_space<vmem>>, vector<1x8x8x128xbf16>
    %100 = vector.shape_cast %99 : vector<1x8x8x128xbf16> to vector<8x8x128xbf16>
    %101 = vector.shape_cast %100 : vector<8x8x128xbf16> to vector<64x128xbf16>
    %c1_94 = arith.constant 1 : index
    %c0_95 = arith.constant 0 : index
    %c384_96 = arith.constant 384 : index
    %102 = vector.load %arg8[%c1_94, %c0_95, %c384_96] : memref<2x64x1152xbf16, #tpu.memory_space<vmem>>, vector<1x64x128xbf16>
    %103 = vector.shape_cast %102 : vector<1x64x128xbf16> to vector<64x128xbf16>
    %104 = vector.shape_cast %101 : vector<64x128xbf16> to vector<1x64x128xbf16>
    tpu.vector_store %arg8[%c1_94, %c0_95, %c384_96], %104 {strides = array<i32>} : memref<2x64x1152xbf16, #tpu.memory_space<vmem>>, vector<1x64x128xbf16>,
    %c1_97 = arith.constant 1 : index
    %c1_98 = arith.constant 1 : index
    %c1_99 = arith.constant 1 : index
    %c0_100 = arith.constant 0 : index
    %105 = vector.load %arg7[%c1_97, %c1_98, %c1_99, %c0_100] : memref<2x10x10x128xbf16, #tpu.memory_space<vmem>>, vector<1x8x8x128xbf16>
    %106 = vector.shape_cast %105 : vector<1x8x8x128xbf16> to vector<8x8x128xbf16>
    %107 = vector.shape_cast %106 : vector<8x8x128xbf16> to vector<64x128xbf16>
    %c1_101 = arith.constant 1 : index
    %c0_102 = arith.constant 0 : index
    %c512_103 = arith.constant 512 : index
    %108 = vector.load %arg8[%c1_101, %c0_102, %c512_103] : memref<2x64x1152xbf16, #tpu.memory_space<vmem>>, vector<1x64x128xbf16>
    %109 = vector.shape_cast %108 : vector<1x64x128xbf16> to vector<64x128xbf16>
    %110 = vector.shape_cast %107 : vector<64x128xbf16> to vector<1x64x128xbf16>
    tpu.vector_store %arg8[%c1_101, %c0_102, %c512_103], %110 {strides = array<i32>} : memref<2x64x1152xbf16, #tpu.memory_space<vmem>>, vector<1x64x128xbf16>,
    %c1_104 = arith.constant 1 : index
    %c1_105 = arith.constant 1 : index
    %c2_106 = arith.constant 2 : index
    %c0_107 = arith.constant 0 : index
    %111 = vector.load %arg7[%c1_104, %c1_105, %c2_106, %c0_107] : memref<2x10x10x128xbf16, #tpu.memory_space<vmem>>, vector<1x8x8x128xbf16>
    %112 = vector.shape_cast %111 : vector<1x8x8x128xbf16> to vector<8x8x128xbf16>
    %113 = vector.shape_cast %112 : vector<8x8x128xbf16> to vector<64x128xbf16>
    %c1_108 = arith.constant 1 : index
    %c0_109 = arith.constant 0 : index
    %c640_110 = arith.constant 640 : index
    %114 = vector.load %arg8[%c1_108, %c0_109, %c640_110] : memref<2x64x1152xbf16, #tpu.memory_space<vmem>>, vector<1x64x128xbf16>
    %115 = vector.shape_cast %114 : vector<1x64x128xbf16> to vector<64x128xbf16>
    %116 = vector.shape_cast %113 : vector<64x128xbf16> to vector<1x64x128xbf16>
    tpu.vector_store %arg8[%c1_108, %c0_109, %c640_110], %116 {strides = array<i32>} : memref<2x64x1152xbf16, #tpu.memory_space<vmem>>, vector<1x64x128xbf16>,
    %c1_111 = arith.constant 1 : index
    %c2_112 = arith.constant 2 : index
    %c0_113 = arith.constant 0 : index
    %c0_114 = arith.constant 0 : index
    %117 = vector.load %arg7[%c1_111, %c2_112, %c0_113, %c0_114] : memref<2x10x10x128xbf16, #tpu.memory_space<vmem>>, vector<1x8x8x128xbf16>
    %118 = vector.shape_cast %117 : vector<1x8x8x128xbf16> to vector<8x8x128xbf16>
    %119 = vector.shape_cast %118 : vector<8x8x128xbf16> to vector<64x128xbf16>
    %c1_115 = arith.constant 1 : index
    %c0_116 = arith.constant 0 : index
    %c768_117 = arith.constant 768 : index
    %120 = vector.load %arg8[%c1_115, %c0_116, %c768_117] : memref<2x64x1152xbf16, #tpu.memory_space<vmem>>, vector<1x64x128xbf16>
    %121 = vector.shape_cast %120 : vector<1x64x128xbf16> to vector<64x128xbf16>
    %122 = vector.shape_cast %119 : vector<64x128xbf16> to vector<1x64x128xbf16>
    tpu.vector_store %arg8[%c1_115, %c0_116, %c768_117], %122 {strides = array<i32>} : memref<2x64x1152xbf16, #tpu.memory_space<vmem>>, vector<1x64x128xbf16>,
    %c1_118 = arith.constant 1 : index
    %c2_119 = arith.constant 2 : index
    %c1_120 = arith.constant 1 : index
    %c0_121 = arith.constant 0 : index
    %123 = vector.load %arg7[%c1_118, %c2_119, %c1_120, %c0_121] : memref<2x10x10x128xbf16, #tpu.memory_space<vmem>>, vector<1x8x8x128xbf16>
    %124 = vector.shape_cast %123 : vector<1x8x8x128xbf16> to vector<8x8x128xbf16>
    %125 = vector.shape_cast %124 : vector<8x8x128xbf16> to vector<64x128xbf16>
    %c1_122 = arith.constant 1 : index
    %c0_123 = arith.constant 0 : index
    %c896_124 = arith.constant 896 : index
    %126 = vector.load %arg8[%c1_122, %c0_123, %c896_124] : memref<2x64x1152xbf16, #tpu.memory_space<vmem>>, vector<1x64x128xbf16>
    %127 = vector.shape_cast %126 : vector<1x64x128xbf16> to vector<64x128xbf16>
    %128 = vector.shape_cast %125 : vector<64x128xbf16> to vector<1x64x128xbf16>
    tpu.vector_store %arg8[%c1_122, %c0_123, %c896_124], %128 {strides = array<i32>} : memref<2x64x1152xbf16, #tpu.memory_space<vmem>>, vector<1x64x128xbf16>,
    %c1_125 = arith.constant 1 : index
    %c2_126 = arith.constant 2 : index
    %c2_127 = arith.constant 2 : index
    %c0_128 = arith.constant 0 : index
    %129 = vector.load %arg7[%c1_125, %c2_126, %c2_127, %c0_128] : memref<2x10x10x128xbf16, #tpu.memory_space<vmem>>, vector<1x8x8x128xbf16>
    %130 = vector.shape_cast %129 : vector<1x8x8x128xbf16> to vector<8x8x128xbf16>
    %131 = vector.shape_cast %130 : vector<8x8x128xbf16> to vector<64x128xbf16>
    %c1_129 = arith.constant 1 : index
    %c0_130 = arith.constant 0 : index
    %c1024_131 = arith.constant 1024 : index
    %132 = vector.load %arg8[%c1_129, %c0_130, %c1024_131] : memref<2x64x1152xbf16, #tpu.memory_space<vmem>>, vector<1x64x128xbf16>
    %133 = vector.shape_cast %132 : vector<1x64x128xbf16> to vector<64x128xbf16>
    %134 = vector.shape_cast %131 : vector<64x128xbf16> to vector<1x64x128xbf16>
    tpu.vector_store %arg8[%c1_129, %c0_130, %c1024_131], %134 {strides = array<i32>} : memref<2x64x1152xbf16, #tpu.memory_space<vmem>>, vector<1x64x128xbf16>,
    %c0_132 = arith.constant 0 : index
    %c0_133 = arith.constant 0 : index
    %c0_134 = arith.constant 0 : index
    %135 = vector.load %arg8[%c0_132, %c0_133, %c0_134] : memref<2x64x1152xbf16, #tpu.memory_space<vmem>>, vector<2x64x1152xbf16>
    %136 = vector.shape_cast %135 : vector<2x64x1152xbf16> to vector<128x1152xbf16>
    %c0_135 = arith.constant 0 : index
    %c0_136 = arith.constant 0 : index
    %137 = vector.load %arg4[%c0_135, %c0_136] : memref<1152x128xbf16, #tpu.memory_space<vmem>>, vector<1152x128xbf16>
    %cst_137 = arith.constant dense<0.000000e+00> : vector<128x128xf32>
    %138 = tpu.matmul %136, %137, %cst_137 {dimension_numbers = #tpu.dot_dimension_numbers<[1], [0], [0], [1], [0, 0, 1, 1], [], []>} : vector<128x1152xbf16>, vector<1152x128xbf16>, vector<128x128xf32> -> vector<128x128xf32>
    %cst_138 = arith.constant dense<0.000000e+00> : vector<128xf32>
    %139 = vector.multi_reduction <add>, %138, %cst_138 [0] : vector<128x128xf32> to vector<128xf32>
    %140 = vector.shape_cast %139 : vector<128xf32> to vector<1x128xf32>
    %c0_139 = arith.constant 0 : index
    %c0_140 = arith.constant 0 : index
    %c0_141 = arith.constant 0 : index
    %141 = vector.load %arg6[%c0_139, %c0_140, %c0_141] : memref<1x2x128xf32, #tpu.memory_space<vmem>>, vector<1x1x128xf32>
    %142 = vector.shape_cast %141 : vector<1x1x128xf32> to vector<1x128xf32>
    %143 = vector.shape_cast %140 : vector<1x128xf32> to vector<1x1x128xf32>
    tpu.vector_store %arg6[%c0_139, %c0_140, %c0_141], %143 {strides = array<i32>} : memref<1x2x128xf32, #tpu.memory_space<vmem>>, vector<1x1x128xf32>,
    %144 = arith.mulf %138, %138 : vector<128x128xf32>
    %cst_142 = arith.constant dense<0.000000e+00> : vector<128xf32>
    %145 = vector.multi_reduction <add>, %144, %cst_142 [0] : vector<128x128xf32> to vector<128xf32>
    %146 = vector.shape_cast %145 : vector<128xf32> to vector<1x128xf32>
    %c0_143 = arith.constant 0 : index
    %c1_144 = arith.constant 1 : index
    %c0_145 = arith.constant 0 : index
    %147 = vector.load %arg6[%c0_143, %c1_144, %c0_145] : memref<1x2x128xf32, #tpu.memory_space<vmem>>, vector<1x1x128xf32>
    %148 = vector.shape_cast %147 : vector<1x1x128xf32> to vector<1x128xf32>
    %149 = vector.shape_cast %146 : vector<1x128xf32> to vector<1x1x128xf32>
    tpu.vector_store %arg6[%c0_143, %c1_144, %c0_145], %149 {strides = array<i32>} : memref<1x2x128xf32, #tpu.memory_space<vmem>>, vector<1x1x128xf32>,
    %150 = vector.shape_cast %138 : vector<128x128xf32> to vector<2x8x8x128xf32>
    %151 = arith.truncf %150 : vector<2x8x8x128xf32> to vector<2x8x8x128xbf16>
    %c0_146 = arith.constant 0 : index
    %c0_147 = arith.constant 0 : index
    %c0_148 = arith.constant 0 : index
    %c0_149 = arith.constant 0 : index
    %152 = vector.load %arg5[%c0_146, %c0_147, %c0_148, %c0_149] : memref<2x8x8x128xbf16, #tpu.memory_space<vmem>>, vector<2x8x8x128xbf16>
    tpu.vector_store %arg5[%c0_146, %c0_147, %c0_148, %c0_149], %151 {strides = array<i32>} : memref<2x8x8x128xbf16, #tpu.memory_space<vmem>>, vector<2x8x8x128xbf16>,
    return
  }
  func.func @transform_0(%arg0: i32) -> (i32, i32, i32, i32) {
    %c0_i32 = arith.constant 0 : i32
    %c0_i32_0 = arith.constant 0 : i32
    %c0_i32_1 = arith.constant 0 : i32
    %c0_i32_2 = arith.constant 0 : i32
    return %arg0, %c0_i32, %c0_i32_0, %c0_i32_1 : i32, i32, i32, i32
  }
  func.func @transform_1(%arg0: i32) -> (i32, i32) {
    %c0_i32 = arith.constant 0 : i32
    %c0_i32_0 = arith.constant 0 : i32
    %c0_i32_1 = arith.constant 0 : i32
    return %c0_i32, %c0_i32_0 : i32, i32
  }
  func.func @transform_2(%arg0: i32) -> (i32, i32) {
    %c0_i32 = arith.constant 0 : i32
    %c0_i32_0 = arith.constant 0 : i32
    %c0_i32_1 = arith.constant 0 : i32
    return %c0_i32, %c0_i32_0 : i32, i32
  }
  func.func @transform_3(%arg0: i32) -> (i32, i32) {
    %c0_i32 = arith.constant 0 : i32
    %c0_i32_0 = arith.constant 0 : i32
    %c0_i32_1 = arith.constant 0 : i32
    return %c0_i32, %c0_i32_0 : i32, i32
  }
  func.func @transform_4(%arg0: i32) -> (i32, i32, i32, i32) {
    %c0_i32 = arith.constant 0 : i32
    %c0_i32_0 = arith.constant 0 : i32
    %c0_i32_1 = arith.constant 0 : i32
    %c0_i32_2 = arith.constant 0 : i32
    return %arg0, %c0_i32, %c0_i32_0, %c0_i32_1 : i32, i32, i32, i32
  }
  func.func @transform_5(%arg0: i32) -> (i32, i32, i32) {
    %c0_i32 = arith.constant 0 : i32
    %c0_i32_0 = arith.constant 0 : i32
    %c0_i32_1 = arith.constant 0 : i32
    return %arg0, %c0_i32, %c0_i32_0 : i32, i32, i32
  }
}

module attributes {stable_mosaic.version = 11 : i64} {
  func.func @_bn_add_relu_kernel(%arg0: i32, %arg1: memref<128x128xbf16, #tpu.memory_space<vmem>>, %arg2: memref<128x128xbf16, #tpu.memory_space<vmem>>, %arg3: memref<1x128xf32, #tpu.memory_space<vmem>>, %arg4: memref<1x128xf32, #tpu.memory_space<vmem>>, %arg5: memref<128x128xbf16, #tpu.memory_space<vmem>>) attributes {dimension_semantics = [#tpu.dimension_semantics<parallel>], iteration_bounds = array<i64: 1>, scalar_prefetch = 0 : i64, scratch_operands = 0 : i64, tpu.core_type = #tpu.core_type<tc>, window_params = [{transform_indices = @transform_0, window_bounds = array<i64: 128, 128>}, {transform_indices = @transform_1, window_bounds = array<i64: 128, 128>}, {pipeline_mode = #tpu.pipeline_mode<synchronous>, transform_indices = @transform_2, window_bounds = array<i64: 1, 128>}, {pipeline_mode = #tpu.pipeline_mode<synchronous>, transform_indices = @transform_3, window_bounds = array<i64: 1, 128>}, {transform_indices = @transform_4, window_bounds = array<i64: 128, 128>}]} {
    %c0 = arith.constant 0 : index
    %c0_0 = arith.constant 0 : index
    %0 = vector.load %arg1[%c0, %c0_0] : memref<128x128xbf16, #tpu.memory_space<vmem>>, vector<128x128xbf16>
    %1 = arith.extf %0 : vector<128x128xbf16> to vector<128x128xf32>
    %c0_1 = arith.constant 0 : index
    %c0_2 = arith.constant 0 : index
    %2 = vector.load %arg2[%c0_1, %c0_2] : memref<128x128xbf16, #tpu.memory_space<vmem>>, vector<128x128xbf16>
    %3 = arith.extf %2 : vector<128x128xbf16> to vector<128x128xf32>
    %c0_3 = arith.constant 0 : index
    %c0_4 = arith.constant 0 : index
    %4 = vector.load %arg3[%c0_3, %c0_4] : memref<1x128xf32, #tpu.memory_space<vmem>>, vector<1x128xf32>
    %5 = vector.broadcast %4 : vector<1x128xf32> to vector<128x128xf32>
    %6 = arith.mulf %1, %5 : vector<128x128xf32>
    %c0_5 = arith.constant 0 : index
    %c0_6 = arith.constant 0 : index
    %7 = vector.load %arg4[%c0_5, %c0_6] : memref<1x128xf32, #tpu.memory_space<vmem>>, vector<1x128xf32>
    %8 = vector.broadcast %7 : vector<1x128xf32> to vector<128x128xf32>
    %9 = arith.addf %6, %8 : vector<128x128xf32>
    %10 = arith.addf %9, %3 : vector<128x128xf32>
    %cst = arith.constant 0.000000e+00 : f32
    %11 = vector.broadcast %cst : f32 to vector<128x128xf32>
    %12 = arith.maximumf %10, %11 : vector<128x128xf32>
    %13 = arith.truncf %12 : vector<128x128xf32> to vector<128x128xbf16>
    %c0_7 = arith.constant 0 : index
    %c0_8 = arith.constant 0 : index
    %14 = vector.load %arg5[%c0_7, %c0_8] : memref<128x128xbf16, #tpu.memory_space<vmem>>, vector<128x128xbf16>
    tpu.vector_store %arg5[%c0_7, %c0_8], %13 {strides = array<i32>} : memref<128x128xbf16, #tpu.memory_space<vmem>>, vector<128x128xbf16>,
    return
  }
  func.func @transform_0(%arg0: i32) -> (i32, i32) {
    %c0_i32 = arith.constant 0 : i32
    %c0_i32_0 = arith.constant 0 : i32
    return %arg0, %c0_i32 : i32, i32
  }
  func.func @transform_1(%arg0: i32) -> (i32, i32) {
    %c0_i32 = arith.constant 0 : i32
    %c0_i32_0 = arith.constant 0 : i32
    return %arg0, %c0_i32 : i32, i32
  }
  func.func @transform_2(%arg0: i32) -> (i32, i32) {
    %c0_i32 = arith.constant 0 : i32
    %c0_i32_0 = arith.constant 0 : i32
    %c0_i32_1 = arith.constant 0 : i32
    return %c0_i32, %c0_i32_0 : i32, i32
  }
  func.func @transform_3(%arg0: i32) -> (i32, i32) {
    %c0_i32 = arith.constant 0 : i32
    %c0_i32_0 = arith.constant 0 : i32
    %c0_i32_1 = arith.constant 0 : i32
    return %c0_i32, %c0_i32_0 : i32, i32
  }
  func.func @transform_4(%arg0: i32) -> (i32, i32) {
    %c0_i32 = arith.constant 0 : i32
    %c0_i32_0 = arith.constant 0 : i32
    return %arg0, %c0_i32 : i32, i32
  }
}

</mosaic_0001>

<llo_original>
// kernel: residual_layer.5
$region0: #{residual_layer.5}
  #allocation0 [shape = 'u32[]', space=smem, size = 0x4, offset = 0x4, fixed_abs, tag = 'smem constant byte address 0x4 - core index']
  #allocation1 [shape = 'u32[144,128]{1,0:T(1,128)}', space=vmem, size = 0x12000, scoped, tag = 'internal scratch']
  %s0 = inlined_call_operand.vmem [shape: bf16[128,128], index: 0, kind: input, shape index: {}, may-alias: {0,4}]
  %s1 = inlined_call_operand.vmem [shape: bf16[128,128], index: 1, kind: input, shape index: {}]
  %s2 = inlined_call_operand.vmem [shape: f32[1,128], index: 2, kind: input, shape index: {}]
  %s3 = inlined_call_operand.vmem [shape: f32[1,128], index: 3, kind: input, shape index: {}]
  %s4 = inlined_call_operand.vmem [shape: bf16[128,128], index: 4, kind: output, shape index: {}, may-alias: {0,4}]
  %s5 = sld [smem:[#allocation0]]
  $region26: #{residual_layer.5} parent=0
    _
  %s7 = ssub.s32 1, %s5
  %s8 = scalar_select 0, %s7, %s5
  // Predicated region
  $region2: #{residual_layer.5} parent=0 // pred_check
    _
  $region3: #{residual_layer.5} parent=0 // pred_check_branch
    %10 = sbr.rel (0) target = $region5
  $region4: #{residual_layer.5} parent=0 // pred_region
    _
  $region5: #{residual_layer.5} parent=0 // pred_fallthru
    _
  // Predicated region
  $region6: #{residual_layer.5} parent=0 // pred_check
    _
  $region7: #{residual_layer.5} parent=0 // pred_check_branch
    %12 = sbr.rel (0) target = $region9
  $region8: #{residual_layer.5} parent=0 // pred_region
    _
  $region9: #{residual_layer.5} parent=0 // pred_fallthru
    _
  // Predicated region
  $region10: #{residual_layer.5} parent=0 // pred_check
    _
  $region11: #{residual_layer.5} parent=0 // pred_check_branch
    %14 = sbr.rel (0) target = $region13
  $region12: #{residual_layer.5} parent=0 // pred_region
    _
  $region13: #{residual_layer.5} parent=0 // pred_fallthru
    _
  // Predicated region
  $region14: #{residual_layer.5} parent=0 // pred_check
    _
  $region15: #{residual_layer.5} parent=0 // pred_check_branch
    %16 = sbr.rel (0) target = $region17
  $region16: #{residual_layer.5} parent=0 // pred_region
    _
  $region17: #{residual_layer.5} parent=0 // pred_fallthru
    _
  %v17 = vld [vmem:[%s0] sm:$0xf]
  %v18 = vld [vmem:[%s0 + $0x4] sm:$0xf]
  %v19 = vld [vmem:[%s0 + $0x8] sm:$0xf]
  %v20 = vld [vmem:[%s0 + $0xc] sm:$0xf]
  %v21 = vld [vmem:[%s0 + $0x10] sm:$0xf]
  %v22 = vld [vmem:[%s0 + $0x14] sm:$0xf]
  %v23 = vld [vmem:[%s0 + $0x18] sm:$0xf]
  %v24 = vld [vmem:[%s0 + $0x1c] sm:$0xf]
  %v25 = vld [vmem:[%s0 + $0x20] sm:$0xf]
  %v26 = vld [vmem:[%s0 + $0x24] sm:$0xf]
  %v27 = vld [vmem:[%s0 + $0x28] sm:$0xf]
  %v28 = vld [vmem:[%s0 + $0x2c] sm:$0xf]
  %v29 = vld [vmem:[%s0 + $0x30] sm:$0xf]
  %v30 = vld [vmem:[%s0 + $0x34] sm:$0xf]
  %v31 = vld [vmem:[%s0 + $0x38] sm:$0xf]
  %v32 = vld [vmem:[%s0 + $0x3c] sm:$0xf]
  %v33 = vunpack.c.l.bf16 %v17
  %v34 = vunpack.c.l.bf16 %v18
  %v35 = vunpack.c.l.bf16 %v19
  %v36 = vunpack.c.l.bf16 %v20
  %v37 = vunpack.c.l.bf16 %v21
  %v38 = vunpack.c.l.bf16 %v22
  %v39 = vunpack.c.l.bf16 %v23
  %v40 = vunpack.c.l.bf16 %v24
  %v41 = vunpack.c.l.bf16 %v25
  %v42 = vunpack.c.l.bf16 %v26
  %v43 = vunpack.c.l.bf16 %v27
  %v44 = vunpack.c.l.bf16 %v28
  %v45 = vunpack.c.l.bf16 %v29
  %v46 = vunpack.c.l.bf16 %v30
  %v47 = vunpack.c.l.bf16 %v31
  %v48 = vunpack.c.l.bf16 %v32
  %v49 = vld [vmem:[%s1] sm:$0xf]
  %v50 = vld [vmem:[%s1 + $0x4] sm:$0xf]
  %v51 = vld [vmem:[%s1 + $0x8] sm:$0xf]
  %v52 = vld [vmem:[%s1 + $0xc] sm:$0xf]
  %v53 = vld [vmem:[%s1 + $0x10] sm:$0xf]
  %v54 = vld [vmem:[%s1 + $0x14] sm:$0xf]
  %v55 = vld [vmem:[%s1 + $0x18] sm:$0xf]
  %v56 = vld [vmem:[%s1 + $0x1c] sm:$0xf]
  %v57 = vld [vmem:[%s1 + $0x20] sm:$0xf]
  %v58 = vld [vmem:[%s1 + $0x24] sm:$0xf]
  %v59 = vld [vmem:[%s1 + $0x28] sm:$0xf]
  %v60 = vld [vmem:[%s1 + $0x2c] sm:$0xf]
  %v61 = vld [vmem:[%s1 + $0x30] sm:$0xf]
  %v62 = vld [vmem:[%s1 + $0x34] sm:$0xf]
  %v63 = vld [vmem:[%s1 + $0x38] sm:$0xf]
  %v64 = vld [vmem:[%s1 + $0x3c] sm:$0xf]
  %v65 = vunpack.c.l.bf16 %v49
  %v66 = vunpack.c.l.bf16 %v50
  %v67 = vunpack.c.l.bf16 %v51
  %v68 = vunpack.c.l.bf16 %v52
  %v69 = vunpack.c.l.bf16 %v53
  %v70 = vunpack.c.l.bf16 %v54
  %v71 = vunpack.c.l.bf16 %v55
  %v72 = vunpack.c.l.bf16 %v56
  %v73 = vunpack.c.l.bf16 %v57
  %v74 = vunpack.c.l.bf16 %v58
  %v75 = vunpack.c.l.bf16 %v59
  %v76 = vunpack.c.l.bf16 %v60
  %v77 = vunpack.c.l.bf16 %v61
  %v78 = vunpack.c.l.bf16 %v62
  %v79 = vunpack.c.l.bf16 %v63
  %v80 = vunpack.c.l.bf16 %v64
  %v81 = vld [vmem:[%s2] sm:$0x1]
  %v83 = vlaneseq
  %v84 = vshrl.u32 %v83, 7
  %v85 = vsub.s32 0, %v84
  %v86 = vrot.slane %v81, %v85
  %v88 = vmul.f32 %v33, %v86
  %v89 = vmul.f32 %v34, %v86
  %v90 = vmul.f32 %v35, %v86
  %v91 = vmul.f32 %v36, %v86
  %v92 = vmul.f32 %v37, %v86
  %v93 = vmul.f32 %v38, %v86
  %v94 = vmul.f32 %v39, %v86
  %v95 = vmul.f32 %v40, %v86
  %v96 = vmul.f32 %v41, %v86
  %v97 = vmul.f32 %v42, %v86
  %v98 = vmul.f32 %v43, %v86
  %v99 = vmul.f32 %v44, %v86
  %v100 = vmul.f32 %v45, %v86
  %v101 = vmul.f32 %v46, %v86
  %v102 = vmul.f32 %v47, %v86
  %v103 = vmul.f32 %v48, %v86
  %v104 = vld [vmem:[%s3] sm:$0x1]
  %v106 = vlaneseq
  %v107 = vshrl.u32 %v106, 7
  %v108 = vsub.s32 0, %v107
  %v109 = vrot.slane %v104, %v108
  %v111 = vadd.f32 %v88, %v109
  %v112 = vadd.f32 %v89, %v109
  %v113 = vadd.f32 %v90, %v109
  %v114 = vadd.f32 %v91, %v109
  %v115 = vadd.f32 %v92, %v109
  %v116 = vadd.f32 %v93, %v109
  %v117 = vadd.f32 %v94, %v109
  %v118 = vadd.f32 %v95, %v109
  %v119 = vadd.f32 %v96, %v109
  %v120 = vadd.f32 %v97, %v109
  %v121 = vadd.f32 %v98, %v109
  %v122 = vadd.f32 %v99, %v109
  %v123 = vadd.f32 %v100, %v109
  %v124 = vadd.f32 %v101, %v109
  %v125 = vadd.f32 %v102, %v109
  %v126 = vadd.f32 %v103, %v109
  %v127 = vadd.f32 %v111, %v65
  %v128 = vadd.f32 %v112, %v66
  %v129 = vadd.f32 %v113, %v67
  %v130 = vadd.f32 %v114, %v68
  %v131 = vadd.f32 %v115, %v69
  %v132 = vadd.f32 %v116, %v70
  %v133 = vadd.f32 %v117, %v71
  %v134 = vadd.f32 %v118, %v72
  %v135 = vadd.f32 %v119, %v73
  %v136 = vadd.f32 %v120, %v74
  %v137 = vadd.f32 %v121, %v75
  %v138 = vadd.f32 %v122, %v76
  %v139 = vadd.f32 %v123, %v77
  %v140 = vadd.f32 %v124, %v78
  %v141 = vadd.f32 %v125, %v79
  %v142 = vadd.f32 %v126, %v80
  %v143 = vmax.f32 %v127, 0.0
  %v144 = vmax.f32 %v128, 0.0
  %v145 = vmax.f32 %v129, 0.0
  %v146 = vmax.f32 %v130, 0.0
  %v147 = vmax.f32 %v131, 0.0
  %v148 = vmax.f32 %v132, 0.0
  %v149 = vmax.f32 %v133, 0.0
  %v150 = vmax.f32 %v134, 0.0
  %v151 = vmax.f32 %v135, 0.0
  %v152 = vmax.f32 %v136, 0.0
  %v153 = vmax.f32 %v137, 0.0
  %v154 = vmax.f32 %v138, 0.0
  %v155 = vmax.f32 %v139, 0.0
  %v156 = vmax.f32 %v140, 0.0
  %v157 = vmax.f32 %v141, 0.0
  %v158 = vmax.f32 %v142, 0.0
  %v159 = vpack.c.bf16 %v144, %v143
  %v160 = vpack.c.bf16 %v146, %v145
  %v161 = vpack.c.bf16 %v148, %v147
  %v162 = vpack.c.bf16 %v150, %v149
  %v163 = vpack.c.bf16 %v152, %v151
  %v164 = vpack.c.bf16 %v154, %v153
  %v165 = vpack.c.bf16 %v156, %v155
  %v166 = vpack.c.bf16 %v158, %v157
  %v175 = vunpack.c.l.b16 %v159
  %v176 = vunpack.c.h.b16 %v159
  %v177 = vunpack.c.l.b16 %v160
  %v178 = vunpack.c.h.b16 %v160
  %v179 = vunpack.c.l.b16 %v161
  %v180 = vunpack.c.h.b16 %v161
  %v181 = vunpack.c.l.b16 %v162
  %v182 = vunpack.c.h.b16 %v162
  %v183 = vunpack.c.l.b16 %v163
  %v184 = vunpack.c.h.b16 %v163
  %v185 = vunpack.c.l.b16 %v164
  %v186 = vunpack.c.h.b16 %v164
  %v187 = vunpack.c.l.b16 %v165
  %v188 = vunpack.c.h.b16 %v165
  %v189 = vunpack.c.l.b16 %v166
  %v190 = vunpack.c.h.b16 %v166
  %v191 = vpack.c.b16 %v175, %v175
  %v192 = vpack.c.b16 %v176, %v176
  %v193 = vpack.c.b16 %v177, %v177
  %v194 = vpack.c.b16 %v178, %v178
  %v195 = vpack.c.b16 %v179, %v179
  %v196 = vpack.c.b16 %v180, %v180
  %v197 = vpack.c.b16 %v181, %v181
  %v198 = vpack.c.b16 %v182, %v182
  %v199 = vpack.c.b16 %v183, %v183
  %v200 = vpack.c.b16 %v184, %v184
  %v201 = vpack.c.b16 %v185, %v185
  %v202 = vpack.c.b16 %v186, %v186
  %v203 = vpack.c.b16 %v187, %v187
  %v204 = vpack.c.b16 %v188, %v188
  %v205 = vpack.c.b16 %v189, %v189
  %v206 = vpack.c.b16 %v190, %v190
  %223 = vst [vmem:[%s4] sm:$0xf] %v191
  %224 = vst [vmem:[%s4 + $0x4] sm:$0xf] %v192
  %225 = vst [vmem:[%s4 + $0x8] sm:$0xf] %v193
  %226 = vst [vmem:[%s4 + $0xc] sm:$0xf] %v194
  %227 = vst [vmem:[%s4 + $0x10] sm:$0xf] %v195
  %228 = vst [vmem:[%s4 + $0x14] sm:$0xf] %v196
  %229 = vst [vmem:[%s4 + $0x18] sm:$0xf] %v197
  %230 = vst [vmem:[%s4 + $0x1c] sm:$0xf] %v198
  %231 = vst [vmem:[%s4 + $0x20] sm:$0xf] %v199
  %232 = vst [vmem:[%s4 + $0x24] sm:$0xf] %v200
  %233 = vst [vmem:[%s4 + $0x28] sm:$0xf] %v201
  %234 = vst [vmem:[%s4 + $0x2c] sm:$0xf] %v202
  %235 = vst [vmem:[%s4 + $0x30] sm:$0xf] %v203
  %236 = vst [vmem:[%s4 + $0x34] sm:$0xf] %v204
  %237 = vst [vmem:[%s4 + $0x38] sm:$0xf] %v205
  %238 = vst [vmem:[%s4 + $0x3c] sm:$0xf] %v206
  // Predicated region
  $region18: #{residual_layer.5} parent=0 // pred_check
    _
  $region19: #{residual_layer.5} parent=0 // pred_check_branch
    %240 = sbr.rel (0) target = $region21
  $region20: #{residual_layer.5} parent=0 // pred_region
    _
  $region21: #{residual_layer.5} parent=0 // pred_fallthru
    _
  // Predicated region
  $region22: #{residual_layer.5} parent=0 // pred_check
    _
  $region23: #{residual_layer.5} parent=0 // pred_check_branch
    %242 = sbr.rel (0) target = $region25
  $region24: #{residual_layer.5} parent=0 // pred_region
    _
  $region25: #{residual_layer.5} parent=0 // pred_fallthru
    _

// kernel: residual_layer.3
$region0: #{residual_layer.3}
  #allocation0 [shape = 'u32[]', space=smem, size = 0x4, offset = 0x4, fixed_abs, tag = 'smem constant byte address 0x4 - core index']
  #allocation1 [shape = 'u32[144,128]{1,0:T(1,128)}', space=vmem, size = 0x12000, scoped, tag = 'internal scratch']
  #allocation2 [shape = 'bf16[2,10,10,128]{3,2,1,0:T(8,128)(2,1)}', space=vmem, size = 0x14000, scoped, tag = 'scratch operand']
  #allocation3 [shape = 'bf16[2,64,1152]{2,1,0:T(8,128)(2,1)}', space=vmem, size = 0x48000, scoped, tag = 'scratch operand']
  %s0 = inlined_call_operand.vmem [shape: bf16[2,8,8,128], index: 0, kind: input, shape index: {}]
  %s1 = inlined_call_operand.vmem [shape: bf16[1152,128], index: 1, kind: input, shape index: {}]
  %s2 = inlined_call_operand.vmem [shape: bf16[2,8,8,128], index: 2, kind: output, shape index: {0}]
  %s3 = inlined_call_operand.vmem [shape: f32[1,2,128], index: 3, kind: output, shape index: {1}]
  %4 = xla_tuple %s2, %s3
  %s5 = sld [smem:[#allocation0]]
  $region30: #{residual_layer.3} parent=0
    _
  %s7 = ssub.s32 1, %s5
  %s8 = scalar_select 0, %s7, %s5
  // Predicated region
  $region2: #{residual_layer.3} parent=0 // pred_check
    _
  $region3: #{residual_layer.3} parent=0 // pred_check_branch
    %10 = sbr.rel (0) target = $region5
  $region4: #{residual_layer.3} parent=0 // pred_region
    _
  $region5: #{residual_layer.3} parent=0 // pred_fallthru
    _
  // Predicated region
  $region6: #{residual_layer.3} parent=0 // pred_check
    _
  $region7: #{residual_layer.3} parent=0 // pred_check_branch
    %12 = sbr.rel (0) target = $region9
  $region8: #{residual_layer.3} parent=0 // pred_region
    _
  $region9: #{residual_layer.3} parent=0 // pred_fallthru
    _
  %p14 = scmp.eq.s32.totalorder 0, 0
  // Predicated region
  $region10: #{residual_layer.3} parent=0 // pred_check
    %p15 = pneg %p14
  $region11: #{residual_layer.3} parent=0 // pred_check_branch
    %17 = sbr.rel (%p15) target = $region13
  $region12: #{residual_layer.3} parent=0 // pred_region
    %18 = vst [vmem:[#allocation2] sm:$0xf] 0
    %19 = vst [vmem:[#allocation2 + $0x4] sm:$0x1] 0
    %s20 = scalar_lea.vmem [#allocation2], 72
    %21 = vst [vmem:[%s20] sm:$0xf] 0
    %22 = vst [vmem:[%s20 + $0x4] sm:$0x1] 0
    %s23 = scalar_lea.vmem [#allocation2], 8
    %vm24 = vcmask 1040384
    %vm25 = vsmask.f32 256
    %vm26 = vmand %vm24, %vm25
    %v27 = vld [vmem:[%s23] sm:$0x1]
    %v28 = vsel %vm26, 0, %v27
    %29 = vst [vmem:[%s23] sm:$0x1] %v28
    %v30 = vld [vmem:[%s23 + $0x8] sm:$0x1]
    %v31 = vsel %vm26, 0, %v30
    %32 = vst [vmem:[%s23 + $0x8] sm:$0x1] %v31
    %v33 = vld [vmem:[%s23 + $0x10] sm:$0x1]
    %v34 = vsel %vm26, 0, %v33
    %35 = vst [vmem:[%s23 + $0x10] sm:$0x1] %v34
    %v36 = vld [vmem:[%s23 + $0x18] sm:$0x1]
    %v37 = vsel %vm26, 0, %v36
    %38 = vst [vmem:[%s23 + $0x18] sm:$0x1] %v37
    %v39 = vld [vmem:[%s23 + $0x20] sm:$0x1]
    %v40 = vsel %vm26, 0, %v39
    %41 = vst [vmem:[%s23 + $0x20] sm:$0x1] %v40
    %v42 = vld [vmem:[%s23 + $0x28] sm:$0x1]
    %v43 = vsel %vm26, 0, %v42
    %44 = vst [vmem:[%s23 + $0x28] sm:$0x1] %v43
    %v45 = vld [vmem:[%s23 + $0x30] sm:$0x1]
    %v46 = vsel %vm26, 0, %v45
    %47 = vst [vmem:[%s23 + $0x30] sm:$0x1] %v46
    %v48 = vld [vmem:[%s23 + $0x38] sm:$0x1]
    %v49 = vsel %vm26, 0, %v48
    %50 = vst [vmem:[%s23 + $0x38] sm:$0x1] %v49
    %vm51 = vsmask.f32 7938
    %vm52 = vmand %vm24, %vm51
    %v53 = vld [vmem:[%s23 + $0x4] sm:$0x1]
    %v54 = vsel %vm52, 0, %v53
    %55 = vst [vmem:[%s23 + $0x4] sm:$0x1] %v54
    %v56 = vld [vmem:[%s23 + $0xc] sm:$0x1]
    %v57 = vsel %vm52, 0, %v56
    %58 = vst [vmem:[%s23 + $0xc] sm:$0x1] %v57
    %v59 = vld [vmem:[%s23 + $0x14] sm:$0x1]
    %v60 = vsel %vm52, 0, %v59
    %61 = vst [vmem:[%s23 + $0x14] sm:$0x1] %v60
    %v62 = vld [vmem:[%s23 + $0x1c] sm:$0x1]
    %v63 = vsel %vm52, 0, %v62
    %64 = vst [vmem:[%s23 + $0x1c] sm:$0x1] %v63
    %v65 = vld [vmem:[%s23 + $0x24] sm:$0x1]
    %v66 = vsel %vm52, 0, %v65
    %67 = vst [vmem:[%s23 + $0x24] sm:$0x1] %v66
    %v68 = vld [vmem:[%s23 + $0x2c] sm:$0x1]
    %v69 = vsel %vm52, 0, %v68
    %70 = vst [vmem:[%s23 + $0x2c] sm:$0x1] %v69
    %v71 = vld [vmem:[%s23 + $0x34] sm:$0x1]
    %v72 = vsel %vm52, 0, %v71
    %73 = vst [vmem:[%s23 + $0x34] sm:$0x1] %v72
    %v74 = vld [vmem:[%s23 + $0x3c] sm:$0x1]
    %v75 = vsel %vm52, 0, %v74
    %76 = vst [vmem:[%s23 + $0x3c] sm:$0x1] %v75
    %s77 = scalar_lea.vmem [#allocation2], 80
    %78 = vst [vmem:[%s77] sm:$0xf] 0
    %79 = vst [vmem:[%s77 + $0x4] sm:$0x1] 0
    %s80 = scalar_lea.vmem [#allocation2], 152
    %81 = vst [vmem:[%s80] sm:$0xf] 0
    %82 = vst [vmem:[%s80 + $0x4] sm:$0x1] 0
    %s83 = scalar_lea.vmem [#allocation2], 88
    %v84 = vld [vmem:[%s83] sm:$0x1]
    %v85 = vsel %vm26, 0, %v84
    %86 = vst [vmem:[%s83] sm:$0x1] %v85
    %v87 = vld [vmem:[%s83 + $0x8] sm:$0x1]
    %v88 = vsel %vm26, 0, %v87
    %89 = vst [vmem:[%s83 + $0x8] sm:$0x1] %v88
    %v90 = vld [vmem:[%s83 + $0x10] sm:$0x1]
    %v91 = vsel %vm26, 0, %v90
    %92 = vst [vmem:[%s83 + $0x10] sm:$0x1] %v91
    %v93 = vld [vmem:[%s83 + $0x18] sm:$0x1]
    %v94 = vsel %vm26, 0, %v93
    %95 = vst [vmem:[%s83 + $0x18] sm:$0x1] %v94
    %v96 = vld [vmem:[%s83 + $0x20] sm:$0x1]
    %v97 = vsel %vm26, 0, %v96
    %98 = vst [vmem:[%s83 + $0x20] sm:$0x1] %v97
    %v99 = vld [vmem:[%s83 + $0x28] sm:$0x1]
    %v100 = vsel %vm26, 0, %v99
    %101 = vst [vmem:[%s83 + $0x28] sm:$0x1] %v100
    %v102 = vld [vmem:[%s83 + $0x30] sm:$0x1]
    %v103 = vsel %vm26, 0, %v102
    %104 = vst [vmem:[%s83 + $0x30] sm:$0x1] %v103
    %v105 = vld [vmem:[%s83 + $0x38] sm:$0x1]
    %v106 = vsel %vm26, 0, %v105
    %107 = vst [vmem:[%s83 + $0x38] sm:$0x1] %v106
    %v108 = vld [vmem:[%s83 + $0x4] sm:$0x1]
    %v109 = vsel %vm52, 0, %v108
    %110 = vst [vmem:[%s83 + $0x4] sm:$0x1] %v109
    %v111 = vld [vmem:[%s83 + $0xc] sm:$0x1]
    %v112 = vsel %vm52, 0, %v111
    %113 = vst [vmem:[%s83 + $0xc] sm:$0x1] %v112
    %v114 = vld [vmem:[%s83 + $0x14] sm:$0x1]
    %v115 = vsel %vm52, 0, %v114
    %116 = vst [vmem:[%s83 + $0x14] sm:$0x1] %v115
    %v117 = vld [vmem:[%s83 + $0x1c] sm:$0x1]
    %v118 = vsel %vm52, 0, %v117
    %119 = vst [vmem:[%s83 + $0x1c] sm:$0x1] %v118
    %v120 = vld [vmem:[%s83 + $0x24] sm:$0x1]
    %v121 = vsel %vm52, 0, %v120
    %122 = vst [vmem:[%s83 + $0x24] sm:$0x1] %v121
    %v123 = vld [vmem:[%s83 + $0x2c] sm:$0x1]
    %v124 = vsel %vm52, 0, %v123
    %125 = vst [vmem:[%s83 + $0x2c] sm:$0x1] %v124
    %v126 = vld [vmem:[%s83 + $0x34] sm:$0x1]
    %v127 = vsel %vm52, 0, %v126
    %128 = vst [vmem:[%s83 + $0x34] sm:$0x1] %v127
    %v129 = vld [vmem:[%s83 + $0x3c] sm:$0x1]
    %v130 = vsel %vm52, 0, %v129
    %131 = vst [vmem:[%s83 + $0x3c] sm:$0x1] %v130
  $region13: #{residual_layer.3} parent=0 // pred_fallthru
    _
  %v132 = vld [vmem:[%s0] sm:$0xf]
  %v133 = vld [vmem:[%s0 + $0x4] sm:$0xf]
  %v134 = vld [vmem:[%s0 + $0x8] sm:$0xf]
  %v135 = vld [vmem:[%s0 + $0xc] sm:$0xf]
  %v136 = vld [vmem:[%s0 + $0x10] sm:$0xf]
  %v137 = vld [vmem:[%s0 + $0x14] sm:$0xf]
  %v138 = vld [vmem:[%s0 + $0x18] sm:$0xf]
  %v139 = vld [vmem:[%s0 + $0x1c] sm:$0xf]
  %v140 = vld [vmem:[%s0 + $0x20] sm:$0xf]
  %v141 = vld [vmem:[%s0 + $0x24] sm:$0xf]
  %v142 = vld [vmem:[%s0 + $0x28] sm:$0xf]
  %v143 = vld [vmem:[%s0 + $0x2c] sm:$0xf]
  %v144 = vld [vmem:[%s0 + $0x30] sm:$0xf]
  %v145 = vld [vmem:[%s0 + $0x34] sm:$0xf]
  %v146 = vld [vmem:[%s0 + $0x38] sm:$0xf]
  %v147 = vld [vmem:[%s0 + $0x3c] sm:$0xf]
  %v149 = vshrl.u32 %v132, 16
  %v151 = vrot.slane %v149, 7
  %v152 = vshll.u32 %v132, 16
  %v154 = vor.u32 %v151, %v152
  %v155 = vrot.slane %v151, 4
  %v157 = vshrl.u32 %v133, 16
  %v159 = vrot.slane %v157, 7
  %v160 = vshll.u32 %v133, 16
  %v162 = vor.u32 %v159, %v160
  %v163 = vrot.slane %v159, 4
  %v165 = vshrl.u32 %v134, 16
  %v167 = vrot.slane %v165, 7
  %v168 = vshll.u32 %v134, 16
  %v170 = vor.u32 %v167, %v168
  %v171 = vrot.slane %v167, 4
  %v173 = vshrl.u32 %v135, 16
  %v175 = vrot.slane %v173, 7
  %v176 = vshll.u32 %v135, 16
  %v178 = vor.u32 %v175, %v176
  %v179 = vrot.slane %v175, 4
  %v181 = vshrl.u32 %v136, 16
  %v183 = vrot.slane %v181, 7
  %v184 = vshll.u32 %v136, 16
  %v186 = vor.u32 %v183, %v184
  %v187 = vrot.slane %v183, 4
  %v189 = vshrl.u32 %v137, 16
  %v191 = vrot.slane %v189, 7
  %v192 = vshll.u32 %v137, 16
  %v194 = vor.u32 %v191, %v192
  %v195 = vrot.slane %v191, 4
  %v197 = vshrl.u32 %v138, 16
  %v199 = vrot.slane %v197, 7
  %v200 = vshll.u32 %v138, 16
  %v202 = vor.u32 %v199, %v200
  %v203 = vrot.slane %v199, 4
  %v205 = vshrl.u32 %v139, 16
  %v207 = vrot.slane %v205, 7
  %v208 = vshll.u32 %v139, 16
  %v210 = vor.u32 %v207, %v208
  %v211 = vrot.slane %v207, 4
  %s228 = scalar_lea.vmem [#allocation2], 8
  %vm229 = vcmask 1043456
  %vm230 = vsmask.f32 7938
  %vm231 = vmand %vm229, %vm230
  %v232 = vld [vmem:[%s228] sm:$0xf]
  %v233 = vsel %vm231, %v154, %v232
  %234 = vst [vmem:[%s228] sm:$0xf] %v233
  %vm235 = vcmask 1040384
  %vm236 = vsmask.f32 256
  %vm237 = vmand %vm235, %vm236
  %v238 = vld [vmem:[%s228 + $0x4] sm:$0x1]
  %v239 = vsel %vm237, %v155, %v238
  %240 = vst [vmem:[%s228 + $0x4] sm:$0x1] %v239
  %v241 = vld [vmem:[%s228 + $0x8] sm:$0xf]
  %v242 = vsel %vm231, %v162, %v241
  %243 = vst [vmem:[%s228 + $0x8] sm:$0xf] %v242
  %v244 = vld [vmem:[%s228 + $0xc] sm:$0x1]
  %v245 = vsel %vm237, %v163, %v244
  %246 = vst [vmem:[%s228 + $0xc] sm:$0x1] %v245
  %v247 = vld [vmem:[%s228 + $0x10] sm:$0xf]
  %v248 = vsel %vm231, %v170, %v247
  %249 = vst [vmem:[%s228 + $0x10] sm:$0xf] %v248
  %v250 = vld [vmem:[%s228 + $0x14] sm:$0x1]
  %v251 = vsel %vm237, %v171, %v250
  %252 = vst [vmem:[%s228 + $0x14] sm:$0x1] %v251
  %v253 = vld [vmem:[%s228 + $0x18] sm:$0xf]
  %v254 = vsel %vm231, %v178, %v253
  %255 = vst [vmem:[%s228 + $0x18] sm:$0xf] %v254
  %v256 = vld [vmem:[%s228 + $0x1c] sm:$0x1]
  %v257 = vsel %vm237, %v179, %v256
  %258 = vst [vmem:[%s228 + $0x1c] sm:$0x1] %v257
  %v259 = vld [vmem:[%s228 + $0x20] sm:$0xf]
  %v260 = vsel %vm231, %v186, %v259
  %261 = vst [vmem:[%s228 + $0x20] sm:$0xf] %v260
  %v262 = vld [vmem:[%s228 + $0x24] sm:$0x1]
  %v263 = vsel %vm237, %v187, %v262
  %264 = vst [vmem:[%s228 + $0x24] sm:$0x1] %v263
  %v265 = vld [vmem:[%s228 + $0x28] sm:$0xf]
  %v266 = vsel %vm231, %v194, %v265
  %267 = vst [vmem:[%s228 + $0x28] sm:$0xf] %v266
  %v268 = vld [vmem:[%s228 + $0x2c] sm:$0x1]
  %v269 = vsel %vm237, %v195, %v268
  %270 = vst [vmem:[%s228 + $0x2c] sm:$0x1] %v269
  %v271 = vld [vmem:[%s228 + $0x30] sm:$0xf]
  %v272 = vsel %vm231, %v202, %v271
  %273 = vst [vmem:[%s228 + $0x30] sm:$0xf] %v272
  %v274 = vld [vmem:[%s228 + $0x34] sm:$0x1]
  %v275 = vsel %vm237, %v203, %v274
  %276 = vst [vmem:[%s228 + $0x34] sm:$0x1] %v275
  %v277 = vld [vmem:[%s228 + $0x38] sm:$0xf]
  %v278 = vsel %vm231, %v210, %v277
  %279 = vst [vmem:[%s228 + $0x38] sm:$0xf] %v278
  %v280 = vld [vmem:[%s228 + $0x3c] sm:$0x1]
  %v281 = vsel %vm237, %v211, %v280
  %282 = vst [vmem:[%s228 + $0x3c] sm:$0x1] %v281
  %v283 = vld [vmem:[#allocation2] sm:$0xf]
  %v284 = vld [vmem:[#allocation2 + $0x8] sm:$0xf]
  %v285 = vld [vmem:[#allocation2 + $0x10] sm:$0xf]
  %v286 = vld [vmem:[#allocation2 + $0x18] sm:$0xf]
  %v287 = vld [vmem:[#allocation2 + $0x20] sm:$0xf]
  %v288 = vld [vmem:[#allocation2 + $0x28] sm:$0xf]
  %v289 = vld [vmem:[#allocation2 + $0x30] sm:$0xf]
  %v290 = vld [vmem:[#allocation2 + $0x38] sm:$0xf]
  %291 = vst [vmem:[#allocation3] sm:$0xf] %v283
  %292 = vst [vmem:[#allocation3 + $0x24] sm:$0xf] %v284
  %293 = vst [vmem:[#allocation3 + $0x48] sm:$0xf] %v285
  %294 = vst [vmem:[#allocation3 + $0x6c] sm:$0xf] %v286
  %295 = vst [vmem:[#allocation3 + $0x90] sm:$0xf] %v287
  %296 = vst [vmem:[#allocation3 + $0xb4] sm:$0xf] %v288
  %297 = vst [vmem:[#allocation3 + $0xd8] sm:$0xf] %v289
  %298 = vst [vmem:[#allocation3 + $0xfc] sm:$0xf] %v290
  %v299 = vld [vmem:[#allocation2] sm:$0xf]
  %v300 = vld [vmem:[#allocation2 + $0x4] sm:$0x1]
  %v301 = vld [vmem:[#allocation2 + $0x8] sm:$0xf]
  %v302 = vld [vmem:[#allocation2 + $0xc] sm:$0x1]
  %v303 = vld [vmem:[#allocation2 + $0x10] sm:$0xf]
  %v304 = vld [vmem:[#allocation2 + $0x14] sm:$0x1]
  %v305 = vld [vmem:[#allocation2 + $0x18] sm:$0xf]
  %v306 = vld [vmem:[#allocation2 + $0x1c] sm:$0x1]
  %v307 = vld [vmem:[#allocation2 + $0x20] sm:$0xf]
  %v308 = vld [vmem:[#allocation2 + $0x24] sm:$0x1]
  %v309 = vld [vmem:[#allocation2 + $0x28] sm:$0xf]
  %v310 = vld [vmem:[#allocation2 + $0x2c] sm:$0x1]
  %v311 = vld [vmem:[#allocation2 + $0x30] sm:$0xf]
  %v312 = vld [vmem:[#allocation2 + $0x34] sm:$0x1]
  %v313 = vld [vmem:[#allocation2 + $0x38] sm:$0xf]
  %v314 = vld [vmem:[#allocation2 + $0x3c] sm:$0x1]
  %vm315 = vsmask.f32 3328
  %vm316 = vsmask.f32 7440
  %vm317 = vmor %vm315, %vm316
  %v319 = vshrl.u32 %v299, 16
  %v321 = vrot.slane %v319, 4
  %v322 = vshll.u32 %v299, 16
  %v324 = vrot.slane %v322, 5
  %v325 = vor.u32 %v321, %v324
  %v326 = vrot.slane %v325, 4
  %v328 = vshll.u32 %v300, 16
  %v330 = vrot.slane %v328, 5
  %v331 = vsel %vm317, %v326, %v330
  %v333 = vshrl.u32 %v301, 16
  %v335 = vrot.slane %v333, 4
  %v336 = vshll.u32 %v301, 16
  %v338 = vrot.slane %v336, 5
  %v339 = vor.u32 %v335, %v338
  %v340 = vrot.slane %v339, 4
  %v342 = vshll.u32 %v302, 16
  %v344 = vrot.slane %v342, 5
  %v345 = vsel %vm317, %v340, %v344
  %v347 = vshrl.u32 %v303, 16
  %v349 = vrot.slane %v347, 4
  %v350 = vshll.u32 %v303, 16
  %v352 = vrot.slane %v350, 5
  %v353 = vor.u32 %v349, %v352
  %v354 = vrot.slane %v353, 4
  %v356 = vshll.u32 %v304, 16
  %v358 = vrot.slane %v356, 5
  %v359 = vsel %vm317, %v354, %v358
  %v361 = vshrl.u32 %v305, 16
  %v363 = vrot.slane %v361, 4
  %v364 = vshll.u32 %v305, 16
  %v366 = vrot.slane %v364, 5
  %v367 = vor.u32 %v363, %v366
  %v368 = vrot.slane %v367, 4
  %v370 = vshll.u32 %v306, 16
  %v372 = vrot.slane %v370, 5
  %v373 = vsel %vm317, %v368, %v372
  %v375 = vshrl.u32 %v307, 16
  %v377 = vrot.slane %v375, 4
  %v378 = vshll.u32 %v307, 16
  %v380 = vrot.slane %v378, 5
  %v381 = vor.u32 %v377, %v380
  %v382 = vrot.slane %v381, 4
  %v384 = vshll.u32 %v308, 16
  %v386 = vrot.slane %v384, 5
  %v387 = vsel %vm317, %v382, %v386
  %v389 = vshrl.u32 %v309, 16
  %v391 = vrot.slane %v389, 4
  %v392 = vshll.u32 %v309, 16
  %v394 = vrot.slane %v392, 5
  %v395 = vor.u32 %v391, %v394
  %v396 = vrot.slane %v395, 4
  %v398 = vshll.u32 %v310, 16
  %v400 = vrot.slane %v398, 5
  %v401 = vsel %vm317, %v396, %v400
  %v403 = vshrl.u32 %v311, 16
  %v405 = vrot.slane %v403, 4
  %v406 = vshll.u32 %v311, 16
  %v408 = vrot.slane %v406, 5
  %v409 = vor.u32 %v405, %v408
  %v410 = vrot.slane %v409, 4
  %v412 = vshll.u32 %v312, 16
  %v414 = vrot.slane %v412, 5
  %v415 = vsel %vm317, %v410, %v414
  %v417 = vshrl.u32 %v313, 16
  %v419 = vrot.slane %v417, 4
  %v420 = vshll.u32 %v313, 16
  %v422 = vrot.slane %v420, 5
  %v423 = vor.u32 %v419, %v422
  %v424 = vrot.slane %v423, 4
  %v426 = vshll.u32 %v314, 16
  %v428 = vrot.slane %v426, 5
  %v429 = vsel %vm317, %v424, %v428
  %438 = vst [vmem:[#allocation3 + $0x4] sm:$0xf] %v331
  %439 = vst [vmem:[#allocation3 + $0x28] sm:$0xf] %v345
  %440 = vst [vmem:[#allocation3 + $0x4c] sm:$0xf] %v359
  %441 = vst [vmem:[#allocation3 + $0x70] sm:$0xf] %v373
  %442 = vst [vmem:[#allocation3 + $0x94] sm:$0xf] %v387
  %443 = vst [vmem:[#allocation3 + $0xb8] sm:$0xf] %v401
  %444 = vst [vmem:[#allocation3 + $0xdc] sm:$0xf] %v415
  %445 = vst [vmem:[#allocation3 + $0x100] sm:$0xf] %v429
  %v446 = vld [vmem:[#allocation2] sm:$0xe]
  %v447 = vld [vmem:[#allocation2 + $0x4] sm:$0x1]
  %v448 = vld [vmem:[#allocation2 + $0x8] sm:$0xe]
  %v449 = vld [vmem:[#allocation2 + $0xc] sm:$0x1]
  %v450 = vld [vmem:[#allocation2 + $0x10] sm:$0xe]
  %v451 = vld [vmem:[#allocation2 + $0x14] sm:$0x1]
  %v452 = vld [vmem:[#allocation2 + $0x18] sm:$0xe]
  %v453 = vld [vmem:[#allocation2 + $0x1c] sm:$0x1]
  %v454 = vld [vmem:[#allocation2 + $0x20] sm:$0xe]
  %v455 = vld [vmem:[#allocation2 + $0x24] sm:$0x1]
  %v456 = vld [vmem:[#allocation2 + $0x28] sm:$0xe]
  %v457 = vld [vmem:[#allocation2 + $0x2c] sm:$0x1]
  %v458 = vld [vmem:[#allocation2 + $0x30] sm:$0xe]
  %v459 = vld [vmem:[#allocation2 + $0x34] sm:$0x1]
  %v460 = vld [vmem:[#allocation2 + $0x38] sm:$0xe]
  %v461 = vld [vmem:[#allocation2 + $0x3c] sm:$0x1]
  %vm478 = vcmask 1042432
  %vm479 = vcmask 1046532
  %vm480 = vmor %vm478, %vm479
  %v481 = vrot.slane %v446, 5
  %v482 = vrot.slane %v481, 4
  %v483 = vrot.slane %v447, 5
  %v484 = vsel %vm480, %v482, %v483
  %v485 = vrot.slane %v448, 5
  %v486 = vrot.slane %v485, 4
  %v487 = vrot.slane %v449, 5
  %v488 = vsel %vm480, %v486, %v487
  %v489 = vrot.slane %v450, 5
  %v490 = vrot.slane %v489, 4
  %v491 = vrot.slane %v451, 5
  %v492 = vsel %vm480, %v490, %v491
  %v493 = vrot.slane %v452, 5
  %v494 = vrot.slane %v493, 4
  %v495 = vrot.slane %v453, 5
  %v496 = vsel %vm480, %v494, %v495
  %v497 = vrot.slane %v454, 5
  %v498 = vrot.slane %v497, 4
  %v499 = vrot.slane %v455, 5
  %v500 = vsel %vm480, %v498, %v499
  %v501 = vrot.slane %v456, 5
  %v502 = vrot.slane %v501, 4
  %v503 = vrot.slane %v457, 5
  %v504 = vsel %vm480, %v502, %v503
  %v505 = vrot.slane %v458, 5
  %v506 = vrot.slane %v505, 4
  %v507 = vrot.slane %v459, 5
  %v508 = vsel %vm480, %v506, %v507
  %v509 = vrot.slane %v460, 5
  %v510 = vrot.slane %v509, 4
  %v511 = vrot.slane %v461, 5
  %v512 = vsel %vm480, %v510, %v511
  %521 = vst [vmem:[#allocation3 + $0x8] sm:$0xf] %v484
  %522 = vst [vmem:[#allocation3 + $0x2c] sm:$0xf] %v488
  %523 = vst [vmem:[#allocation3 + $0x50] sm:$0xf] %v492
  %524 = vst [vmem:[#allocation3 + $0x74] sm:$0xf] %v496
  %525 = vst [vmem:[#allocation3 + $0x98] sm:$0xf] %v500
  %526 = vst [vmem:[#allocation3 + $0xbc] sm:$0xf] %v504
  %527 = vst [vmem:[#allocation3 + $0xe0] sm:$0xf] %v508
  %528 = vst [vmem:[#allocation3 + $0x104] sm:$0xf] %v512
  %v529 = vld [vmem:[%s228] sm:$0xf]
  %v530 = vld [vmem:[%s228 + $0x8] sm:$0xf]
  %v531 = vld [vmem:[%s228 + $0x10] sm:$0xf]
  %v532 = vld [vmem:[%s228 + $0x18] sm:$0xf]
  %v533 = vld [vmem:[%s228 + $0x20] sm:$0xf]
  %v534 = vld [vmem:[%s228 + $0x28] sm:$0xf]
  %v535 = vld [vmem:[%s228 + $0x30] sm:$0xf]
  %v536 = vld [vmem:[%s228 + $0x38] sm:$0xf]
  %537 = vst [vmem:[#allocation3 + $0xc] sm:$0xf] %v529
  %538 = vst [vmem:[#allocation3 + $0x30] sm:$0xf] %v530
  %539 = vst [vmem:[#allocation3 + $0x54] sm:$0xf] %v531
  %540 = vst [vmem:[#allocation3 + $0x78] sm:$0xf] %v532
  %541 = vst [vmem:[#allocation3 + $0x9c] sm:$0xf] %v533
  %542 = vst [vmem:[#allocation3 + $0xc0] sm:$0xf] %v534
  %543 = vst [vmem:[#allocation3 + $0xe4] sm:$0xf] %v535
  %544 = vst [vmem:[#allocation3 + $0x108] sm:$0xf] %v536
  %v545 = vld [vmem:[%s228] sm:$0xf]
  %v546 = vld [vmem:[%s228 + $0x4] sm:$0x1]
  %v547 = vld [vmem:[%s228 + $0x8] sm:$0xf]
  %v548 = vld [vmem:[%s228 + $0xc] sm:$0x1]
  %v549 = vld [vmem:[%s228 + $0x10] sm:$0xf]
  %v550 = vld [vmem:[%s228 + $0x14] sm:$0x1]
  %v551 = vld [vmem:[%s228 + $0x18] sm:$0xf]
  %v552 = vld [vmem:[%s228 + $0x1c] sm:$0x1]
  %v553 = vld [vmem:[%s228 + $0x20] sm:$0xf]
  %v554 = vld [vmem:[%s228 + $0x24] sm:$0x1]
  %v555 = vld [vmem:[%s228 + $0x28] sm:$0xf]
  %v556 = vld [vmem:[%s228 + $0x2c] sm:$0x1]
  %v557 = vld [vmem:[%s228 + $0x30] sm:$0xf]
  %v558 = vld [vmem:[%s228 + $0x34] sm:$0x1]
  %v559 = vld [vmem:[%s228 + $0x38] sm:$0xf]
  %v560 = vld [vmem:[%s228 + $0x3c] sm:$0x1]
  %v562 = vshrl.u32 %v545, 16
  %v564 = vrot.slane %v562, 4
  %v565 = vshll.u32 %v545, 16
  %v567 = vrot.slane %v565, 5
  %v568 = vor.u32 %v564, %v567
  %v569 = vrot.slane %v568, 4
  %v571 = vshll.u32 %v546, 16
  %v573 = vrot.slane %v571, 5
  %v574 = vsel %vm317, %v569, %v573
  %v576 = vshrl.u32 %v547, 16
  %v578 = vrot.slane %v576, 4
  %v579 = vshll.u32 %v547, 16
  %v581 = vrot.slane %v579, 5
  %v582 = vor.u32 %v578, %v581
  %v583 = vrot.slane %v582, 4
  %v585 = vshll.u32 %v548, 16
  %v587 = vrot.slane %v585, 5
  %v588 = vsel %vm317, %v583, %v587
  %v590 = vshrl.u32 %v549, 16
  %v592 = vrot.slane %v590, 4
  %v593 = vshll.u32 %v549, 16
  %v595 = vrot.slane %v593, 5
  %v596 = vor.u32 %v592, %v595
  %v597 = vrot.slane %v596, 4
  %v599 = vshll.u32 %v550, 16
  %v601 = vrot.slane %v599, 5
  %v602 = vsel %vm317, %v597, %v601
  %v604 = vshrl.u32 %v551, 16
  %v606 = vrot.slane %v604, 4
  %v607 = vshll.u32 %v551, 16
  %v609 = vrot.slane %v607, 5
  %v610 = vor.u32 %v606, %v609
  %v611 = vrot.slane %v610, 4
  %v613 = vshll.u32 %v552, 16
  %v615 = vrot.slane %v613, 5
  %v616 = vsel %vm317, %v611, %v615
  %v618 = vshrl.u32 %v553, 16
  %v620 = vrot.slane %v618, 4
  %v621 = vshll.u32 %v553, 16
  %v623 = vrot.slane %v621, 5
  %v624 = vor.u32 %v620, %v623
  %v625 = vrot.slane %v624, 4
  %v627 = vshll.u32 %v554, 16
  %v629 = vrot.slane %v627, 5
  %v630 = vsel %vm317, %v625, %v629
  %v632 = vshrl.u32 %v555, 16
  %v634 = vrot.slane %v632, 4
  %v635 = vshll.u32 %v555, 16
  %v637 = vrot.slane %v635, 5
  %v638 = vor.u32 %v634, %v637
  %v639 = vrot.slane %v638, 4
  %v641 = vshll.u32 %v556, 16
  %v643 = vrot.slane %v641, 5
  %v644 = vsel %vm317, %v639, %v643
  %v646 = vshrl.u32 %v557, 16
  %v648 = vrot.slane %v646, 4
  %v649 = vshll.u32 %v557, 16
  %v651 = vrot.slane %v649, 5
  %v652 = vor.u32 %v648, %v651
  %v653 = vrot.slane %v652, 4
  %v655 = vshll.u32 %v558, 16
  %v657 = vrot.slane %v655, 5
  %v658 = vsel %vm317, %v653, %v657
  %v660 = vshrl.u32 %v559, 16
  %v662 = vrot.slane %v660, 4
  %v663 = vshll.u32 %v559, 16
  %v665 = vrot.slane %v663, 5
  %v666 = vor.u32 %v662, %v665
  %v667 = vrot.slane %v666, 4
  %v669 = vshll.u32 %v560, 16
  %v671 = vrot.slane %v669, 5
  %v672 = vsel %vm317, %v667, %v671
  %681 = vst [vmem:[#allocation3 + $0x10] sm:$0xf] %v574
  %682 = vst [vmem:[#allocation3 + $0x34] sm:$0xf] %v588
  %683 = vst [vmem:[#allocation3 + $0x58] sm:$0xf] %v602
  %684 = vst [vmem:[#allocation3 + $0x7c] sm:$0xf] %v616
  %685 = vst [vmem:[#allocation3 + $0xa0] sm:$0xf] %v630
  %686 = vst [vmem:[#allocation3 + $0xc4] sm:$0xf] %v644
  %687 = vst [vmem:[#allocation3 + $0xe8] sm:$0xf] %v658
  %688 = vst [vmem:[#allocation3 + $0x10c] sm:$0xf] %v672
  %v689 = vld [vmem:[%s228] sm:$0xe]
  %v690 = vld [vmem:[%s228 + $0x4] sm:$0x1]
  %v691 = vld [vmem:[%s228 + $0x8] sm:$0xe]
  %v692 = vld [vmem:[%s228 + $0xc] sm:$0x1]
  %v693 = vld [vmem:[%s228 + $0x10] sm:$0xe]
  %v694 = vld [vmem:[%s228 + $0x14] sm:$0x1]
  %v695 = vld [vmem:[%s228 + $0x18] sm:$0xe]
  %v696 = vld [vmem:[%s228 + $0x1c] sm:$0x1]
  %v697 = vld [vmem:[%s228 + $0x20] sm:$0xe]
  %v698 = vld [vmem:[%s228 + $0x24] sm:$0x1]
  %v699 = vld [vmem:[%s228 + $0x28] sm:$0xe]
  %v700 = vld [vmem:[%s228 + $0x2c] sm:$0x1]
  %v701 = vld [vmem:[%s228 + $0x30] sm:$0xe]
  %v702 = vld [vmem:[%s228 + $0x34] sm:$0x1]
  %v703 = vld [vmem:[%s228 + $0x38] sm:$0xe]
  %v704 = vld [vmem:[%s228 + $0x3c] sm:$0x1]
  %v721 = vrot.slane %v689, 5
  %v722 = vrot.slane %v721, 4
  %v723 = vrot.slane %v690, 5
  %v724 = vsel %vm480, %v722, %v723
  %v725 = vrot.slane %v691, 5
  %v726 = vrot.slane %v725, 4
  %v727 = vrot.slane %v692, 5
  %v728 = vsel %vm480, %v726, %v727
  %v729 = vrot.slane %v693, 5
  %v730 = vrot.slane %v729, 4
  %v731 = vrot.slane %v694, 5
  %v732 = vsel %vm480, %v730, %v731
  %v733 = vrot.slane %v695, 5
  %v734 = vrot.slane %v733, 4
  %v735 = vrot.slane %v696, 5
  %v736 = vsel %vm480, %v734, %v735
  %v737 = vrot.slane %v697, 5
  %v738 = vrot.slane %v737, 4
  %v739 = vrot.slane %v698, 5
  %v740 = vsel %vm480, %v738, %v739
  %v741 = vrot.slane %v699, 5
  %v742 = vrot.slane %v741, 4
  %v743 = vrot.slane %v700, 5
  %v744 = vsel %vm480, %v742, %v743
  %v745 = vrot.slane %v701, 5
  %v746 = vrot.slane %v745, 4
  %v747 = vrot.slane %v702, 5
  %v748 = vsel %vm480, %v746, %v747
  %v749 = vrot.slane %v703, 5
  %v750 = vrot.slane %v749, 4
  %v751 = vrot.slane %v704, 5
  %v752 = vsel %vm480, %v750, %v751
  %761 = vst [vmem:[#allocation3 + $0x14] sm:$0xf] %v724
  %762 = vst [vmem:[#allocation3 + $0x38] sm:$0xf] %v728
  %763 = vst [vmem:[#allocation3 + $0x5c] sm:$0xf] %v732
  %764 = vst [vmem:[#allocation3 + $0x80] sm:$0xf] %v736
  %765 = vst [vmem:[#allocation3 + $0xa4] sm:$0xf] %v740
  %766 = vst [vmem:[#allocation3 + $0xc8] sm:$0xf] %v744
  %767 = vst [vmem:[#allocation3 + $0xec] sm:$0xf] %v748
  %768 = vst [vmem:[#allocation3 + $0x110] sm:$0xf] %v752
  %s769 = scalar_lea.vmem [#allocation2], 16
  %v770 = vld [vmem:[%s769] sm:$0xf]
  %v771 = vld [vmem:[%s769 + $0x8] sm:$0xf]
  %v772 = vld [vmem:[%s769 + $0x10] sm:$0xf]
  %v773 = vld [vmem:[%s769 + $0x18] sm:$0xf]
  %v774 = vld [vmem:[%s769 + $0x20] sm:$0xf]
  %v775 = vld [vmem:[%s769 + $0x28] sm:$0xf]
  %v776 = vld [vmem:[%s769 + $0x30] sm:$0xf]
  %v777 = vld [vmem:[%s769 + $0x38] sm:$0xf]
  %778 = vst [vmem:[#allocation3 + $0x18] sm:$0xf] %v770
  %779 = vst [vmem:[#allocation3 + $0x3c] sm:$0xf] %v771
  %780 = vst [vmem:[#allocation3 + $0x60] sm:$0xf] %v772
  %781 = vst [vmem:[#allocation3 + $0x84] sm:$0xf] %v773
  %782 = vst [vmem:[#allocation3 + $0xa8] sm:$0xf] %v774
  %783 = vst [vmem:[#allocation3 + $0xcc] sm:$0xf] %v775
  %784 = vst [vmem:[#allocation3 + $0xf0] sm:$0xf] %v776
  %785 = vst [vmem:[#allocation3 + $0x114] sm:$0xf] %v777
  %v786 = vld [vmem:[%s769] sm:$0xf]
  %v787 = vld [vmem:[%s769 + $0x4] sm:$0x1]
  %v788 = vld [vmem:[%s769 + $0x8] sm:$0xf]
  %v789 = vld [vmem:[%s769 + $0xc] sm:$0x1]
  %v790 = vld [vmem:[%s769 + $0x10] sm:$0xf]
  %v791 = vld [vmem:[%s769 + $0x14] sm:$0x1]
  %v792 = vld [vmem:[%s769 + $0x18] sm:$0xf]
  %v793 = vld [vmem:[%s769 + $0x1c] sm:$0x1]
  %v794 = vld [vmem:[%s769 + $0x20] sm:$0xf]
  %v795 = vld [vmem:[%s769 + $0x24] sm:$0x1]
  %v796 = vld [vmem:[%s769 + $0x28] sm:$0xf]
  %v797 = vld [vmem:[%s769 + $0x2c] sm:$0x1]
  %v798 = vld [vmem:[%s769 + $0x30] sm:$0xf]
  %v799 = vld [vmem:[%s769 + $0x34] sm:$0x1]
  %v800 = vld [vmem:[%s769 + $0x38] sm:$0xf]
  %v801 = vld [vmem:[%s769 + $0x3c] sm:$0x1]
  %v803 = vshrl.u32 %v786, 16
  %v805 = vrot.slane %v803, 4
  %v806 = vshll.u32 %v786, 16
  %v808 = vrot.slane %v806, 5
  %v809 = vor.u32 %v805, %v808
  %v810 = vrot.slane %v809, 4
  %v812 = vshll.u32 %v787, 16
  %v814 = vrot.slane %v812, 5
  %v815 = vsel %vm317, %v810, %v814
  %v817 = vshrl.u32 %v788, 16
  %v819 = vrot.slane %v817, 4
  %v820 = vshll.u32 %v788, 16
  %v822 = vrot.slane %v820, 5
  %v823 = vor.u32 %v819, %v822
  %v824 = vrot.slane %v823, 4
  %v826 = vshll.u32 %v789, 16
  %v828 = vrot.slane %v826, 5
  %v829 = vsel %vm317, %v824, %v828
  %v831 = vshrl.u32 %v790, 16
  %v833 = vrot.slane %v831, 4
  %v834 = vshll.u32 %v790, 16
  %v836 = vrot.slane %v834, 5
  %v837 = vor.u32 %v833, %v836
  %v838 = vrot.slane %v837, 4
  %v840 = vshll.u32 %v791, 16
  %v842 = vrot.slane %v840, 5
  %v843 = vsel %vm317, %v838, %v842
  %v845 = vshrl.u32 %v792, 16
  %v847 = vrot.slane %v845, 4
  %v848 = vshll.u32 %v792, 16
  %v850 = vrot.slane %v848, 5
  %v851 = vor.u32 %v847, %v850
  %v852 = vrot.slane %v851, 4
  %v854 = vshll.u32 %v793, 16
  %v856 = vrot.slane %v854, 5
  %v857 = vsel %vm317, %v852, %v856
  %v859 = vshrl.u32 %v794, 16
  %v861 = vrot.slane %v859, 4
  %v862 = vshll.u32 %v794, 16
  %v864 = vrot.slane %v862, 5
  %v865 = vor.u32 %v861, %v864
  %v866 = vrot.slane %v865, 4
  %v868 = vshll.u32 %v795, 16
  %v870 = vrot.slane %v868, 5
  %v871 = vsel %vm317, %v866, %v870
  %v873 = vshrl.u32 %v796, 16
  %v875 = vrot.slane %v873, 4
  %v876 = vshll.u32 %v796, 16
  %v878 = vrot.slane %v876, 5
  %v879 = vor.u32 %v875, %v878
  %v880 = vrot.slane %v879, 4
  %v882 = vshll.u32 %v797, 16
  %v884 = vrot.slane %v882, 5
  %v885 = vsel %vm317, %v880, %v884
  %v887 = vshrl.u32 %v798, 16
  %v889 = vrot.slane %v887, 4
  %v890 = vshll.u32 %v798, 16
  %v892 = vrot.slane %v890, 5
  %v893 = vor.u32 %v889, %v892
  %v894 = vrot.slane %v893, 4
  %v896 = vshll.u32 %v799, 16
  %v898 = vrot.slane %v896, 5
  %v899 = vsel %vm317, %v894, %v898
  %v901 = vshrl.u32 %v800, 16
  %v903 = vrot.slane %v901, 4
  %v904 = vshll.u32 %v800, 16
  %v906 = vrot.slane %v904, 5
  %v907 = vor.u32 %v903, %v906
  %v908 = vrot.slane %v907, 4
  %v910 = vshll.u32 %v801, 16
  %v912 = vrot.slane %v910, 5
  %v913 = vsel %vm317, %v908, %v912
  %922 = vst [vmem:[#allocation3 + $0x1c] sm:$0xf] %v815
  %923 = vst [vmem:[#allocation3 + $0x40] sm:$0xf] %v829
  %924 = vst [vmem:[#allocation3 + $0x64] sm:$0xf] %v843
  %925 = vst [vmem:[#allocation3 + $0x88] sm:$0xf] %v857
  %926 = vst [vmem:[#allocation3 + $0xac] sm:$0xf] %v871
  %927 = vst [vmem:[#allocation3 + $0xd0] sm:$0xf] %v885
  %928 = vst [vmem:[#allocation3 + $0xf4] sm:$0xf] %v899
  %929 = vst [vmem:[#allocation3 + $0x118] sm:$0xf] %v913
  %v930 = vld [vmem:[%s769] sm:$0xe]
  %v931 = vld [vmem:[%s769 + $0x4] sm:$0x1]
  %v932 = vld [vmem:[%s769 + $0x8] sm:$0xe]
  %v933 = vld [vmem:[%s769 + $0xc] sm:$0x1]
  %v934 = vld [vmem:[%s769 + $0x10] sm:$0xe]
  %v935 = vld [vmem:[%s769 + $0x14] sm:$0x1]
  %v936 = vld [vmem:[%s769 + $0x18] sm:$0xe]
  %v937 = vld [vmem:[%s769 + $0x1c] sm:$0x1]
  %v938 = vld [vmem:[%s769 + $0x20] sm:$0xe]
  %v939 = vld [vmem:[%s769 + $0x24] sm:$0x1]
  %v940 = vld [vmem:[%s769 + $0x28] sm:$0xe]
  %v941 = vld [vmem:[%s769 + $0x2c] sm:$0x1]
  %v942 = vld [vmem:[%s769 + $0x30] sm:$0xe]
  %v943 = vld [vmem:[%s769 + $0x34] sm:$0x1]
  %v944 = vld [vmem:[%s769 + $0x38] sm:$0xe]
  %v945 = vld [vmem:[%s769 + $0x3c] sm:$0x1]
  %v962 = vrot.slane %v930, 5
  %v963 = vrot.slane %v962, 4
  %v964 = vrot.slane %v931, 5
  %v965 = vsel %vm480, %v963, %v964
  %v966 = vrot.slane %v932, 5
  %v967 = vrot.slane %v966, 4
  %v968 = vrot.slane %v933, 5
  %v969 = vsel %vm480, %v967, %v968
  %v970 = vrot.slane %v934, 5
  %v971 = vrot.slane %v970, 4
  %v972 = vrot.slane %v935, 5
  %v973 = vsel %vm480, %v971, %v972
  %v974 = vrot.slane %v936, 5
  %v975 = vrot.slane %v974, 4
  %v976 = vrot.slane %v937, 5
  %v977 = vsel %vm480, %v975, %v976
  %v978 = vrot.slane %v938, 5
  %v979 = vrot.slane %v978, 4
  %v980 = vrot.slane %v939, 5
  %v981 = vsel %vm480, %v979, %v980
  %v982 = vrot.slane %v940, 5
  %v983 = vrot.slane %v982, 4
  %v984 = vrot.slane %v941, 5
  %v985 = vsel %vm480, %v983, %v984
  %v986 = vrot.slane %v942, 5
  %v987 = vrot.slane %v986, 4
  %v988 = vrot.slane %v943, 5
  %v989 = vsel %vm480, %v987, %v988
  %v990 = vrot.slane %v944, 5
  %v991 = vrot.slane %v990, 4
  %v992 = vrot.slane %v945, 5
  %v993 = vsel %vm480, %v991, %v992
  %1002 = vst [vmem:[#allocation3 + $0x20] sm:$0xf] %v965
  %1003 = vst [vmem:[#allocation3 + $0x44] sm:$0xf] %v969
  %1004 = vst [vmem:[#allocation3 + $0x68] sm:$0xf] %v973
  %1005 = vst [vmem:[#allocation3 + $0x8c] sm:$0xf] %v977
  %1006 = vst [vmem:[#allocation3 + $0xb0] sm:$0xf] %v981
  %1007 = vst [vmem:[#allocation3 + $0xd4] sm:$0xf] %v985
  %1008 = vst [vmem:[#allocation3 + $0xf8] sm:$0xf] %v989
  %1009 = vst [vmem:[#allocation3 + $0x11c] sm:$0xf] %v993
  %v1011 = vshrl.u32 %v140, 16
  %v1013 = vrot.slane %v1011, 7
  %v1014 = vshll.u32 %v140, 16
  %v1016 = vor.u32 %v1013, %v1014
  %v1017 = vrot.slane %v1013, 4
  %v1019 = vshrl.u32 %v141, 16
  %v1021 = vrot.slane %v1019, 7
  %v1022 = vshll.u32 %v141, 16
  %v1024 = vor.u32 %v1021, %v1022
  %v1025 = vrot.slane %v1021, 4
  %v1027 = vshrl.u32 %v142, 16
  %v1029 = vrot.slane %v1027, 7
  %v1030 = vshll.u32 %v142, 16
  %v1032 = vor.u32 %v1029, %v1030
  %v1033 = vrot.slane %v1029, 4
  %v1035 = vshrl.u32 %v143, 16
  %v1037 = vrot.slane %v1035, 7
  %v1038 = vshll.u32 %v143, 16
  %v1040 = vor.u32 %v1037, %v1038
  %v1041 = vrot.slane %v1037, 4
  %v1043 = vshrl.u32 %v144, 16
  %v1045 = vrot.slane %v1043, 7
  %v1046 = vshll.u32 %v144, 16
  %v1048 = vor.u32 %v1045, %v1046
  %v1049 = vrot.slane %v1045, 4
  %v1051 = vshrl.u32 %v145, 16
  %v1053 = vrot.slane %v1051, 7
  %v1054 = vshll.u32 %v145, 16
  %v1056 = vor.u32 %v1053, %v1054
  %v1057 = vrot.slane %v1053, 4
  %v1059 = vshrl.u32 %v146, 16
  %v1061 = vrot.slane %v1059, 7
  %v1062 = vshll.u32 %v146, 16
  %v1064 = vor.u32 %v1061, %v1062
  %v1065 = vrot.slane %v1061, 4
  %v1067 = vshrl.u32 %v147, 16
  %v1069 = vrot.slane %v1067, 7
  %v1070 = vshll.u32 %v147, 16
  %v1072 = vor.u32 %v1069, %v1070
  %v1073 = vrot.slane %v1069, 4
  %s1090 = scalar_lea.vmem [#allocation2], 88
  %v1091 = vld [vmem:[%s1090] sm:$0xf]
  %v1092 = vsel %vm231, %v1016, %v1091
  %1093 = vst [vmem:[%s1090] sm:$0xf] %v1092
  %v1094 = vld [vmem:[%s1090 + $0x4] sm:$0x1]
  %v1095 = vsel %vm237, %v1017, %v1094
  %1096 = vst [vmem:[%s1090 + $0x4] sm:$0x1] %v1095
  %v1097 = vld [vmem:[%s1090 + $0x8] sm:$0xf]
  %v1098 = vsel %vm231, %v1024, %v1097
  %1099 = vst [vmem:[%s1090 + $0x8] sm:$0xf] %v1098
  %v1100 = vld [vmem:[%s1090 + $0xc] sm:$0x1]
  %v1101 = vsel %vm237, %v1025, %v1100
  %1102 = vst [vmem:[%s1090 + $0xc] sm:$0x1] %v1101
  %v1103 = vld [vmem:[%s1090 + $0x10] sm:$0xf]
  %v1104 = vsel %vm231, %v1032, %v1103
  %1105 = vst [vmem:[%s1090 + $0x10] sm:$0xf] %v1104
  %v1106 = vld [vmem:[%s1090 + $0x14] sm:$0x1]
  %v1107 = vsel %vm237, %v1033, %v1106
  %1108 = vst [vmem:[%s1090 + $0x14] sm:$0x1] %v1107
  %v1109 = vld [vmem:[%s1090 + $0x18] sm:$0xf]
  %v1110 = vsel %vm231, %v1040, %v1109
  %1111 = vst [vmem:[%s1090 + $0x18] sm:$0xf] %v1110
  %v1112 = vld [vmem:[%s1090 + $0x1c] sm:$0x1]
  %v1113 = vsel %vm237, %v1041, %v1112
  %1114 = vst [vmem:[%s1090 + $0x1c] sm:$0x1] %v1113
  %v1115 = vld [vmem:[%s1090 + $0x20] sm:$0xf]
  %v1116 = vsel %vm231, %v1048, %v1115
  %1117 = vst [vmem:[%s1090 + $0x20] sm:$0xf] %v1116
  %v1118 = vld [vmem:[%s1090 + $0x24] sm:$0x1]
  %v1119 = vsel %vm237, %v1049, %v1118
  %1120 = vst [vmem:[%s1090 + $0x24] sm:$0x1] %v1119
  %v1121 = vld [vmem:[%s1090 + $0x28] sm:$0xf]
  %v1122 = vsel %vm231, %v1056, %v1121
  %1123 = vst [vmem:[%s1090 + $0x28] sm:$0xf] %v1122
  %v1124 = vld [vmem:[%s1090 + $0x2c] sm:$0x1]
  %v1125 = vsel %vm237, %v1057, %v1124
  %1126 = vst [vmem:[%s1090 + $0x2c] sm:$0x1] %v1125
  %v1127 = vld [vmem:[%s1090 + $0x30] sm:$0xf]
  %v1128 = vsel %vm231, %v1064, %v1127
  %1129 = vst [vmem:[%s1090 + $0x30] sm:$0xf] %v1128
  %v1130 = vld [vmem:[%s1090 + $0x34] sm:$0x1]
  %v1131 = vsel %vm237, %v1065, %v1130
  %1132 = vst [vmem:[%s1090 + $0x34] sm:$0x1] %v1131
  %v1133 = vld [vmem:[%s1090 + $0x38] sm:$0xf]
  %v1134 = vsel %vm231, %v1072, %v1133
  %1135 = vst [vmem:[%s1090 + $0x38] sm:$0xf] %v1134
  %v1136 = vld [vmem:[%s1090 + $0x3c] sm:$0x1]
  %v1137 = vsel %vm237, %v1073, %v1136
  %1138 = vst [vmem:[%s1090 + $0x3c] sm:$0x1] %v1137
  %s1139 = scalar_lea.vmem [#allocation2], 80
  %v1140 = vld [vmem:[%s1139] sm:$0xf]
  %v1141 = vld [vmem:[%s1139 + $0x8] sm:$0xf]
  %v1142 = vld [vmem:[%s1139 + $0x10] sm:$0xf]
  %v1143 = vld [vmem:[%s1139 + $0x18] sm:$0xf]
  %v1144 = vld [vmem:[%s1139 + $0x20] sm:$0xf]
  %v1145 = vld [vmem:[%s1139 + $0x28] sm:$0xf]
  %v1146 = vld [vmem:[%s1139 + $0x30] sm:$0xf]
  %v1147 = vld [vmem:[%s1139 + $0x38] sm:$0xf]
  %s1148 = scalar_lea.vmem [#allocation3], 288
  %1149 = vst [vmem:[%s1148] sm:$0xf] %v1140
  %1150 = vst [vmem:[%s1148 + $0x24] sm:$0xf] %v1141
  %1151 = vst [vmem:[%s1148 + $0x48] sm:$0xf] %v1142
  %1152 = vst [vmem:[%s1148 + $0x6c] sm:$0xf] %v1143
  %1153 = vst [vmem:[%s1148 + $0x90] sm:$0xf] %v1144
  %1154 = vst [vmem:[%s1148 + $0xb4] sm:$0xf] %v1145
  %1155 = vst [vmem:[%s1148 + $0xd8] sm:$0xf] %v1146
  %1156 = vst [vmem:[%s1148 + $0xfc] sm:$0xf] %v1147
  %v1157 = vld [vmem:[%s1139] sm:$0xf]
  %v1158 = vld [vmem:[%s1139 + $0x4] sm:$0x1]
  %v1159 = vld [vmem:[%s1139 + $0x8] sm:$0xf]
  %v1160 = vld [vmem:[%s1139 + $0xc] sm:$0x1]
  %v1161 = vld [vmem:[%s1139 + $0x10] sm:$0xf]
  %v1162 = vld [vmem:[%s1139 + $0x14] sm:$0x1]
  %v1163 = vld [vmem:[%s1139 + $0x18] sm:$0xf]
  %v1164 = vld [vmem:[%s1139 + $0x1c] sm:$0x1]
  %v1165 = vld [vmem:[%s1139 + $0x20] sm:$0xf]
  %v1166 = vld [vmem:[%s1139 + $0x24] sm:$0x1]
  %v1167 = vld [vmem:[%s1139 + $0x28] sm:$0xf]
  %v1168 = vld [vmem:[%s1139 + $0x2c] sm:$0x1]
  %v1169 = vld [vmem:[%s1139 + $0x30] sm:$0xf]
  %v1170 = vld [vmem:[%s1139 + $0x34] sm:$0x1]
  %v1171 = vld [vmem:[%s1139 + $0x38] sm:$0xf]
  %v1172 = vld [vmem:[%s1139 + $0x3c] sm:$0x1]
  %v1174 = vshrl.u32 %v1157, 16
  %v1176 = vrot.slane %v1174, 4
  %v1177 = vshll.u32 %v1157, 16
  %v1179 = vrot.slane %v1177, 5
  %v1180 = vor.u32 %v1176, %v1179
  %v1181 = vrot.slane %v1180, 4
  %v1183 = vshll.u32 %v1158, 16
  %v1185 = vrot.slane %v1183, 5
  %v1186 = vsel %vm317, %v1181, %v1185
  %v1188 = vshrl.u32 %v1159, 16
  %v1190 = vrot.slane %v1188, 4
  %v1191 = vshll.u32 %v1159, 16
  %v1193 = vrot.slane %v1191, 5
  %v1194 = vor.u32 %v1190, %v1193
  %v1195 = vrot.slane %v1194, 4
  %v1197 = vshll.u32 %v1160, 16
  %v1199 = vrot.slane %v1197, 5
  %v1200 = vsel %vm317, %v1195, %v1199
  %v1202 = vshrl.u32 %v1161, 16
  %v1204 = vrot.slane %v1202, 4
  %v1205 = vshll.u32 %v1161, 16
  %v1207 = vrot.slane %v1205, 5
  %v1208 = vor.u32 %v1204, %v1207
  %v1209 = vrot.slane %v1208, 4
  %v1211 = vshll.u32 %v1162, 16
  %v1213 = vrot.slane %v1211, 5
  %v1214 = vsel %vm317, %v1209, %v1213
  %v1216 = vshrl.u32 %v1163, 16
  %v1218 = vrot.slane %v1216, 4
  %v1219 = vshll.u32 %v1163, 16
  %v1221 = vrot.slane %v1219, 5
  %v1222 = vor.u32 %v1218, %v1221
  %v1223 = vrot.slane %v1222, 4
  %v1225 = vshll.u32 %v1164, 16
  %v1227 = vrot.slane %v1225, 5
  %v1228 = vsel %vm317, %v1223, %v1227
  %v1230 = vshrl.u32 %v1165, 16
  %v1232 = vrot.slane %v1230, 4
  %v1233 = vshll.u32 %v1165, 16
  %v1235 = vrot.slane %v1233, 5
  %v1236 = vor.u32 %v1232, %v1235
  %v1237 = vrot.slane %v1236, 4
  %v1239 = vshll.u32 %v1166, 16
  %v1241 = vrot.slane %v1239, 5
  %v1242 = vsel %vm317, %v1237, %v1241
  %v1244 = vshrl.u32 %v1167, 16
  %v1246 = vrot.slane %v1244, 4
  %v1247 = vshll.u32 %v1167, 16
  %v1249 = vrot.slane %v1247, 5
  %v1250 = vor.u32 %v1246, %v1249
  %v1251 = vrot.slane %v1250, 4
  %v1253 = vshll.u32 %v1168, 16
  %v1255 = vrot.slane %v1253, 5
  %v1256 = vsel %vm317, %v1251, %v1255
  %v1258 = vshrl.u32 %v1169, 16
  %v1260 = vrot.slane %v1258, 4
  %v1261 = vshll.u32 %v1169, 16
  %v1263 = vrot.slane %v1261, 5
  %v1264 = vor.u32 %v1260, %v1263
  %v1265 = vrot.slane %v1264, 4
  %v1267 = vshll.u32 %v1170, 16
  %v1269 = vrot.slane %v1267, 5
  %v1270 = vsel %vm317, %v1265, %v1269
  %v1272 = vshrl.u32 %v1171, 16
  %v1274 = vrot.slane %v1272, 4
  %v1275 = vshll.u32 %v1171, 16
  %v1277 = vrot.slane %v1275, 5
  %v1278 = vor.u32 %v1274, %v1277
  %v1279 = vrot.slane %v1278, 4
  %v1281 = vshll.u32 %v1172, 16
  %v1283 = vrot.slane %v1281, 5
  %v1284 = vsel %vm317, %v1279, %v1283
  %1293 = vst [vmem:[%s1148 + $0x4] sm:$0xf] %v1186
  %1294 = vst [vmem:[%s1148 + $0x28] sm:$0xf] %v1200
  %1295 = vst [vmem:[%s1148 + $0x4c] sm:$0xf] %v1214
  %1296 = vst [vmem:[%s1148 + $0x70] sm:$0xf] %v1228
  %1297 = vst [vmem:[%s1148 + $0x94] sm:$0xf] %v1242
  %1298 = vst [vmem:[%s1148 + $0xb8] sm:$0xf] %v1256
  %1299 = vst [vmem:[%s1148 + $0xdc] sm:$0xf] %v1270
  %1300 = vst [vmem:[%s1148 + $0x100] sm:$0xf] %v1284
  %v1301 = vld [vmem:[%s1139] sm:$0xe]
  %v1302 = vld [vmem:[%s1139 + $0x4] sm:$0x1]
  %v1303 = vld [vmem:[%s1139 + $0x8] sm:$0xe]
  %v1304 = vld [vmem:[%s1139 + $0xc] sm:$0x1]
  %v1305 = vld [vmem:[%s1139 + $0x10] sm:$0xe]
  %v1306 = vld [vmem:[%s1139 + $0x14] sm:$0x1]
  %v1307 = vld [vmem:[%s1139 + $0x18] sm:$0xe]
  %v1308 = vld [vmem:[%s1139 + $0x1c] sm:$0x1]
  %v1309 = vld [vmem:[%s1139 + $0x20] sm:$0xe]
  %v1310 = vld [vmem:[%s1139 + $0x24] sm:$0x1]
  %v1311 = vld [vmem:[%s1139 + $0x28] sm:$0xe]
  %v1312 = vld [vmem:[%s1139 + $0x2c] sm:$0x1]
  %v1313 = vld [vmem:[%s1139 + $0x30] sm:$0xe]
  %v1314 = vld [vmem:[%s1139 + $0x34] sm:$0x1]
  %v1315 = vld [vmem:[%s1139 + $0x38] sm:$0xe]
  %v1316 = vld [vmem:[%s1139 + $0x3c] sm:$0x1]
  %v1333 = vrot.slane %v1301, 5
  %v1334 = vrot.slane %v1333, 4
  %v1335 = vrot.slane %v1302, 5
  %v1336 = vsel %vm480, %v1334, %v1335
  %v1337 = vrot.slane %v1303, 5
  %v1338 = vrot.slane %v1337, 4
  %v1339 = vrot.slane %v1304, 5
  %v1340 = vsel %vm480, %v1338, %v1339
  %v1341 = vrot.slane %v1305, 5
  %v1342 = vrot.slane %v1341, 4
  %v1343 = vrot.slane %v1306, 5
  %v1344 = vsel %vm480, %v1342, %v1343
  %v1345 = vrot.slane %v1307, 5
  %v1346 = vrot.slane %v1345, 4
  %v1347 = vrot.slane %v1308, 5
  %v1348 = vsel %vm480, %v1346, %v1347
  %v1349 = vrot.slane %v1309, 5
  %v1350 = vrot.slane %v1349, 4
  %v1351 = vrot.slane %v1310, 5
  %v1352 = vsel %vm480, %v1350, %v1351
  %v1353 = vrot.slane %v1311, 5
  %v1354 = vrot.slane %v1353, 4
  %v1355 = vrot.slane %v1312, 5
  %v1356 = vsel %vm480, %v1354, %v1355
  %v1357 = vrot.slane %v1313, 5
  %v1358 = vrot.slane %v1357, 4
  %v1359 = vrot.slane %v1314, 5
  %v1360 = vsel %vm480, %v1358, %v1359
  %v1361 = vrot.slane %v1315, 5
  %v1362 = vrot.slane %v1361, 4
  %v1363 = vrot.slane %v1316, 5
  %v1364 = vsel %vm480, %v1362, %v1363
  %1373 = vst [vmem:[%s1148 + $0x8] sm:$0xf] %v1336
  %1374 = vst [vmem:[%s1148 + $0x2c] sm:$0xf] %v1340
  %1375 = vst [vmem:[%s1148 + $0x50] sm:$0xf] %v1344
  %1376 = vst [vmem:[%s1148 + $0x74] sm:$0xf] %v1348
  %1377 = vst [vmem:[%s1148 + $0x98] sm:$0xf] %v1352
  %1378 = vst [vmem:[%s1148 + $0xbc] sm:$0xf] %v1356
  %1379 = vst [vmem:[%s1148 + $0xe0] sm:$0xf] %v1360
  %1380 = vst [vmem:[%s1148 + $0x104] sm:$0xf] %v1364
  %v1381 = vld [vmem:[%s1090] sm:$0xf]
  %v1382 = vld [vmem:[%s1090 + $0x8] sm:$0xf]
  %v1383 = vld [vmem:[%s1090 + $0x10] sm:$0xf]
  %v1384 = vld [vmem:[%s1090 + $0x18] sm:$0xf]
  %v1385 = vld [vmem:[%s1090 + $0x20] sm:$0xf]
  %v1386 = vld [vmem:[%s1090 + $0x28] sm:$0xf]
  %v1387 = vld [vmem:[%s1090 + $0x30] sm:$0xf]
  %v1388 = vld [vmem:[%s1090 + $0x38] sm:$0xf]
  %1389 = vst [vmem:[%s1148 + $0xc] sm:$0xf] %v1381
  %1390 = vst [vmem:[%s1148 + $0x30] sm:$0xf] %v1382
  %1391 = vst [vmem:[%s1148 + $0x54] sm:$0xf] %v1383
  %1392 = vst [vmem:[%s1148 + $0x78] sm:$0xf] %v1384
  %1393 = vst [vmem:[%s1148 + $0x9c] sm:$0xf] %v1385
  %1394 = vst [vmem:[%s1148 + $0xc0] sm:$0xf] %v1386
  %1395 = vst [vmem:[%s1148 + $0xe4] sm:$0xf] %v1387
  %1396 = vst [vmem:[%s1148 + $0x108] sm:$0xf] %v1388
  %v1397 = vld [vmem:[%s1090] sm:$0xf]
  %v1398 = vld [vmem:[%s1090 + $0x4] sm:$0x1]
  %v1399 = vld [vmem:[%s1090 + $0x8] sm:$0xf]
  %v1400 = vld [vmem:[%s1090 + $0xc] sm:$0x1]
  %v1401 = vld [vmem:[%s1090 + $0x10] sm:$0xf]
  %v1402 = vld [vmem:[%s1090 + $0x14] sm:$0x1]
  %v1403 = vld [vmem:[%s1090 + $0x18] sm:$0xf]
  %v1404 = vld [vmem:[%s1090 + $0x1c] sm:$0x1]
  %v1405 = vld [vmem:[%s1090 + $0x20] sm:$0xf]
  %v1406 = vld [vmem:[%s1090 + $0x24] sm:$0x1]
  %v1407 = vld [vmem:[%s1090 + $0x28] sm:$0xf]
  %v1408 = vld [vmem:[%s1090 + $0x2c] sm:$0x1]
  %v1409 = vld [vmem:[%s1090 + $0x30] sm:$0xf]
  %v1410 = vld [vmem:[%s1090 + $0x34] sm:$0x1]
  %v1411 = vld [vmem:[%s1090 + $0x38] sm:$0xf]
  %v1412 = vld [vmem:[%s1090 + $0x3c] sm:$0x1]
  %v1414 = vshrl.u32 %v1397, 16
  %v1416 = vrot.slane %v1414, 4
  %v1417 = vshll.u32 %v1397, 16
  %v1419 = vrot.slane %v1417, 5
  %v1420 = vor.u32 %v1416, %v1419
  %v1421 = vrot.slane %v1420, 4
  %v1423 = vshll.u32 %v1398, 16
  %v1425 = vrot.slane %v1423, 5
  %v1426 = vsel %vm317, %v1421, %v1425
  %v1428 = vshrl.u32 %v1399, 16
  %v1430 = vrot.slane %v1428, 4
  %v1431 = vshll.u32 %v1399, 16
  %v1433 = vrot.slane %v1431, 5
  %v1434 = vor.u32 %v1430, %v1433
  %v1435 = vrot.slane %v1434, 4
  %v1437 = vshll.u32 %v1400, 16
  %v1439 = vrot.slane %v1437, 5
  %v1440 = vsel %vm317, %v1435, %v1439
  %v1442 = vshrl.u32 %v1401, 16
  %v1444 = vrot.slane %v1442, 4
  %v1445 = vshll.u32 %v1401, 16
  %v1447 = vrot.slane %v1445, 5
  %v1448 = vor.u32 %v1444, %v1447
  %v1449 = vrot.slane %v1448, 4
  %v1451 = vshll.u32 %v1402, 16
  %v1453 = vrot.slane %v1451, 5
  %v1454 = vsel %vm317, %v1449, %v1453
  %v1456 = vshrl.u32 %v1403, 16
  %v1458 = vrot.slane %v1456, 4
  %v1459 = vshll.u32 %v1403, 16
  %v1461 = vrot.slane %v1459, 5
  %v1462 = vor.u32 %v1458, %v1461
  %v1463 = vrot.slane %v1462, 4
  %v1465 = vshll.u32 %v1404, 16
  %v1467 = vrot.slane %v1465, 5
  %v1468 = vsel %vm317, %v1463, %v1467
  %v1470 = vshrl.u32 %v1405, 16
  %v1472 = vrot.slane %v1470, 4
  %v1473 = vshll.u32 %v1405, 16
  %v1475 = vrot.slane %v1473, 5
  %v1476 = vor.u32 %v1472, %v1475
  %v1477 = vrot.slane %v1476, 4
  %v1479 = vshll.u32 %v1406, 16
  %v1481 = vrot.slane %v1479, 5
  %v1482 = vsel %vm317, %v1477, %v1481
  %v1484 = vshrl.u32 %v1407, 16
  %v1486 = vrot.slane %v1484, 4
  %v1487 = vshll.u32 %v1407, 16
  %v1489 = vrot.slane %v1487, 5
  %v1490 = vor.u32 %v1486, %v1489
  %v1491 = vrot.slane %v1490, 4
  %v1493 = vshll.u32 %v1408, 16
  %v1495 = vrot.slane %v1493, 5
  %v1496 = vsel %vm317, %v1491, %v1495
  %v1498 = vshrl.u32 %v1409, 16
  %v1500 = vrot.slane %v1498, 4
  %v1501 = vshll.u32 %v1409, 16
  %v1503 = vrot.slane %v1501, 5
  %v1504 = vor.u32 %v1500, %v1503
  %v1505 = vrot.slane %v1504, 4
  %v1507 = vshll.u32 %v1410, 16
  %v1509 = vrot.slane %v1507, 5
  %v1510 = vsel %vm317, %v1505, %v1509
  %v1512 = vshrl.u32 %v1411, 16
  %v1514 = vrot.slane %v1512, 4
  %v1515 = vshll.u32 %v1411, 16
  %v1517 = vrot.slane %v1515, 5
  %v1518 = vor.u32 %v1514, %v1517
  %v1519 = vrot.slane %v1518, 4
  %v1521 = vshll.u32 %v1412, 16
  %v1523 = vrot.slane %v1521, 5
  %v1524 = vsel %vm317, %v1519, %v1523
  %1533 = vst [vmem:[%s1148 + $0x10] sm:$0xf] %v1426
  %1534 = vst [vmem:[%s1148 + $0x34] sm:$0xf] %v1440
  %1535 = vst [vmem:[%s1148 + $0x58] sm:$0xf] %v1454
  %1536 = vst [vmem:[%s1148 + $0x7c] sm:$0xf] %v1468
  %1537 = vst [vmem:[%s1148 + $0xa0] sm:$0xf] %v1482
  %1538 = vst [vmem:[%s1148 + $0xc4] sm:$0xf] %v1496
  %1539 = vst [vmem:[%s1148 + $0xe8] sm:$0xf] %v1510
  %1540 = vst [vmem:[%s1148 + $0x10c] sm:$0xf] %v1524
  %v1541 = vld [vmem:[%s1090] sm:$0xe]
  %v1542 = vld [vmem:[%s1090 + $0x4] sm:$0x1]
  %v1543 = vld [vmem:[%s1090 + $0x8] sm:$0xe]
  %v1544 = vld [vmem:[%s1090 + $0xc] sm:$0x1]
  %v1545 = vld [vmem:[%s1090 + $0x10] sm:$0xe]
  %v1546 = vld [vmem:[%s1090 + $0x14] sm:$0x1]
  %v1547 = vld [vmem:[%s1090 + $0x18] sm:$0xe]
  %v1548 = vld [vmem:[%s1090 + $0x1c] sm:$0x1]
  %v1549 = vld [vmem:[%s1090 + $0x20] sm:$0xe]
  %v1550 = vld [vmem:[%s1090 + $0x24] sm:$0x1]
  %v1551 = vld [vmem:[%s1090 + $0x28] sm:$0xe]
  %v1552 = vld [vmem:[%s1090 + $0x2c] sm:$0x1]
  %v1553 = vld [vmem:[%s1090 + $0x30] sm:$0xe]
  %v1554 = vld [vmem:[%s1090 + $0x34] sm:$0x1]
  %v1555 = vld [vmem:[%s1090 + $0x38] sm:$0xe]
  %v1556 = vld [vmem:[%s1090 + $0x3c] sm:$0x1]
  %v1573 = vrot.slane %v1541, 5
  %v1574 = vrot.slane %v1573, 4
  %v1575 = vrot.slane %v1542, 5
  %v1576 = vsel %vm480, %v1574, %v1575
  %v1577 = vrot.slane %v1543, 5
  %v1578 = vrot.slane %v1577, 4
  %v1579 = vrot.slane %v1544, 5
  %v1580 = vsel %vm480, %v1578, %v1579
  %v1581 = vrot.slane %v1545, 5
  %v1582 = vrot.slane %v1581, 4
  %v1583 = vrot.slane %v1546, 5
  %v1584 = vsel %vm480, %v1582, %v1583
  %v1585 = vrot.slane %v1547, 5
  %v1586 = vrot.slane %v1585, 4
  %v1587 = vrot.slane %v1548, 5
  %v1588 = vsel %vm480, %v1586, %v1587
  %v1589 = vrot.slane %v1549, 5
  %v1590 = vrot.slane %v1589, 4
  %v1591 = vrot.slane %v1550, 5
  %v1592 = vsel %vm480, %v1590, %v1591
  %v1593 = vrot.slane %v1551, 5
  %v1594 = vrot.slane %v1593, 4
  %v1595 = vrot.slane %v1552, 5
  %v1596 = vsel %vm480, %v1594, %v1595
  %v1597 = vrot.slane %v1553, 5
  %v1598 = vrot.slane %v1597, 4
  %v1599 = vrot.slane %v1554, 5
  %v1600 = vsel %vm480, %v1598, %v1599
  %v1601 = vrot.slane %v1555, 5
  %v1602 = vrot.slane %v1601, 4
  %v1603 = vrot.slane %v1556, 5
  %v1604 = vsel %vm480, %v1602, %v1603
  %1613 = vst [vmem:[%s1148 + $0x14] sm:$0xf] %v1576
  %1614 = vst [vmem:[%s1148 + $0x38] sm:$0xf] %v1580
  %1615 = vst [vmem:[%s1148 + $0x5c] sm:$0xf] %v1584
  %1616 = vst [vmem:[%s1148 + $0x80] sm:$0xf] %v1588
  %1617 = vst [vmem:[%s1148 + $0xa4] sm:$0xf] %v1592
  %1618 = vst [vmem:[%s1148 + $0xc8] sm:$0xf] %v1596
  %1619 = vst [vmem:[%s1148 + $0xec] sm:$0xf] %v1600
  %1620 = vst [vmem:[%s1148 + $0x110] sm:$0xf] %v1604
  %s1621 = scalar_lea.vmem [#allocation2], 96
  %v1622 = vld [vmem:[%s1621] sm:$0xf]
  %v1623 = vld [vmem:[%s1621 + $0x8] sm:$0xf]
  %v1624 = vld [vmem:[%s1621 + $0x10] sm:$0xf]
  %v1625 = vld [vmem:[%s1621 + $0x18] sm:$0xf]
  %v1626 = vld [vmem:[%s1621 + $0x20] sm:$0xf]
  %v1627 = vld [vmem:[%s1621 + $0x28] sm:$0xf]
  %v1628 = vld [vmem:[%s1621 + $0x30] sm:$0xf]
  %v1629 = vld [vmem:[%s1621 + $0x38] sm:$0xf]
  %1630 = vst [vmem:[%s1148 + $0x18] sm:$0xf] %v1622
  %1631 = vst [vmem:[%s1148 + $0x3c] sm:$0xf] %v1623
  %1632 = vst [vmem:[%s1148 + $0x60] sm:$0xf] %v1624
  %1633 = vst [vmem:[%s1148 + $0x84] sm:$0xf] %v1625
  %1634 = vst [vmem:[%s1148 + $0xa8] sm:$0xf] %v1626
  %1635 = vst [vmem:[%s1148 + $0xcc] sm:$0xf] %v1627
  %1636 = vst [vmem:[%s1148 + $0xf0] sm:$0xf] %v1628
  %1637 = vst [vmem:[%s1148 + $0x114] sm:$0xf] %v1629
  %v1638 = vld [vmem:[%s1621] sm:$0xf]
  %v1639 = vld [vmem:[%s1621 + $0x4] sm:$0x1]
  %v1640 = vld [vmem:[%s1621 + $0x8] sm:$0xf]
  %v1641 = vld [vmem:[%s1621 + $0xc] sm:$0x1]
  %v1642 = vld [vmem:[%s1621 + $0x10] sm:$0xf]
  %v1643 = vld [vmem:[%s1621 + $0x14] sm:$0x1]
  %v1644 = vld [vmem:[%s1621 + $0x18] sm:$0xf]
  %v1645 = vld [vmem:[%s1621 + $0x1c] sm:$0x1]
  %v1646 = vld [vmem:[%s1621 + $0x20] sm:$0xf]
  %v1647 = vld [vmem:[%s1621 + $0x24] sm:$0x1]
  %v1648 = vld [vmem:[%s1621 + $0x28] sm:$0xf]
  %v1649 = vld [vmem:[%s1621 + $0x2c] sm:$0x1]
  %v1650 = vld [vmem:[%s1621 + $0x30] sm:$0xf]
  %v1651 = vld [vmem:[%s1621 + $0x34] sm:$0x1]
  %v1652 = vld [vmem:[%s1621 + $0x38] sm:$0xf]
  %v1653 = vld [vmem:[%s1621 + $0x3c] sm:$0x1]
  %v1655 = vshrl.u32 %v1638, 16
  %v1657 = vrot.slane %v1655, 4
  %v1658 = vshll.u32 %v1638, 16
  %v1660 = vrot.slane %v1658, 5
  %v1661 = vor.u32 %v1657, %v1660
  %v1662 = vrot.slane %v1661, 4
  %v1664 = vshll.u32 %v1639, 16
  %v1666 = vrot.slane %v1664, 5
  %v1667 = vsel %vm317, %v1662, %v1666
  %v1669 = vshrl.u32 %v1640, 16
  %v1671 = vrot.slane %v1669, 4
  %v1672 = vshll.u32 %v1640, 16
  %v1674 = vrot.slane %v1672, 5
  %v1675 = vor.u32 %v1671, %v1674
  %v1676 = vrot.slane %v1675, 4
  %v1678 = vshll.u32 %v1641, 16
  %v1680 = vrot.slane %v1678, 5
  %v1681 = vsel %vm317, %v1676, %v1680
  %v1683 = vshrl.u32 %v1642, 16
  %v1685 = vrot.slane %v1683, 4
  %v1686 = vshll.u32 %v1642, 16
  %v1688 = vrot.slane %v1686, 5
  %v1689 = vor.u32 %v1685, %v1688
  %v1690 = vrot.slane %v1689, 4
  %v1692 = vshll.u32 %v1643, 16
  %v1694 = vrot.slane %v1692, 5
  %v1695 = vsel %vm317, %v1690, %v1694
  %v1697 = vshrl.u32 %v1644, 16
  %v1699 = vrot.slane %v1697, 4
  %v1700 = vshll.u32 %v1644, 16
  %v1702 = vrot.slane %v1700, 5
  %v1703 = vor.u32 %v1699, %v1702
  %v1704 = vrot.slane %v1703, 4
  %v1706 = vshll.u32 %v1645, 16
  %v1708 = vrot.slane %v1706, 5
  %v1709 = vsel %vm317, %v1704, %v1708
  %v1711 = vshrl.u32 %v1646, 16
  %v1713 = vrot.slane %v1711, 4
  %v1714 = vshll.u32 %v1646, 16
  %v1716 = vrot.slane %v1714, 5
  %v1717 = vor.u32 %v1713, %v1716
  %v1718 = vrot.slane %v1717, 4
  %v1720 = vshll.u32 %v1647, 16
  %v1722 = vrot.slane %v1720, 5
  %v1723 = vsel %vm317, %v1718, %v1722
  %v1725 = vshrl.u32 %v1648, 16
  %v1727 = vrot.slane %v1725, 4
  %v1728 = vshll.u32 %v1648, 16
  %v1730 = vrot.slane %v1728, 5
  %v1731 = vor.u32 %v1727, %v1730
  %v1732 = vrot.slane %v1731, 4
  %v1734 = vshll.u32 %v1649, 16
  %v1736 = vrot.slane %v1734, 5
  %v1737 = vsel %vm317, %v1732, %v1736
  %v1739 = vshrl.u32 %v1650, 16
  %v1741 = vrot.slane %v1739, 4
  %v1742 = vshll.u32 %v1650, 16
  %v1744 = vrot.slane %v1742, 5
  %v1745 = vor.u32 %v1741, %v1744
  %v1746 = vrot.slane %v1745, 4
  %v1748 = vshll.u32 %v1651, 16
  %v1750 = vrot.slane %v1748, 5
  %v1751 = vsel %vm317, %v1746, %v1750
  %v1753 = vshrl.u32 %v1652, 16
  %v1755 = vrot.slane %v1753, 4
  %v1756 = vshll.u32 %v1652, 16
  %v1758 = vrot.slane %v1756, 5
  %v1759 = vor.u32 %v1755, %v1758
  %v1760 = vrot.slane %v1759, 4
  %v1762 = vshll.u32 %v1653, 16
  %v1764 = vrot.slane %v1762, 5
  %v1765 = vsel %vm317, %v1760, %v1764
  %1774 = vst [vmem:[%s1148 + $0x1c] sm:$0xf] %v1667
  %1775 = vst [vmem:[%s1148 + $0x40] sm:$0xf] %v1681
  %1776 = vst [vmem:[%s1148 + $0x64] sm:$0xf] %v1695
  %1777 = vst [vmem:[%s1148 + $0x88] sm:$0xf] %v1709
  %1778 = vst [vmem:[%s1148 + $0xac] sm:$0xf] %v1723
  %1779 = vst [vmem:[%s1148 + $0xd0] sm:$0xf] %v1737
  %1780 = vst [vmem:[%s1148 + $0xf4] sm:$0xf] %v1751
  %1781 = vst [vmem:[%s1148 + $0x118] sm:$0xf] %v1765
  %v1782 = vld [vmem:[%s1621] sm:$0xe]
  %v1783 = vld [vmem:[%s1621 + $0x4] sm:$0x1]
  %v1784 = vld [vmem:[%s1621 + $0x8] sm:$0xe]
  %v1785 = vld [vmem:[%s1621 + $0xc] sm:$0x1]
  %v1786 = vld [vmem:[%s1621 + $0x10] sm:$0xe]
  %v1787 = vld [vmem:[%s1621 + $0x14] sm:$0x1]
  %v1788 = vld [vmem:[%s1621 + $0x18] sm:$0xe]
  %v1789 = vld [vmem:[%s1621 + $0x1c] sm:$0x1]
  %v1790 = vld [vmem:[%s1621 + $0x20] sm:$0xe]
  %v1791 = vld [vmem:[%s1621 + $0x24] sm:$0x1]
  %v1792 = vld [vmem:[%s1621 + $0x28] sm:$0xe]
  %v1793 = vld [vmem:[%s1621 + $0x2c] sm:$0x1]
  %v1794 = vld [vmem:[%s1621 + $0x30] sm:$0xe]
  %v1795 = vld [vmem:[%s1621 + $0x34] sm:$0x1]
  %v1796 = vld [vmem:[%s1621 + $0x38] sm:$0xe]
  %v1797 = vld [vmem:[%s1621 + $0x3c] sm:$0x1]
  %v1814 = vrot.slane %v1782, 5
  %v1815 = vrot.slane %v1814, 4
  %v1816 = vrot.slane %v1783, 5
  %v1817 = vsel %vm480, %v1815, %v1816
  %v1818 = vrot.slane %v1784, 5
  %v1819 = vrot.slane %v1818, 4
  %v1820 = vrot.slane %v1785, 5
  %v1821 = vsel %vm480, %v1819, %v1820
  %v1822 = vrot.slane %v1786, 5
  %v1823 = vrot.slane %v1822, 4
  %v1824 = vrot.slane %v1787, 5
  %v1825 = vsel %vm480, %v1823, %v1824
  %v1826 = vrot.slane %v1788, 5
  %v1827 = vrot.slane %v1826, 4
  %v1828 = vrot.slane %v1789, 5
  %v1829 = vsel %vm480, %v1827, %v1828
  %v1830 = vrot.slane %v1790, 5
  %v1831 = vrot.slane %v1830, 4
  %v1832 = vrot.slane %v1791, 5
  %v1833 = vsel %vm480, %v1831, %v1832
  %v1834 = vrot.slane %v1792, 5
  %v1835 = vrot.slane %v1834, 4
  %v1836 = vrot.slane %v1793, 5
  %v1837 = vsel %vm480, %v1835, %v1836
  %v1838 = vrot.slane %v1794, 5
  %v1839 = vrot.slane %v1838, 4
  %v1840 = vrot.slane %v1795, 5
  %v1841 = vsel %vm480, %v1839, %v1840
  %v1842 = vrot.slane %v1796, 5
  %v1843 = vrot.slane %v1842, 4
  %v1844 = vrot.slane %v1797, 5
  %v1845 = vsel %vm480, %v1843, %v1844
  %1854 = vst [vmem:[%s1148 + $0x20] sm:$0xf] %v1817
  %1855 = vst [vmem:[%s1148 + $0x44] sm:$0xf] %v1821
  %1856 = vst [vmem:[%s1148 + $0x68] sm:$0xf] %v1825
  %1857 = vst [vmem:[%s1148 + $0x8c] sm:$0xf] %v1829
  %1858 = vst [vmem:[%s1148 + $0xb0] sm:$0xf] %v1833
  %1859 = vst [vmem:[%s1148 + $0xd4] sm:$0xf] %v1837
  %1860 = vst [vmem:[%s1148 + $0xf8] sm:$0xf] %v1841
  %1861 = vst [vmem:[%s1148 + $0x11c] sm:$0xf] %v1845
  %v1862 = vld [vmem:[#allocation3] sm:$0xff]
  %v1863 = vld [vmem:[#allocation3 + $0x8] sm:$0xff]
  %v1864 = vld [vmem:[#allocation3 + $0x10] sm:$0xff]
  %v1865 = vld [vmem:[#allocation3 + $0x18] sm:$0xff]
  %v1866 = vld [vmem:[#allocation3 + $0x20] sm:$0xf]
  %v1867 = vld [vmem:[#allocation3 + $0x24] sm:$0xff]
  %v1868 = vld [vmem:[#allocation3 + $0x2c] sm:$0xff]
  %v1869 = vld [vmem:[#allocation3 + $0x34] sm:$0xff]
  %v1870 = vld [vmem:[#allocation3 + $0x3c] sm:$0xff]
  %v1871 = vld [vmem:[#allocation3 + $0x44] sm:$0xf]
  %v1872 = vld [vmem:[#allocation3 + $0x48] sm:$0xff]
  %v1873 = vld [vmem:[#allocation3 + $0x50] sm:$0xff]
  %v1874 = vld [vmem:[#allocation3 + $0x58] sm:$0xff]
  %v1875 = vld [vmem:[#allocation3 + $0x60] sm:$0xff]
  %v1876 = vld [vmem:[#allocation3 + $0x68] sm:$0xf]
  %v1877 = vld [vmem:[#allocation3 + $0x6c] sm:$0xff]
  %v1878 = vld [vmem:[#allocation3 + $0x74] sm:$0xff]
  %v1879 = vld [vmem:[#allocation3 + $0x7c] sm:$0xff]
  %v1880 = vld [vmem:[#allocation3 + $0x84] sm:$0xff]
  %v1881 = vld [vmem:[#allocation3 + $0x8c] sm:$0xf]
  %v1882 = vld [vmem:[#allocation3 + $0x90] sm:$0xff]
  %v1883 = vld [vmem:[#allocation3 + $0x98] sm:$0xff]
  %v1884 = vld [vmem:[#allocation3 + $0xa0] sm:$0xff]
  %v1885 = vld [vmem:[#allocation3 + $0xa8] sm:$0xff]
  %v1886 = vld [vmem:[#allocation3 + $0xb0] sm:$0xf]
  %v1887 = vld [vmem:[#allocation3 + $0xb4] sm:$0xff]
  %v1888 = vld [vmem:[#allocation3 + $0xbc] sm:$0xff]
  %v1889 = vld [vmem:[#allocation3 + $0xc4] sm:$0xff]
  %v1890 = vld [vmem:[#allocation3 + $0xcc] sm:$0xff]
  %v1891 = vld [vmem:[#allocation3 + $0xd4] sm:$0xf]
  %v1892 = vld [vmem:[#allocation3 + $0xd8] sm:$0xff]
  %v1893 = vld [vmem:[#allocation3 + $0xe0] sm:$0xff]
  %v1894 = vld [vmem:[#allocation3 + $0xe8] sm:$0xff]
  %v1895 = vld [vmem:[#allocation3 + $0xf0] sm:$0xff]
  %v1896 = vld [vmem:[#allocation3 + $0xf8] sm:$0xf]
  %v1897 = vld [vmem:[#allocation3 + $0xfc] sm:$0xff]
  %v1898 = vld [vmem:[#allocation3 + $0x104] sm:$0xff]
  %v1899 = vld [vmem:[#allocation3 + $0x10c] sm:$0xff]
  %v1900 = vld [vmem:[#allocation3 + $0x114] sm:$0xff]
  %v1901 = vld [vmem:[#allocation3 + $0x11c] sm:$0xf]
  %v1902 = vld [vmem:[#allocation3 + $0x120] sm:$0xff]
  %v1903 = vld [vmem:[#allocation3 + $0x128] sm:$0xff]
  %v1904 = vld [vmem:[#allocation3 + $0x130] sm:$0xff]
  %v1905 = vld [vmem:[#allocation3 + $0x138] sm:$0xff]
  %v1906 = vld [vmem:[#allocation3 + $0x140] sm:$0xf]
  %v1907 = vld [vmem:[#allocation3 + $0x144] sm:$0xff]
  %v1908 = vld [vmem:[#allocation3 + $0x14c] sm:$0xff]
  %v1909 = vld [vmem:[#allocation3 + $0x154] sm:$0xff]
  %v1910 = vld [vmem:[#allocation3 + $0x15c] sm:$0xff]
  %v1911 = vld [vmem:[#allocation3 + $0x164] sm:$0xf]
  %v1912 = vld [vmem:[#allocation3 + $0x168] sm:$0xff]
  %v1913 = vld [vmem:[#allocation3 + $0x170] sm:$0xff]
  %v1914 = vld [vmem:[#allocation3 + $0x178] sm:$0xff]
  %v1915 = vld [vmem:[#allocation3 + $0x180] sm:$0xff]
  %v1916 = vld [vmem:[#allocation3 + $0x188] sm:$0xf]
  %v1917 = vld [vmem:[#allocation3 + $0x18c] sm:$0xff]
  %v1918 = vld [vmem:[#allocation3 + $0x194] sm:$0xff]
  %v1919 = vld [vmem:[#allocation3 + $0x19c] sm:$0xff]
  %v1920 = vld [vmem:[#allocation3 + $0x1a4] sm:$0xff]
  %v1921 = vld [vmem:[#allocation3 + $0x1ac] sm:$0xf]
  %v1922 = vld [vmem:[#allocation3 + $0x1b0] sm:$0xff]
  %v1923 = vld [vmem:[#allocation3 + $0x1b8] sm:$0xff]
  %v1924 = vld [vmem:[#allocation3 + $0x1c0] sm:$0xff]
  %v1925 = vld [vmem:[#allocation3 + $0x1c8] sm:$0xff]
  %v1926 = vld [vmem:[#allocation3 + $0x1d0] sm:$0xf]
  %v1927 = vld [vmem:[#allocation3 + $0x1d4] sm:$0xff]
  %v1928 = vld [vmem:[#allocation3 + $0x1dc] sm:$0xff]
  %v1929 = vld [vmem:[#allocation3 + $0x1e4] sm:$0xff]
  %v1930 = vld [vmem:[#allocation3 + $0x1ec] sm:$0xff]
  %v1931 = vld [vmem:[#allocation3 + $0x1f4] sm:$0xf]
  %v1932 = vld [vmem:[#allocation3 + $0x1f8] sm:$0xff]
  %v1933 = vld [vmem:[#allocation3 + $0x200] sm:$0xff]
  %v1934 = vld [vmem:[#allocation3 + $0x208] sm:$0xff]
  %v1935 = vld [vmem:[#allocation3 + $0x210] sm:$0xff]
  %v1936 = vld [vmem:[#allocation3 + $0x218] sm:$0xf]
  %v1937 = vld [vmem:[#allocation3 + $0x21c] sm:$0xff]
  %v1938 = vld [vmem:[#allocation3 + $0x224] sm:$0xff]
  %v1939 = vld [vmem:[#allocation3 + $0x22c] sm:$0xff]
  %v1940 = vld [vmem:[#allocation3 + $0x234] sm:$0xff]
  %v1941 = vld [vmem:[#allocation3 + $0x23c] sm:$0xf]
  %v1942 = vld [vmem:[%s1] sm:$0xf]
  %v1943 = vld [vmem:[%s1 + $0x4] sm:$0xf]
  %v1944 = vld [vmem:[%s1 + $0x8] sm:$0xf]
  %v1945 = vld [vmem:[%s1 + $0xc] sm:$0xf]
  %v1946 = vld [vmem:[%s1 + $0x10] sm:$0xf]
  %v1947 = vld [vmem:[%s1 + $0x14] sm:$0xf]
  %v1948 = vld [vmem:[%s1 + $0x18] sm:$0xf]
  %v1949 = vld [vmem:[%s1 + $0x1c] sm:$0xf]
  %v1950 = vld [vmem:[%s1 + $0x20] sm:$0xf]
  %v1951 = vld [vmem:[%s1 + $0x24] sm:$0xf]
  %v1952 = vld [vmem:[%s1 + $0x28] sm:$0xf]
  %v1953 = vld [vmem:[%s1 + $0x2c] sm:$0xf]
  %v1954 = vld [vmem:[%s1 + $0x30] sm:$0xf]
  %v1955 = vld [vmem:[%s1 + $0x34] sm:$0xf]
  %v1956 = vld [vmem:[%s1 + $0x38] sm:$0xf]
  %v1957 = vld [vmem:[%s1 + $0x3c] sm:$0xf]
  %v1958 = vld [vmem:[%s1 + $0x40] sm:$0xf]
  %v1959 = vld [vmem:[%s1 + $0x44] sm:$0xf]
  %v1960 = vld [vmem:[%s1 + $0x48] sm:$0xf]
  %v1961 = vld [vmem:[%s1 + $0x4c] sm:$0xf]
  %v1962 = vld [vmem:[%s1 + $0x50] sm:$0xf]
  %v1963 = vld [vmem:[%s1 + $0x54] sm:$0xf]
  %v1964 = vld [vmem:[%s1 + $0x58] sm:$0xf]
  %v1965 = vld [vmem:[%s1 + $0x5c] sm:$0xf]
  %v1966 = vld [vmem:[%s1 + $0x60] sm:$0xf]
  %v1967 = vld [vmem:[%s1 + $0x64] sm:$0xf]
  %v1968 = vld [vmem:[%s1 + $0x68] sm:$0xf]
  %v1969 = vld [vmem:[%s1 + $0x6c] sm:$0xf]
  %v1970 = vld [vmem:[%s1 + $0x70] sm:$0xf]
  %v1971 = vld [vmem:[%s1 + $0x74] sm:$0xf]
  %v1972 = vld [vmem:[%s1 + $0x78] sm:$0xf]
  %v1973 = vld [vmem:[%s1 + $0x7c] sm:$0xf]
  %v1974 = vld [vmem:[%s1 + $0x80] sm:$0xf]
  %v1975 = vld [vmem:[%s1 + $0x84] sm:$0xf]
  %v1976 = vld [vmem:[%s1 + $0x88] sm:$0xf]
  %v1977 = vld [vmem:[%s1 + $0x8c] sm:$0xf]
  %v1978 = vld [vmem:[%s1 + $0x90] sm:$0xf]
  %v1979 = vld [vmem:[%s1 + $0x94] sm:$0xf]
  %v1980 = vld [vmem:[%s1 + $0x98] sm:$0xf]
  %v1981 = vld [vmem:[%s1 + $0x9c] sm:$0xf]
  %v1982 = vld [vmem:[%s1 + $0xa0] sm:$0xf]
  %v1983 = vld [vmem:[%s1 + $0xa4] sm:$0xf]
  %v1984 = vld [vmem:[%s1 + $0xa8] sm:$0xf]
  %v1985 = vld [vmem:[%s1 + $0xac] sm:$0xf]
  %v1986 = vld [vmem:[%s1 + $0xb0] sm:$0xf]
  %v1987 = vld [vmem:[%s1 + $0xb4] sm:$0xf]
  %v1988 = vld [vmem:[%s1 + $0xb8] sm:$0xf]
  %v1989 = vld [vmem:[%s1 + $0xbc] sm:$0xf]
  %v1990 = vld [vmem:[%s1 + $0xc0] sm:$0xf]
  %v1991 = vld [vmem:[%s1 + $0xc4] sm:$0xf]
  %v1992 = vld [vmem:[%s1 + $0xc8] sm:$0xf]
  %v1993 = vld [vmem:[%s1 + $0xcc] sm:$0xf]
  %v1994 = vld [vmem:[%s1 + $0xd0] sm:$0xf]
  %v1995 = vld [vmem:[%s1 + $0xd4] sm:$0xf]
  %v1996 = vld [vmem:[%s1 + $0xd8] sm:$0xf]
  %v1997 = vld [vmem:[%s1 + $0xdc] sm:$0xf]
  %v1998 = vld [vmem:[%s1 + $0xe0] sm:$0xf]
  %v1999 = vld [vmem:[%s1 + $0xe4] sm:$0xf]
  %v2000 = vld [vmem:[%s1 + $0xe8] sm:$0xf]
  %v2001 = vld [vmem:[%s1 + $0xec] sm:$0xf]
  %v2002 = vld [vmem:[%s1 + $0xf0] sm:$0xf]
  %v2003 = vld [vmem:[%s1 + $0xf4] sm:$0xf]
  %v2004 = vld [vmem:[%s1 + $0xf8] sm:$0xf]
  %v2005 = vld [vmem:[%s1 + $0xfc] sm:$0xf]
  %v2006 = vld [vmem:[%s1 + $0x100] sm:$0xf]
  %v2007 = vld [vmem:[%s1 + $0x104] sm:$0xf]
  %v2008 = vld [vmem:[%s1 + $0x108] sm:$0xf]
  %v2009 = vld [vmem:[%s1 + $0x10c] sm:$0xf]
  %v2010 = vld [vmem:[%s1 + $0x110] sm:$0xf]
  %v2011 = vld [vmem:[%s1 + $0x114] sm:$0xf]
  %v2012 = vld [vmem:[%s1 + $0x118] sm:$0xf]
  %v2013 = vld [vmem:[%s1 + $0x11c] sm:$0xf]
  %v2014 = vld [vmem:[%s1 + $0x120] sm:$0xf]
  %v2015 = vld [vmem:[%s1 + $0x124] sm:$0xf]
  %v2016 = vld [vmem:[%s1 + $0x128] sm:$0xf]
  %v2017 = vld [vmem:[%s1 + $0x12c] sm:$0xf]
  %v2018 = vld [vmem:[%s1 + $0x130] sm:$0xf]
  %v2019 = vld [vmem:[%s1 + $0x134] sm:$0xf]
  %v2020 = vld [vmem:[%s1 + $0x138] sm:$0xf]
  %v2021 = vld [vmem:[%s1 + $0x13c] sm:$0xf]
  %v2022 = vld [vmem:[%s1 + $0x140] sm:$0xf]
  %v2023 = vld [vmem:[%s1 + $0x144] sm:$0xf]
  %v2024 = vld [vmem:[%s1 + $0x148] sm:$0xf]
  %v2025 = vld [vmem:[%s1 + $0x14c] sm:$0xf]
  %v2026 = vld [vmem:[%s1 + $0x150] sm:$0xf]
  %v2027 = vld [vmem:[%s1 + $0x154] sm:$0xf]
  %v2028 = vld [vmem:[%s1 + $0x158] sm:$0xf]
  %v2029 = vld [vmem:[%s1 + $0x15c] sm:$0xf]
  %v2030 = vld [vmem:[%s1 + $0x160] sm:$0xf]
  %v2031 = vld [vmem:[%s1 + $0x164] sm:$0xf]
  %v2032 = vld [vmem:[%s1 + $0x168] sm:$0xf]
  %v2033 = vld [vmem:[%s1 + $0x16c] sm:$0xf]
  %v2034 = vld [vmem:[%s1 + $0x170] sm:$0xf]
  %v2035 = vld [vmem:[%s1 + $0x174] sm:$0xf]
  %v2036 = vld [vmem:[%s1 + $0x178] sm:$0xf]
  %v2037 = vld [vmem:[%s1 + $0x17c] sm:$0xf]
  %v2038 = vld [vmem:[%s1 + $0x180] sm:$0xf]
  %v2039 = vld [vmem:[%s1 + $0x184] sm:$0xf]
  %v2040 = vld [vmem:[%s1 + $0x188] sm:$0xf]
  %v2041 = vld [vmem:[%s1 + $0x18c] sm:$0xf]
  %v2042 = vld [vmem:[%s1 + $0x190] sm:$0xf]
  %v2043 = vld [vmem:[%s1 + $0x194] sm:$0xf]
  %v2044 = vld [vmem:[%s1 + $0x198] sm:$0xf]
  %v2045 = vld [vmem:[%s1 + $0x19c] sm:$0xf]
  %v2046 = vld [vmem:[%s1 + $0x1a0] sm:$0xf]
  %v2047 = vld [vmem:[%s1 + $0x1a4] sm:$0xf]
  %v2048 = vld [vmem:[%s1 + $0x1a8] sm:$0xf]
  %v2049 = vld [vmem:[%s1 + $0x1ac] sm:$0xf]
  %v2050 = vld [vmem:[%s1 + $0x1b0] sm:$0xf]
  %v2051 = vld [vmem:[%s1 + $0x1b4] sm:$0xf]
  %v2052 = vld [vmem:[%s1 + $0x1b8] sm:$0xf]
  %v2053 = vld [vmem:[%s1 + $0x1bc] sm:$0xf]
  %v2054 = vld [vmem:[%s1 + $0x1c0] sm:$0xf]
  %v2055 = vld [vmem:[%s1 + $0x1c4] sm:$0xf]
  %v2056 = vld [vmem:[%s1 + $0x1c8] sm:$0xf]
  %v2057 = vld [vmem:[%s1 + $0x1cc] sm:$0xf]
  %v2058 = vld [vmem:[%s1 + $0x1d0] sm:$0xf]
  %v2059 = vld [vmem:[%s1 + $0x1d4] sm:$0xf]
  %v2060 = vld [vmem:[%s1 + $0x1d8] sm:$0xf]
  %v2061 = vld [vmem:[%s1 + $0x1dc] sm:$0xf]
  %v2062 = vld [vmem:[%s1 + $0x1e0] sm:$0xf]
  %v2063 = vld [vmem:[%s1 + $0x1e4] sm:$0xf]
  %v2064 = vld [vmem:[%s1 + $0x1e8] sm:$0xf]
  %v2065 = vld [vmem:[%s1 + $0x1ec] sm:$0xf]
  %v2066 = vld [vmem:[%s1 + $0x1f0] sm:$0xf]
  %v2067 = vld [vmem:[%s1 + $0x1f4] sm:$0xf]
  %v2068 = vld [vmem:[%s1 + $0x1f8] sm:$0xf]
  %v2069 = vld [vmem:[%s1 + $0x1fc] sm:$0xf]
  %v2070 = vld [vmem:[%s1 + $0x200] sm:$0xf]
  %v2071 = vld [vmem:[%s1 + $0x204] sm:$0xf]
  %v2072 = vld [vmem:[%s1 + $0x208] sm:$0xf]
  %v2073 = vld [vmem:[%s1 + $0x20c] sm:$0xf]
  %v2074 = vld [vmem:[%s1 + $0x210] sm:$0xf]
  %v2075 = vld [vmem:[%s1 + $0x214] sm:$0xf]
  %v2076 = vld [vmem:[%s1 + $0x218] sm:$0xf]
  %v2077 = vld [vmem:[%s1 + $0x21c] sm:$0xf]
  %v2078 = vld [vmem:[%s1 + $0x220] sm:$0xf]
  %v2079 = vld [vmem:[%s1 + $0x224] sm:$0xf]
  %v2080 = vld [vmem:[%s1 + $0x228] sm:$0xf]
  %v2081 = vld [vmem:[%s1 + $0x22c] sm:$0xf]
  %v2082 = vld [vmem:[%s1 + $0x230] sm:$0xf]
  %v2083 = vld [vmem:[%s1 + $0x234] sm:$0xf]
  %v2084 = vld [vmem:[%s1 + $0x238] sm:$0xf]
  %v2085 = vld [vmem:[%s1 + $0x23c] sm:$0xf]
  %v2166 = vunpack.c.l.b16 %v1862
  %v2167 = vunpack.c.h.b16 %v1862
  %v2168 = vunpack.c.l.b16 %v1863
  %v2169 = vunpack.c.h.b16 %v1863
  %v2170 = vunpack.c.l.b16 %v1864
  %v2171 = vunpack.c.h.b16 %v1864
  %v2172 = vunpack.c.l.b16 %v1865
  %v2173 = vunpack.c.h.b16 %v1865
  %v2174 = vunpack.c.l.b16 %v1866
  %v2175 = vunpack.c.l.b16 %v1867
  %v2176 = vunpack.c.h.b16 %v1867
  %v2177 = vunpack.c.l.b16 %v1868
  %v2178 = vunpack.c.h.b16 %v1868
  %v2179 = vunpack.c.l.b16 %v1869
  %v2180 = vunpack.c.h.b16 %v1869
  %v2181 = vunpack.c.l.b16 %v1870
  %v2182 = vunpack.c.h.b16 %v1870
  %v2183 = vunpack.c.l.b16 %v1871
  %v2184 = vunpack.c.l.b16 %v1872
  %v2185 = vunpack.c.h.b16 %v1872
  %v2186 = vunpack.c.l.b16 %v1873
  %v2187 = vunpack.c.h.b16 %v1873
  %v2188 = vunpack.c.l.b16 %v1874
  %v2189 = vunpack.c.h.b16 %v1874
  %v2190 = vunpack.c.l.b16 %v1875
  %v2191 = vunpack.c.h.b16 %v1875
  %v2192 = vunpack.c.l.b16 %v1876
  %v2193 = vunpack.c.l.b16 %v1877
  %v2194 = vunpack.c.h.b16 %v1877
  %v2195 = vunpack.c.l.b16 %v1878
  %v2196 = vunpack.c.h.b16 %v1878
  %v2197 = vunpack.c.l.b16 %v1879
  %v2198 = vunpack.c.h.b16 %v1879
  %v2199 = vunpack.c.l.b16 %v1880
  %v2200 = vunpack.c.h.b16 %v1880
  %v2201 = vunpack.c.l.b16 %v1881
  %v2202 = vunpack.c.l.b16 %v1882
  %v2203 = vunpack.c.h.b16 %v1882
  %v2204 = vunpack.c.l.b16 %v1883
  %v2205 = vunpack.c.h.b16 %v1883
  %v2206 = vunpack.c.l.b16 %v1884
  %v2207 = vunpack.c.h.b16 %v1884
  %v2208 = vunpack.c.l.b16 %v1885
  %v2209 = vunpack.c.h.b16 %v1885
  %v2210 = vunpack.c.l.b16 %v1886
  %v2211 = vunpack.c.l.b16 %v1887
  %v2212 = vunpack.c.h.b16 %v1887
  %v2213 = vunpack.c.l.b16 %v1888
  %v2214 = vunpack.c.h.b16 %v1888
  %v2215 = vunpack.c.l.b16 %v1889
  %v2216 = vunpack.c.h.b16 %v1889
  %v2217 = vunpack.c.l.b16 %v1890
  %v2218 = vunpack.c.h.b16 %v1890
  %v2219 = vunpack.c.l.b16 %v1891
  %v2220 = vunpack.c.l.b16 %v1892
  %v2221 = vunpack.c.h.b16 %v1892
  %v2222 = vunpack.c.l.b16 %v1893
  %v2223 = vunpack.c.h.b16 %v1893
  %v2224 = vunpack.c.l.b16 %v1894
  %v2225 = vunpack.c.h.b16 %v1894
  %v2226 = vunpack.c.l.b16 %v1895
  %v2227 = vunpack.c.h.b16 %v1895
  %v2228 = vunpack.c.l.b16 %v1896
  %v2229 = vunpack.c.l.b16 %v1897
  %v2230 = vunpack.c.h.b16 %v1897
  %v2231 = vunpack.c.l.b16 %v1898
  %v2232 = vunpack.c.h.b16 %v1898
  %v2233 = vunpack.c.l.b16 %v1899
  %v2234 = vunpack.c.h.b16 %v1899
  %v2235 = vunpack.c.l.b16 %v1900
  %v2236 = vunpack.c.h.b16 %v1900
  %v2237 = vunpack.c.l.b16 %v1901
  %v2238 = vunpack.c.l.b16 %v1902
  %v2239 = vunpack.c.h.b16 %v1902
  %v2240 = vunpack.c.l.b16 %v1903
  %v2241 = vunpack.c.h.b16 %v1903
  %v2242 = vunpack.c.l.b16 %v1904
  %v2243 = vunpack.c.h.b16 %v1904
  %v2244 = vunpack.c.l.b16 %v1905
  %v2245 = vunpack.c.h.b16 %v1905
  %v2246 = vunpack.c.l.b16 %v1906
  %v2247 = vunpack.c.l.b16 %v1907
  %v2248 = vunpack.c.h.b16 %v1907
  %v2249 = vunpack.c.l.b16 %v1908
  %v2250 = vunpack.c.h.b16 %v1908
  %v2251 = vunpack.c.l.b16 %v1909
  %v2252 = vunpack.c.h.b16 %v1909
  %v2253 = vunpack.c.l.b16 %v1910
  %v2254 = vunpack.c.h.b16 %v1910
  %v2255 = vunpack.c.l.b16 %v1911
  %v2256 = vunpack.c.l.b16 %v1912
  %v2257 = vunpack.c.h.b16 %v1912
  %v2258 = vunpack.c.l.b16 %v1913
  %v2259 = vunpack.c.h.b16 %v1913
  %v2260 = vunpack.c.l.b16 %v1914
  %v2261 = vunpack.c.h.b16 %v1914
  %v2262 = vunpack.c.l.b16 %v1915
  %v2263 = vunpack.c.h.b16 %v1915
  %v2264 = vunpack.c.l.b16 %v1916
  %v2265 = vunpack.c.l.b16 %v1917
  %v2266 = vunpack.c.h.b16 %v1917
  %v2267 = vunpack.c.l.b16 %v1918
  %v2268 = vunpack.c.h.b16 %v1918
  %v2269 = vunpack.c.l.b16 %v1919
  %v2270 = vunpack.c.h.b16 %v1919
  %v2271 = vunpack.c.l.b16 %v1920
  %v2272 = vunpack.c.h.b16 %v1920
  %v2273 = vunpack.c.l.b16 %v1921
  %v2274 = vunpack.c.l.b16 %v1922
  %v2275 = vunpack.c.h.b16 %v1922
  %v2276 = vunpack.c.l.b16 %v1923
  %v2277 = vunpack.c.h.b16 %v1923
  %v2278 = vunpack.c.l.b16 %v1924
  %v2279 = vunpack.c.h.b16 %v1924
  %v2280 = vunpack.c.l.b16 %v1925
  %v2281 = vunpack.c.h.b16 %v1925
  %v2282 = vunpack.c.l.b16 %v1926
  %v2283 = vunpack.c.l.b16 %v1927
  %v2284 = vunpack.c.h.b16 %v1927
  %v2285 = vunpack.c.l.b16 %v1928
  %v2286 = vunpack.c.h.b16 %v1928
  %v2287 = vunpack.c.l.b16 %v1929
  %v2288 = vunpack.c.h.b16 %v1929
  %v2289 = vunpack.c.l.b16 %v1930
  %v2290 = vunpack.c.h.b16 %v1930
  %v2291 = vunpack.c.l.b16 %v1931
  %v2292 = vunpack.c.l.b16 %v1932
  %v2293 = vunpack.c.h.b16 %v1932
  %v2294 = vunpack.c.l.b16 %v1933
  %v2295 = vunpack.c.h.b16 %v1933
  %v2296 = vunpack.c.l.b16 %v1934
  %v2297 = vunpack.c.h.b16 %v1934
  %v2298 = vunpack.c.l.b16 %v1935
  %v2299 = vunpack.c.h.b16 %v1935
  %v2300 = vunpack.c.l.b16 %v1936
  %v2301 = vunpack.c.l.b16 %v1937
  %v2302 = vunpack.c.h.b16 %v1937
  %v2303 = vunpack.c.l.b16 %v1938
  %v2304 = vunpack.c.h.b16 %v1938
  %v2305 = vunpack.c.l.b16 %v1939
  %v2306 = vunpack.c.h.b16 %v1939
  %v2307 = vunpack.c.l.b16 %v1940
  %v2308 = vunpack.c.h.b16 %v1940
  %v2309 = vunpack.c.l.b16 %v1941
  %v2310 = vpack.c.b16 %v2175, %v2166
  %v2311 = vpack.c.b16 %v2176, %v2167
  %v2312 = vpack.c.b16 %v2177, %v2168
  %v2313 = vpack.c.b16 %v2178, %v2169
  %v2314 = vpack.c.b16 %v2179, %v2170
  %v2315 = vpack.c.b16 %v2180, %v2171
  %v2316 = vpack.c.b16 %v2181, %v2172
  %v2317 = vpack.c.b16 %v2182, %v2173
  %v2318 = vpack.c.b16 %v2183, %v2174
  %v2319 = vpack.c.b16 %v2193, %v2184
  %v2320 = vpack.c.b16 %v2194, %v2185
  %v2321 = vpack.c.b16 %v2195, %v2186
  %v2322 = vpack.c.b16 %v2196, %v2187
  %v2323 = vpack.c.b16 %v2197, %v2188
  %v2324 = vpack.c.b16 %v2198, %v2189
  %v2325 = vpack.c.b16 %v2199, %v2190
  %v2326 = vpack.c.b16 %v2200, %v2191
  %v2327 = vpack.c.b16 %v2201, %v2192
  %v2328 = vpack.c.b16 %v2211, %v2202
  %v2329 = vpack.c.b16 %v2212, %v2203
  %v2330 = vpack.c.b16 %v2213, %v2204
  %v2331 = vpack.c.b16 %v2214, %v2205
  %v2332 = vpack.c.b16 %v2215, %v2206
  %v2333 = vpack.c.b16 %v2216, %v2207
  %v2334 = vpack.c.b16 %v2217, %v2208
  %v2335 = vpack.c.b16 %v2218, %v2209
  %v2336 = vpack.c.b16 %v2219, %v2210
  %v2337 = vpack.c.b16 %v2229, %v2220
  %v2338 = vpack.c.b16 %v2230, %v2221
  %v2339 = vpack.c.b16 %v2231, %v2222
  %v2340 = vpack.c.b16 %v2232, %v2223
  %v2341 = vpack.c.b16 %v2233, %v2224
  %v2342 = vpack.c.b16 %v2234, %v2225
  %v2343 = vpack.c.b16 %v2235, %v2226
  %v2344 = vpack.c.b16 %v2236, %v2227
  %v2345 = vpack.c.b16 %v2237, %v2228
  %v2346 = vpack.c.b16 %v2247, %v2238
  %v2347 = vpack.c.b16 %v2248, %v2239
  %v2348 = vpack.c.b16 %v2249, %v2240
  %v2349 = vpack.c.b16 %v2250, %v2241
  %v2350 = vpack.c.b16 %v2251, %v2242
  %v2351 = vpack.c.b16 %v2252, %v2243
  %v2352 = vpack.c.b16 %v2253, %v2244
  %v2353 = vpack.c.b16 %v2254, %v2245
  %v2354 = vpack.c.b16 %v2255, %v2246
  %v2355 = vpack.c.b16 %v2265, %v2256
  %v2356 = vpack.c.b16 %v2266, %v2257
  %v2357 = vpack.c.b16 %v2267, %v2258
  %v2358 = vpack.c.b16 %v2268, %v2259
  %v2359 = vpack.c.b16 %v2269, %v2260
  %v2360 = vpack.c.b16 %v2270, %v2261
  %v2361 = vpack.c.b16 %v2271, %v2262
  %v2362 = vpack.c.b16 %v2272, %v2263
  %v2363 = vpack.c.b16 %v2273, %v2264
  %v2364 = vpack.c.b16 %v2283, %v2274
  %v2365 = vpack.c.b16 %v2284, %v2275
  %v2366 = vpack.c.b16 %v2285, %v2276
  %v2367 = vpack.c.b16 %v2286, %v2277
  %v2368 = vpack.c.b16 %v2287, %v2278
  %v2369 = vpack.c.b16 %v2288, %v2279
  %v2370 = vpack.c.b16 %v2289, %v2280
  %v2371 = vpack.c.b16 %v2290, %v2281
  %v2372 = vpack.c.b16 %v2291, %v2282
  %v2373 = vpack.c.b16 %v2301, %v2292
  %v2374 = vpack.c.b16 %v2302, %v2293
  %v2375 = vpack.c.b16 %v2303, %v2294
  %v2376 = vpack.c.b16 %v2304, %v2295
  %v2377 = vpack.c.b16 %v2305, %v2296
  %v2378 = vpack.c.b16 %v2306, %v2297
  %v2379 = vpack.c.b16 %v2307, %v2298
  %v2380 = vpack.c.b16 %v2308, %v2299
  %v2381 = vpack.c.b16 %v2309, %v2300
  %v2598 = vunpack.c.l.b16 %v1942
  %v2599 = vunpack.c.l.b16 %v1943
  %v2600 = vunpack.c.l.b16 %v1944
  %v2601 = vunpack.c.l.b16 %v1945
  %v2602 = vunpack.c.l.b16 %v1946
  %v2603 = vunpack.c.l.b16 %v1947
  %v2604 = vunpack.c.l.b16 %v1948
  %v2605 = vunpack.c.l.b16 %v1949
  %v2606 = vunpack.c.l.b16 %v1950
  %v2607 = vunpack.c.l.b16 %v1951
  %v2608 = vunpack.c.l.b16 %v1952
  %v2609 = vunpack.c.l.b16 %v1953
  %v2610 = vunpack.c.l.b16 %v1954
  %v2611 = vunpack.c.l.b16 %v1955
  %v2612 = vunpack.c.l.b16 %v1956
  %v2613 = vunpack.c.l.b16 %v1957
  %v2614 = vunpack.c.l.b16 %v1958
  %v2615 = vunpack.c.l.b16 %v1959
  %v2616 = vunpack.c.l.b16 %v1960
  %v2617 = vunpack.c.l.b16 %v1961
  %v2618 = vunpack.c.l.b16 %v1962
  %v2619 = vunpack.c.l.b16 %v1963
  %v2620 = vunpack.c.l.b16 %v1964
  %v2621 = vunpack.c.l.b16 %v1965
  %v2622 = vunpack.c.l.b16 %v1966
  %v2623 = vunpack.c.l.b16 %v1967
  %v2624 = vunpack.c.l.b16 %v1968
  %v2625 = vunpack.c.l.b16 %v1969
  %v2626 = vunpack.c.l.b16 %v1970
  %v2627 = vunpack.c.l.b16 %v1971
  %v2628 = vunpack.c.l.b16 %v1972
  %v2629 = vunpack.c.l.b16 %v1973
  %v2630 = vunpack.c.l.b16 %v1974
  %v2631 = vunpack.c.l.b16 %v1975
  %v2632 = vunpack.c.l.b16 %v1976
  %v2633 = vunpack.c.l.b16 %v1977
  %v2634 = vunpack.c.l.b16 %v1978
  %v2635 = vunpack.c.l.b16 %v1979
  %v2636 = vunpack.c.l.b16 %v1980
  %v2637 = vunpack.c.l.b16 %v1981
  %v2638 = vunpack.c.l.b16 %v1982
  %v2639 = vunpack.c.l.b16 %v1983
  %v2640 = vunpack.c.l.b16 %v1984
  %v2641 = vunpack.c.l.b16 %v1985
  %v2642 = vunpack.c.l.b16 %v1986
  %v2643 = vunpack.c.l.b16 %v1987
  %v2644 = vunpack.c.l.b16 %v1988
  %v2645 = vunpack.c.l.b16 %v1989
  %v2646 = vunpack.c.l.b16 %v1990
  %v2647 = vunpack.c.l.b16 %v1991
  %v2648 = vunpack.c.l.b16 %v1992
  %v2649 = vunpack.c.l.b16 %v1993
  %v2650 = vunpack.c.l.b16 %v1994
  %v2651 = vunpack.c.l.b16 %v1995
  %v2652 = vunpack.c.l.b16 %v1996
  %v2653 = vunpack.c.l.b16 %v1997
  %v2654 = vunpack.c.l.b16 %v1998
  %v2655 = vunpack.c.l.b16 %v1999
  %v2656 = vunpack.c.l.b16 %v2000
  %v2657 = vunpack.c.l.b16 %v2001
  %v2658 = vunpack.c.l.b16 %v2002
  %v2659 = vunpack.c.l.b16 %v2003
  %v2660 = vunpack.c.l.b16 %v2004
  %v2661 = vunpack.c.l.b16 %v2005
  %v2662 = vunpack.c.l.b16 %v2006
  %v2663 = vunpack.c.l.b16 %v2007
  %v2664 = vunpack.c.l.b16 %v2008
  %v2665 = vunpack.c.l.b16 %v2009
  %v2666 = vunpack.c.l.b16 %v2010
  %v2667 = vunpack.c.l.b16 %v2011
  %v2668 = vunpack.c.l.b16 %v2012
  %v2669 = vunpack.c.l.b16 %v2013
  %v2670 = vunpack.c.l.b16 %v2014
  %v2671 = vunpack.c.l.b16 %v2015
  %v2672 = vunpack.c.l.b16 %v2016
  %v2673 = vunpack.c.l.b16 %v2017
  %v2674 = vunpack.c.l.b16 %v2018
  %v2675 = vunpack.c.l.b16 %v2019
  %v2676 = vunpack.c.l.b16 %v2020
  %v2677 = vunpack.c.l.b16 %v2021
  %v2678 = vunpack.c.l.b16 %v2022
  %v2679 = vunpack.c.l.b16 %v2023
  %v2680 = vunpack.c.l.b16 %v2024
  %v2681 = vunpack.c.l.b16 %v2025
  %v2682 = vunpack.c.l.b16 %v2026
  %v2683 = vunpack.c.l.b16 %v2027
  %v2684 = vunpack.c.l.b16 %v2028
  %v2685 = vunpack.c.l.b16 %v2029
  %v2686 = vunpack.c.l.b16 %v2030
  %v2687 = vunpack.c.l.b16 %v2031
  %v2688 = vunpack.c.l.b16 %v2032
  %v2689 = vunpack.c.l.b16 %v2033
  %v2690 = vunpack.c.l.b16 %v2034
  %v2691 = vunpack.c.l.b16 %v2035
  %v2692 = vunpack.c.l.b16 %v2036
  %v2693 = vunpack.c.l.b16 %v2037
  %v2694 = vunpack.c.l.b16 %v2038
  %v2695 = vunpack.c.l.b16 %v2039
  %v2696 = vunpack.c.l.b16 %v2040
  %v2697 = vunpack.c.l.b16 %v2041
  %v2698 = vunpack.c.l.b16 %v2042
  %v2699 = vunpack.c.l.b16 %v2043
  %v2700 = vunpack.c.l.b16 %v2044
  %v2701 = vunpack.c.l.b16 %v2045
  %v2702 = vunpack.c.l.b16 %v2046
  %v2703 = vunpack.c.l.b16 %v2047
  %v2704 = vunpack.c.l.b16 %v2048
  %v2705 = vunpack.c.l.b16 %v2049
  %v2706 = vunpack.c.l.b16 %v2050
  %v2707 = vunpack.c.l.b16 %v2051
  %v2708 = vunpack.c.l.b16 %v2052
  %v2709 = vunpack.c.l.b16 %v2053
  %v2710 = vunpack.c.l.b16 %v2054
  %v2711 = vunpack.c.l.b16 %v2055
  %v2712 = vunpack.c.l.b16 %v2056
  %v2713 = vunpack.c.l.b16 %v2057
  %v2714 = vunpack.c.l.b16 %v2058
  %v2715 = vunpack.c.l.b16 %v2059
  %v2716 = vunpack.c.l.b16 %v2060
  %v2717 = vunpack.c.l.b16 %v2061
  %v2718 = vunpack.c.l.b16 %v2062
  %v2719 = vunpack.c.l.b16 %v2063
  %v2720 = vunpack.c.l.b16 %v2064
  %v2721 = vunpack.c.l.b16 %v2065
  %v2722 = vunpack.c.l.b16 %v2066
  %v2723 = vunpack.c.l.b16 %v2067
  %v2724 = vunpack.c.l.b16 %v2068
  %v2725 = vunpack.c.l.b16 %v2069
  %v2726 = vunpack.c.l.b16 %v2070
  %v2727 = vunpack.c.l.b16 %v2071
  %v2728 = vunpack.c.l.b16 %v2072
  %v2729 = vunpack.c.l.b16 %v2073
  %v2730 = vunpack.c.l.b16 %v2074
  %v2731 = vunpack.c.l.b16 %v2075
  %v2732 = vunpack.c.l.b16 %v2076
  %v2733 = vunpack.c.l.b16 %v2077
  %v2734 = vunpack.c.l.b16 %v2078
  %v2735 = vunpack.c.l.b16 %v2079
  %v2736 = vunpack.c.l.b16 %v2080
  %v2737 = vunpack.c.l.b16 %v2081
  %v2738 = vunpack.c.l.b16 %v2082
  %v2739 = vunpack.c.l.b16 %v2083
  %v2740 = vunpack.c.l.b16 %v2084
  %v2741 = vunpack.c.l.b16 %v2085
  %v2742 = vpack.c.b16 %v2599, %v2598
  %v2743 = vpack.c.b16 %v2601, %v2600
  %v2744 = vpack.c.b16 %v2603, %v2602
  %v2745 = vpack.c.b16 %v2605, %v2604
  %v2746 = vpack.c.b16 %v2607, %v2606
  %v2747 = vpack.c.b16 %v2609, %v2608
  %v2748 = vpack.c.b16 %v2611, %v2610
  %v2749 = vpack.c.b16 %v2613, %v2612
  %v2750 = vpack.c.b16 %v2615, %v2614
  %v2751 = vpack.c.b16 %v2617, %v2616
  %v2752 = vpack.c.b16 %v2619, %v2618
  %v2753 = vpack.c.b16 %v2621, %v2620
  %v2754 = vpack.c.b16 %v2623, %v2622
  %v2755 = vpack.c.b16 %v2625, %v2624
  %v2756 = vpack.c.b16 %v2627, %v2626
  %v2757 = vpack.c.b16 %v2629, %v2628
  %v2758 = vpack.c.b16 %v2631, %v2630
  %v2759 = vpack.c.b16 %v2633, %v2632
  %v2760 = vpack.c.b16 %v2635, %v2634
  %v2761 = vpack.c.b16 %v2637, %v2636
  %v2762 = vpack.c.b16 %v2639, %v2638
  %v2763 = vpack.c.b16 %v2641, %v2640
  %v2764 = vpack.c.b16 %v2643, %v2642
  %v2765 = vpack.c.b16 %v2645, %v2644
  %v2766 = vpack.c.b16 %v2647, %v2646
  %v2767 = vpack.c.b16 %v2649, %v2648
  %v2768 = vpack.c.b16 %v2651, %v2650
  %v2769 = vpack.c.b16 %v2653, %v2652
  %v2770 = vpack.c.b16 %v2655, %v2654
  %v2771 = vpack.c.b16 %v2657, %v2656
  %v2772 = vpack.c.b16 %v2659, %v2658
  %v2773 = vpack.c.b16 %v2661, %v2660
  %v2774 = vpack.c.b16 %v2663, %v2662
  %v2775 = vpack.c.b16 %v2665, %v2664
  %v2776 = vpack.c.b16 %v2667, %v2666
  %v2777 = vpack.c.b16 %v2669, %v2668
  %v2778 = vpack.c.b16 %v2671, %v2670
  %v2779 = vpack.c.b16 %v2673, %v2672
  %v2780 = vpack.c.b16 %v2675, %v2674
  %v2781 = vpack.c.b16 %v2677, %v2676
  %v2782 = vpack.c.b16 %v2679, %v2678
  %v2783 = vpack.c.b16 %v2681, %v2680
  %v2784 = vpack.c.b16 %v2683, %v2682
  %v2785 = vpack.c.b16 %v2685, %v2684
  %v2786 = vpack.c.b16 %v2687, %v2686
  %v2787 = vpack.c.b16 %v2689, %v2688
  %v2788 = vpack.c.b16 %v2691, %v2690
  %v2789 = vpack.c.b16 %v2693, %v2692
  %v2790 = vpack.c.b16 %v2695, %v2694
  %v2791 = vpack.c.b16 %v2697, %v2696
  %v2792 = vpack.c.b16 %v2699, %v2698
  %v2793 = vpack.c.b16 %v2701, %v2700
  %v2794 = vpack.c.b16 %v2703, %v2702
  %v2795 = vpack.c.b16 %v2705, %v2704
  %v2796 = vpack.c.b16 %v2707, %v2706
  %v2797 = vpack.c.b16 %v2709, %v2708
  %v2798 = vpack.c.b16 %v2711, %v2710
  %v2799 = vpack.c.b16 %v2713, %v2712
  %v2800 = vpack.c.b16 %v2715, %v2714
  %v2801 = vpack.c.b16 %v2717, %v2716
  %v2802 = vpack.c.b16 %v2719, %v2718
  %v2803 = vpack.c.b16 %v2721, %v2720
  %v2804 = vpack.c.b16 %v2723, %v2722
  %v2805 = vpack.c.b16 %v2725, %v2724
  %v2806 = vpack.c.b16 %v2727, %v2726
  %v2807 = vpack.c.b16 %v2729, %v2728
  %v2808 = vpack.c.b16 %v2731, %v2730
  %v2809 = vpack.c.b16 %v2733, %v2732
  %v2810 = vpack.c.b16 %v2735, %v2734
  %v2811 = vpack.c.b16 %v2737, %v2736
  %v2812 = vpack.c.b16 %v2739, %v2738
  %v2813 = vpack.c.b16 %v2741, %v2740
  %2886 = vmatprep.subr.bf16.mxu0 0
  %2887 = vmatpush1.bf16.msra.mxu0 %v2749
  %2888 = vmatprep.subr.bf16.mxu0 0
  %2889 = vmatpush1.bf16.msra.mxu0 %v2748
  %2890 = vmatprep.subr.bf16.mxu0 0
  %2891 = vmatpush1.bf16.msra.mxu0 %v2747
  %2892 = vmatprep.subr.bf16.mxu0 0
  %2893 = vmatpush1.bf16.msra.mxu0 %v2746
  %2894 = vmatprep.subr.bf16.mxu0 0
  %2895 = vmatpush1.bf16.msra.mxu0 %v2745
  %2896 = vmatprep.subr.bf16.mxu0 0
  %2897 = vmatpush1.bf16.msra.mxu0 %v2744
  %2898 = vmatprep.subr.bf16.mxu0 0
  %2899 = vmatpush1.bf16.msra.mxu0 %v2743
  %2900 = vmatprep.subr.bf16.mxu0 0
  %2901 = vmatpush1.bf16.msra.mxu0 %v2742
  %2902 = vmatprep.subr.bf16.mxu0 0
  %2903 = vmatpush2.bf16.msra.mxu0 %v2757
  %2904 = vmatprep.subr.bf16.mxu0 0
  %2905 = vmatpush2.bf16.msra.mxu0 %v2756
  %2906 = vmatprep.subr.bf16.mxu0 0
  %2907 = vmatpush2.bf16.msra.mxu0 %v2755
  %2908 = vmatprep.subr.bf16.mxu0 0
  %2909 = vmatpush2.bf16.msra.mxu0 %v2754
  %2910 = vmatprep.subr.bf16.mxu0 0
  %2911 = vmatpush2.bf16.msra.mxu0 %v2753
  %2912 = vmatprep.subr.bf16.mxu0 0
  %2913 = vmatpush2.bf16.msra.mxu0 %v2752
  %2914 = vmatprep.subr.bf16.mxu0 0
  %2915 = vmatpush2.bf16.msra.mxu0 %v2751
  %2916 = vmatprep.subr.bf16.mxu0 0
  %2917 = vmatpush2.bf16.msra.mxu0 %v2750
  %2918 = vmatprep.mubr.bf16.mxu0 %v2311
  %2919 = vmatmul.mubr.bf16.gmra.mxu0 %v2310
  %v2920 = vpop.f32.mrf.mxu0
  %v2921 = vadd.f32 0.0, %v2920
  %v2922 = vpop.f32.mrf.mxu0
  %v2923 = vpop.f32.mrf.mxu0
  %v2924 = vadd.f32 0.0, %v2923
  %v2925 = vpop.f32.mrf.mxu0
  %2926 = vmatprep.mubr.bf16.mxu0 %v2320
  %2927 = vmatmul.mubr.bf16.gmra.mxu0 %v2319
  %v2928 = vpop.f32.mrf.mxu0
  %v2929 = vadd.f32 0.0, %v2928
  %v2930 = vpop.f32.mrf.mxu0
  %v2931 = vpop.f32.mrf.mxu0
  %v2932 = vadd.f32 0.0, %v2931
  %v2933 = vpop.f32.mrf.mxu0
  %2934 = vmatprep.mubr.bf16.mxu0 %v2329
  %2935 = vmatmul.mubr.bf16.gmra.mxu0 %v2328
  %v2936 = vpop.f32.mrf.mxu0
  %v2937 = vadd.f32 0.0, %v2936
  %v2938 = vpop.f32.mrf.mxu0
  %v2939 = vpop.f32.mrf.mxu0
  %v2940 = vadd.f32 0.0, %v2939
  %v2941 = vpop.f32.mrf.mxu0
  %2942 = vmatprep.mubr.bf16.mxu0 %v2338
  %2943 = vmatmul.mubr.bf16.gmra.mxu0 %v2337
  %v2944 = vpop.f32.mrf.mxu0
  %v2945 = vadd.f32 0.0, %v2944
  %v2946 = vpop.f32.mrf.mxu0
  %v2947 = vpop.f32.mrf.mxu0
  %v2948 = vadd.f32 0.0, %v2947
  %v2949 = vpop.f32.mrf.mxu0
  %2950 = vmatprep.mubr.bf16.mxu0 %v2347
  %2951 = vmatmul.mubr.bf16.gmra.mxu0 %v2346
  %v2952 = vpop.f32.mrf.mxu0
  %v2953 = vadd.f32 0.0, %v2952
  %v2954 = vpop.f32.mrf.mxu0
  %v2955 = vpop.f32.mrf.mxu0
  %v2956 = vadd.f32 0.0, %v2955
  %v2957 = vpop.f32.mrf.mxu0
  %2958 = vmatprep.mubr.bf16.mxu0 %v2356
  %2959 = vmatmul.mubr.bf16.gmra.mxu0 %v2355
  %v2960 = vpop.f32.mrf.mxu0
  %v2961 = vadd.f32 0.0, %v2960
  %v2962 = vpop.f32.mrf.mxu0
  %v2963 = vpop.f32.mrf.mxu0
  %v2964 = vadd.f32 0.0, %v2963
  %v2965 = vpop.f32.mrf.mxu0
  %2966 = vmatprep.mubr.bf16.mxu0 %v2365
  %2967 = vmatmul.mubr.bf16.gmra.mxu0 %v2364
  %v2968 = vpop.f32.mrf.mxu0
  %v2969 = vadd.f32 0.0, %v2968
  %v2970 = vpop.f32.mrf.mxu0
  %v2971 = vpop.f32.mrf.mxu0
  %v2972 = vadd.f32 0.0, %v2971
  %v2973 = vpop.f32.mrf.mxu0
  %2974 = vmatprep.mubr.bf16.mxu0 %v2374
  %2975 = vmatmul.mubr.bf16.gmra.mxu0 %v2373
  %v2976 = vpop.f32.mrf.mxu0
  %v2977 = vadd.f32 0.0, %v2976
  %v2978 = vpop.f32.mrf.mxu0
  %v2979 = vpop.f32.mrf.mxu0
  %v2980 = vadd.f32 0.0, %v2979
  %v2981 = vpop.f32.mrf.mxu0
  %2982 = vdwg.mxu0
  %2983 = vmatprep.subr.bf16.mxu0 0
  %2984 = vmatpush1.bf16.msra.mxu0 %v2765
  %2985 = vmatprep.subr.bf16.mxu0 0
  %2986 = vmatpush1.bf16.msra.mxu0 %v2764
  %2987 = vmatprep.subr.bf16.mxu0 0
  %2988 = vmatpush1.bf16.msra.mxu0 %v2763
  %2989 = vmatprep.subr.bf16.mxu0 0
  %2990 = vmatpush1.bf16.msra.mxu0 %v2762
  %2991 = vmatprep.subr.bf16.mxu0 0
  %2992 = vmatpush1.bf16.msra.mxu0 %v2761
  %2993 = vmatprep.subr.bf16.mxu0 0
  %2994 = vmatpush1.bf16.msra.mxu0 %v2760
  %2995 = vmatprep.subr.bf16.mxu0 0
  %2996 = vmatpush1.bf16.msra.mxu0 %v2759
  %2997 = vmatprep.subr.bf16.mxu0 0
  %2998 = vmatpush1.bf16.msra.mxu0 %v2758
  %2999 = vmatprep.subr.bf16.mxu0 0
  %3000 = vmatpush2.bf16.msra.mxu0 %v2773
  %3001 = vmatprep.subr.bf16.mxu0 0
  %3002 = vmatpush2.bf16.msra.mxu0 %v2772
  %3003 = vmatprep.subr.bf16.mxu0 0
  %3004 = vmatpush2.bf16.msra.mxu0 %v2771
  %3005 = vmatprep.subr.bf16.mxu0 0
  %3006 = vmatpush2.bf16.msra.mxu0 %v2770
  %3007 = vmatprep.subr.bf16.mxu0 0
  %3008 = vmatpush2.bf16.msra.mxu0 %v2769
  %3009 = vmatprep.subr.bf16.mxu0 0
  %3010 = vmatpush2.bf16.msra.mxu0 %v2768
  %3011 = vmatprep.subr.bf16.mxu0 0
  %3012 = vmatpush2.bf16.msra.mxu0 %v2767
  %3013 = vmatprep.subr.bf16.mxu0 0
  %3014 = vmatpush2.bf16.msra.mxu0 %v2766
  %3015 = vmatprep.mubr.bf16.mxu0 %v2313
  %3016 = vmatmul.mubr.bf16.gmra.mxu0 %v2312
  %v3017 = vpop.f32.mrf.mxu0
  %v3018 = vadd.f32 %v2921, %v3017
  %v3019 = vpop.f32.mrf.mxu0
  %v3020 = vpop.f32.mrf.mxu0
  %v3021 = vadd.f32 %v2924, %v3020
  %v3022 = vpop.f32.mrf.mxu0
  %3023 = vmatprep.mubr.bf16.mxu0 %v2322
  %3024 = vmatmul.mubr.bf16.gmra.mxu0 %v2321
  %v3025 = vpop.f32.mrf.mxu0
  %v3026 = vadd.f32 %v2929, %v3025
  %v3027 = vpop.f32.mrf.mxu0
  %v3028 = vpop.f32.mrf.mxu0
  %v3029 = vadd.f32 %v2932, %v3028
  %v3030 = vpop.f32.mrf.mxu0
  %3031 = vmatprep.mubr.bf16.mxu0 %v2331
  %3032 = vmatmul.mubr.bf16.gmra.mxu0 %v2330
  %v3033 = vpop.f32.mrf.mxu0
  %v3034 = vadd.f32 %v2937, %v3033
  %v3035 = vpop.f32.mrf.mxu0
  %v3036 = vpop.f32.mrf.mxu0
  %v3037 = vadd.f32 %v2940, %v3036
  %v3038 = vpop.f32.mrf.mxu0
  %3039 = vmatprep.mubr.bf16.mxu0 %v2340
  %3040 = vmatmul.mubr.bf16.gmra.mxu0 %v2339
  %v3041 = vpop.f32.mrf.mxu0
  %v3042 = vadd.f32 %v2945, %v3041
  %v3043 = vpop.f32.mrf.mxu0
  %v3044 = vpop.f32.mrf.mxu0
  %v3045 = vadd.f32 %v2948, %v3044
  %v3046 = vpop.f32.mrf.mxu0
  %3047 = vmatprep.mubr.bf16.mxu0 %v2349
  %3048 = vmatmul.mubr.bf16.gmra.mxu0 %v2348
  %v3049 = vpop.f32.mrf.mxu0
  %v3050 = vadd.f32 %v2953, %v3049
  %v3051 = vpop.f32.mrf.mxu0
  %v3052 = vpop.f32.mrf.mxu0
  %v3053 = vadd.f32 %v2956, %v3052
  %v3054 = vpop.f32.mrf.mxu0
  %3055 = vmatprep.mubr.bf16.mxu0 %v2358
  %3056 = vmatmul.mubr.bf16.gmra.mxu0 %v2357
  %v3057 = vpop.f32.mrf.mxu0
  %v3058 = vadd.f32 %v2961, %v3057
  %v3059 = vpop.f32.mrf.mxu0
  %v3060 = vpop.f32.mrf.mxu0
  %v3061 = vadd.f32 %v2964, %v3060
  %v3062 = vpop.f32.mrf.mxu0
  %3063 = vmatprep.mubr.bf16.mxu0 %v2367
  %3064 = vmatmul.mubr.bf16.gmra.mxu0 %v2366
  %v3065 = vpop.f32.mrf.mxu0
  %v3066 = vadd.f32 %v2969, %v3065
  %v3067 = vpop.f32.mrf.mxu0
  %v3068 = vpop.f32.mrf.mxu0
  %v3069 = vadd.f32 %v2972, %v3068
  %v3070 = vpop.f32.mrf.mxu0
  %3071 = vmatprep.mubr.bf16.mxu0 %v2376
  %3072 = vmatmul.mubr.bf16.gmra.mxu0 %v2375
  %v3073 = vpop.f32.mrf.mxu0
  %v3074 = vadd.f32 %v2977, %v3073
  %v3075 = vpop.f32.mrf.mxu0
  %v3076 = vpop.f32.mrf.mxu0
  %v3077 = vadd.f32 %v2980, %v3076
  %v3078 = vpop.f32.mrf.mxu0
  %3079 = vdwg.mxu0
  %3080 = vmatprep.subr.bf16.mxu0 0
  %3081 = vmatpush1.bf16.msra.mxu0 %v2781
  %3082 = vmatprep.subr.bf16.mxu0 0
  %3083 = vmatpush1.bf16.msra.mxu0 %v2780
  %3084 = vmatprep.subr.bf16.mxu0 0
  %3085 = vmatpush1.bf16.msra.mxu0 %v2779
  %3086 = vmatprep.subr.bf16.mxu0 0
  %3087 = vmatpush1.bf16.msra.mxu0 %v2778
  %3088 = vmatprep.subr.bf16.mxu0 0
  %3089 = vmatpush1.bf16.msra.mxu0 %v2777
  %3090 = vmatprep.subr.bf16.mxu0 0
  %3091 = vmatpush1.bf16.msra.mxu0 %v2776
  %3092 = vmatprep.subr.bf16.mxu0 0
  %3093 = vmatpush1.bf16.msra.mxu0 %v2775
  %3094 = vmatprep.subr.bf16.mxu0 0
  %3095 = vmatpush1.bf16.msra.mxu0 %v2774
  %3096 = vmatprep.subr.bf16.mxu0 0
  %3097 = vmatpush2.bf16.msra.mxu0 %v2789
  %3098 = vmatprep.subr.bf16.mxu0 0
  %3099 = vmatpush2.bf16.msra.mxu0 %v2788
  %3100 = vmatprep.subr.bf16.mxu0 0
  %3101 = vmatpush2.bf16.msra.mxu0 %v2787
  %3102 = vmatprep.subr.bf16.mxu0 0
  %3103 = vmatpush2.bf16.msra.mxu0 %v2786
  %3104 = vmatprep.subr.bf16.mxu0 0
  %3105 = vmatpush2.bf16.msra.mxu0 %v2785
  %3106 = vmatprep.subr.bf16.mxu0 0
  %3107 = vmatpush2.bf16.msra.mxu0 %v2784
  %3108 = vmatprep.subr.bf16.mxu0 0
  %3109 = vmatpush2.bf16.msra.mxu0 %v2783
  %3110 = vmatprep.subr.bf16.mxu0 0
  %3111 = vmatpush2.bf16.msra.mxu0 %v2782
  %3112 = vmatprep.mubr.bf16.mxu0 %v2315
  %3113 = vmatmul.mubr.bf16.gmra.mxu0 %v2314
  %v3114 = vpop.f32.mrf.mxu0
  %v3115 = vadd.f32 %v3018, %v3114
  %v3116 = vpop.f32.mrf.mxu0
  %v3117 = vpop.f32.mrf.mxu0
  %v3118 = vadd.f32 %v3021, %v3117
  %v3119 = vpop.f32.mrf.mxu0
  %3120 = vmatprep.mubr.bf16.mxu0 %v2324
  %3121 = vmatmul.mubr.bf16.gmra.mxu0 %v2323
  %v3122 = vpop.f32.mrf.mxu0
  %v3123 = vadd.f32 %v3026, %v3122
  %v3124 = vpop.f32.mrf.mxu0
  %v3125 = vpop.f32.mrf.mxu0
  %v3126 = vadd.f32 %v3029, %v3125
  %v3127 = vpop.f32.mrf.mxu0
  %3128 = vmatprep.mubr.bf16.mxu0 %v2333
  %3129 = vmatmul.mubr.bf16.gmra.mxu0 %v2332
  %v3130 = vpop.f32.mrf.mxu0
  %v3131 = vadd.f32 %v3034, %v3130
  %v3132 = vpop.f32.mrf.mxu0
  %v3133 = vpop.f32.mrf.mxu0
  %v3134 = vadd.f32 %v3037, %v3133
  %v3135 = vpop.f32.mrf.mxu0
  %3136 = vmatprep.mubr.bf16.mxu0 %v2342
  %3137 = vmatmul.mubr.bf16.gmra.mxu0 %v2341
  %v3138 = vpop.f32.mrf.mxu0
  %v3139 = vadd.f32 %v3042, %v3138
  %v3140 = vpop.f32.mrf.mxu0
  %v3141 = vpop.f32.mrf.mxu0
  %v3142 = vadd.f32 %v3045, %v3141
  %v3143 = vpop.f32.mrf.mxu0
  %3144 = vmatprep.mubr.bf16.mxu0 %v2351
  %3145 = vmatmul.mubr.bf16.gmra.mxu0 %v2350
  %v3146 = vpop.f32.mrf.mxu0
  %v3147 = vadd.f32 %v3050, %v3146
  %v3148 = vpop.f32.mrf.mxu0
  %v3149 = vpop.f32.mrf.mxu0
  %v3150 = vadd.f32 %v3053, %v3149
  %v3151 = vpop.f32.mrf.mxu0
  %3152 = vmatprep.mubr.bf16.mxu0 %v2360
  %3153 = vmatmul.mubr.bf16.gmra.mxu0 %v2359
  %v3154 = vpop.f32.mrf.mxu0
  %v3155 = vadd.f32 %v3058, %v3154
  %v3156 = vpop.f32.mrf.mxu0
  %v3157 = vpop.f32.mrf.mxu0
  %v3158 = vadd.f32 %v3061, %v3157
  %v3159 = vpop.f32.mrf.mxu0
  %3160 = vmatprep.mubr.bf16.mxu0 %v2369
  %3161 = vmatmul.mubr.bf16.gmra.mxu0 %v2368
  %v3162 = vpop.f32.mrf.mxu0
  %v3163 = vadd.f32 %v3066, %v3162
  %v3164 = vpop.f32.mrf.mxu0
  %v3165 = vpop.f32.mrf.mxu0
  %v3166 = vadd.f32 %v3069, %v3165
  %v3167 = vpop.f32.mrf.mxu0
  %3168 = vmatprep.mubr.bf16.mxu0 %v2378
  %3169 = vmatmul.mubr.bf16.gmra.mxu0 %v2377
  %v3170 = vpop.f32.mrf.mxu0
  %v3171 = vadd.f32 %v3074, %v3170
  %v3172 = vpop.f32.mrf.mxu0
  %v3173 = vpop.f32.mrf.mxu0
  %v3174 = vadd.f32 %v3077, %v3173
  %v3175 = vpop.f32.mrf.mxu0
  %3176 = vdwg.mxu0
  %3177 = vmatprep.subr.bf16.mxu0 0
  %3178 = vmatpush1.bf16.msra.mxu0 %v2797
  %3179 = vmatprep.subr.bf16.mxu0 0
  %3180 = vmatpush1.bf16.msra.mxu0 %v2796
  %3181 = vmatprep.subr.bf16.mxu0 0
  %3182 = vmatpush1.bf16.msra.mxu0 %v2795
  %3183 = vmatprep.subr.bf16.mxu0 0
  %3184 = vmatpush1.bf16.msra.mxu0 %v2794
  %3185 = vmatprep.subr.bf16.mxu0 0
  %3186 = vmatpush1.bf16.msra.mxu0 %v2793
  %3187 = vmatprep.subr.bf16.mxu0 0
  %3188 = vmatpush1.bf16.msra.mxu0 %v2792
  %3189 = vmatprep.subr.bf16.mxu0 0
  %3190 = vmatpush1.bf16.msra.mxu0 %v2791
  %3191 = vmatprep.subr.bf16.mxu0 0
  %3192 = vmatpush1.bf16.msra.mxu0 %v2790
  %3193 = vmatprep.subr.bf16.mxu0 0
  %3194 = vmatpush2.bf16.msra.mxu0 %v2805
  %3195 = vmatprep.subr.bf16.mxu0 0
  %3196 = vmatpush2.bf16.msra.mxu0 %v2804
  %3197 = vmatprep.subr.bf16.mxu0 0
  %3198 = vmatpush2.bf16.msra.mxu0 %v2803
  %3199 = vmatprep.subr.bf16.mxu0 0
  %3200 = vmatpush2.bf16.msra.mxu0 %v2802
  %3201 = vmatprep.subr.bf16.mxu0 0
  %3202 = vmatpush2.bf16.msra.mxu0 %v2801
  %3203 = vmatprep.subr.bf16.mxu0 0
  %3204 = vmatpush2.bf16.msra.mxu0 %v2800
  %3205 = vmatprep.subr.bf16.mxu0 0
  %3206 = vmatpush2.bf16.msra.mxu0 %v2799
  %3207 = vmatprep.subr.bf16.mxu0 0
  %3208 = vmatpush2.bf16.msra.mxu0 %v2798
  %3209 = vmatprep.mubr.bf16.mxu0 %v2317
  %3210 = vmatmul.mubr.bf16.gmra.mxu0 %v2316
  %v3211 = vpop.f32.mrf.mxu0
  %v3212 = vadd.f32 %v3115, %v3211
  %v3213 = vpop.f32.mrf.mxu0
  %v3214 = vpop.f32.mrf.mxu0
  %v3215 = vadd.f32 %v3118, %v3214
  %v3216 = vpop.f32.mrf.mxu0
  %3217 = vmatprep.mubr.bf16.mxu0 %v2326
  %3218 = vmatmul.mubr.bf16.gmra.mxu0 %v2325
  %v3219 = vpop.f32.mrf.mxu0
  %v3220 = vadd.f32 %v3123, %v3219
  %v3221 = vpop.f32.mrf.mxu0
  %v3222 = vpop.f32.mrf.mxu0
  %v3223 = vadd.f32 %v3126, %v3222
  %v3224 = vpop.f32.mrf.mxu0
  %3225 = vmatprep.mubr.bf16.mxu0 %v2335
  %3226 = vmatmul.mubr.bf16.gmra.mxu0 %v2334
  %v3227 = vpop.f32.mrf.mxu0
  %v3228 = vadd.f32 %v3131, %v3227
  %v3229 = vpop.f32.mrf.mxu0
  %v3230 = vpop.f32.mrf.mxu0
  %v3231 = vadd.f32 %v3134, %v3230
  %v3232 = vpop.f32.mrf.mxu0
  %3233 = vmatprep.mubr.bf16.mxu0 %v2344
  %3234 = vmatmul.mubr.bf16.gmra.mxu0 %v2343
  %v3235 = vpop.f32.mrf.mxu0
  %v3236 = vadd.f32 %v3139, %v3235
  %v3237 = vpop.f32.mrf.mxu0
  %v3238 = vpop.f32.mrf.mxu0
  %v3239 = vadd.f32 %v3142, %v3238
  %v3240 = vpop.f32.mrf.mxu0
  %3241 = vmatprep.mubr.bf16.mxu0 %v2353
  %3242 = vmatmul.mubr.bf16.gmra.mxu0 %v2352
  %v3243 = vpop.f32.mrf.mxu0
  %v3244 = vadd.f32 %v3147, %v3243
  %v3245 = vpop.f32.mrf.mxu0
  %v3246 = vpop.f32.mrf.mxu0
  %v3247 = vadd.f32 %v3150, %v3246
  %v3248 = vpop.f32.mrf.mxu0
  %3249 = vmatprep.mubr.bf16.mxu0 %v2362
  %3250 = vmatmul.mubr.bf16.gmra.mxu0 %v2361
  %v3251 = vpop.f32.mrf.mxu0
  %v3252 = vadd.f32 %v3155, %v3251
  %v3253 = vpop.f32.mrf.mxu0
  %v3254 = vpop.f32.mrf.mxu0
  %v3255 = vadd.f32 %v3158, %v3254
  %v3256 = vpop.f32.mrf.mxu0
  %3257 = vmatprep.mubr.bf16.mxu0 %v2371
  %3258 = vmatmul.mubr.bf16.gmra.mxu0 %v2370
  %v3259 = vpop.f32.mrf.mxu0
  %v3260 = vadd.f32 %v3163, %v3259
  %v3261 = vpop.f32.mrf.mxu0
  %v3262 = vpop.f32.mrf.mxu0
  %v3263 = vadd.f32 %v3166, %v3262
  %v3264 = vpop.f32.mrf.mxu0
  %3265 = vmatprep.mubr.bf16.mxu0 %v2380
  %3266 = vmatmul.mubr.bf16.gmra.mxu0 %v2379
  %v3267 = vpop.f32.mrf.mxu0
  %v3268 = vadd.f32 %v3171, %v3267
  %v3269 = vpop.f32.mrf.mxu0
  %v3270 = vpop.f32.mrf.mxu0
  %v3271 = vadd.f32 %v3174, %v3270
  %v3272 = vpop.f32.mrf.mxu0
  %3273 = vdwg.mxu0
  %3274 = vmatprep.subr.bf16.mxu0 0
  %3275 = vmatpush1.bf16.msra.mxu0 %v2813
  %3276 = vmatprep.subr.bf16.mxu0 0
  %3277 = vmatpush1.bf16.msra.mxu0 %v2812
  %3278 = vmatprep.subr.bf16.mxu0 0
  %3279 = vmatpush1.bf16.msra.mxu0 %v2811
  %3280 = vmatprep.subr.bf16.mxu0 0
  %3281 = vmatpush1.bf16.msra.mxu0 %v2810
  %3282 = vmatprep.subr.bf16.mxu0 0
  %3283 = vmatpush1.bf16.msra.mxu0 %v2809
  %3284 = vmatprep.subr.bf16.mxu0 0
  %3285 = vmatpush1.bf16.msra.mxu0 %v2808
  %3286 = vmatprep.subr.bf16.mxu0 0
  %3287 = vmatpush1.bf16.msra.mxu0 %v2807
  %3288 = vmatprep.subr.bf16.mxu0 0
  %3289 = vmatpush1.bf16.msra.mxu0 %v2806
  %3290 = vmatprep.subr.bf16.mxu0 0
  %3291 = vmatpush2.bf16.msra.mxu0 0
  %3292 = vmatprep.subr.bf16.mxu0 0
  %3293 = vmatpush2.bf16.msra.mxu0 0
  %3294 = vmatprep.subr.bf16.mxu0 0
  %3295 = vmatpush2.bf16.msra.mxu0 0
  %3296 = vmatprep.subr.bf16.mxu0 0
  %3297 = vmatpush2.bf16.msra.mxu0 0
  %3298 = vmatprep.subr.bf16.mxu0 0
  %3299 = vmatpush2.bf16.msra.mxu0 0
  %3300 = vmatprep.subr.bf16.mxu0 0
  %3301 = vmatpush2.bf16.msra.mxu0 0
  %3302 = vmatprep.subr.bf16.mxu0 0
  %3303 = vmatpush2.bf16.msra.mxu0 0
  %3304 = vmatprep.subr.bf16.mxu0 0
  %3305 = vmatpush2.bf16.msra.mxu0 0
  %3306 = vmatprep.mubr.bf16.mxu0 0
  %3307 = vmatmul.mubr.bf16.gmra.mxu0 %v2318
  %v3308 = vpop.f32.mrf.mxu0
  %v3309 = vadd.f32 %v3212, %v3308
  %v3310 = vpop.f32.mrf.mxu0
  %v3311 = vpop.f32.mrf.mxu0
  %v3312 = vadd.f32 %v3215, %v3311
  %v3313 = vpop.f32.mrf.mxu0
  %3314 = vmatprep.mubr.bf16.mxu0 0
  %3315 = vmatmul.mubr.bf16.gmra.mxu0 %v2327
  %v3316 = vpop.f32.mrf.mxu0
  %v3317 = vadd.f32 %v3220, %v3316
  %v3318 = vpop.f32.mrf.mxu0
  %v3319 = vpop.f32.mrf.mxu0
  %v3320 = vadd.f32 %v3223, %v3319
  %v3321 = vpop.f32.mrf.mxu0
  %3322 = vmatprep.mubr.bf16.mxu0 0
  %3323 = vmatmul.mubr.bf16.gmra.mxu0 %v2336
  %v3324 = vpop.f32.mrf.mxu0
  %v3325 = vadd.f32 %v3228, %v3324
  %v3326 = vpop.f32.mrf.mxu0
  %v3327 = vpop.f32.mrf.mxu0
  %v3328 = vadd.f32 %v3231, %v3327
  %v3329 = vpop.f32.mrf.mxu0
  %3330 = vmatprep.mubr.bf16.mxu0 0
  %3331 = vmatmul.mubr.bf16.gmra.mxu0 %v2345
  %v3332 = vpop.f32.mrf.mxu0
  %v3333 = vadd.f32 %v3236, %v3332
  %v3334 = vpop.f32.mrf.mxu0
  %v3335 = vpop.f32.mrf.mxu0
  %v3336 = vadd.f32 %v3239, %v3335
  %v3337 = vpop.f32.mrf.mxu0
  %3338 = vmatprep.mubr.bf16.mxu0 0
  %3339 = vmatmul.mubr.bf16.gmra.mxu0 %v2354
  %v3340 = vpop.f32.mrf.mxu0
  %v3341 = vadd.f32 %v3244, %v3340
  %v3342 = vpop.f32.mrf.mxu0
  %v3343 = vpop.f32.mrf.mxu0
  %v3344 = vadd.f32 %v3247, %v3343
  %v3345 = vpop.f32.mrf.mxu0
  %3346 = vmatprep.mubr.bf16.mxu0 0
  %3347 = vmatmul.mubr.bf16.gmra.mxu0 %v2363
  %v3348 = vpop.f32.mrf.mxu0
  %v3349 = vadd.f32 %v3252, %v3348
  %v3350 = vpop.f32.mrf.mxu0
  %v3351 = vpop.f32.mrf.mxu0
  %v3352 = vadd.f32 %v3255, %v3351
  %v3353 = vpop.f32.mrf.mxu0
  %3354 = vmatprep.mubr.bf16.mxu0 0
  %3355 = vmatmul.mubr.bf16.gmra.mxu0 %v2372
  %v3356 = vpop.f32.mrf.mxu0
  %v3357 = vadd.f32 %v3260, %v3356
  %v3358 = vpop.f32.mrf.mxu0
  %v3359 = vpop.f32.mrf.mxu0
  %v3360 = vadd.f32 %v3263, %v3359
  %v3361 = vpop.f32.mrf.mxu0
  %3362 = vmatprep.mubr.bf16.mxu0 0
  %3363 = vmatmul.mubr.bf16.gmra.mxu0 %v2381
  %v3364 = vpop.f32.mrf.mxu0
  %v3365 = vadd.f32 %v3268, %v3364
  %v3366 = vpop.f32.mrf.mxu0
  %v3367 = vpop.f32.mrf.mxu0
  %v3368 = vadd.f32 %v3271, %v3367
  %v3369 = vpop.f32.mrf.mxu0
  %3370 = vdwg.mxu0
  %v3371 = vadd.f32 %v3309, %v3312
  %v3372 = vadd.f32 %v3371, %v3317
  %v3373 = vadd.f32 %v3372, %v3320
  %v3374 = vadd.f32 %v3373, %v3325
  %v3375 = vadd.f32 %v3374, %v3328
  %v3376 = vadd.f32 %v3375, %v3333
  %v3377 = vadd.f32 %v3376, %v3336
  %v3378 = vadd.f32 %v3377, %v3341
  %v3379 = vadd.f32 %v3378, %v3344
  %v3380 = vadd.f32 %v3379, %v3349
  %v3381 = vadd.f32 %v3380, %v3352
  %v3382 = vadd.f32 %v3381, %v3357
  %v3383 = vadd.f32 %v3382, %v3360
  %v3384 = vadd.f32 %v3383, %v3365
  %v3385 = vadd.f32 %v3384, %v3368
  %v3386 = vrot.slane %v3385, 4
  %v3387 = vadd.f32 %v3385, %v3386
  %v3388 = vrot.slane %v3387, 2
  %v3389 = vadd.f32 %v3387, %v3388
  %v3390 = vrot.slane %v3389, 1
  %v3391 = vadd.f32 %v3389, %v3390
  %3392 = vst [vmem:[%s3] sm:$0x1] %v3391
  %v3393 = vmul.f32 %v3309, %v3309
  %v3394 = vmul.f32 %v3312, %v3312
  %v3395 = vmul.f32 %v3317, %v3317
  %v3396 = vmul.f32 %v3320, %v3320
  %v3397 = vmul.f32 %v3325, %v3325
  %v3398 = vmul.f32 %v3328, %v3328
  %v3399 = vmul.f32 %v3333, %v3333
  %v3400 = vmul.f32 %v3336, %v3336
  %v3401 = vmul.f32 %v3341, %v3341
  %v3402 = vmul.f32 %v3344, %v3344
  %v3403 = vmul.f32 %v3349, %v3349
  %v3404 = vmul.f32 %v3352, %v3352
  %v3405 = vmul.f32 %v3357, %v3357
  %v3406 = vmul.f32 %v3360, %v3360
  %v3407 = vmul.f32 %v3365, %v3365
  %v3408 = vmul.f32 %v3368, %v3368
  %v3409 = vadd.f32 %v3393, %v3394
  %v3410 = vadd.f32 %v3409, %v3395
  %v3411 = vadd.f32 %v3410, %v3396
  %v3412 = vadd.f32 %v3411, %v3397
  %v3413 = vadd.f32 %v3412, %v3398
  %v3414 = vadd.f32 %v3413, %v3399
  %v3415 = vadd.f32 %v3414, %v3400
  %v3416 = vadd.f32 %v3415, %v3401
  %v3417 = vadd.f32 %v3416, %v3402
  %v3418 = vadd.f32 %v3417, %v3403
  %v3419 = vadd.f32 %v3418, %v3404
  %v3420 = vadd.f32 %v3419, %v3405
  %v3421 = vadd.f32 %v3420, %v3406
  %v3422 = vadd.f32 %v3421, %v3407
  %v3423 = vadd.f32 %v3422, %v3408
  %v3424 = vrot.slane %v3423, 4
  %v3425 = vadd.f32 %v3423, %v3424
  %v3426 = vrot.slane %v3425, 2
  %v3427 = vadd.f32 %v3425, %v3426
  %v3428 = vrot.slane %v3427, 1
  %v3429 = vadd.f32 %v3427, %v3428
  %3430 = vst [vmem:[%s3 + $0x1] sm:$0x1] %v3429
  %v3431 = vpack.c.bf16 %v3309, %v3309
  %v3432 = vpack.c.bf16 %v3312, %v3312
  %v3433 = vpack.c.bf16 %v3317, %v3317
  %v3434 = vpack.c.bf16 %v3320, %v3320
  %v3435 = vpack.c.bf16 %v3325, %v3325
  %v3436 = vpack.c.bf16 %v3328, %v3328
  %v3437 = vpack.c.bf16 %v3333, %v3333
  %v3438 = vpack.c.bf16 %v3336, %v3336
  %v3439 = vpack.c.bf16 %v3341, %v3341
  %v3440 = vpack.c.bf16 %v3344, %v3344
  %v3441 = vpack.c.bf16 %v3349, %v3349
  %v3442 = vpack.c.bf16 %v3352, %v3352
  %v3443 = vpack.c.bf16 %v3357, %v3357
  %v3444 = vpack.c.bf16 %v3360, %v3360
  %v3445 = vpack.c.bf16 %v3365, %v3365
  %v3446 = vpack.c.bf16 %v3368, %v3368
  %3447 = vst [vmem:[%s2] sm:$0xf] %v3431
  %3448 = vst [vmem:[%s2 + $0x4] sm:$0xf] %v3432
  %3449 = vst [vmem:[%s2 + $0x8] sm:$0xf] %v3433
  %3450 = vst [vmem:[%s2 + $0xc] sm:$0xf] %v3434
  %3451 = vst [vmem:[%s2 + $0x10] sm:$0xf] %v3435
  %3452 = vst [vmem:[%s2 + $0x14] sm:$0xf] %v3436
  %3453 = vst [vmem:[%s2 + $0x18] sm:$0xf] %v3437
  %3454 = vst [vmem:[%s2 + $0x1c] sm:$0xf] %v3438
  %3455 = vst [vmem:[%s2 + $0x20] sm:$0xf] %v3439
  %3456 = vst [vmem:[%s2 + $0x24] sm:$0xf] %v3440
  %3457 = vst [vmem:[%s2 + $0x28] sm:$0xf] %v3441
  %3458 = vst [vmem:[%s2 + $0x2c] sm:$0xf] %v3442
  %3459 = vst [vmem:[%s2 + $0x30] sm:$0xf] %v3443
  %3460 = vst [vmem:[%s2 + $0x34] sm:$0xf] %v3444
  %3461 = vst [vmem:[%s2 + $0x38] sm:$0xf] %v3445
  %3462 = vst [vmem:[%s2 + $0x3c] sm:$0xf] %v3446
  // Predicated region
  $region14: #{residual_layer.3} parent=0 // pred_check
    _
  $region15: #{residual_layer.3} parent=0 // pred_check_branch
    %3464 = sbr.rel (0) target = $region17
  $region16: #{residual_layer.3} parent=0 // pred_region
    _
  $region17: #{residual_layer.3} parent=0 // pred_fallthru
    _
  // Predicated region
  $region18: #{residual_layer.3} parent=0 // pred_check
    _
  $region19: #{residual_layer.3} parent=0 // pred_check_branch
    %3466 = sbr.rel (0) target = $region21
  $region20: #{residual_layer.3} parent=0 // pred_region
    _
  $region21: #{residual_layer.3} parent=0 // pred_fallthru
    _
  // Predicated region
  $region22: #{residual_layer.3} parent=0 // pred_check
    _
  $region23: #{residual_layer.3} parent=0 // pred_check_branch
    %3468 = sbr.rel (0) target = $region25
  $region24: #{residual_layer.3} parent=0 // pred_region
    _
  $region25: #{residual_layer.3} parent=0 // pred_fallthru
    _
  // Predicated region
  $region26: #{residual_layer.3} parent=0 // pred_check
    _
  $region27: #{residual_layer.3} parent=0 // pred_check_branch
    %3470 = sbr.rel (0) target = $region29
  $region28: #{residual_layer.3} parent=0 // pred_region
    _
  $region29: #{residual_layer.3} parent=0 // pred_fallthru
    _

// kernel: residual_layer.4
$region0: #{residual_layer.4}
  #allocation0 [shape = 'u32[]', space=smem, size = 0x4, offset = 0x4, fixed_abs, tag = 'smem constant byte address 0x4 - core index']
  #allocation1 [shape = 'u32[144,128]{1,0:T(1,128)}', space=vmem, size = 0x12000, scoped, tag = 'internal scratch']
  #allocation2 [shape = 'bf16[2,10,10,128]{3,2,1,0:T(8,128)(2,1)}', space=vmem, size = 0x14000, scoped, tag = 'scratch operand']
  #allocation3 [shape = 'bf16[2,64,1152]{2,1,0:T(8,128)(2,1)}', space=vmem, size = 0x48000, scoped, tag = 'scratch operand']
  %s0 = inlined_call_operand.vmem [shape: bf16[2,8,8,128], index: 0, kind: input, shape index: {}]
  %s1 = inlined_call_operand.vmem [shape: f32[1,128], index: 1, kind: input, shape index: {}]
  %s2 = inlined_call_operand.vmem [shape: f32[1,128], index: 2, kind: input, shape index: {}]
  %s3 = inlined_call_operand.vmem [shape: bf16[1152,128], index: 3, kind: input, shape index: {}]
  %s4 = inlined_call_operand.vmem [shape: bf16[2,8,8,128], index: 4, kind: output, shape index: {0}]
  %s5 = inlined_call_operand.vmem [shape: f32[1,2,128], index: 5, kind: output, shape index: {1}]
  %6 = xla_tuple %s4, %s5
  %s7 = sld [smem:[#allocation0]]
  $region38: #{residual_layer.4} parent=0
    _
  %s9 = ssub.s32 1, %s7
  %s10 = scalar_select 0, %s9, %s7
  // Predicated region
  $region2: #{residual_layer.4} parent=0 // pred_check
    _
  $region3: #{residual_layer.4} parent=0 // pred_check_branch
    %12 = sbr.rel (0) target = $region5
  $region4: #{residual_layer.4} parent=0 // pred_region
    _
  $region5: #{residual_layer.4} parent=0 // pred_fallthru
    _
  // Predicated region
  $region6: #{residual_layer.4} parent=0 // pred_check
    _
  $region7: #{residual_layer.4} parent=0 // pred_check_branch
    %14 = sbr.rel (0) target = $region9
  $region8: #{residual_layer.4} parent=0 // pred_region
    _
  $region9: #{residual_layer.4} parent=0 // pred_fallthru
    _
  // Predicated region
  $region10: #{residual_layer.4} parent=0 // pred_check
    _
  $region11: #{residual_layer.4} parent=0 // pred_check_branch
    %16 = sbr.rel (0) target = $region13
  $region12: #{residual_layer.4} parent=0 // pred_region
    _
  $region13: #{residual_layer.4} parent=0 // pred_fallthru
    _
  // Predicated region
  $region14: #{residual_layer.4} parent=0 // pred_check
    _
  $region15: #{residual_layer.4} parent=0 // pred_check_branch
    %18 = sbr.rel (0) target = $region17
  $region16: #{residual_layer.4} parent=0 // pred_region
    _
  $region17: #{residual_layer.4} parent=0 // pred_fallthru
    _
  %p20 = scmp.eq.s32.totalorder 0, 0
  // Predicated region
  $region18: #{residual_layer.4} parent=0 // pred_check
    %p21 = pneg %p20
  $region19: #{residual_layer.4} parent=0 // pred_check_branch
    %23 = sbr.rel (%p21) target = $region21
  $region20: #{residual_layer.4} parent=0 // pred_region
    %24 = vst [vmem:[#allocation2] sm:$0xf] 0
    %25 = vst [vmem:[#allocation2 + $0x4] sm:$0x1] 0
    %s26 = scalar_lea.vmem [#allocation2], 72
    %27 = vst [vmem:[%s26] sm:$0xf] 0
    %28 = vst [vmem:[%s26 + $0x4] sm:$0x1] 0
    %s29 = scalar_lea.vmem [#allocation2], 8
    %vm30 = vcmask 1040384
    %vm31 = vsmask.f32 256
    %vm32 = vmand %vm30, %vm31
    %v33 = vld [vmem:[%s29] sm:$0x1]
    %v34 = vsel %vm32, 0, %v33
    %35 = vst [vmem:[%s29] sm:$0x1] %v34
    %v36 = vld [vmem:[%s29 + $0x8] sm:$0x1]
    %v37 = vsel %vm32, 0, %v36
    %38 = vst [vmem:[%s29 + $0x8] sm:$0x1] %v37
    %v39 = vld [vmem:[%s29 + $0x10] sm:$0x1]
    %v40 = vsel %vm32, 0, %v39
    %41 = vst [vmem:[%s29 + $0x10] sm:$0x1] %v40
    %v42 = vld [vmem:[%s29 + $0x18] sm:$0x1]
    %v43 = vsel %vm32, 0, %v42
    %44 = vst [vmem:[%s29 + $0x18] sm:$0x1] %v43
    %v45 = vld [vmem:[%s29 + $0x20] sm:$0x1]
    %v46 = vsel %vm32, 0, %v45
    %47 = vst [vmem:[%s29 + $0x20] sm:$0x1] %v46
    %v48 = vld [vmem:[%s29 + $0x28] sm:$0x1]
    %v49 = vsel %vm32, 0, %v48
    %50 = vst [vmem:[%s29 + $0x28] sm:$0x1] %v49
    %v51 = vld [vmem:[%s29 + $0x30] sm:$0x1]
    %v52 = vsel %vm32, 0, %v51
    %53 = vst [vmem:[%s29 + $0x30] sm:$0x1] %v52
    %v54 = vld [vmem:[%s29 + $0x38] sm:$0x1]
    %v55 = vsel %vm32, 0, %v54
    %56 = vst [vmem:[%s29 + $0x38] sm:$0x1] %v55
    %vm57 = vsmask.f32 7938
    %vm58 = vmand %vm30, %vm57
    %v59 = vld [vmem:[%s29 + $0x4] sm:$0x1]
    %v60 = vsel %vm58, 0, %v59
    %61 = vst [vmem:[%s29 + $0x4] sm:$0x1] %v60
    %v62 = vld [vmem:[%s29 + $0xc] sm:$0x1]
    %v63 = vsel %vm58, 0, %v62
    %64 = vst [vmem:[%s29 + $0xc] sm:$0x1] %v63
    %v65 = vld [vmem:[%s29 + $0x14] sm:$0x1]
    %v66 = vsel %vm58, 0, %v65
    %67 = vst [vmem:[%s29 + $0x14] sm:$0x1] %v66
    %v68 = vld [vmem:[%s29 + $0x1c] sm:$0x1]
    %v69 = vsel %vm58, 0, %v68
    %70 = vst [vmem:[%s29 + $0x1c] sm:$0x1] %v69
    %v71 = vld [vmem:[%s29 + $0x24] sm:$0x1]
    %v72 = vsel %vm58, 0, %v71
    %73 = vst [vmem:[%s29 + $0x24] sm:$0x1] %v72
    %v74 = vld [vmem:[%s29 + $0x2c] sm:$0x1]
    %v75 = vsel %vm58, 0, %v74
    %76 = vst [vmem:[%s29 + $0x2c] sm:$0x1] %v75
    %v77 = vld [vmem:[%s29 + $0x34] sm:$0x1]
    %v78 = vsel %vm58, 0, %v77
    %79 = vst [vmem:[%s29 + $0x34] sm:$0x1] %v78
    %v80 = vld [vmem:[%s29 + $0x3c] sm:$0x1]
    %v81 = vsel %vm58, 0, %v80
    %82 = vst [vmem:[%s29 + $0x3c] sm:$0x1] %v81
    %s83 = scalar_lea.vmem [#allocation2], 80
    %84 = vst [vmem:[%s83] sm:$0xf] 0
    %85 = vst [vmem:[%s83 + $0x4] sm:$0x1] 0
    %s86 = scalar_lea.vmem [#allocation2], 152
    %87 = vst [vmem:[%s86] sm:$0xf] 0
    %88 = vst [vmem:[%s86 + $0x4] sm:$0x1] 0
    %s89 = scalar_lea.vmem [#allocation2], 88
    %v90 = vld [vmem:[%s89] sm:$0x1]
    %v91 = vsel %vm32, 0, %v90
    %92 = vst [vmem:[%s89] sm:$0x1] %v91
    %v93 = vld [vmem:[%s89 + $0x8] sm:$0x1]
    %v94 = vsel %vm32, 0, %v93
    %95 = vst [vmem:[%s89 + $0x8] sm:$0x1] %v94
    %v96 = vld [vmem:[%s89 + $0x10] sm:$0x1]
    %v97 = vsel %vm32, 0, %v96
    %98 = vst [vmem:[%s89 + $0x10] sm:$0x1] %v97
    %v99 = vld [vmem:[%s89 + $0x18] sm:$0x1]
    %v100 = vsel %vm32, 0, %v99
    %101 = vst [vmem:[%s89 + $0x18] sm:$0x1] %v100
    %v102 = vld [vmem:[%s89 + $0x20] sm:$0x1]
    %v103 = vsel %vm32, 0, %v102
    %104 = vst [vmem:[%s89 + $0x20] sm:$0x1] %v103
    %v105 = vld [vmem:[%s89 + $0x28] sm:$0x1]
    %v106 = vsel %vm32, 0, %v105
    %107 = vst [vmem:[%s89 + $0x28] sm:$0x1] %v106
    %v108 = vld [vmem:[%s89 + $0x30] sm:$0x1]
    %v109 = vsel %vm32, 0, %v108
    %110 = vst [vmem:[%s89 + $0x30] sm:$0x1] %v109
    %v111 = vld [vmem:[%s89 + $0x38] sm:$0x1]
    %v112 = vsel %vm32, 0, %v111
    %113 = vst [vmem:[%s89 + $0x38] sm:$0x1] %v112
    %v114 = vld [vmem:[%s89 + $0x4] sm:$0x1]
    %v115 = vsel %vm58, 0, %v114
    %116 = vst [vmem:[%s89 + $0x4] sm:$0x1] %v115
    %v117 = vld [vmem:[%s89 + $0xc] sm:$0x1]
    %v118 = vsel %vm58, 0, %v117
    %119 = vst [vmem:[%s89 + $0xc] sm:$0x1] %v118
    %v120 = vld [vmem:[%s89 + $0x14] sm:$0x1]
    %v121 = vsel %vm58, 0, %v120
    %122 = vst [vmem:[%s89 + $0x14] sm:$0x1] %v121
    %v123 = vld [vmem:[%s89 + $0x1c] sm:$0x1]
    %v124 = vsel %vm58, 0, %v123
    %125 = vst [vmem:[%s89 + $0x1c] sm:$0x1] %v124
    %v126 = vld [vmem:[%s89 + $0x24] sm:$0x1]
    %v127 = vsel %vm58, 0, %v126
    %128 = vst [vmem:[%s89 + $0x24] sm:$0x1] %v127
    %v129 = vld [vmem:[%s89 + $0x2c] sm:$0x1]
    %v130 = vsel %vm58, 0, %v129
    %131 = vst [vmem:[%s89 + $0x2c] sm:$0x1] %v130
    %v132 = vld [vmem:[%s89 + $0x34] sm:$0x1]
    %v133 = vsel %vm58, 0, %v132
    %134 = vst [vmem:[%s89 + $0x34] sm:$0x1] %v133
    %v135 = vld [vmem:[%s89 + $0x3c] sm:$0x1]
    %v136 = vsel %vm58, 0, %v135
    %137 = vst [vmem:[%s89 + $0x3c] sm:$0x1] %v136
  $region21: #{residual_layer.4} parent=0 // pred_fallthru
    _
  %v138 = vld [vmem:[%s0] sm:$0xf]
  %v139 = vld [vmem:[%s0 + $0x4] sm:$0xf]
  %v140 = vld [vmem:[%s0 + $0x8] sm:$0xf]
  %v141 = vld [vmem:[%s0 + $0xc] sm:$0xf]
  %v142 = vld [vmem:[%s0 + $0x10] sm:$0xf]
  %v143 = vld [vmem:[%s0 + $0x14] sm:$0xf]
  %v144 = vld [vmem:[%s0 + $0x18] sm:$0xf]
  %v145 = vld [vmem:[%s0 + $0x1c] sm:$0xf]
  %v146 = vld [vmem:[%s0 + $0x20] sm:$0xf]
  %v147 = vld [vmem:[%s0 + $0x24] sm:$0xf]
  %v148 = vld [vmem:[%s0 + $0x28] sm:$0xf]
  %v149 = vld [vmem:[%s0 + $0x2c] sm:$0xf]
  %v150 = vld [vmem:[%s0 + $0x30] sm:$0xf]
  %v151 = vld [vmem:[%s0 + $0x34] sm:$0xf]
  %v152 = vld [vmem:[%s0 + $0x38] sm:$0xf]
  %v153 = vld [vmem:[%s0 + $0x3c] sm:$0xf]
  %v154 = vunpack.c.l.bf16 %v138
  %v155 = vunpack.c.l.bf16 %v139
  %v156 = vunpack.c.l.bf16 %v140
  %v157 = vunpack.c.l.bf16 %v141
  %v158 = vunpack.c.l.bf16 %v142
  %v159 = vunpack.c.l.bf16 %v143
  %v160 = vunpack.c.l.bf16 %v144
  %v161 = vunpack.c.l.bf16 %v145
  %v162 = vunpack.c.l.bf16 %v146
  %v163 = vunpack.c.l.bf16 %v147
  %v164 = vunpack.c.l.bf16 %v148
  %v165 = vunpack.c.l.bf16 %v149
  %v166 = vunpack.c.l.bf16 %v150
  %v167 = vunpack.c.l.bf16 %v151
  %v168 = vunpack.c.l.bf16 %v152
  %v169 = vunpack.c.l.bf16 %v153
  %v170 = vld [vmem:[%s1] sm:$0x1]
  %v172 = vlaneseq
  %v173 = vshrl.u32 %v172, 7
  %v174 = vsub.s32 0, %v173
  %v175 = vrot.slane %v170, %v174
  %v177 = vmul.f32 %v154, %v175
  %v178 = vmul.f32 %v155, %v175
  %v179 = vmul.f32 %v156, %v175
  %v180 = vmul.f32 %v157, %v175
  %v181 = vmul.f32 %v158, %v175
  %v182 = vmul.f32 %v159, %v175
  %v183 = vmul.f32 %v160, %v175
  %v184 = vmul.f32 %v161, %v175
  %v185 = vmul.f32 %v162, %v175
  %v186 = vmul.f32 %v163, %v175
  %v187 = vmul.f32 %v164, %v175
  %v188 = vmul.f32 %v165, %v175
  %v189 = vmul.f32 %v166, %v175
  %v190 = vmul.f32 %v167, %v175
  %v191 = vmul.f32 %v168, %v175
  %v192 = vmul.f32 %v169, %v175
  %v193 = vld [vmem:[%s2] sm:$0x1]
  %v195 = vlaneseq
  %v196 = vshrl.u32 %v195, 7
  %v197 = vsub.s32 0, %v196
  %v198 = vrot.slane %v193, %v197
  %v200 = vadd.f32 %v177, %v198
  %v201 = vadd.f32 %v178, %v198
  %v202 = vadd.f32 %v179, %v198
  %v203 = vadd.f32 %v180, %v198
  %v204 = vadd.f32 %v181, %v198
  %v205 = vadd.f32 %v182, %v198
  %v206 = vadd.f32 %v183, %v198
  %v207 = vadd.f32 %v184, %v198
  %v208 = vadd.f32 %v185, %v198
  %v209 = vadd.f32 %v186, %v198
  %v210 = vadd.f32 %v187, %v198
  %v211 = vadd.f32 %v188, %v198
  %v212 = vadd.f32 %v189, %v198
  %v213 = vadd.f32 %v190, %v198
  %v214 = vadd.f32 %v191, %v198
  %v215 = vadd.f32 %v192, %v198
  %v216 = vmax.f32 %v200, 0.0
  %v217 = vmax.f32 %v201, 0.0
  %v218 = vmax.f32 %v202, 0.0
  %v219 = vmax.f32 %v203, 0.0
  %v220 = vmax.f32 %v204, 0.0
  %v221 = vmax.f32 %v205, 0.0
  %v222 = vmax.f32 %v206, 0.0
  %v223 = vmax.f32 %v207, 0.0
  %v224 = vmax.f32 %v208, 0.0
  %v225 = vmax.f32 %v209, 0.0
  %v226 = vmax.f32 %v210, 0.0
  %v227 = vmax.f32 %v211, 0.0
  %v228 = vmax.f32 %v212, 0.0
  %v229 = vmax.f32 %v213, 0.0
  %v230 = vmax.f32 %v214, 0.0
  %v231 = vmax.f32 %v215, 0.0
  %v232 = vpack.c.bf16 %v216, %v216
  %v233 = vpack.c.bf16 %v217, %v217
  %v234 = vpack.c.bf16 %v218, %v218
  %v235 = vpack.c.bf16 %v219, %v219
  %v236 = vpack.c.bf16 %v220, %v220
  %v237 = vpack.c.bf16 %v221, %v221
  %v238 = vpack.c.bf16 %v222, %v222
  %v239 = vpack.c.bf16 %v223, %v223
  %v248 = vunpack.c.l.b16 %v232
  %v249 = vunpack.c.l.b16 %v233
  %v250 = vunpack.c.l.b16 %v234
  %v251 = vunpack.c.l.b16 %v235
  %v252 = vunpack.c.l.b16 %v236
  %v253 = vunpack.c.l.b16 %v237
  %v254 = vunpack.c.l.b16 %v238
  %v255 = vunpack.c.l.b16 %v239
  %v256 = vpack.c.b16 %v248, %v248
  %v257 = vpack.c.b16 %v249, %v249
  %v258 = vpack.c.b16 %v250, %v250
  %v259 = vpack.c.b16 %v251, %v251
  %v260 = vpack.c.b16 %v252, %v252
  %v261 = vpack.c.b16 %v253, %v253
  %v262 = vpack.c.b16 %v254, %v254
  %v263 = vpack.c.b16 %v255, %v255
  %v265 = vshrl.u32 %v256, 16
  %v267 = vrot.slane %v265, 7
  %v268 = vshll.u32 %v256, 16
  %v270 = vor.u32 %v267, %v268
  %v271 = vrot.slane %v267, 4
  %v273 = vshrl.u32 %v257, 16
  %v275 = vrot.slane %v273, 7
  %v276 = vshll.u32 %v257, 16
  %v278 = vor.u32 %v275, %v276
  %v279 = vrot.slane %v275, 4
  %v281 = vshrl.u32 %v258, 16
  %v283 = vrot.slane %v281, 7
  %v284 = vshll.u32 %v258, 16
  %v286 = vor.u32 %v283, %v284
  %v287 = vrot.slane %v283, 4
  %v289 = vshrl.u32 %v259, 16
  %v291 = vrot.slane %v289, 7
  %v292 = vshll.u32 %v259, 16
  %v294 = vor.u32 %v291, %v292
  %v295 = vrot.slane %v291, 4
  %v297 = vshrl.u32 %v260, 16
  %v299 = vrot.slane %v297, 7
  %v300 = vshll.u32 %v260, 16
  %v302 = vor.u32 %v299, %v300
  %v303 = vrot.slane %v299, 4
  %v305 = vshrl.u32 %v261, 16
  %v307 = vrot.slane %v305, 7
  %v308 = vshll.u32 %v261, 16
  %v310 = vor.u32 %v307, %v308
  %v311 = vrot.slane %v307, 4
  %v313 = vshrl.u32 %v262, 16
  %v315 = vrot.slane %v313, 7
  %v316 = vshll.u32 %v262, 16
  %v318 = vor.u32 %v315, %v316
  %v319 = vrot.slane %v315, 4
  %v321 = vshrl.u32 %v263, 16
  %v323 = vrot.slane %v321, 7
  %v324 = vshll.u32 %v263, 16
  %v326 = vor.u32 %v323, %v324
  %v327 = vrot.slane %v323, 4
  %s344 = scalar_lea.vmem [#allocation2], 8
  %vm345 = vcmask 1043456
  %vm346 = vsmask.f32 7938
  %vm347 = vmand %vm345, %vm346
  %v348 = vld [vmem:[%s344] sm:$0xf]
  %v349 = vsel %vm347, %v270, %v348
  %350 = vst [vmem:[%s344] sm:$0xf] %v349
  %vm351 = vcmask 1040384
  %vm352 = vsmask.f32 256
  %vm353 = vmand %vm351, %vm352
  %v354 = vld [vmem:[%s344 + $0x4] sm:$0x1]
  %v355 = vsel %vm353, %v271, %v354
  %356 = vst [vmem:[%s344 + $0x4] sm:$0x1] %v355
  %v357 = vld [vmem:[%s344 + $0x8] sm:$0xf]
  %v358 = vsel %vm347, %v278, %v357
  %359 = vst [vmem:[%s344 + $0x8] sm:$0xf] %v358
  %v360 = vld [vmem:[%s344 + $0xc] sm:$0x1]
  %v361 = vsel %vm353, %v279, %v360
  %362 = vst [vmem:[%s344 + $0xc] sm:$0x1] %v361
  %v363 = vld [vmem:[%s344 + $0x10] sm:$0xf]
  %v364 = vsel %vm347, %v286, %v363
  %365 = vst [vmem:[%s344 + $0x10] sm:$0xf] %v364
  %v366 = vld [vmem:[%s344 + $0x14] sm:$0x1]
  %v367 = vsel %vm353, %v287, %v366
  %368 = vst [vmem:[%s344 + $0x14] sm:$0x1] %v367
  %v369 = vld [vmem:[%s344 + $0x18] sm:$0xf]
  %v370 = vsel %vm347, %v294, %v369
  %371 = vst [vmem:[%s344 + $0x18] sm:$0xf] %v370
  %v372 = vld [vmem:[%s344 + $0x1c] sm:$0x1]
  %v373 = vsel %vm353, %v295, %v372
  %374 = vst [vmem:[%s344 + $0x1c] sm:$0x1] %v373
  %v375 = vld [vmem:[%s344 + $0x20] sm:$0xf]
  %v376 = vsel %vm347, %v302, %v375
  %377 = vst [vmem:[%s344 + $0x20] sm:$0xf] %v376
  %v378 = vld [vmem:[%s344 + $0x24] sm:$0x1]
  %v379 = vsel %vm353, %v303, %v378
  %380 = vst [vmem:[%s344 + $0x24] sm:$0x1] %v379
  %v381 = vld [vmem:[%s344 + $0x28] sm:$0xf]
  %v382 = vsel %vm347, %v310, %v381
  %383 = vst [vmem:[%s344 + $0x28] sm:$0xf] %v382
  %v384 = vld [vmem:[%s344 + $0x2c] sm:$0x1]
  %v385 = vsel %vm353, %v311, %v384
  %386 = vst [vmem:[%s344 + $0x2c] sm:$0x1] %v385
  %v387 = vld [vmem:[%s344 + $0x30] sm:$0xf]
  %v388 = vsel %vm347, %v318, %v387
  %389 = vst [vmem:[%s344 + $0x30] sm:$0xf] %v388
  %v390 = vld [vmem:[%s344 + $0x34] sm:$0x1]
  %v391 = vsel %vm353, %v319, %v390
  %392 = vst [vmem:[%s344 + $0x34] sm:$0x1] %v391
  %v393 = vld [vmem:[%s344 + $0x38] sm:$0xf]
  %v394 = vsel %vm347, %v326, %v393
  %395 = vst [vmem:[%s344 + $0x38] sm:$0xf] %v394
  %v396 = vld [vmem:[%s344 + $0x3c] sm:$0x1]
  %v397 = vsel %vm353, %v327, %v396
  %398 = vst [vmem:[%s344 + $0x3c] sm:$0x1] %v397
  %v399 = vld [vmem:[#allocation2] sm:$0xf]
  %v400 = vld [vmem:[#allocation2 + $0x8] sm:$0xf]
  %v401 = vld [vmem:[#allocation2 + $0x10] sm:$0xf]
  %v402 = vld [vmem:[#allocation2 + $0x18] sm:$0xf]
  %v403 = vld [vmem:[#allocation2 + $0x20] sm:$0xf]
  %v404 = vld [vmem:[#allocation2 + $0x28] sm:$0xf]
  %v405 = vld [vmem:[#allocation2 + $0x30] sm:$0xf]
  %v406 = vld [vmem:[#allocation2 + $0x38] sm:$0xf]
  %407 = vst [vmem:[#allocation3] sm:$0xf] %v399
  %408 = vst [vmem:[#allocation3 + $0x24] sm:$0xf] %v400
  %409 = vst [vmem:[#allocation3 + $0x48] sm:$0xf] %v401
  %410 = vst [vmem:[#allocation3 + $0x6c] sm:$0xf] %v402
  %411 = vst [vmem:[#allocation3 + $0x90] sm:$0xf] %v403
  %412 = vst [vmem:[#allocation3 + $0xb4] sm:$0xf] %v404
  %413 = vst [vmem:[#allocation3 + $0xd8] sm:$0xf] %v405
  %414 = vst [vmem:[#allocation3 + $0xfc] sm:$0xf] %v406
  %v415 = vld [vmem:[#allocation2] sm:$0xf]
  %v416 = vld [vmem:[#allocation2 + $0x4] sm:$0x1]
  %v417 = vld [vmem:[#allocation2 + $0x8] sm:$0xf]
  %v418 = vld [vmem:[#allocation2 + $0xc] sm:$0x1]
  %v419 = vld [vmem:[#allocation2 + $0x10] sm:$0xf]
  %v420 = vld [vmem:[#allocation2 + $0x14] sm:$0x1]
  %v421 = vld [vmem:[#allocation2 + $0x18] sm:$0xf]
  %v422 = vld [vmem:[#allocation2 + $0x1c] sm:$0x1]
  %v423 = vld [vmem:[#allocation2 + $0x20] sm:$0xf]
  %v424 = vld [vmem:[#allocation2 + $0x24] sm:$0x1]
  %v425 = vld [vmem:[#allocation2 + $0x28] sm:$0xf]
  %v426 = vld [vmem:[#allocation2 + $0x2c] sm:$0x1]
  %v427 = vld [vmem:[#allocation2 + $0x30] sm:$0xf]
  %v428 = vld [vmem:[#allocation2 + $0x34] sm:$0x1]
  %v429 = vld [vmem:[#allocation2 + $0x38] sm:$0xf]
  %v430 = vld [vmem:[#allocation2 + $0x3c] sm:$0x1]
  %vm431 = vsmask.f32 3328
  %vm432 = vsmask.f32 7440
  %vm433 = vmor %vm431, %vm432
  %v435 = vshrl.u32 %v415, 16
  %v437 = vrot.slane %v435, 4
  %v438 = vshll.u32 %v415, 16
  %v440 = vrot.slane %v438, 5
  %v441 = vor.u32 %v437, %v440
  %v442 = vrot.slane %v441, 4
  %v444 = vshll.u32 %v416, 16
  %v446 = vrot.slane %v444, 5
  %v447 = vsel %vm433, %v442, %v446
  %v449 = vshrl.u32 %v417, 16
  %v451 = vrot.slane %v449, 4
  %v452 = vshll.u32 %v417, 16
  %v454 = vrot.slane %v452, 5
  %v455 = vor.u32 %v451, %v454
  %v456 = vrot.slane %v455, 4
  %v458 = vshll.u32 %v418, 16
  %v460 = vrot.slane %v458, 5
  %v461 = vsel %vm433, %v456, %v460
  %v463 = vshrl.u32 %v419, 16
  %v465 = vrot.slane %v463, 4
  %v466 = vshll.u32 %v419, 16
  %v468 = vrot.slane %v466, 5
  %v469 = vor.u32 %v465, %v468
  %v470 = vrot.slane %v469, 4
  %v472 = vshll.u32 %v420, 16
  %v474 = vrot.slane %v472, 5
  %v475 = vsel %vm433, %v470, %v474
  %v477 = vshrl.u32 %v421, 16
  %v479 = vrot.slane %v477, 4
  %v480 = vshll.u32 %v421, 16
  %v482 = vrot.slane %v480, 5
  %v483 = vor.u32 %v479, %v482
  %v484 = vrot.slane %v483, 4
  %v486 = vshll.u32 %v422, 16
  %v488 = vrot.slane %v486, 5
  %v489 = vsel %vm433, %v484, %v488
  %v491 = vshrl.u32 %v423, 16
  %v493 = vrot.slane %v491, 4
  %v494 = vshll.u32 %v423, 16
  %v496 = vrot.slane %v494, 5
  %v497 = vor.u32 %v493, %v496
  %v498 = vrot.slane %v497, 4
  %v500 = vshll.u32 %v424, 16
  %v502 = vrot.slane %v500, 5
  %v503 = vsel %vm433, %v498, %v502
  %v505 = vshrl.u32 %v425, 16
  %v507 = vrot.slane %v505, 4
  %v508 = vshll.u32 %v425, 16
  %v510 = vrot.slane %v508, 5
  %v511 = vor.u32 %v507, %v510
  %v512 = vrot.slane %v511, 4
  %v514 = vshll.u32 %v426, 16
  %v516 = vrot.slane %v514, 5
  %v517 = vsel %vm433, %v512, %v516
  %v519 = vshrl.u32 %v427, 16
  %v521 = vrot.slane %v519, 4
  %v522 = vshll.u32 %v427, 16
  %v524 = vrot.slane %v522, 5
  %v525 = vor.u32 %v521, %v524
  %v526 = vrot.slane %v525, 4
  %v528 = vshll.u32 %v428, 16
  %v530 = vrot.slane %v528, 5
  %v531 = vsel %vm433, %v526, %v530
  %v533 = vshrl.u32 %v429, 16
  %v535 = vrot.slane %v533, 4
  %v536 = vshll.u32 %v429, 16
  %v538 = vrot.slane %v536, 5
  %v539 = vor.u32 %v535, %v538
  %v540 = vrot.slane %v539, 4
  %v542 = vshll.u32 %v430, 16
  %v544 = vrot.slane %v542, 5
  %v545 = vsel %vm433, %v540, %v544
  %554 = vst [vmem:[#allocation3 + $0x4] sm:$0xf] %v447
  %555 = vst [vmem:[#allocation3 + $0x28] sm:$0xf] %v461
  %556 = vst [vmem:[#allocation3 + $0x4c] sm:$0xf] %v475
  %557 = vst [vmem:[#allocation3 + $0x70] sm:$0xf] %v489
  %558 = vst [vmem:[#allocation3 + $0x94] sm:$0xf] %v503
  %559 = vst [vmem:[#allocation3 + $0xb8] sm:$0xf] %v517
  %560 = vst [vmem:[#allocation3 + $0xdc] sm:$0xf] %v531
  %561 = vst [vmem:[#allocation3 + $0x100] sm:$0xf] %v545
  %v562 = vld [vmem:[#allocation2] sm:$0xe]
  %v563 = vld [vmem:[#allocation2 + $0x4] sm:$0x1]
  %v564 = vld [vmem:[#allocation2 + $0x8] sm:$0xe]
  %v565 = vld [vmem:[#allocation2 + $0xc] sm:$0x1]
  %v566 = vld [vmem:[#allocation2 + $0x10] sm:$0xe]
  %v567 = vld [vmem:[#allocation2 + $0x14] sm:$0x1]
  %v568 = vld [vmem:[#allocation2 + $0x18] sm:$0xe]
  %v569 = vld [vmem:[#allocation2 + $0x1c] sm:$0x1]
  %v570 = vld [vmem:[#allocation2 + $0x20] sm:$0xe]
  %v571 = vld [vmem:[#allocation2 + $0x24] sm:$0x1]
  %v572 = vld [vmem:[#allocation2 + $0x28] sm:$0xe]
  %v573 = vld [vmem:[#allocation2 + $0x2c] sm:$0x1]
  %v574 = vld [vmem:[#allocation2 + $0x30] sm:$0xe]
  %v575 = vld [vmem:[#allocation2 + $0x34] sm:$0x1]
  %v576 = vld [vmem:[#allocation2 + $0x38] sm:$0xe]
  %v577 = vld [vmem:[#allocation2 + $0x3c] sm:$0x1]
  %vm594 = vcmask 1042432
  %vm595 = vcmask 1046532
  %vm596 = vmor %vm594, %vm595
  %v597 = vrot.slane %v562, 5
  %v598 = vrot.slane %v597, 4
  %v599 = vrot.slane %v563, 5
  %v600 = vsel %vm596, %v598, %v599
  %v601 = vrot.slane %v564, 5
  %v602 = vrot.slane %v601, 4
  %v603 = vrot.slane %v565, 5
  %v604 = vsel %vm596, %v602, %v603
  %v605 = vrot.slane %v566, 5
  %v606 = vrot.slane %v605, 4
  %v607 = vrot.slane %v567, 5
  %v608 = vsel %vm596, %v606, %v607
  %v609 = vrot.slane %v568, 5
  %v610 = vrot.slane %v609, 4
  %v611 = vrot.slane %v569, 5
  %v612 = vsel %vm596, %v610, %v611
  %v613 = vrot.slane %v570, 5
  %v614 = vrot.slane %v613, 4
  %v615 = vrot.slane %v571, 5
  %v616 = vsel %vm596, %v614, %v615
  %v617 = vrot.slane %v572, 5
  %v618 = vrot.slane %v617, 4
  %v619 = vrot.slane %v573, 5
  %v620 = vsel %vm596, %v618, %v619
  %v621 = vrot.slane %v574, 5
  %v622 = vrot.slane %v621, 4
  %v623 = vrot.slane %v575, 5
  %v624 = vsel %vm596, %v622, %v623
  %v625 = vrot.slane %v576, 5
  %v626 = vrot.slane %v625, 4
  %v627 = vrot.slane %v577, 5
  %v628 = vsel %vm596, %v626, %v627
  %637 = vst [vmem:[#allocation3 + $0x8] sm:$0xf] %v600
  %638 = vst [vmem:[#allocation3 + $0x2c] sm:$0xf] %v604
  %639 = vst [vmem:[#allocation3 + $0x50] sm:$0xf] %v608
  %640 = vst [vmem:[#allocation3 + $0x74] sm:$0xf] %v612
  %641 = vst [vmem:[#allocation3 + $0x98] sm:$0xf] %v616
  %642 = vst [vmem:[#allocation3 + $0xbc] sm:$0xf] %v620
  %643 = vst [vmem:[#allocation3 + $0xe0] sm:$0xf] %v624
  %644 = vst [vmem:[#allocation3 + $0x104] sm:$0xf] %v628
  %v645 = vld [vmem:[%s344] sm:$0xf]
  %v646 = vld [vmem:[%s344 + $0x8] sm:$0xf]
  %v647 = vld [vmem:[%s344 + $0x10] sm:$0xf]
  %v648 = vld [vmem:[%s344 + $0x18] sm:$0xf]
  %v649 = vld [vmem:[%s344 + $0x20] sm:$0xf]
  %v650 = vld [vmem:[%s344 + $0x28] sm:$0xf]
  %v651 = vld [vmem:[%s344 + $0x30] sm:$0xf]
  %v652 = vld [vmem:[%s344 + $0x38] sm:$0xf]
  %653 = vst [vmem:[#allocation3 + $0xc] sm:$0xf] %v645
  %654 = vst [vmem:[#allocation3 + $0x30] sm:$0xf] %v646
  %655 = vst [vmem:[#allocation3 + $0x54] sm:$0xf] %v647
  %656 = vst [vmem:[#allocation3 + $0x78] sm:$0xf] %v648
  %657 = vst [vmem:[#allocation3 + $0x9c] sm:$0xf] %v649
  %658 = vst [vmem:[#allocation3 + $0xc0] sm:$0xf] %v650
  %659 = vst [vmem:[#allocation3 + $0xe4] sm:$0xf] %v651
  %660 = vst [vmem:[#allocation3 + $0x108] sm:$0xf] %v652
  %v661 = vld [vmem:[%s344] sm:$0xf]
  %v662 = vld [vmem:[%s344 + $0x4] sm:$0x1]
  %v663 = vld [vmem:[%s344 + $0x8] sm:$0xf]
  %v664 = vld [vmem:[%s344 + $0xc] sm:$0x1]
  %v665 = vld [vmem:[%s344 + $0x10] sm:$0xf]
  %v666 = vld [vmem:[%s344 + $0x14] sm:$0x1]
  %v667 = vld [vmem:[%s344 + $0x18] sm:$0xf]
  %v668 = vld [vmem:[%s344 + $0x1c] sm:$0x1]
  %v669 = vld [vmem:[%s344 + $0x20] sm:$0xf]
  %v670 = vld [vmem:[%s344 + $0x24] sm:$0x1]
  %v671 = vld [vmem:[%s344 + $0x28] sm:$0xf]
  %v672 = vld [vmem:[%s344 + $0x2c] sm:$0x1]
  %v673 = vld [vmem:[%s344 + $0x30] sm:$0xf]
  %v674 = vld [vmem:[%s344 + $0x34] sm:$0x1]
  %v675 = vld [vmem:[%s344 + $0x38] sm:$0xf]
  %v676 = vld [vmem:[%s344 + $0x3c] sm:$0x1]
  %v678 = vshrl.u32 %v661, 16
  %v680 = vrot.slane %v678, 4
  %v681 = vshll.u32 %v661, 16
  %v683 = vrot.slane %v681, 5
  %v684 = vor.u32 %v680, %v683
  %v685 = vrot.slane %v684, 4
  %v687 = vshll.u32 %v662, 16
  %v689 = vrot.slane %v687, 5
  %v690 = vsel %vm433, %v685, %v689
  %v692 = vshrl.u32 %v663, 16
  %v694 = vrot.slane %v692, 4
  %v695 = vshll.u32 %v663, 16
  %v697 = vrot.slane %v695, 5
  %v698 = vor.u32 %v694, %v697
  %v699 = vrot.slane %v698, 4
  %v701 = vshll.u32 %v664, 16
  %v703 = vrot.slane %v701, 5
  %v704 = vsel %vm433, %v699, %v703
  %v706 = vshrl.u32 %v665, 16
  %v708 = vrot.slane %v706, 4
  %v709 = vshll.u32 %v665, 16
  %v711 = vrot.slane %v709, 5
  %v712 = vor.u32 %v708, %v711
  %v713 = vrot.slane %v712, 4
  %v715 = vshll.u32 %v666, 16
  %v717 = vrot.slane %v715, 5
  %v718 = vsel %vm433, %v713, %v717
  %v720 = vshrl.u32 %v667, 16
  %v722 = vrot.slane %v720, 4
  %v723 = vshll.u32 %v667, 16
  %v725 = vrot.slane %v723, 5
  %v726 = vor.u32 %v722, %v725
  %v727 = vrot.slane %v726, 4
  %v729 = vshll.u32 %v668, 16
  %v731 = vrot.slane %v729, 5
  %v732 = vsel %vm433, %v727, %v731
  %v734 = vshrl.u32 %v669, 16
  %v736 = vrot.slane %v734, 4
  %v737 = vshll.u32 %v669, 16
  %v739 = vrot.slane %v737, 5
  %v740 = vor.u32 %v736, %v739
  %v741 = vrot.slane %v740, 4
  %v743 = vshll.u32 %v670, 16
  %v745 = vrot.slane %v743, 5
  %v746 = vsel %vm433, %v741, %v745
  %v748 = vshrl.u32 %v671, 16
  %v750 = vrot.slane %v748, 4
  %v751 = vshll.u32 %v671, 16
  %v753 = vrot.slane %v751, 5
  %v754 = vor.u32 %v750, %v753
  %v755 = vrot.slane %v754, 4
  %v757 = vshll.u32 %v672, 16
  %v759 = vrot.slane %v757, 5
  %v760 = vsel %vm433, %v755, %v759
  %v762 = vshrl.u32 %v673, 16
  %v764 = vrot.slane %v762, 4
  %v765 = vshll.u32 %v673, 16
  %v767 = vrot.slane %v765, 5
  %v768 = vor.u32 %v764, %v767
  %v769 = vrot.slane %v768, 4
  %v771 = vshll.u32 %v674, 16
  %v773 = vrot.slane %v771, 5
  %v774 = vsel %vm433, %v769, %v773
  %v776 = vshrl.u32 %v675, 16
  %v778 = vrot.slane %v776, 4
  %v779 = vshll.u32 %v675, 16
  %v781 = vrot.slane %v779, 5
  %v782 = vor.u32 %v778, %v781
  %v783 = vrot.slane %v782, 4
  %v785 = vshll.u32 %v676, 16
  %v787 = vrot.slane %v785, 5
  %v788 = vsel %vm433, %v783, %v787
  %797 = vst [vmem:[#allocation3 + $0x10] sm:$0xf] %v690
  %798 = vst [vmem:[#allocation3 + $0x34] sm:$0xf] %v704
  %799 = vst [vmem:[#allocation3 + $0x58] sm:$0xf] %v718
  %800 = vst [vmem:[#allocation3 + $0x7c] sm:$0xf] %v732
  %801 = vst [vmem:[#allocation3 + $0xa0] sm:$0xf] %v746
  %802 = vst [vmem:[#allocation3 + $0xc4] sm:$0xf] %v760
  %803 = vst [vmem:[#allocation3 + $0xe8] sm:$0xf] %v774
  %804 = vst [vmem:[#allocation3 + $0x10c] sm:$0xf] %v788
  %v805 = vld [vmem:[%s344] sm:$0xe]
  %v806 = vld [vmem:[%s344 + $0x4] sm:$0x1]
  %v807 = vld [vmem:[%s344 + $0x8] sm:$0xe]
  %v808 = vld [vmem:[%s344 + $0xc] sm:$0x1]
  %v809 = vld [vmem:[%s344 + $0x10] sm:$0xe]
  %v810 = vld [vmem:[%s344 + $0x14] sm:$0x1]
  %v811 = vld [vmem:[%s344 + $0x18] sm:$0xe]
  %v812 = vld [vmem:[%s344 + $0x1c] sm:$0x1]
  %v813 = vld [vmem:[%s344 + $0x20] sm:$0xe]
  %v814 = vld [vmem:[%s344 + $0x24] sm:$0x1]
  %v815 = vld [vmem:[%s344 + $0x28] sm:$0xe]
  %v816 = vld [vmem:[%s344 + $0x2c] sm:$0x1]
  %v817 = vld [vmem:[%s344 + $0x30] sm:$0xe]
  %v818 = vld [vmem:[%s344 + $0x34] sm:$0x1]
  %v819 = vld [vmem:[%s344 + $0x38] sm:$0xe]
  %v820 = vld [vmem:[%s344 + $0x3c] sm:$0x1]
  %v837 = vrot.slane %v805, 5
  %v838 = vrot.slane %v837, 4
  %v839 = vrot.slane %v806, 5
  %v840 = vsel %vm596, %v838, %v839
  %v841 = vrot.slane %v807, 5
  %v842 = vrot.slane %v841, 4
  %v843 = vrot.slane %v808, 5
  %v844 = vsel %vm596, %v842, %v843
  %v845 = vrot.slane %v809, 5
  %v846 = vrot.slane %v845, 4
  %v847 = vrot.slane %v810, 5
  %v848 = vsel %vm596, %v846, %v847
  %v849 = vrot.slane %v811, 5
  %v850 = vrot.slane %v849, 4
  %v851 = vrot.slane %v812, 5
  %v852 = vsel %vm596, %v850, %v851
  %v853 = vrot.slane %v813, 5
  %v854 = vrot.slane %v853, 4
  %v855 = vrot.slane %v814, 5
  %v856 = vsel %vm596, %v854, %v855
  %v857 = vrot.slane %v815, 5
  %v858 = vrot.slane %v857, 4
  %v859 = vrot.slane %v816, 5
  %v860 = vsel %vm596, %v858, %v859
  %v861 = vrot.slane %v817, 5
  %v862 = vrot.slane %v861, 4
  %v863 = vrot.slane %v818, 5
  %v864 = vsel %vm596, %v862, %v863
  %v865 = vrot.slane %v819, 5
  %v866 = vrot.slane %v865, 4
  %v867 = vrot.slane %v820, 5
  %v868 = vsel %vm596, %v866, %v867
  %877 = vst [vmem:[#allocation3 + $0x14] sm:$0xf] %v840
  %878 = vst [vmem:[#allocation3 + $0x38] sm:$0xf] %v844
  %879 = vst [vmem:[#allocation3 + $0x5c] sm:$0xf] %v848
  %880 = vst [vmem:[#allocation3 + $0x80] sm:$0xf] %v852
  %881 = vst [vmem:[#allocation3 + $0xa4] sm:$0xf] %v856
  %882 = vst [vmem:[#allocation3 + $0xc8] sm:$0xf] %v860
  %883 = vst [vmem:[#allocation3 + $0xec] sm:$0xf] %v864
  %884 = vst [vmem:[#allocation3 + $0x110] sm:$0xf] %v868
  %s885 = scalar_lea.vmem [#allocation2], 16
  %v886 = vld [vmem:[%s885] sm:$0xf]
  %v887 = vld [vmem:[%s885 + $0x8] sm:$0xf]
  %v888 = vld [vmem:[%s885 + $0x10] sm:$0xf]
  %v889 = vld [vmem:[%s885 + $0x18] sm:$0xf]
  %v890 = vld [vmem:[%s885 + $0x20] sm:$0xf]
  %v891 = vld [vmem:[%s885 + $0x28] sm:$0xf]
  %v892 = vld [vmem:[%s885 + $0x30] sm:$0xf]
  %v893 = vld [vmem:[%s885 + $0x38] sm:$0xf]
  %894 = vst [vmem:[#allocation3 + $0x18] sm:$0xf] %v886
  %895 = vst [vmem:[#allocation3 + $0x3c] sm:$0xf] %v887
  %896 = vst [vmem:[#allocation3 + $0x60] sm:$0xf] %v888
  %897 = vst [vmem:[#allocation3 + $0x84] sm:$0xf] %v889
  %898 = vst [vmem:[#allocation3 + $0xa8] sm:$0xf] %v890
  %899 = vst [vmem:[#allocation3 + $0xcc] sm:$0xf] %v891
  %900 = vst [vmem:[#allocation3 + $0xf0] sm:$0xf] %v892
  %901 = vst [vmem:[#allocation3 + $0x114] sm:$0xf] %v893
  %v902 = vld [vmem:[%s885] sm:$0xf]
  %v903 = vld [vmem:[%s885 + $0x4] sm:$0x1]
  %v904 = vld [vmem:[%s885 + $0x8] sm:$0xf]
  %v905 = vld [vmem:[%s885 + $0xc] sm:$0x1]
  %v906 = vld [vmem:[%s885 + $0x10] sm:$0xf]
  %v907 = vld [vmem:[%s885 + $0x14] sm:$0x1]
  %v908 = vld [vmem:[%s885 + $0x18] sm:$0xf]
  %v909 = vld [vmem:[%s885 + $0x1c] sm:$0x1]
  %v910 = vld [vmem:[%s885 + $0x20] sm:$0xf]
  %v911 = vld [vmem:[%s885 + $0x24] sm:$0x1]
  %v912 = vld [vmem:[%s885 + $0x28] sm:$0xf]
  %v913 = vld [vmem:[%s885 + $0x2c] sm:$0x1]
  %v914 = vld [vmem:[%s885 + $0x30] sm:$0xf]
  %v915 = vld [vmem:[%s885 + $0x34] sm:$0x1]
  %v916 = vld [vmem:[%s885 + $0x38] sm:$0xf]
  %v917 = vld [vmem:[%s885 + $0x3c] sm:$0x1]
  %v919 = vshrl.u32 %v902, 16
  %v921 = vrot.slane %v919, 4
  %v922 = vshll.u32 %v902, 16
  %v924 = vrot.slane %v922, 5
  %v925 = vor.u32 %v921, %v924
  %v926 = vrot.slane %v925, 4
  %v928 = vshll.u32 %v903, 16
  %v930 = vrot.slane %v928, 5
  %v931 = vsel %vm433, %v926, %v930
  %v933 = vshrl.u32 %v904, 16
  %v935 = vrot.slane %v933, 4
  %v936 = vshll.u32 %v904, 16
  %v938 = vrot.slane %v936, 5
  %v939 = vor.u32 %v935, %v938
  %v940 = vrot.slane %v939, 4
  %v942 = vshll.u32 %v905, 16
  %v944 = vrot.slane %v942, 5
  %v945 = vsel %vm433, %v940, %v944
  %v947 = vshrl.u32 %v906, 16
  %v949 = vrot.slane %v947, 4
  %v950 = vshll.u32 %v906, 16
  %v952 = vrot.slane %v950, 5
  %v953 = vor.u32 %v949, %v952
  %v954 = vrot.slane %v953, 4
  %v956 = vshll.u32 %v907, 16
  %v958 = vrot.slane %v956, 5
  %v959 = vsel %vm433, %v954, %v958
  %v961 = vshrl.u32 %v908, 16
  %v963 = vrot.slane %v961, 4
  %v964 = vshll.u32 %v908, 16
  %v966 = vrot.slane %v964, 5
  %v967 = vor.u32 %v963, %v966
  %v968 = vrot.slane %v967, 4
  %v970 = vshll.u32 %v909, 16
  %v972 = vrot.slane %v970, 5
  %v973 = vsel %vm433, %v968, %v972
  %v975 = vshrl.u32 %v910, 16
  %v977 = vrot.slane %v975, 4
  %v978 = vshll.u32 %v910, 16
  %v980 = vrot.slane %v978, 5
  %v981 = vor.u32 %v977, %v980
  %v982 = vrot.slane %v981, 4
  %v984 = vshll.u32 %v911, 16
  %v986 = vrot.slane %v984, 5
  %v987 = vsel %vm433, %v982, %v986
  %v989 = vshrl.u32 %v912, 16
  %v991 = vrot.slane %v989, 4
  %v992 = vshll.u32 %v912, 16
  %v994 = vrot.slane %v992, 5
  %v995 = vor.u32 %v991, %v994
  %v996 = vrot.slane %v995, 4
  %v998 = vshll.u32 %v913, 16
  %v1000 = vrot.slane %v998, 5
  %v1001 = vsel %vm433, %v996, %v1000
  %v1003 = vshrl.u32 %v914, 16
  %v1005 = vrot.slane %v1003, 4
  %v1006 = vshll.u32 %v914, 16
  %v1008 = vrot.slane %v1006, 5
  %v1009 = vor.u32 %v1005, %v1008
  %v1010 = vrot.slane %v1009, 4
  %v1012 = vshll.u32 %v915, 16
  %v1014 = vrot.slane %v1012, 5
  %v1015 = vsel %vm433, %v1010, %v1014
  %v1017 = vshrl.u32 %v916, 16
  %v1019 = vrot.slane %v1017, 4
  %v1020 = vshll.u32 %v916, 16
  %v1022 = vrot.slane %v1020, 5
  %v1023 = vor.u32 %v1019, %v1022
  %v1024 = vrot.slane %v1023, 4
  %v1026 = vshll.u32 %v917, 16
  %v1028 = vrot.slane %v1026, 5
  %v1029 = vsel %vm433, %v1024, %v1028
  %1038 = vst [vmem:[#allocation3 + $0x1c] sm:$0xf] %v931
  %1039 = vst [vmem:[#allocation3 + $0x40] sm:$0xf] %v945
  %1040 = vst [vmem:[#allocation3 + $0x64] sm:$0xf] %v959
  %1041 = vst [vmem:[#allocation3 + $0x88] sm:$0xf] %v973
  %1042 = vst [vmem:[#allocation3 + $0xac] sm:$0xf] %v987
  %1043 = vst [vmem:[#allocation3 + $0xd0] sm:$0xf] %v1001
  %1044 = vst [vmem:[#allocation3 + $0xf4] sm:$0xf] %v1015
  %1045 = vst [vmem:[#allocation3 + $0x118] sm:$0xf] %v1029
  %v1046 = vld [vmem:[%s885] sm:$0xe]
  %v1047 = vld [vmem:[%s885 + $0x4] sm:$0x1]
  %v1048 = vld [vmem:[%s885 + $0x8] sm:$0xe]
  %v1049 = vld [vmem:[%s885 + $0xc] sm:$0x1]
  %v1050 = vld [vmem:[%s885 + $0x10] sm:$0xe]
  %v1051 = vld [vmem:[%s885 + $0x14] sm:$0x1]
  %v1052 = vld [vmem:[%s885 + $0x18] sm:$0xe]
  %v1053 = vld [vmem:[%s885 + $0x1c] sm:$0x1]
  %v1054 = vld [vmem:[%s885 + $0x20] sm:$0xe]
  %v1055 = vld [vmem:[%s885 + $0x24] sm:$0x1]
  %v1056 = vld [vmem:[%s885 + $0x28] sm:$0xe]
  %v1057 = vld [vmem:[%s885 + $0x2c] sm:$0x1]
  %v1058 = vld [vmem:[%s885 + $0x30] sm:$0xe]
  %v1059 = vld [vmem:[%s885 + $0x34] sm:$0x1]
  %v1060 = vld [vmem:[%s885 + $0x38] sm:$0xe]
  %v1061 = vld [vmem:[%s885 + $0x3c] sm:$0x1]
  %v1078 = vrot.slane %v1046, 5
  %v1079 = vrot.slane %v1078, 4
  %v1080 = vrot.slane %v1047, 5
  %v1081 = vsel %vm596, %v1079, %v1080
  %v1082 = vrot.slane %v1048, 5
  %v1083 = vrot.slane %v1082, 4
  %v1084 = vrot.slane %v1049, 5
  %v1085 = vsel %vm596, %v1083, %v1084
  %v1086 = vrot.slane %v1050, 5
  %v1087 = vrot.slane %v1086, 4
  %v1088 = vrot.slane %v1051, 5
  %v1089 = vsel %vm596, %v1087, %v1088
  %v1090 = vrot.slane %v1052, 5
  %v1091 = vrot.slane %v1090, 4
  %v1092 = vrot.slane %v1053, 5
  %v1093 = vsel %vm596, %v1091, %v1092
  %v1094 = vrot.slane %v1054, 5
  %v1095 = vrot.slane %v1094, 4
  %v1096 = vrot.slane %v1055, 5
  %v1097 = vsel %vm596, %v1095, %v1096
  %v1098 = vrot.slane %v1056, 5
  %v1099 = vrot.slane %v1098, 4
  %v1100 = vrot.slane %v1057, 5
  %v1101 = vsel %vm596, %v1099, %v1100
  %v1102 = vrot.slane %v1058, 5
  %v1103 = vrot.slane %v1102, 4
  %v1104 = vrot.slane %v1059, 5
  %v1105 = vsel %vm596, %v1103, %v1104
  %v1106 = vrot.slane %v1060, 5
  %v1107 = vrot.slane %v1106, 4
  %v1108 = vrot.slane %v1061, 5
  %v1109 = vsel %vm596, %v1107, %v1108
  %1118 = vst [vmem:[#allocation3 + $0x20] sm:$0xf] %v1081
  %1119 = vst [vmem:[#allocation3 + $0x44] sm:$0xf] %v1085
  %1120 = vst [vmem:[#allocation3 + $0x68] sm:$0xf] %v1089
  %1121 = vst [vmem:[#allocation3 + $0x8c] sm:$0xf] %v1093
  %1122 = vst [vmem:[#allocation3 + $0xb0] sm:$0xf] %v1097
  %1123 = vst [vmem:[#allocation3 + $0xd4] sm:$0xf] %v1101
  %1124 = vst [vmem:[#allocation3 + $0xf8] sm:$0xf] %v1105
  %1125 = vst [vmem:[#allocation3 + $0x11c] sm:$0xf] %v1109
  %v1126 = vpack.c.bf16 %v224, %v224
  %v1127 = vpack.c.bf16 %v225, %v225
  %v1128 = vpack.c.bf16 %v226, %v226
  %v1129 = vpack.c.bf16 %v227, %v227
  %v1130 = vpack.c.bf16 %v228, %v228
  %v1131 = vpack.c.bf16 %v229, %v229
  %v1132 = vpack.c.bf16 %v230, %v230
  %v1133 = vpack.c.bf16 %v231, %v231
  %v1142 = vunpack.c.l.b16 %v1126
  %v1143 = vunpack.c.l.b16 %v1127
  %v1144 = vunpack.c.l.b16 %v1128
  %v1145 = vunpack.c.l.b16 %v1129
  %v1146 = vunpack.c.l.b16 %v1130
  %v1147 = vunpack.c.l.b16 %v1131
  %v1148 = vunpack.c.l.b16 %v1132
  %v1149 = vunpack.c.l.b16 %v1133
  %v1150 = vpack.c.b16 %v1142, %v1142
  %v1151 = vpack.c.b16 %v1143, %v1143
  %v1152 = vpack.c.b16 %v1144, %v1144
  %v1153 = vpack.c.b16 %v1145, %v1145
  %v1154 = vpack.c.b16 %v1146, %v1146
  %v1155 = vpack.c.b16 %v1147, %v1147
  %v1156 = vpack.c.b16 %v1148, %v1148
  %v1157 = vpack.c.b16 %v1149, %v1149
  %v1159 = vshrl.u32 %v1150, 16
  %v1161 = vrot.slane %v1159, 7
  %v1162 = vshll.u32 %v1150, 16
  %v1164 = vor.u32 %v1161, %v1162
  %v1165 = vrot.slane %v1161, 4
  %v1167 = vshrl.u32 %v1151, 16
  %v1169 = vrot.slane %v1167, 7
  %v1170 = vshll.u32 %v1151, 16
  %v1172 = vor.u32 %v1169, %v1170
  %v1173 = vrot.slane %v1169, 4
  %v1175 = vshrl.u32 %v1152, 16
  %v1177 = vrot.slane %v1175, 7
  %v1178 = vshll.u32 %v1152, 16
  %v1180 = vor.u32 %v1177, %v1178
  %v1181 = vrot.slane %v1177, 4
  %v1183 = vshrl.u32 %v1153, 16
  %v1185 = vrot.slane %v1183, 7
  %v1186 = vshll.u32 %v1153, 16
  %v1188 = vor.u32 %v1185, %v1186
  %v1189 = vrot.slane %v1185, 4
  %v1191 = vshrl.u32 %v1154, 16
  %v1193 = vrot.slane %v1191, 7
  %v1194 = vshll.u32 %v1154, 16
  %v1196 = vor.u32 %v1193, %v1194
  %v1197 = vrot.slane %v1193, 4
  %v1199 = vshrl.u32 %v1155, 16
  %v1201 = vrot.slane %v1199, 7
  %v1202 = vshll.u32 %v1155, 16
  %v1204 = vor.u32 %v1201, %v1202
  %v1205 = vrot.slane %v1201, 4
  %v1207 = vshrl.u32 %v1156, 16
  %v1209 = vrot.slane %v1207, 7
  %v1210 = vshll.u32 %v1156, 16
  %v1212 = vor.u32 %v1209, %v1210
  %v1213 = vrot.slane %v1209, 4
  %v1215 = vshrl.u32 %v1157, 16
  %v1217 = vrot.slane %v1215, 7
  %v1218 = vshll.u32 %v1157, 16
  %v1220 = vor.u32 %v1217, %v1218
  %v1221 = vrot.slane %v1217, 4
  %s1238 = scalar_lea.vmem [#allocation2], 88
  %v1239 = vld [vmem:[%s1238] sm:$0xf]
  %v1240 = vsel %vm347, %v1164, %v1239
  %1241 = vst [vmem:[%s1238] sm:$0xf] %v1240
  %v1242 = vld [vmem:[%s1238 + $0x4] sm:$0x1]
  %v1243 = vsel %vm353, %v1165, %v1242
  %1244 = vst [vmem:[%s1238 + $0x4] sm:$0x1] %v1243
  %v1245 = vld [vmem:[%s1238 + $0x8] sm:$0xf]
  %v1246 = vsel %vm347, %v1172, %v1245
  %1247 = vst [vmem:[%s1238 + $0x8] sm:$0xf] %v1246
  %v1248 = vld [vmem:[%s1238 + $0xc] sm:$0x1]
  %v1249 = vsel %vm353, %v1173, %v1248
  %1250 = vst [vmem:[%s1238 + $0xc] sm:$0x1] %v1249
  %v1251 = vld [vmem:[%s1238 + $0x10] sm:$0xf]
  %v1252 = vsel %vm347, %v1180, %v1251
  %1253 = vst [vmem:[%s1238 + $0x10] sm:$0xf] %v1252
  %v1254 = vld [vmem:[%s1238 + $0x14] sm:$0x1]
  %v1255 = vsel %vm353, %v1181, %v1254
  %1256 = vst [vmem:[%s1238 + $0x14] sm:$0x1] %v1255
  %v1257 = vld [vmem:[%s1238 + $0x18] sm:$0xf]
  %v1258 = vsel %vm347, %v1188, %v1257
  %1259 = vst [vmem:[%s1238 + $0x18] sm:$0xf] %v1258
  %v1260 = vld [vmem:[%s1238 + $0x1c] sm:$0x1]
  %v1261 = vsel %vm353, %v1189, %v1260
  %1262 = vst [vmem:[%s1238 + $0x1c] sm:$0x1] %v1261
  %v1263 = vld [vmem:[%s1238 + $0x20] sm:$0xf]
  %v1264 = vsel %vm347, %v1196, %v1263
  %1265 = vst [vmem:[%s1238 + $0x20] sm:$0xf] %v1264
  %v1266 = vld [vmem:[%s1238 + $0x24] sm:$0x1]
  %v1267 = vsel %vm353, %v1197, %v1266
  %1268 = vst [vmem:[%s1238 + $0x24] sm:$0x1] %v1267
  %v1269 = vld [vmem:[%s1238 + $0x28] sm:$0xf]
  %v1270 = vsel %vm347, %v1204, %v1269
  %1271 = vst [vmem:[%s1238 + $0x28] sm:$0xf] %v1270
  %v1272 = vld [vmem:[%s1238 + $0x2c] sm:$0x1]
  %v1273 = vsel %vm353, %v1205, %v1272
  %1274 = vst [vmem:[%s1238 + $0x2c] sm:$0x1] %v1273
  %v1275 = vld [vmem:[%s1238 + $0x30] sm:$0xf]
  %v1276 = vsel %vm347, %v1212, %v1275
  %1277 = vst [vmem:[%s1238 + $0x30] sm:$0xf] %v1276
  %v1278 = vld [vmem:[%s1238 + $0x34] sm:$0x1]
  %v1279 = vsel %vm353, %v1213, %v1278
  %1280 = vst [vmem:[%s1238 + $0x34] sm:$0x1] %v1279
  %v1281 = vld [vmem:[%s1238 + $0x38] sm:$0xf]
  %v1282 = vsel %vm347, %v1220, %v1281
  %1283 = vst [vmem:[%s1238 + $0x38] sm:$0xf] %v1282
  %v1284 = vld [vmem:[%s1238 + $0x3c] sm:$0x1]
  %v1285 = vsel %vm353, %v1221, %v1284
  %1286 = vst [vmem:[%s1238 + $0x3c] sm:$0x1] %v1285
  %s1287 = scalar_lea.vmem [#allocation2], 80
  %v1288 = vld [vmem:[%s1287] sm:$0xf]
  %v1289 = vld [vmem:[%s1287 + $0x8] sm:$0xf]
  %v1290 = vld [vmem:[%s1287 + $0x10] sm:$0xf]
  %v1291 = vld [vmem:[%s1287 + $0x18] sm:$0xf]
  %v1292 = vld [vmem:[%s1287 + $0x20] sm:$0xf]
  %v1293 = vld [vmem:[%s1287 + $0x28] sm:$0xf]
  %v1294 = vld [vmem:[%s1287 + $0x30] sm:$0xf]
  %v1295 = vld [vmem:[%s1287 + $0x38] sm:$0xf]
  %s1296 = scalar_lea.vmem [#allocation3], 288
  %1297 = vst [vmem:[%s1296] sm:$0xf] %v1288
  %1298 = vst [vmem:[%s1296 + $0x24] sm:$0xf] %v1289
  %1299 = vst [vmem:[%s1296 + $0x48] sm:$0xf] %v1290
  %1300 = vst [vmem:[%s1296 + $0x6c] sm:$0xf] %v1291
  %1301 = vst [vmem:[%s1296 + $0x90] sm:$0xf] %v1292
  %1302 = vst [vmem:[%s1296 + $0xb4] sm:$0xf] %v1293
  %1303 = vst [vmem:[%s1296 + $0xd8] sm:$0xf] %v1294
  %1304 = vst [vmem:[%s1296 + $0xfc] sm:$0xf] %v1295
  %v1305 = vld [vmem:[%s1287] sm:$0xf]
  %v1306 = vld [vmem:[%s1287 + $0x4] sm:$0x1]
  %v1307 = vld [vmem:[%s1287 + $0x8] sm:$0xf]
  %v1308 = vld [vmem:[%s1287 + $0xc] sm:$0x1]
  %v1309 = vld [vmem:[%s1287 + $0x10] sm:$0xf]
  %v1310 = vld [vmem:[%s1287 + $0x14] sm:$0x1]
  %v1311 = vld [vmem:[%s1287 + $0x18] sm:$0xf]
  %v1312 = vld [vmem:[%s1287 + $0x1c] sm:$0x1]
  %v1313 = vld [vmem:[%s1287 + $0x20] sm:$0xf]
  %v1314 = vld [vmem:[%s1287 + $0x24] sm:$0x1]
  %v1315 = vld [vmem:[%s1287 + $0x28] sm:$0xf]
  %v1316 = vld [vmem:[%s1287 + $0x2c] sm:$0x1]
  %v1317 = vld [vmem:[%s1287 + $0x30] sm:$0xf]
  %v1318 = vld [vmem:[%s1287 + $0x34] sm:$0x1]
  %v1319 = vld [vmem:[%s1287 + $0x38] sm:$0xf]
  %v1320 = vld [vmem:[%s1287 + $0x3c] sm:$0x1]
  %v1322 = vshrl.u32 %v1305, 16
  %v1324 = vrot.slane %v1322, 4
  %v1325 = vshll.u32 %v1305, 16
  %v1327 = vrot.slane %v1325, 5
  %v1328 = vor.u32 %v1324, %v1327
  %v1329 = vrot.slane %v1328, 4
  %v1331 = vshll.u32 %v1306, 16
  %v1333 = vrot.slane %v1331, 5
  %v1334 = vsel %vm433, %v1329, %v1333
  %v1336 = vshrl.u32 %v1307, 16
  %v1338 = vrot.slane %v1336, 4
  %v1339 = vshll.u32 %v1307, 16
  %v1341 = vrot.slane %v1339, 5
  %v1342 = vor.u32 %v1338, %v1341
  %v1343 = vrot.slane %v1342, 4
  %v1345 = vshll.u32 %v1308, 16
  %v1347 = vrot.slane %v1345, 5
  %v1348 = vsel %vm433, %v1343, %v1347
  %v1350 = vshrl.u32 %v1309, 16
  %v1352 = vrot.slane %v1350, 4
  %v1353 = vshll.u32 %v1309, 16
  %v1355 = vrot.slane %v1353, 5
  %v1356 = vor.u32 %v1352, %v1355
  %v1357 = vrot.slane %v1356, 4
  %v1359 = vshll.u32 %v1310, 16
  %v1361 = vrot.slane %v1359, 5
  %v1362 = vsel %vm433, %v1357, %v1361
  %v1364 = vshrl.u32 %v1311, 16
  %v1366 = vrot.slane %v1364, 4
  %v1367 = vshll.u32 %v1311, 16
  %v1369 = vrot.slane %v1367, 5
  %v1370 = vor.u32 %v1366, %v1369
  %v1371 = vrot.slane %v1370, 4
  %v1373 = vshll.u32 %v1312, 16
  %v1375 = vrot.slane %v1373, 5
  %v1376 = vsel %vm433, %v1371, %v1375
  %v1378 = vshrl.u32 %v1313, 16
  %v1380 = vrot.slane %v1378, 4
  %v1381 = vshll.u32 %v1313, 16
  %v1383 = vrot.slane %v1381, 5
  %v1384 = vor.u32 %v1380, %v1383
  %v1385 = vrot.slane %v1384, 4
  %v1387 = vshll.u32 %v1314, 16
  %v1389 = vrot.slane %v1387, 5
  %v1390 = vsel %vm433, %v1385, %v1389
  %v1392 = vshrl.u32 %v1315, 16
  %v1394 = vrot.slane %v1392, 4
  %v1395 = vshll.u32 %v1315, 16
  %v1397 = vrot.slane %v1395, 5
  %v1398 = vor.u32 %v1394, %v1397
  %v1399 = vrot.slane %v1398, 4
  %v1401 = vshll.u32 %v1316, 16
  %v1403 = vrot.slane %v1401, 5
  %v1404 = vsel %vm433, %v1399, %v1403
  %v1406 = vshrl.u32 %v1317, 16
  %v1408 = vrot.slane %v1406, 4
  %v1409 = vshll.u32 %v1317, 16
  %v1411 = vrot.slane %v1409, 5
  %v1412 = vor.u32 %v1408, %v1411
  %v1413 = vrot.slane %v1412, 4
  %v1415 = vshll.u32 %v1318, 16
  %v1417 = vrot.slane %v1415, 5
  %v1418 = vsel %vm433, %v1413, %v1417
  %v1420 = vshrl.u32 %v1319, 16
  %v1422 = vrot.slane %v1420, 4
  %v1423 = vshll.u32 %v1319, 16
  %v1425 = vrot.slane %v1423, 5
  %v1426 = vor.u32 %v1422, %v1425
  %v1427 = vrot.slane %v1426, 4
  %v1429 = vshll.u32 %v1320, 16
  %v1431 = vrot.slane %v1429, 5
  %v1432 = vsel %vm433, %v1427, %v1431
  %1441 = vst [vmem:[%s1296 + $0x4] sm:$0xf] %v1334
  %1442 = vst [vmem:[%s1296 + $0x28] sm:$0xf] %v1348
  %1443 = vst [vmem:[%s1296 + $0x4c] sm:$0xf] %v1362
  %1444 = vst [vmem:[%s1296 + $0x70] sm:$0xf] %v1376
  %1445 = vst [vmem:[%s1296 + $0x94] sm:$0xf] %v1390
  %1446 = vst [vmem:[%s1296 + $0xb8] sm:$0xf] %v1404
  %1447 = vst [vmem:[%s1296 + $0xdc] sm:$0xf] %v1418
  %1448 = vst [vmem:[%s1296 + $0x100] sm:$0xf] %v1432
  %v1449 = vld [vmem:[%s1287] sm:$0xe]
  %v1450 = vld [vmem:[%s1287 + $0x4] sm:$0x1]
  %v1451 = vld [vmem:[%s1287 + $0x8] sm:$0xe]
  %v1452 = vld [vmem:[%s1287 + $0xc] sm:$0x1]
  %v1453 = vld [vmem:[%s1287 + $0x10] sm:$0xe]
  %v1454 = vld [vmem:[%s1287 + $0x14] sm:$0x1]
  %v1455 = vld [vmem:[%s1287 + $0x18] sm:$0xe]
  %v1456 = vld [vmem:[%s1287 + $0x1c] sm:$0x1]
  %v1457 = vld [vmem:[%s1287 + $0x20] sm:$0xe]
  %v1458 = vld [vmem:[%s1287 + $0x24] sm:$0x1]
  %v1459 = vld [vmem:[%s1287 + $0x28] sm:$0xe]
  %v1460 = vld [vmem:[%s1287 + $0x2c] sm:$0x1]
  %v1461 = vld [vmem:[%s1287 + $0x30] sm:$0xe]
  %v1462 = vld [vmem:[%s1287 + $0x34] sm:$0x1]
  %v1463 = vld [vmem:[%s1287 + $0x38] sm:$0xe]
  %v1464 = vld [vmem:[%s1287 + $0x3c] sm:$0x1]
  %v1481 = vrot.slane %v1449, 5
  %v1482 = vrot.slane %v1481, 4
  %v1483 = vrot.slane %v1450, 5
  %v1484 = vsel %vm596, %v1482, %v1483
  %v1485 = vrot.slane %v1451, 5
  %v1486 = vrot.slane %v1485, 4
  %v1487 = vrot.slane %v1452, 5
  %v1488 = vsel %vm596, %v1486, %v1487
  %v1489 = vrot.slane %v1453, 5
  %v1490 = vrot.slane %v1489, 4
  %v1491 = vrot.slane %v1454, 5
  %v1492 = vsel %vm596, %v1490, %v1491
  %v1493 = vrot.slane %v1455, 5
  %v1494 = vrot.slane %v1493, 4
  %v1495 = vrot.slane %v1456, 5
  %v1496 = vsel %vm596, %v1494, %v1495
  %v1497 = vrot.slane %v1457, 5
  %v1498 = vrot.slane %v1497, 4
  %v1499 = vrot.slane %v1458, 5
  %v1500 = vsel %vm596, %v1498, %v1499
  %v1501 = vrot.slane %v1459, 5
  %v1502 = vrot.slane %v1501, 4
  %v1503 = vrot.slane %v1460, 5
  %v1504 = vsel %vm596, %v1502, %v1503
  %v1505 = vrot.slane %v1461, 5
  %v1506 = vrot.slane %v1505, 4
  %v1507 = vrot.slane %v1462, 5
  %v1508 = vsel %vm596, %v1506, %v1507
  %v1509 = vrot.slane %v1463, 5
  %v1510 = vrot.slane %v1509, 4
  %v1511 = vrot.slane %v1464, 5
  %v1512 = vsel %vm596, %v1510, %v1511
  %1521 = vst [vmem:[%s1296 + $0x8] sm:$0xf] %v1484
  %1522 = vst [vmem:[%s1296 + $0x2c] sm:$0xf] %v1488
  %1523 = vst [vmem:[%s1296 + $0x50] sm:$0xf] %v1492
  %1524 = vst [vmem:[%s1296 + $0x74] sm:$0xf] %v1496
  %1525 = vst [vmem:[%s1296 + $0x98] sm:$0xf] %v1500
  %1526 = vst [vmem:[%s1296 + $0xbc] sm:$0xf] %v1504
  %1527 = vst [vmem:[%s1296 + $0xe0] sm:$0xf] %v1508
  %1528 = vst [vmem:[%s1296 + $0x104] sm:$0xf] %v1512
  %v1529 = vld [vmem:[%s1238] sm:$0xf]
  %v1530 = vld [vmem:[%s1238 + $0x8] sm:$0xf]
  %v1531 = vld [vmem:[%s1238 + $0x10] sm:$0xf]
  %v1532 = vld [vmem:[%s1238 + $0x18] sm:$0xf]
  %v1533 = vld [vmem:[%s1238 + $0x20] sm:$0xf]
  %v1534 = vld [vmem:[%s1238 + $0x28] sm:$0xf]
  %v1535 = vld [vmem:[%s1238 + $0x30] sm:$0xf]
  %v1536 = vld [vmem:[%s1238 + $0x38] sm:$0xf]
  %1537 = vst [vmem:[%s1296 + $0xc] sm:$0xf] %v1529
  %1538 = vst [vmem:[%s1296 + $0x30] sm:$0xf] %v1530
  %1539 = vst [vmem:[%s1296 + $0x54] sm:$0xf] %v1531
  %1540 = vst [vmem:[%s1296 + $0x78] sm:$0xf] %v1532
  %1541 = vst [vmem:[%s1296 + $0x9c] sm:$0xf] %v1533
  %1542 = vst [vmem:[%s1296 + $0xc0] sm:$0xf] %v1534
  %1543 = vst [vmem:[%s1296 + $0xe4] sm:$0xf] %v1535
  %1544 = vst [vmem:[%s1296 + $0x108] sm:$0xf] %v1536
  %v1545 = vld [vmem:[%s1238] sm:$0xf]
  %v1546 = vld [vmem:[%s1238 + $0x4] sm:$0x1]
  %v1547 = vld [vmem:[%s1238 + $0x8] sm:$0xf]
  %v1548 = vld [vmem:[%s1238 + $0xc] sm:$0x1]
  %v1549 = vld [vmem:[%s1238 + $0x10] sm:$0xf]
  %v1550 = vld [vmem:[%s1238 + $0x14] sm:$0x1]
  %v1551 = vld [vmem:[%s1238 + $0x18] sm:$0xf]
  %v1552 = vld [vmem:[%s1238 + $0x1c] sm:$0x1]
  %v1553 = vld [vmem:[%s1238 + $0x20] sm:$0xf]
  %v1554 = vld [vmem:[%s1238 + $0x24] sm:$0x1]
  %v1555 = vld [vmem:[%s1238 + $0x28] sm:$0xf]
  %v1556 = vld [vmem:[%s1238 + $0x2c] sm:$0x1]
  %v1557 = vld [vmem:[%s1238 + $0x30] sm:$0xf]
  %v1558 = vld [vmem:[%s1238 + $0x34] sm:$0x1]
  %v1559 = vld [vmem:[%s1238 + $0x38] sm:$0xf]
  %v1560 = vld [vmem:[%s1238 + $0x3c] sm:$0x1]
  %v1562 = vshrl.u32 %v1545, 16
  %v1564 = vrot.slane %v1562, 4
  %v1565 = vshll.u32 %v1545, 16
  %v1567 = vrot.slane %v1565, 5
  %v1568 = vor.u32 %v1564, %v1567
  %v1569 = vrot.slane %v1568, 4
  %v1571 = vshll.u32 %v1546, 16
  %v1573 = vrot.slane %v1571, 5
  %v1574 = vsel %vm433, %v1569, %v1573
  %v1576 = vshrl.u32 %v1547, 16
  %v1578 = vrot.slane %v1576, 4
  %v1579 = vshll.u32 %v1547, 16
  %v1581 = vrot.slane %v1579, 5
  %v1582 = vor.u32 %v1578, %v1581
  %v1583 = vrot.slane %v1582, 4
  %v1585 = vshll.u32 %v1548, 16
  %v1587 = vrot.slane %v1585, 5
  %v1588 = vsel %vm433, %v1583, %v1587
  %v1590 = vshrl.u32 %v1549, 16
  %v1592 = vrot.slane %v1590, 4
  %v1593 = vshll.u32 %v1549, 16
  %v1595 = vrot.slane %v1593, 5
  %v1596 = vor.u32 %v1592, %v1595
  %v1597 = vrot.slane %v1596, 4
  %v1599 = vshll.u32 %v1550, 16
  %v1601 = vrot.slane %v1599, 5
  %v1602 = vsel %vm433, %v1597, %v1601
  %v1604 = vshrl.u32 %v1551, 16
  %v1606 = vrot.slane %v1604, 4
  %v1607 = vshll.u32 %v1551, 16
  %v1609 = vrot.slane %v1607, 5
  %v1610 = vor.u32 %v1606, %v1609
  %v1611 = vrot.slane %v1610, 4
  %v1613 = vshll.u32 %v1552, 16
  %v1615 = vrot.slane %v1613, 5
  %v1616 = vsel %vm433, %v1611, %v1615
  %v1618 = vshrl.u32 %v1553, 16
  %v1620 = vrot.slane %v1618, 4
  %v1621 = vshll.u32 %v1553, 16
  %v1623 = vrot.slane %v1621, 5
  %v1624 = vor.u32 %v1620, %v1623
  %v1625 = vrot.slane %v1624, 4
  %v1627 = vshll.u32 %v1554, 16
  %v1629 = vrot.slane %v1627, 5
  %v1630 = vsel %vm433, %v1625, %v1629
  %v1632 = vshrl.u32 %v1555, 16
  %v1634 = vrot.slane %v1632, 4
  %v1635 = vshll.u32 %v1555, 16
  %v1637 = vrot.slane %v1635, 5
  %v1638 = vor.u32 %v1634, %v1637
  %v1639 = vrot.slane %v1638, 4
  %v1641 = vshll.u32 %v1556, 16
  %v1643 = vrot.slane %v1641, 5
  %v1644 = vsel %vm433, %v1639, %v1643
  %v1646 = vshrl.u32 %v1557, 16
  %v1648 = vrot.slane %v1646, 4
  %v1649 = vshll.u32 %v1557, 16
  %v1651 = vrot.slane %v1649, 5
  %v1652 = vor.u32 %v1648, %v1651
  %v1653 = vrot.slane %v1652, 4
  %v1655 = vshll.u32 %v1558, 16
  %v1657 = vrot.slane %v1655, 5
  %v1658 = vsel %vm433, %v1653, %v1657
  %v1660 = vshrl.u32 %v1559, 16
  %v1662 = vrot.slane %v1660, 4
  %v1663 = vshll.u32 %v1559, 16
  %v1665 = vrot.slane %v1663, 5
  %v1666 = vor.u32 %v1662, %v1665
  %v1667 = vrot.slane %v1666, 4
  %v1669 = vshll.u32 %v1560, 16
  %v1671 = vrot.slane %v1669, 5
  %v1672 = vsel %vm433, %v1667, %v1671
  %1681 = vst [vmem:[%s1296 + $0x10] sm:$0xf] %v1574
  %1682 = vst [vmem:[%s1296 + $0x34] sm:$0xf] %v1588
  %1683 = vst [vmem:[%s1296 + $0x58] sm:$0xf] %v1602
  %1684 = vst [vmem:[%s1296 + $0x7c] sm:$0xf] %v1616
  %1685 = vst [vmem:[%s1296 + $0xa0] sm:$0xf] %v1630
  %1686 = vst [vmem:[%s1296 + $0xc4] sm:$0xf] %v1644
  %1687 = vst [vmem:[%s1296 + $0xe8] sm:$0xf] %v1658
  %1688 = vst [vmem:[%s1296 + $0x10c] sm:$0xf] %v1672
  %v1689 = vld [vmem:[%s1238] sm:$0xe]
  %v1690 = vld [vmem:[%s1238 + $0x4] sm:$0x1]
  %v1691 = vld [vmem:[%s1238 + $0x8] sm:$0xe]
  %v1692 = vld [vmem:[%s1238 + $0xc] sm:$0x1]
  %v1693 = vld [vmem:[%s1238 + $0x10] sm:$0xe]
  %v1694 = vld [vmem:[%s1238 + $0x14] sm:$0x1]
  %v1695 = vld [vmem:[%s1238 + $0x18] sm:$0xe]
  %v1696 = vld [vmem:[%s1238 + $0x1c] sm:$0x1]
  %v1697 = vld [vmem:[%s1238 + $0x20] sm:$0xe]
  %v1698 = vld [vmem:[%s1238 + $0x24] sm:$0x1]
  %v1699 = vld [vmem:[%s1238 + $0x28] sm:$0xe]
  %v1700 = vld [vmem:[%s1238 + $0x2c] sm:$0x1]
  %v1701 = vld [vmem:[%s1238 + $0x30] sm:$0xe]
  %v1702 = vld [vmem:[%s1238 + $0x34] sm:$0x1]
  %v1703 = vld [vmem:[%s1238 + $0x38] sm:$0xe]
  %v1704 = vld [vmem:[%s1238 + $0x3c] sm:$0x1]
  %v1721 = vrot.slane %v1689, 5
  %v1722 = vrot.slane %v1721, 4
  %v1723 = vrot.slane %v1690, 5
  %v1724 = vsel %vm596, %v1722, %v1723
  %v1725 = vrot.slane %v1691, 5
  %v1726 = vrot.slane %v1725, 4
  %v1727 = vrot.slane %v1692, 5
  %v1728 = vsel %vm596, %v1726, %v1727
  %v1729 = vrot.slane %v1693, 5
  %v1730 = vrot.slane %v1729, 4
  %v1731 = vrot.slane %v1694, 5
  %v1732 = vsel %vm596, %v1730, %v1731
  %v1733 = vrot.slane %v1695, 5
  %v1734 = vrot.slane %v1733, 4
  %v1735 = vrot.slane %v1696, 5
  %v1736 = vsel %vm596, %v1734, %v1735
  %v1737 = vrot.slane %v1697, 5
  %v1738 = vrot.slane %v1737, 4
  %v1739 = vrot.slane %v1698, 5
  %v1740 = vsel %vm596, %v1738, %v1739
  %v1741 = vrot.slane %v1699, 5
  %v1742 = vrot.slane %v1741, 4
  %v1743 = vrot.slane %v1700, 5
  %v1744 = vsel %vm596, %v1742, %v1743
  %v1745 = vrot.slane %v1701, 5
  %v1746 = vrot.slane %v1745, 4
  %v1747 = vrot.slane %v1702, 5
  %v1748 = vsel %vm596, %v1746, %v1747
  %v1749 = vrot.slane %v1703, 5
  %v1750 = vrot.slane %v1749, 4
  %v1751 = vrot.slane %v1704, 5
  %v1752 = vsel %vm596, %v1750, %v1751
  %1761 = vst [vmem:[%s1296 + $0x14] sm:$0xf] %v1724
  %1762 = vst [vmem:[%s1296 + $0x38] sm:$0xf] %v1728
  %1763 = vst [vmem:[%s1296 + $0x5c] sm:$0xf] %v1732
  %1764 = vst [vmem:[%s1296 + $0x80] sm:$0xf] %v1736
  %1765 = vst [vmem:[%s1296 + $0xa4] sm:$0xf] %v1740
  %1766 = vst [vmem:[%s1296 + $0xc8] sm:$0xf] %v1744
  %1767 = vst [vmem:[%s1296 + $0xec] sm:$0xf] %v1748
  %1768 = vst [vmem:[%s1296 + $0x110] sm:$0xf] %v1752
  %s1769 = scalar_lea.vmem [#allocation2], 96
  %v1770 = vld [vmem:[%s1769] sm:$0xf]
  %v1771 = vld [vmem:[%s1769 + $0x8] sm:$0xf]
  %v1772 = vld [vmem:[%s1769 + $0x10] sm:$0xf]
  %v1773 = vld [vmem:[%s1769 + $0x18] sm:$0xf]
  %v1774 = vld [vmem:[%s1769 + $0x20] sm:$0xf]
  %v1775 = vld [vmem:[%s1769 + $0x28] sm:$0xf]
  %v1776 = vld [vmem:[%s1769 + $0x30] sm:$0xf]
  %v1777 = vld [vmem:[%s1769 + $0x38] sm:$0xf]
  %1778 = vst [vmem:[%s1296 + $0x18] sm:$0xf] %v1770
  %1779 = vst [vmem:[%s1296 + $0x3c] sm:$0xf] %v1771
  %1780 = vst [vmem:[%s1296 + $0x60] sm:$0xf] %v1772
  %1781 = vst [vmem:[%s1296 + $0x84] sm:$0xf] %v1773
  %1782 = vst [vmem:[%s1296 + $0xa8] sm:$0xf] %v1774
  %1783 = vst [vmem:[%s1296 + $0xcc] sm:$0xf] %v1775
  %1784 = vst [vmem:[%s1296 + $0xf0] sm:$0xf] %v1776
  %1785 = vst [vmem:[%s1296 + $0x114] sm:$0xf] %v1777
  %v1786 = vld [vmem:[%s1769] sm:$0xf]
  %v1787 = vld [vmem:[%s1769 + $0x4] sm:$0x1]
  %v1788 = vld [vmem:[%s1769 + $0x8] sm:$0xf]
  %v1789 = vld [vmem:[%s1769 + $0xc] sm:$0x1]
  %v1790 = vld [vmem:[%s1769 + $0x10] sm:$0xf]
  %v1791 = vld [vmem:[%s1769 + $0x14] sm:$0x1]
  %v1792 = vld [vmem:[%s1769 + $0x18] sm:$0xf]
  %v1793 = vld [vmem:[%s1769 + $0x1c] sm:$0x1]
  %v1794 = vld [vmem:[%s1769 + $0x20] sm:$0xf]
  %v1795 = vld [vmem:[%s1769 + $0x24] sm:$0x1]
  %v1796 = vld [vmem:[%s1769 + $0x28] sm:$0xf]
  %v1797 = vld [vmem:[%s1769 + $0x2c] sm:$0x1]
  %v1798 = vld [vmem:[%s1769 + $0x30] sm:$0xf]
  %v1799 = vld [vmem:[%s1769 + $0x34] sm:$0x1]
  %v1800 = vld [vmem:[%s1769 + $0x38] sm:$0xf]
  %v1801 = vld [vmem:[%s1769 + $0x3c] sm:$0x1]
  %v1803 = vshrl.u32 %v1786, 16
  %v1805 = vrot.slane %v1803, 4
  %v1806 = vshll.u32 %v1786, 16
  %v1808 = vrot.slane %v1806, 5
  %v1809 = vor.u32 %v1805, %v1808
  %v1810 = vrot.slane %v1809, 4
  %v1812 = vshll.u32 %v1787, 16
  %v1814 = vrot.slane %v1812, 5
  %v1815 = vsel %vm433, %v1810, %v1814
  %v1817 = vshrl.u32 %v1788, 16
  %v1819 = vrot.slane %v1817, 4
  %v1820 = vshll.u32 %v1788, 16
  %v1822 = vrot.slane %v1820, 5
  %v1823 = vor.u32 %v1819, %v1822
  %v1824 = vrot.slane %v1823, 4
  %v1826 = vshll.u32 %v1789, 16
  %v1828 = vrot.slane %v1826, 5
  %v1829 = vsel %vm433, %v1824, %v1828
  %v1831 = vshrl.u32 %v1790, 16
  %v1833 = vrot.slane %v1831, 4
  %v1834 = vshll.u32 %v1790, 16
  %v1836 = vrot.slane %v1834, 5
  %v1837 = vor.u32 %v1833, %v1836
  %v1838 = vrot.slane %v1837, 4
  %v1840 = vshll.u32 %v1791, 16
  %v1842 = vrot.slane %v1840, 5
  %v1843 = vsel %vm433, %v1838, %v1842
  %v1845 = vshrl.u32 %v1792, 16
  %v1847 = vrot.slane %v1845, 4
  %v1848 = vshll.u32 %v1792, 16
  %v1850 = vrot.slane %v1848, 5
  %v1851 = vor.u32 %v1847, %v1850
  %v1852 = vrot.slane %v1851, 4
  %v1854 = vshll.u32 %v1793, 16
  %v1856 = vrot.slane %v1854, 5
  %v1857 = vsel %vm433, %v1852, %v1856
  %v1859 = vshrl.u32 %v1794, 16
  %v1861 = vrot.slane %v1859, 4
  %v1862 = vshll.u32 %v1794, 16
  %v1864 = vrot.slane %v1862, 5
  %v1865 = vor.u32 %v1861, %v1864
  %v1866 = vrot.slane %v1865, 4
  %v1868 = vshll.u32 %v1795, 16
  %v1870 = vrot.slane %v1868, 5
  %v1871 = vsel %vm433, %v1866, %v1870
  %v1873 = vshrl.u32 %v1796, 16
  %v1875 = vrot.slane %v1873, 4
  %v1876 = vshll.u32 %v1796, 16
  %v1878 = vrot.slane %v1876, 5
  %v1879 = vor.u32 %v1875, %v1878
  %v1880 = vrot.slane %v1879, 4
  %v1882 = vshll.u32 %v1797, 16
  %v1884 = vrot.slane %v1882, 5
  %v1885 = vsel %vm433, %v1880, %v1884
  %v1887 = vshrl.u32 %v1798, 16
  %v1889 = vrot.slane %v1887, 4
  %v1890 = vshll.u32 %v1798, 16
  %v1892 = vrot.slane %v1890, 5
  %v1893 = vor.u32 %v1889, %v1892
  %v1894 = vrot.slane %v1893, 4
  %v1896 = vshll.u32 %v1799, 16
  %v1898 = vrot.slane %v1896, 5
  %v1899 = vsel %vm433, %v1894, %v1898
  %v1901 = vshrl.u32 %v1800, 16
  %v1903 = vrot.slane %v1901, 4
  %v1904 = vshll.u32 %v1800, 16
  %v1906 = vrot.slane %v1904, 5
  %v1907 = vor.u32 %v1903, %v1906
  %v1908 = vrot.slane %v1907, 4
  %v1910 = vshll.u32 %v1801, 16
  %v1912 = vrot.slane %v1910, 5
  %v1913 = vsel %vm433, %v1908, %v1912
  %1922 = vst [vmem:[%s1296 + $0x1c] sm:$0xf] %v1815
  %1923 = vst [vmem:[%s1296 + $0x40] sm:$0xf] %v1829
  %1924 = vst [vmem:[%s1296 + $0x64] sm:$0xf] %v1843
  %1925 = vst [vmem:[%s1296 + $0x88] sm:$0xf] %v1857
  %1926 = vst [vmem:[%s1296 + $0xac] sm:$0xf] %v1871
  %1927 = vst [vmem:[%s1296 + $0xd0] sm:$0xf] %v1885
  %1928 = vst [vmem:[%s1296 + $0xf4] sm:$0xf] %v1899
  %1929 = vst [vmem:[%s1296 + $0x118] sm:$0xf] %v1913
  %v1930 = vld [vmem:[%s1769] sm:$0xe]
  %v1931 = vld [vmem:[%s1769 + $0x4] sm:$0x1]
  %v1932 = vld [vmem:[%s1769 + $0x8] sm:$0xe]
  %v1933 = vld [vmem:[%s1769 + $0xc] sm:$0x1]
  %v1934 = vld [vmem:[%s1769 + $0x10] sm:$0xe]
  %v1935 = vld [vmem:[%s1769 + $0x14] sm:$0x1]
  %v1936 = vld [vmem:[%s1769 + $0x18] sm:$0xe]
  %v1937 = vld [vmem:[%s1769 + $0x1c] sm:$0x1]
  %v1938 = vld [vmem:[%s1769 + $0x20] sm:$0xe]
  %v1939 = vld [vmem:[%s1769 + $0x24] sm:$0x1]
  %v1940 = vld [vmem:[%s1769 + $0x28] sm:$0xe]
  %v1941 = vld [vmem:[%s1769 + $0x2c] sm:$0x1]
  %v1942 = vld [vmem:[%s1769 + $0x30] sm:$0xe]
  %v1943 = vld [vmem:[%s1769 + $0x34] sm:$0x1]
  %v1944 = vld [vmem:[%s1769 + $0x38] sm:$0xe]
  %v1945 = vld [vmem:[%s1769 + $0x3c] sm:$0x1]
  %v1962 = vrot.slane %v1930, 5
  %v1963 = vrot.slane %v1962, 4
  %v1964 = vrot.slane %v1931, 5
  %v1965 = vsel %vm596, %v1963, %v1964
  %v1966 = vrot.slane %v1932, 5
  %v1967 = vrot.slane %v1966, 4
  %v1968 = vrot.slane %v1933, 5
  %v1969 = vsel %vm596, %v1967, %v1968
  %v1970 = vrot.slane %v1934, 5
  %v1971 = vrot.slane %v1970, 4
  %v1972 = vrot.slane %v1935, 5
  %v1973 = vsel %vm596, %v1971, %v1972
  %v1974 = vrot.slane %v1936, 5
  %v1975 = vrot.slane %v1974, 4
  %v1976 = vrot.slane %v1937, 5
  %v1977 = vsel %vm596, %v1975, %v1976
  %v1978 = vrot.slane %v1938, 5
  %v1979 = vrot.slane %v1978, 4
  %v1980 = vrot.slane %v1939, 5
  %v1981 = vsel %vm596, %v1979, %v1980
  %v1982 = vrot.slane %v1940, 5
  %v1983 = vrot.slane %v1982, 4
  %v1984 = vrot.slane %v1941, 5
  %v1985 = vsel %vm596, %v1983, %v1984
  %v1986 = vrot.slane %v1942, 5
  %v1987 = vrot.slane %v1986, 4
  %v1988 = vrot.slane %v1943, 5
  %v1989 = vsel %vm596, %v1987, %v1988
  %v1990 = vrot.slane %v1944, 5
  %v1991 = vrot.slane %v1990, 4
  %v1992 = vrot.slane %v1945, 5
  %v1993 = vsel %vm596, %v1991, %v1992
  %2002 = vst [vmem:[%s1296 + $0x20] sm:$0xf] %v1965
  %2003 = vst [vmem:[%s1296 + $0x44] sm:$0xf] %v1969
  %2004 = vst [vmem:[%s1296 + $0x68] sm:$0xf] %v1973
  %2005 = vst [vmem:[%s1296 + $0x8c] sm:$0xf] %v1977
  %2006 = vst [vmem:[%s1296 + $0xb0] sm:$0xf] %v1981
  %2007 = vst [vmem:[%s1296 + $0xd4] sm:$0xf] %v1985
  %2008 = vst [vmem:[%s1296 + $0xf8] sm:$0xf] %v1989
  %2009 = vst [vmem:[%s1296 + $0x11c] sm:$0xf] %v1993
  %v2010 = vld [vmem:[#allocation3] sm:$0xff]
  %v2011 = vld [vmem:[#allocation3 + $0x8] sm:$0xff]
  %v2012 = vld [vmem:[#allocation3 + $0x10] sm:$0xff]
  %v2013 = vld [vmem:[#allocation3 + $0x18] sm:$0xff]
  %v2014 = vld [vmem:[#allocation3 + $0x20] sm:$0xf]
  %v2015 = vld [vmem:[#allocation3 + $0x24] sm:$0xff]
  %v2016 = vld [vmem:[#allocation3 + $0x2c] sm:$0xff]
  %v2017 = vld [vmem:[#allocation3 + $0x34] sm:$0xff]
  %v2018 = vld [vmem:[#allocation3 + $0x3c] sm:$0xff]
  %v2019 = vld [vmem:[#allocation3 + $0x44] sm:$0xf]
  %v2020 = vld [vmem:[#allocation3 + $0x48] sm:$0xff]
  %v2021 = vld [vmem:[#allocation3 + $0x50] sm:$0xff]
  %v2022 = vld [vmem:[#allocation3 + $0x58] sm:$0xff]
  %v2023 = vld [vmem:[#allocation3 + $0x60] sm:$0xff]
  %v2024 = vld [vmem:[#allocation3 + $0x68] sm:$0xf]
  %v2025 = vld [vmem:[#allocation3 + $0x6c] sm:$0xff]
  %v2026 = vld [vmem:[#allocation3 + $0x74] sm:$0xff]
  %v2027 = vld [vmem:[#allocation3 + $0x7c] sm:$0xff]
  %v2028 = vld [vmem:[#allocation3 + $0x84] sm:$0xff]
  %v2029 = vld [vmem:[#allocation3 + $0x8c] sm:$0xf]
  %v2030 = vld [vmem:[#allocation3 + $0x90] sm:$0xff]
  %v2031 = vld [vmem:[#allocation3 + $0x98] sm:$0xff]
  %v2032 = vld [vmem:[#allocation3 + $0xa0] sm:$0xff]
  %v2033 = vld [vmem:[#allocation3 + $0xa8] sm:$0xff]
  %v2034 = vld [vmem:[#allocation3 + $0xb0] sm:$0xf]
  %v2035 = vld [vmem:[#allocation3 + $0xb4] sm:$0xff]
  %v2036 = vld [vmem:[#allocation3 + $0xbc] sm:$0xff]
  %v2037 = vld [vmem:[#allocation3 + $0xc4] sm:$0xff]
  %v2038 = vld [vmem:[#allocation3 + $0xcc] sm:$0xff]
  %v2039 = vld [vmem:[#allocation3 + $0xd4] sm:$0xf]
  %v2040 = vld [vmem:[#allocation3 + $0xd8] sm:$0xff]
  %v2041 = vld [vmem:[#allocation3 + $0xe0] sm:$0xff]
  %v2042 = vld [vmem:[#allocation3 + $0xe8] sm:$0xff]
  %v2043 = vld [vmem:[#allocation3 + $0xf0] sm:$0xff]
  %v2044 = vld [vmem:[#allocation3 + $0xf8] sm:$0xf]
  %v2045 = vld [vmem:[#allocation3 + $0xfc] sm:$0xff]
  %v2046 = vld [vmem:[#allocation3 + $0x104] sm:$0xff]
  %v2047 = vld [vmem:[#allocation3 + $0x10c] sm:$0xff]
  %v2048 = vld [vmem:[#allocation3 + $0x114] sm:$0xff]
  %v2049 = vld [vmem:[#allocation3 + $0x11c] sm:$0xf]
  %v2050 = vld [vmem:[#allocation3 + $0x120] sm:$0xff]
  %v2051 = vld [vmem:[#allocation3 + $0x128] sm:$0xff]
  %v2052 = vld [vmem:[#allocation3 + $0x130] sm:$0xff]
  %v2053 = vld [vmem:[#allocation3 + $0x138] sm:$0xff]
  %v2054 = vld [vmem:[#allocation3 + $0x140] sm:$0xf]
  %v2055 = vld [vmem:[#allocation3 + $0x144] sm:$0xff]
  %v2056 = vld [vmem:[#allocation3 + $0x14c] sm:$0xff]
  %v2057 = vld [vmem:[#allocation3 + $0x154] sm:$0xff]
  %v2058 = vld [vmem:[#allocation3 + $0x15c] sm:$0xff]
  %v2059 = vld [vmem:[#allocation3 + $0x164] sm:$0xf]
  %v2060 = vld [vmem:[#allocation3 + $0x168] sm:$0xff]
  %v2061 = vld [vmem:[#allocation3 + $0x170] sm:$0xff]
  %v2062 = vld [vmem:[#allocation3 + $0x178] sm:$0xff]
  %v2063 = vld [vmem:[#allocation3 + $0x180] sm:$0xff]
  %v2064 = vld [vmem:[#allocation3 + $0x188] sm:$0xf]
  %v2065 = vld [vmem:[#allocation3 + $0x18c] sm:$0xff]
  %v2066 = vld [vmem:[#allocation3 + $0x194] sm:$0xff]
  %v2067 = vld [vmem:[#allocation3 + $0x19c] sm:$0xff]
  %v2068 = vld [vmem:[#allocation3 + $0x1a4] sm:$0xff]
  %v2069 = vld [vmem:[#allocation3 + $0x1ac] sm:$0xf]
  %v2070 = vld [vmem:[#allocation3 + $0x1b0] sm:$0xff]
  %v2071 = vld [vmem:[#allocation3 + $0x1b8] sm:$0xff]
  %v2072 = vld [vmem:[#allocation3 + $0x1c0] sm:$0xff]
  %v2073 = vld [vmem:[#allocation3 + $0x1c8] sm:$0xff]
  %v2074 = vld [vmem:[#allocation3 + $0x1d0] sm:$0xf]
  %v2075 = vld [vmem:[#allocation3 + $0x1d4] sm:$0xff]
  %v2076 = vld [vmem:[#allocation3 + $0x1dc] sm:$0xff]
  %v2077 = vld [vmem:[#allocation3 + $0x1e4] sm:$0xff]
  %v2078 = vld [vmem:[#allocation3 + $0x1ec] sm:$0xff]
  %v2079 = vld [vmem:[#allocation3 + $0x1f4] sm:$0xf]
  %v2080 = vld [vmem:[#allocation3 + $0x1f8] sm:$0xff]
  %v2081 = vld [vmem:[#allocation3 + $0x200] sm:$0xff]
  %v2082 = vld [vmem:[#allocation3 + $0x208] sm:$0xff]
  %v2083 = vld [vmem:[#allocation3 + $0x210] sm:$0xff]
  %v2084 = vld [vmem:[#allocation3 + $0x218] sm:$0xf]
  %v2085 = vld [vmem:[#allocation3 + $0x21c] sm:$0xff]
  %v2086 = vld [vmem:[#allocation3 + $0x224] sm:$0xff]
  %v2087 = vld [vmem:[#allocation3 + $0x22c] sm:$0xff]
  %v2088 = vld [vmem:[#allocation3 + $0x234] sm:$0xff]
  %v2089 = vld [vmem:[#allocation3 + $0x23c] sm:$0xf]
  %v2090 = vld [vmem:[%s3] sm:$0xf]
  %v2091 = vld [vmem:[%s3 + $0x4] sm:$0xf]
  %v2092 = vld [vmem:[%s3 + $0x8] sm:$0xf]
  %v2093 = vld [vmem:[%s3 + $0xc] sm:$0xf]
  %v2094 = vld [vmem:[%s3 + $0x10] sm:$0xf]
  %v2095 = vld [vmem:[%s3 + $0x14] sm:$0xf]
  %v2096 = vld [vmem:[%s3 + $0x18] sm:$0xf]
  %v2097 = vld [vmem:[%s3 + $0x1c] sm:$0xf]
  %v2098 = vld [vmem:[%s3 + $0x20] sm:$0xf]
  %v2099 = vld [vmem:[%s3 + $0x24] sm:$0xf]
  %v2100 = vld [vmem:[%s3 + $0x28] sm:$0xf]
  %v2101 = vld [vmem:[%s3 + $0x2c] sm:$0xf]
  %v2102 = vld [vmem:[%s3 + $0x30] sm:$0xf]
  %v2103 = vld [vmem:[%s3 + $0x34] sm:$0xf]
  %v2104 = vld [vmem:[%s3 + $0x38] sm:$0xf]
  %v2105 = vld [vmem:[%s3 + $0x3c] sm:$0xf]
  %v2106 = vld [vmem:[%s3 + $0x40] sm:$0xf]
  %v2107 = vld [vmem:[%s3 + $0x44] sm:$0xf]
  %v2108 = vld [vmem:[%s3 + $0x48] sm:$0xf]
  %v2109 = vld [vmem:[%s3 + $0x4c] sm:$0xf]
  %v2110 = vld [vmem:[%s3 + $0x50] sm:$0xf]
  %v2111 = vld [vmem:[%s3 + $0x54] sm:$0xf]
  %v2112 = vld [vmem:[%s3 + $0x58] sm:$0xf]
  %v2113 = vld [vmem:[%s3 + $0x5c] sm:$0xf]
  %v2114 = vld [vmem:[%s3 + $0x60] sm:$0xf]
  %v2115 = vld [vmem:[%s3 + $0x64] sm:$0xf]
  %v2116 = vld [vmem:[%s3 + $0x68] sm:$0xf]
  %v2117 = vld [vmem:[%s3 + $0x6c] sm:$0xf]
  %v2118 = vld [vmem:[%s3 + $0x70] sm:$0xf]
  %v2119 = vld [vmem:[%s3 + $0x74] sm:$0xf]
  %v2120 = vld [vmem:[%s3 + $0x78] sm:$0xf]
  %v2121 = vld [vmem:[%s3 + $0x7c] sm:$0xf]
  %v2122 = vld [vmem:[%s3 + $0x80] sm:$0xf]
  %v2123 = vld [vmem:[%s3 + $0x84] sm:$0xf]
  %v2124 = vld [vmem:[%s3 + $0x88] sm:$0xf]
  %v2125 = vld [vmem:[%s3 + $0x8c] sm:$0xf]
  %v2126 = vld [vmem:[%s3 + $0x90] sm:$0xf]
  %v2127 = vld [vmem:[%s3 + $0x94] sm:$0xf]
  %v2128 = vld [vmem:[%s3 + $0x98] sm:$0xf]
  %v2129 = vld [vmem:[%s3 + $0x9c] sm:$0xf]
  %v2130 = vld [vmem:[%s3 + $0xa0] sm:$0xf]
  %v2131 = vld [vmem:[%s3 + $0xa4] sm:$0xf]
  %v2132 = vld [vmem:[%s3 + $0xa8] sm:$0xf]
  %v2133 = vld [vmem:[%s3 + $0xac] sm:$0xf]
  %v2134 = vld [vmem:[%s3 + $0xb0] sm:$0xf]
  %v2135 = vld [vmem:[%s3 + $0xb4] sm:$0xf]
  %v2136 = vld [vmem:[%s3 + $0xb8] sm:$0xf]
  %v2137 = vld [vmem:[%s3 + $0xbc] sm:$0xf]
  %v2138 = vld [vmem:[%s3 + $0xc0] sm:$0xf]
  %v2139 = vld [vmem:[%s3 + $0xc4] sm:$0xf]
  %v2140 = vld [vmem:[%s3 + $0xc8] sm:$0xf]
  %v2141 = vld [vmem:[%s3 + $0xcc] sm:$0xf]
  %v2142 = vld [vmem:[%s3 + $0xd0] sm:$0xf]
  %v2143 = vld [vmem:[%s3 + $0xd4] sm:$0xf]
  %v2144 = vld [vmem:[%s3 + $0xd8] sm:$0xf]
  %v2145 = vld [vmem:[%s3 + $0xdc] sm:$0xf]
  %v2146 = vld [vmem:[%s3 + $0xe0] sm:$0xf]
  %v2147 = vld [vmem:[%s3 + $0xe4] sm:$0xf]
  %v2148 = vld [vmem:[%s3 + $0xe8] sm:$0xf]
  %v2149 = vld [vmem:[%s3 + $0xec] sm:$0xf]
  %v2150 = vld [vmem:[%s3 + $0xf0] sm:$0xf]
  %v2151 = vld [vmem:[%s3 + $0xf4] sm:$0xf]
  %v2152 = vld [vmem:[%s3 + $0xf8] sm:$0xf]
  %v2153 = vld [vmem:[%s3 + $0xfc] sm:$0xf]
  %v2154 = vld [vmem:[%s3 + $0x100] sm:$0xf]
  %v2155 = vld [vmem:[%s3 + $0x104] sm:$0xf]
  %v2156 = vld [vmem:[%s3 + $0x108] sm:$0xf]
  %v2157 = vld [vmem:[%s3 + $0x10c] sm:$0xf]
  %v2158 = vld [vmem:[%s3 + $0x110] sm:$0xf]
  %v2159 = vld [vmem:[%s3 + $0x114] sm:$0xf]
  %v2160 = vld [vmem:[%s3 + $0x118] sm:$0xf]
  %v2161 = vld [vmem:[%s3 + $0x11c] sm:$0xf]
  %v2162 = vld [vmem:[%s3 + $0x120] sm:$0xf]
  %v2163 = vld [vmem:[%s3 + $0x124] sm:$0xf]
  %v2164 = vld [vmem:[%s3 + $0x128] sm:$0xf]
  %v2165 = vld [vmem:[%s3 + $0x12c] sm:$0xf]
  %v2166 = vld [vmem:[%s3 + $0x130] sm:$0xf]
  %v2167 = vld [vmem:[%s3 + $0x134] sm:$0xf]
  %v2168 = vld [vmem:[%s3 + $0x138] sm:$0xf]
  %v2169 = vld [vmem:[%s3 + $0x13c] sm:$0xf]
  %v2170 = vld [vmem:[%s3 + $0x140] sm:$0xf]
  %v2171 = vld [vmem:[%s3 + $0x144] sm:$0xf]
  %v2172 = vld [vmem:[%s3 + $0x148] sm:$0xf]
  %v2173 = vld [vmem:[%s3 + $0x14c] sm:$0xf]
  %v2174 = vld [vmem:[%s3 + $0x150] sm:$0xf]
  %v2175 = vld [vmem:[%s3 + $0x154] sm:$0xf]
  %v2176 = vld [vmem:[%s3 + $0x158] sm:$0xf]
  %v2177 = vld [vmem:[%s3 + $0x15c] sm:$0xf]
  %v2178 = vld [vmem:[%s3 + $0x160] sm:$0xf]
  %v2179 = vld [vmem:[%s3 + $0x164] sm:$0xf]
  %v2180 = vld [vmem:[%s3 + $0x168] sm:$0xf]
  %v2181 = vld [vmem:[%s3 + $0x16c] sm:$0xf]
  %v2182 = vld [vmem:[%s3 + $0x170] sm:$0xf]
  %v2183 = vld [vmem:[%s3 + $0x174] sm:$0xf]
  %v2184 = vld [vmem:[%s3 + $0x178] sm:$0xf]
  %v2185 = vld [vmem:[%s3 + $0x17c] sm:$0xf]
  %v2186 = vld [vmem:[%s3 + $0x180] sm:$0xf]
  %v2187 = vld [vmem:[%s3 + $0x184] sm:$0xf]
  %v2188 = vld [vmem:[%s3 + $0x188] sm:$0xf]
  %v2189 = vld [vmem:[%s3 + $0x18c] sm:$0xf]
  %v2190 = vld [vmem:[%s3 + $0x190] sm:$0xf]
  %v2191 = vld [vmem:[%s3 + $0x194] sm:$0xf]
  %v2192 = vld [vmem:[%s3 + $0x198] sm:$0xf]
  %v2193 = vld [vmem:[%s3 + $0x19c] sm:$0xf]
  %v2194 = vld [vmem:[%s3 + $0x1a0] sm:$0xf]
  %v2195 = vld [vmem:[%s3 + $0x1a4] sm:$0xf]
  %v2196 = vld [vmem:[%s3 + $0x1a8] sm:$0xf]
  %v2197 = vld [vmem:[%s3 + $0x1ac] sm:$0xf]
  %v2198 = vld [vmem:[%s3 + $0x1b0] sm:$0xf]
  %v2199 = vld [vmem:[%s3 + $0x1b4] sm:$0xf]
  %v2200 = vld [vmem:[%s3 + $0x1b8] sm:$0xf]
  %v2201 = vld [vmem:[%s3 + $0x1bc] sm:$0xf]
  %v2202 = vld [vmem:[%s3 + $0x1c0] sm:$0xf]
  %v2203 = vld [vmem:[%s3 + $0x1c4] sm:$0xf]
  %v2204 = vld [vmem:[%s3 + $0x1c8] sm:$0xf]
  %v2205 = vld [vmem:[%s3 + $0x1cc] sm:$0xf]
  %v2206 = vld [vmem:[%s3 + $0x1d0] sm:$0xf]
  %v2207 = vld [vmem:[%s3 + $0x1d4] sm:$0xf]
  %v2208 = vld [vmem:[%s3 + $0x1d8] sm:$0xf]
  %v2209 = vld [vmem:[%s3 + $0x1dc] sm:$0xf]
  %v2210 = vld [vmem:[%s3 + $0x1e0] sm:$0xf]
  %v2211 = vld [vmem:[%s3 + $0x1e4] sm:$0xf]
  %v2212 = vld [vmem:[%s3 + $0x1e8] sm:$0xf]
  %v2213 = vld [vmem:[%s3 + $0x1ec] sm:$0xf]
  %v2214 = vld [vmem:[%s3 + $0x1f0] sm:$0xf]
  %v2215 = vld [vmem:[%s3 + $0x1f4] sm:$0xf]
  %v2216 = vld [vmem:[%s3 + $0x1f8] sm:$0xf]
  %v2217 = vld [vmem:[%s3 + $0x1fc] sm:$0xf]
  %v2218 = vld [vmem:[%s3 + $0x200] sm:$0xf]
  %v2219 = vld [vmem:[%s3 + $0x204] sm:$0xf]
  %v2220 = vld [vmem:[%s3 + $0x208] sm:$0xf]
  %v2221 = vld [vmem:[%s3 + $0x20c] sm:$0xf]
  %v2222 = vld [vmem:[%s3 + $0x210] sm:$0xf]
  %v2223 = vld [vmem:[%s3 + $0x214] sm:$0xf]
  %v2224 = vld [vmem:[%s3 + $0x218] sm:$0xf]
  %v2225 = vld [vmem:[%s3 + $0x21c] sm:$0xf]
  %v2226 = vld [vmem:[%s3 + $0x220] sm:$0xf]
  %v2227 = vld [vmem:[%s3 + $0x224] sm:$0xf]
  %v2228 = vld [vmem:[%s3 + $0x228] sm:$0xf]
  %v2229 = vld [vmem:[%s3 + $0x22c] sm:$0xf]
  %v2230 = vld [vmem:[%s3 + $0x230] sm:$0xf]
  %v2231 = vld [vmem:[%s3 + $0x234] sm:$0xf]
  %v2232 = vld [vmem:[%s3 + $0x238] sm:$0xf]
  %v2233 = vld [vmem:[%s3 + $0x23c] sm:$0xf]
  %v2314 = vunpack.c.l.b16 %v2010
  %v2315 = vunpack.c.h.b16 %v2010
  %v2316 = vunpack.c.l.b16 %v2011
  %v2317 = vunpack.c.h.b16 %v2011
  %v2318 = vunpack.c.l.b16 %v2012
  %v2319 = vunpack.c.h.b16 %v2012
  %v2320 = vunpack.c.l.b16 %v2013
  %v2321 = vunpack.c.h.b16 %v2013
  %v2322 = vunpack.c.l.b16 %v2014
  %v2323 = vunpack.c.l.b16 %v2015
  %v2324 = vunpack.c.h.b16 %v2015
  %v2325 = vunpack.c.l.b16 %v2016
  %v2326 = vunpack.c.h.b16 %v2016
  %v2327 = vunpack.c.l.b16 %v2017
  %v2328 = vunpack.c.h.b16 %v2017
  %v2329 = vunpack.c.l.b16 %v2018
  %v2330 = vunpack.c.h.b16 %v2018
  %v2331 = vunpack.c.l.b16 %v2019
  %v2332 = vunpack.c.l.b16 %v2020
  %v2333 = vunpack.c.h.b16 %v2020
  %v2334 = vunpack.c.l.b16 %v2021
  %v2335 = vunpack.c.h.b16 %v2021
  %v2336 = vunpack.c.l.b16 %v2022
  %v2337 = vunpack.c.h.b16 %v2022
  %v2338 = vunpack.c.l.b16 %v2023
  %v2339 = vunpack.c.h.b16 %v2023
  %v2340 = vunpack.c.l.b16 %v2024
  %v2341 = vunpack.c.l.b16 %v2025
  %v2342 = vunpack.c.h.b16 %v2025
  %v2343 = vunpack.c.l.b16 %v2026
  %v2344 = vunpack.c.h.b16 %v2026
  %v2345 = vunpack.c.l.b16 %v2027
  %v2346 = vunpack.c.h.b16 %v2027
  %v2347 = vunpack.c.l.b16 %v2028
  %v2348 = vunpack.c.h.b16 %v2028
  %v2349 = vunpack.c.l.b16 %v2029
  %v2350 = vunpack.c.l.b16 %v2030
  %v2351 = vunpack.c.h.b16 %v2030
  %v2352 = vunpack.c.l.b16 %v2031
  %v2353 = vunpack.c.h.b16 %v2031
  %v2354 = vunpack.c.l.b16 %v2032
  %v2355 = vunpack.c.h.b16 %v2032
  %v2356 = vunpack.c.l.b16 %v2033
  %v2357 = vunpack.c.h.b16 %v2033
  %v2358 = vunpack.c.l.b16 %v2034
  %v2359 = vunpack.c.l.b16 %v2035
  %v2360 = vunpack.c.h.b16 %v2035
  %v2361 = vunpack.c.l.b16 %v2036
  %v2362 = vunpack.c.h.b16 %v2036
  %v2363 = vunpack.c.l.b16 %v2037
  %v2364 = vunpack.c.h.b16 %v2037
  %v2365 = vunpack.c.l.b16 %v2038
  %v2366 = vunpack.c.h.b16 %v2038
  %v2367 = vunpack.c.l.b16 %v2039
  %v2368 = vunpack.c.l.b16 %v2040
  %v2369 = vunpack.c.h.b16 %v2040
  %v2370 = vunpack.c.l.b16 %v2041
  %v2371 = vunpack.c.h.b16 %v2041
  %v2372 = vunpack.c.l.b16 %v2042
  %v2373 = vunpack.c.h.b16 %v2042
  %v2374 = vunpack.c.l.b16 %v2043
  %v2375 = vunpack.c.h.b16 %v2043
  %v2376 = vunpack.c.l.b16 %v2044
  %v2377 = vunpack.c.l.b16 %v2045
  %v2378 = vunpack.c.h.b16 %v2045
  %v2379 = vunpack.c.l.b16 %v2046
  %v2380 = vunpack.c.h.b16 %v2046
  %v2381 = vunpack.c.l.b16 %v2047
  %v2382 = vunpack.c.h.b16 %v2047
  %v2383 = vunpack.c.l.b16 %v2048
  %v2384 = vunpack.c.h.b16 %v2048
  %v2385 = vunpack.c.l.b16 %v2049
  %v2386 = vunpack.c.l.b16 %v2050
  %v2387 = vunpack.c.h.b16 %v2050
  %v2388 = vunpack.c.l.b16 %v2051
  %v2389 = vunpack.c.h.b16 %v2051
  %v2390 = vunpack.c.l.b16 %v2052
  %v2391 = vunpack.c.h.b16 %v2052
  %v2392 = vunpack.c.l.b16 %v2053
  %v2393 = vunpack.c.h.b16 %v2053
  %v2394 = vunpack.c.l.b16 %v2054
  %v2395 = vunpack.c.l.b16 %v2055
  %v2396 = vunpack.c.h.b16 %v2055
  %v2397 = vunpack.c.l.b16 %v2056
  %v2398 = vunpack.c.h.b16 %v2056
  %v2399 = vunpack.c.l.b16 %v2057
  %v2400 = vunpack.c.h.b16 %v2057
  %v2401 = vunpack.c.l.b16 %v2058
  %v2402 = vunpack.c.h.b16 %v2058
  %v2403 = vunpack.c.l.b16 %v2059
  %v2404 = vunpack.c.l.b16 %v2060
  %v2405 = vunpack.c.h.b16 %v2060
  %v2406 = vunpack.c.l.b16 %v2061
  %v2407 = vunpack.c.h.b16 %v2061
  %v2408 = vunpack.c.l.b16 %v2062
  %v2409 = vunpack.c.h.b16 %v2062
  %v2410 = vunpack.c.l.b16 %v2063
  %v2411 = vunpack.c.h.b16 %v2063
  %v2412 = vunpack.c.l.b16 %v2064
  %v2413 = vunpack.c.l.b16 %v2065
  %v2414 = vunpack.c.h.b16 %v2065
  %v2415 = vunpack.c.l.b16 %v2066
  %v2416 = vunpack.c.h.b16 %v2066
  %v2417 = vunpack.c.l.b16 %v2067
  %v2418 = vunpack.c.h.b16 %v2067
  %v2419 = vunpack.c.l.b16 %v2068
  %v2420 = vunpack.c.h.b16 %v2068
  %v2421 = vunpack.c.l.b16 %v2069
  %v2422 = vunpack.c.l.b16 %v2070
  %v2423 = vunpack.c.h.b16 %v2070
  %v2424 = vunpack.c.l.b16 %v2071
  %v2425 = vunpack.c.h.b16 %v2071
  %v2426 = vunpack.c.l.b16 %v2072
  %v2427 = vunpack.c.h.b16 %v2072
  %v2428 = vunpack.c.l.b16 %v2073
  %v2429 = vunpack.c.h.b16 %v2073
  %v2430 = vunpack.c.l.b16 %v2074
  %v2431 = vunpack.c.l.b16 %v2075
  %v2432 = vunpack.c.h.b16 %v2075
  %v2433 = vunpack.c.l.b16 %v2076
  %v2434 = vunpack.c.h.b16 %v2076
  %v2435 = vunpack.c.l.b16 %v2077
  %v2436 = vunpack.c.h.b16 %v2077
  %v2437 = vunpack.c.l.b16 %v2078
  %v2438 = vunpack.c.h.b16 %v2078
  %v2439 = vunpack.c.l.b16 %v2079
  %v2440 = vunpack.c.l.b16 %v2080
  %v2441 = vunpack.c.h.b16 %v2080
  %v2442 = vunpack.c.l.b16 %v2081
  %v2443 = vunpack.c.h.b16 %v2081
  %v2444 = vunpack.c.l.b16 %v2082
  %v2445 = vunpack.c.h.b16 %v2082
  %v2446 = vunpack.c.l.b16 %v2083
  %v2447 = vunpack.c.h.b16 %v2083
  %v2448 = vunpack.c.l.b16 %v2084
  %v2449 = vunpack.c.l.b16 %v2085
  %v2450 = vunpack.c.h.b16 %v2085
  %v2451 = vunpack.c.l.b16 %v2086
  %v2452 = vunpack.c.h.b16 %v2086
  %v2453 = vunpack.c.l.b16 %v2087
  %v2454 = vunpack.c.h.b16 %v2087
  %v2455 = vunpack.c.l.b16 %v2088
  %v2456 = vunpack.c.h.b16 %v2088
  %v2457 = vunpack.c.l.b16 %v2089
  %v2458 = vpack.c.b16 %v2323, %v2314
  %v2459 = vpack.c.b16 %v2324, %v2315
  %v2460 = vpack.c.b16 %v2325, %v2316
  %v2461 = vpack.c.b16 %v2326, %v2317
  %v2462 = vpack.c.b16 %v2327, %v2318
  %v2463 = vpack.c.b16 %v2328, %v2319
  %v2464 = vpack.c.b16 %v2329, %v2320
  %v2465 = vpack.c.b16 %v2330, %v2321
  %v2466 = vpack.c.b16 %v2331, %v2322
  %v2467 = vpack.c.b16 %v2341, %v2332
  %v2468 = vpack.c.b16 %v2342, %v2333
  %v2469 = vpack.c.b16 %v2343, %v2334
  %v2470 = vpack.c.b16 %v2344, %v2335
  %v2471 = vpack.c.b16 %v2345, %v2336
  %v2472 = vpack.c.b16 %v2346, %v2337
  %v2473 = vpack.c.b16 %v2347, %v2338
  %v2474 = vpack.c.b16 %v2348, %v2339
  %v2475 = vpack.c.b16 %v2349, %v2340
  %v2476 = vpack.c.b16 %v2359, %v2350
  %v2477 = vpack.c.b16 %v2360, %v2351
  %v2478 = vpack.c.b16 %v2361, %v2352
  %v2479 = vpack.c.b16 %v2362, %v2353
  %v2480 = vpack.c.b16 %v2363, %v2354
  %v2481 = vpack.c.b16 %v2364, %v2355
  %v2482 = vpack.c.b16 %v2365, %v2356
  %v2483 = vpack.c.b16 %v2366, %v2357
  %v2484 = vpack.c.b16 %v2367, %v2358
  %v2485 = vpack.c.b16 %v2377, %v2368
  %v2486 = vpack.c.b16 %v2378, %v2369
  %v2487 = vpack.c.b16 %v2379, %v2370
  %v2488 = vpack.c.b16 %v2380, %v2371
  %v2489 = vpack.c.b16 %v2381, %v2372
  %v2490 = vpack.c.b16 %v2382, %v2373
  %v2491 = vpack.c.b16 %v2383, %v2374
  %v2492 = vpack.c.b16 %v2384, %v2375
  %v2493 = vpack.c.b16 %v2385, %v2376
  %v2494 = vpack.c.b16 %v2395, %v2386
  %v2495 = vpack.c.b16 %v2396, %v2387
  %v2496 = vpack.c.b16 %v2397, %v2388
  %v2497 = vpack.c.b16 %v2398, %v2389
  %v2498 = vpack.c.b16 %v2399, %v2390
  %v2499 = vpack.c.b16 %v2400, %v2391
  %v2500 = vpack.c.b16 %v2401, %v2392
  %v2501 = vpack.c.b16 %v2402, %v2393
  %v2502 = vpack.c.b16 %v2403, %v2394
  %v2503 = vpack.c.b16 %v2413, %v2404
  %v2504 = vpack.c.b16 %v2414, %v2405
  %v2505 = vpack.c.b16 %v2415, %v2406
  %v2506 = vpack.c.b16 %v2416, %v2407
  %v2507 = vpack.c.b16 %v2417, %v2408
  %v2508 = vpack.c.b16 %v2418, %v2409
  %v2509 = vpack.c.b16 %v2419, %v2410
  %v2510 = vpack.c.b16 %v2420, %v2411
  %v2511 = vpack.c.b16 %v2421, %v2412
  %v2512 = vpack.c.b16 %v2431, %v2422
  %v2513 = vpack.c.b16 %v2432, %v2423
  %v2514 = vpack.c.b16 %v2433, %v2424
  %v2515 = vpack.c.b16 %v2434, %v2425
  %v2516 = vpack.c.b16 %v2435, %v2426
  %v2517 = vpack.c.b16 %v2436, %v2427
  %v2518 = vpack.c.b16 %v2437, %v2428
  %v2519 = vpack.c.b16 %v2438, %v2429
  %v2520 = vpack.c.b16 %v2439, %v2430
  %v2521 = vpack.c.b16 %v2449, %v2440
  %v2522 = vpack.c.b16 %v2450, %v2441
  %v2523 = vpack.c.b16 %v2451, %v2442
  %v2524 = vpack.c.b16 %v2452, %v2443
  %v2525 = vpack.c.b16 %v2453, %v2444
  %v2526 = vpack.c.b16 %v2454, %v2445
  %v2527 = vpack.c.b16 %v2455, %v2446
  %v2528 = vpack.c.b16 %v2456, %v2447
  %v2529 = vpack.c.b16 %v2457, %v2448
  %v2746 = vunpack.c.l.b16 %v2090
  %v2747 = vunpack.c.l.b16 %v2091
  %v2748 = vunpack.c.l.b16 %v2092
  %v2749 = vunpack.c.l.b16 %v2093
  %v2750 = vunpack.c.l.b16 %v2094
  %v2751 = vunpack.c.l.b16 %v2095
  %v2752 = vunpack.c.l.b16 %v2096
  %v2753 = vunpack.c.l.b16 %v2097
  %v2754 = vunpack.c.l.b16 %v2098
  %v2755 = vunpack.c.l.b16 %v2099
  %v2756 = vunpack.c.l.b16 %v2100
  %v2757 = vunpack.c.l.b16 %v2101
  %v2758 = vunpack.c.l.b16 %v2102
  %v2759 = vunpack.c.l.b16 %v2103
  %v2760 = vunpack.c.l.b16 %v2104
  %v2761 = vunpack.c.l.b16 %v2105
  %v2762 = vunpack.c.l.b16 %v2106
  %v2763 = vunpack.c.l.b16 %v2107
  %v2764 = vunpack.c.l.b16 %v2108
  %v2765 = vunpack.c.l.b16 %v2109
  %v2766 = vunpack.c.l.b16 %v2110
  %v2767 = vunpack.c.l.b16 %v2111
  %v2768 = vunpack.c.l.b16 %v2112
  %v2769 = vunpack.c.l.b16 %v2113
  %v2770 = vunpack.c.l.b16 %v2114
  %v2771 = vunpack.c.l.b16 %v2115
  %v2772 = vunpack.c.l.b16 %v2116
  %v2773 = vunpack.c.l.b16 %v2117
  %v2774 = vunpack.c.l.b16 %v2118
  %v2775 = vunpack.c.l.b16 %v2119
  %v2776 = vunpack.c.l.b16 %v2120
  %v2777 = vunpack.c.l.b16 %v2121
  %v2778 = vunpack.c.l.b16 %v2122
  %v2779 = vunpack.c.l.b16 %v2123
  %v2780 = vunpack.c.l.b16 %v2124
  %v2781 = vunpack.c.l.b16 %v2125
  %v2782 = vunpack.c.l.b16 %v2126
  %v2783 = vunpack.c.l.b16 %v2127
  %v2784 = vunpack.c.l.b16 %v2128
  %v2785 = vunpack.c.l.b16 %v2129
  %v2786 = vunpack.c.l.b16 %v2130
  %v2787 = vunpack.c.l.b16 %v2131
  %v2788 = vunpack.c.l.b16 %v2132
  %v2789 = vunpack.c.l.b16 %v2133
  %v2790 = vunpack.c.l.b16 %v2134
  %v2791 = vunpack.c.l.b16 %v2135
  %v2792 = vunpack.c.l.b16 %v2136
  %v2793 = vunpack.c.l.b16 %v2137
  %v2794 = vunpack.c.l.b16 %v2138
  %v2795 = vunpack.c.l.b16 %v2139
  %v2796 = vunpack.c.l.b16 %v2140
  %v2797 = vunpack.c.l.b16 %v2141
  %v2798 = vunpack.c.l.b16 %v2142
  %v2799 = vunpack.c.l.b16 %v2143
  %v2800 = vunpack.c.l.b16 %v2144
  %v2801 = vunpack.c.l.b16 %v2145
  %v2802 = vunpack.c.l.b16 %v2146
  %v2803 = vunpack.c.l.b16 %v2147
  %v2804 = vunpack.c.l.b16 %v2148
  %v2805 = vunpack.c.l.b16 %v2149
  %v2806 = vunpack.c.l.b16 %v2150
  %v2807 = vunpack.c.l.b16 %v2151
  %v2808 = vunpack.c.l.b16 %v2152
  %v2809 = vunpack.c.l.b16 %v2153
  %v2810 = vunpack.c.l.b16 %v2154
  %v2811 = vunpack.c.l.b16 %v2155
  %v2812 = vunpack.c.l.b16 %v2156
  %v2813 = vunpack.c.l.b16 %v2157
  %v2814 = vunpack.c.l.b16 %v2158
  %v2815 = vunpack.c.l.b16 %v2159
  %v2816 = vunpack.c.l.b16 %v2160
  %v2817 = vunpack.c.l.b16 %v2161
  %v2818 = vunpack.c.l.b16 %v2162
  %v2819 = vunpack.c.l.b16 %v2163
  %v2820 = vunpack.c.l.b16 %v2164
  %v2821 = vunpack.c.l.b16 %v2165
  %v2822 = vunpack.c.l.b16 %v2166
  %v2823 = vunpack.c.l.b16 %v2167
  %v2824 = vunpack.c.l.b16 %v2168
  %v2825 = vunpack.c.l.b16 %v2169
  %v2826 = vunpack.c.l.b16 %v2170
  %v2827 = vunpack.c.l.b16 %v2171
  %v2828 = vunpack.c.l.b16 %v2172
  %v2829 = vunpack.c.l.b16 %v2173
  %v2830 = vunpack.c.l.b16 %v2174
  %v2831 = vunpack.c.l.b16 %v2175
  %v2832 = vunpack.c.l.b16 %v2176
  %v2833 = vunpack.c.l.b16 %v2177
  %v2834 = vunpack.c.l.b16 %v2178
  %v2835 = vunpack.c.l.b16 %v2179
  %v2836 = vunpack.c.l.b16 %v2180
  %v2837 = vunpack.c.l.b16 %v2181
  %v2838 = vunpack.c.l.b16 %v2182
  %v2839 = vunpack.c.l.b16 %v2183
  %v2840 = vunpack.c.l.b16 %v2184
  %v2841 = vunpack.c.l.b16 %v2185
  %v2842 = vunpack.c.l.b16 %v2186
  %v2843 = vunpack.c.l.b16 %v2187
  %v2844 = vunpack.c.l.b16 %v2188
  %v2845 = vunpack.c.l.b16 %v2189
  %v2846 = vunpack.c.l.b16 %v2190
  %v2847 = vunpack.c.l.b16 %v2191
  %v2848 = vunpack.c.l.b16 %v2192
  %v2849 = vunpack.c.l.b16 %v2193
  %v2850 = vunpack.c.l.b16 %v2194
  %v2851 = vunpack.c.l.b16 %v2195
  %v2852 = vunpack.c.l.b16 %v2196
  %v2853 = vunpack.c.l.b16 %v2197
  %v2854 = vunpack.c.l.b16 %v2198
  %v2855 = vunpack.c.l.b16 %v2199
  %v2856 = vunpack.c.l.b16 %v2200
  %v2857 = vunpack.c.l.b16 %v2201
  %v2858 = vunpack.c.l.b16 %v2202
  %v2859 = vunpack.c.l.b16 %v2203
  %v2860 = vunpack.c.l.b16 %v2204
  %v2861 = vunpack.c.l.b16 %v2205
  %v2862 = vunpack.c.l.b16 %v2206
  %v2863 = vunpack.c.l.b16 %v2207
  %v2864 = vunpack.c.l.b16 %v2208
  %v2865 = vunpack.c.l.b16 %v2209
  %v2866 = vunpack.c.l.b16 %v2210
  %v2867 = vunpack.c.l.b16 %v2211
  %v2868 = vunpack.c.l.b16 %v2212
  %v2869 = vunpack.c.l.b16 %v2213
  %v2870 = vunpack.c.l.b16 %v2214
  %v2871 = vunpack.c.l.b16 %v2215
  %v2872 = vunpack.c.l.b16 %v2216
  %v2873 = vunpack.c.l.b16 %v2217
  %v2874 = vunpack.c.l.b16 %v2218
  %v2875 = vunpack.c.l.b16 %v2219
  %v2876 = vunpack.c.l.b16 %v2220
  %v2877 = vunpack.c.l.b16 %v2221
  %v2878 = vunpack.c.l.b16 %v2222
  %v2879 = vunpack.c.l.b16 %v2223
  %v2880 = vunpack.c.l.b16 %v2224
  %v2881 = vunpack.c.l.b16 %v2225
  %v2882 = vunpack.c.l.b16 %v2226
  %v2883 = vunpack.c.l.b16 %v2227
  %v2884 = vunpack.c.l.b16 %v2228
  %v2885 = vunpack.c.l.b16 %v2229
  %v2886 = vunpack.c.l.b16 %v2230
  %v2887 = vunpack.c.l.b16 %v2231
  %v2888 = vunpack.c.l.b16 %v2232
  %v2889 = vunpack.c.l.b16 %v2233
  %v2890 = vpack.c.b16 %v2747, %v2746
  %v2891 = vpack.c.b16 %v2749, %v2748
  %v2892 = vpack.c.b16 %v2751, %v2750
  %v2893 = vpack.c.b16 %v2753, %v2752
  %v2894 = vpack.c.b16 %v2755, %v2754
  %v2895 = vpack.c.b16 %v2757, %v2756
  %v2896 = vpack.c.b16 %v2759, %v2758
  %v2897 = vpack.c.b16 %v2761, %v2760
  %v2898 = vpack.c.b16 %v2763, %v2762
  %v2899 = vpack.c.b16 %v2765, %v2764
  %v2900 = vpack.c.b16 %v2767, %v2766
  %v2901 = vpack.c.b16 %v2769, %v2768
  %v2902 = vpack.c.b16 %v2771, %v2770
  %v2903 = vpack.c.b16 %v2773, %v2772
  %v2904 = vpack.c.b16 %v2775, %v2774
  %v2905 = vpack.c.b16 %v2777, %v2776
  %v2906 = vpack.c.b16 %v2779, %v2778
  %v2907 = vpack.c.b16 %v2781, %v2780
  %v2908 = vpack.c.b16 %v2783, %v2782
  %v2909 = vpack.c.b16 %v2785, %v2784
  %v2910 = vpack.c.b16 %v2787, %v2786
  %v2911 = vpack.c.b16 %v2789, %v2788
  %v2912 = vpack.c.b16 %v2791, %v2790
  %v2913 = vpack.c.b16 %v2793, %v2792
  %v2914 = vpack.c.b16 %v2795, %v2794
  %v2915 = vpack.c.b16 %v2797, %v2796
  %v2916 = vpack.c.b16 %v2799, %v2798
  %v2917 = vpack.c.b16 %v2801, %v2800
  %v2918 = vpack.c.b16 %v2803, %v2802
  %v2919 = vpack.c.b16 %v2805, %v2804
  %v2920 = vpack.c.b16 %v2807, %v2806
  %v2921 = vpack.c.b16 %v2809, %v2808
  %v2922 = vpack.c.b16 %v2811, %v2810
  %v2923 = vpack.c.b16 %v2813, %v2812
  %v2924 = vpack.c.b16 %v2815, %v2814
  %v2925 = vpack.c.b16 %v2817, %v2816
  %v2926 = vpack.c.b16 %v2819, %v2818
  %v2927 = vpack.c.b16 %v2821, %v2820
  %v2928 = vpack.c.b16 %v2823, %v2822
  %v2929 = vpack.c.b16 %v2825, %v2824
  %v2930 = vpack.c.b16 %v2827, %v2826
  %v2931 = vpack.c.b16 %v2829, %v2828
  %v2932 = vpack.c.b16 %v2831, %v2830
  %v2933 = vpack.c.b16 %v2833, %v2832
  %v2934 = vpack.c.b16 %v2835, %v2834
  %v2935 = vpack.c.b16 %v2837, %v2836
  %v2936 = vpack.c.b16 %v2839, %v2838
  %v2937 = vpack.c.b16 %v2841, %v2840
  %v2938 = vpack.c.b16 %v2843, %v2842
  %v2939 = vpack.c.b16 %v2845, %v2844
  %v2940 = vpack.c.b16 %v2847, %v2846
  %v2941 = vpack.c.b16 %v2849, %v2848
  %v2942 = vpack.c.b16 %v2851, %v2850
  %v2943 = vpack.c.b16 %v2853, %v2852
  %v2944 = vpack.c.b16 %v2855, %v2854
  %v2945 = vpack.c.b16 %v2857, %v2856
  %v2946 = vpack.c.b16 %v2859, %v2858
  %v2947 = vpack.c.b16 %v2861, %v2860
  %v2948 = vpack.c.b16 %v2863, %v2862
  %v2949 = vpack.c.b16 %v2865, %v2864
  %v2950 = vpack.c.b16 %v2867, %v2866
  %v2951 = vpack.c.b16 %v2869, %v2868
  %v2952 = vpack.c.b16 %v2871, %v2870
  %v2953 = vpack.c.b16 %v2873, %v2872
  %v2954 = vpack.c.b16 %v2875, %v2874
  %v2955 = vpack.c.b16 %v2877, %v2876
  %v2956 = vpack.c.b16 %v2879, %v2878
  %v2957 = vpack.c.b16 %v2881, %v2880
  %v2958 = vpack.c.b16 %v2883, %v2882
  %v2959 = vpack.c.b16 %v2885, %v2884
  %v2960 = vpack.c.b16 %v2887, %v2886
  %v2961 = vpack.c.b16 %v2889, %v2888
  %3034 = vmatprep.subr.bf16.mxu0 0
  %3035 = vmatpush1.bf16.msra.mxu0 %v2897
  %3036 = vmatprep.subr.bf16.mxu0 0
  %3037 = vmatpush1.bf16.msra.mxu0 %v2896
  %3038 = vmatprep.subr.bf16.mxu0 0
  %3039 = vmatpush1.bf16.msra.mxu0 %v2895
  %3040 = vmatprep.subr.bf16.mxu0 0
  %3041 = vmatpush1.bf16.msra.mxu0 %v2894
  %3042 = vmatprep.subr.bf16.mxu0 0
  %3043 = vmatpush1.bf16.msra.mxu0 %v2893
  %3044 = vmatprep.subr.bf16.mxu0 0
  %3045 = vmatpush1.bf16.msra.mxu0 %v2892
  %3046 = vmatprep.subr.bf16.mxu0 0
  %3047 = vmatpush1.bf16.msra.mxu0 %v2891
  %3048 = vmatprep.subr.bf16.mxu0 0
  %3049 = vmatpush1.bf16.msra.mxu0 %v2890
  %3050 = vmatprep.subr.bf16.mxu0 0
  %3051 = vmatpush2.bf16.msra.mxu0 %v2905
  %3052 = vmatprep.subr.bf16.mxu0 0
  %3053 = vmatpush2.bf16.msra.mxu0 %v2904
  %3054 = vmatprep.subr.bf16.mxu0 0
  %3055 = vmatpush2.bf16.msra.mxu0 %v2903
  %3056 = vmatprep.subr.bf16.mxu0 0
  %3057 = vmatpush2.bf16.msra.mxu0 %v2902
  %3058 = vmatprep.subr.bf16.mxu0 0
  %3059 = vmatpush2.bf16.msra.mxu0 %v2901
  %3060 = vmatprep.subr.bf16.mxu0 0
  %3061 = vmatpush2.bf16.msra.mxu0 %v2900
  %3062 = vmatprep.subr.bf16.mxu0 0
  %3063 = vmatpush2.bf16.msra.mxu0 %v2899
  %3064 = vmatprep.subr.bf16.mxu0 0
  %3065 = vmatpush2.bf16.msra.mxu0 %v2898
  %3066 = vmatprep.mubr.bf16.mxu0 %v2459
  %3067 = vmatmul.mubr.bf16.gmra.mxu0 %v2458
  %v3068 = vpop.f32.mrf.mxu0
  %v3069 = vadd.f32 0.0, %v3068
  %v3070 = vpop.f32.mrf.mxu0
  %v3071 = vpop.f32.mrf.mxu0
  %v3072 = vadd.f32 0.0, %v3071
  %v3073 = vpop.f32.mrf.mxu0
  %3074 = vmatprep.mubr.bf16.mxu0 %v2468
  %3075 = vmatmul.mubr.bf16.gmra.mxu0 %v2467
  %v3076 = vpop.f32.mrf.mxu0
  %v3077 = vadd.f32 0.0, %v3076
  %v3078 = vpop.f32.mrf.mxu0
  %v3079 = vpop.f32.mrf.mxu0
  %v3080 = vadd.f32 0.0, %v3079
  %v3081 = vpop.f32.mrf.mxu0
  %3082 = vmatprep.mubr.bf16.mxu0 %v2477
  %3083 = vmatmul.mubr.bf16.gmra.mxu0 %v2476
  %v3084 = vpop.f32.mrf.mxu0
  %v3085 = vadd.f32 0.0, %v3084
  %v3086 = vpop.f32.mrf.mxu0
  %v3087 = vpop.f32.mrf.mxu0
  %v3088 = vadd.f32 0.0, %v3087
  %v3089 = vpop.f32.mrf.mxu0
  %3090 = vmatprep.mubr.bf16.mxu0 %v2486
  %3091 = vmatmul.mubr.bf16.gmra.mxu0 %v2485
  %v3092 = vpop.f32.mrf.mxu0
  %v3093 = vadd.f32 0.0, %v3092
  %v3094 = vpop.f32.mrf.mxu0
  %v3095 = vpop.f32.mrf.mxu0
  %v3096 = vadd.f32 0.0, %v3095
  %v3097 = vpop.f32.mrf.mxu0
  %3098 = vmatprep.mubr.bf16.mxu0 %v2495
  %3099 = vmatmul.mubr.bf16.gmra.mxu0 %v2494
  %v3100 = vpop.f32.mrf.mxu0
  %v3101 = vadd.f32 0.0, %v3100
  %v3102 = vpop.f32.mrf.mxu0
  %v3103 = vpop.f32.mrf.mxu0
  %v3104 = vadd.f32 0.0, %v3103
  %v3105 = vpop.f32.mrf.mxu0
  %3106 = vmatprep.mubr.bf16.mxu0 %v2504
  %3107 = vmatmul.mubr.bf16.gmra.mxu0 %v2503
  %v3108 = vpop.f32.mrf.mxu0
  %v3109 = vadd.f32 0.0, %v3108
  %v3110 = vpop.f32.mrf.mxu0
  %v3111 = vpop.f32.mrf.mxu0
  %v3112 = vadd.f32 0.0, %v3111
  %v3113 = vpop.f32.mrf.mxu0
  %3114 = vmatprep.mubr.bf16.mxu0 %v2513
  %3115 = vmatmul.mubr.bf16.gmra.mxu0 %v2512
  %v3116 = vpop.f32.mrf.mxu0
  %v3117 = vadd.f32 0.0, %v3116
  %v3118 = vpop.f32.mrf.mxu0
  %v3119 = vpop.f32.mrf.mxu0
  %v3120 = vadd.f32 0.0, %v3119
  %v3121 = vpop.f32.mrf.mxu0
  %3122 = vmatprep.mubr.bf16.mxu0 %v2522
  %3123 = vmatmul.mubr.bf16.gmra.mxu0 %v2521
  %v3124 = vpop.f32.mrf.mxu0
  %v3125 = vadd.f32 0.0, %v3124
  %v3126 = vpop.f32.mrf.mxu0
  %v3127 = vpop.f32.mrf.mxu0
  %v3128 = vadd.f32 0.0, %v3127
  %v3129 = vpop.f32.mrf.mxu0
  %3130 = vdwg.mxu0
  %3131 = vmatprep.subr.bf16.mxu0 0
  %3132 = vmatpush1.bf16.msra.mxu0 %v2913
  %3133 = vmatprep.subr.bf16.mxu0 0
  %3134 = vmatpush1.bf16.msra.mxu0 %v2912
  %3135 = vmatprep.subr.bf16.mxu0 0
  %3136 = vmatpush1.bf16.msra.mxu0 %v2911
  %3137 = vmatprep.subr.bf16.mxu0 0
  %3138 = vmatpush1.bf16.msra.mxu0 %v2910
  %3139 = vmatprep.subr.bf16.mxu0 0
  %3140 = vmatpush1.bf16.msra.mxu0 %v2909
  %3141 = vmatprep.subr.bf16.mxu0 0
  %3142 = vmatpush1.bf16.msra.mxu0 %v2908
  %3143 = vmatprep.subr.bf16.mxu0 0
  %3144 = vmatpush1.bf16.msra.mxu0 %v2907
  %3145 = vmatprep.subr.bf16.mxu0 0
  %3146 = vmatpush1.bf16.msra.mxu0 %v2906
  %3147 = vmatprep.subr.bf16.mxu0 0
  %3148 = vmatpush2.bf16.msra.mxu0 %v2921
  %3149 = vmatprep.subr.bf16.mxu0 0
  %3150 = vmatpush2.bf16.msra.mxu0 %v2920
  %3151 = vmatprep.subr.bf16.mxu0 0
  %3152 = vmatpush2.bf16.msra.mxu0 %v2919
  %3153 = vmatprep.subr.bf16.mxu0 0
  %3154 = vmatpush2.bf16.msra.mxu0 %v2918
  %3155 = vmatprep.subr.bf16.mxu0 0
  %3156 = vmatpush2.bf16.msra.mxu0 %v2917
  %3157 = vmatprep.subr.bf16.mxu0 0
  %3158 = vmatpush2.bf16.msra.mxu0 %v2916
  %3159 = vmatprep.subr.bf16.mxu0 0
  %3160 = vmatpush2.bf16.msra.mxu0 %v2915
  %3161 = vmatprep.subr.bf16.mxu0 0
  %3162 = vmatpush2.bf16.msra.mxu0 %v2914
  %3163 = vmatprep.mubr.bf16.mxu0 %v2461
  %3164 = vmatmul.mubr.bf16.gmra.mxu0 %v2460
  %v3165 = vpop.f32.mrf.mxu0
  %v3166 = vadd.f32 %v3069, %v3165
  %v3167 = vpop.f32.mrf.mxu0
  %v3168 = vpop.f32.mrf.mxu0
  %v3169 = vadd.f32 %v3072, %v3168
  %v3170 = vpop.f32.mrf.mxu0
  %3171 = vmatprep.mubr.bf16.mxu0 %v2470
  %3172 = vmatmul.mubr.bf16.gmra.mxu0 %v2469
  %v3173 = vpop.f32.mrf.mxu0
  %v3174 = vadd.f32 %v3077, %v3173
  %v3175 = vpop.f32.mrf.mxu0
  %v3176 = vpop.f32.mrf.mxu0
  %v3177 = vadd.f32 %v3080, %v3176
  %v3178 = vpop.f32.mrf.mxu0
  %3179 = vmatprep.mubr.bf16.mxu0 %v2479
  %3180 = vmatmul.mubr.bf16.gmra.mxu0 %v2478
  %v3181 = vpop.f32.mrf.mxu0
  %v3182 = vadd.f32 %v3085, %v3181
  %v3183 = vpop.f32.mrf.mxu0
  %v3184 = vpop.f32.mrf.mxu0
  %v3185 = vadd.f32 %v3088, %v3184
  %v3186 = vpop.f32.mrf.mxu0
  %3187 = vmatprep.mubr.bf16.mxu0 %v2488
  %3188 = vmatmul.mubr.bf16.gmra.mxu0 %v2487
  %v3189 = vpop.f32.mrf.mxu0
  %v3190 = vadd.f32 %v3093, %v3189
  %v3191 = vpop.f32.mrf.mxu0
  %v3192 = vpop.f32.mrf.mxu0
  %v3193 = vadd.f32 %v3096, %v3192
  %v3194 = vpop.f32.mrf.mxu0
  %3195 = vmatprep.mubr.bf16.mxu0 %v2497
  %3196 = vmatmul.mubr.bf16.gmra.mxu0 %v2496
  %v3197 = vpop.f32.mrf.mxu0
  %v3198 = vadd.f32 %v3101, %v3197
  %v3199 = vpop.f32.mrf.mxu0
  %v3200 = vpop.f32.mrf.mxu0
  %v3201 = vadd.f32 %v3104, %v3200
  %v3202 = vpop.f32.mrf.mxu0
  %3203 = vmatprep.mubr.bf16.mxu0 %v2506
  %3204 = vmatmul.mubr.bf16.gmra.mxu0 %v2505
  %v3205 = vpop.f32.mrf.mxu0
  %v3206 = vadd.f32 %v3109, %v3205
  %v3207 = vpop.f32.mrf.mxu0
  %v3208 = vpop.f32.mrf.mxu0
  %v3209 = vadd.f32 %v3112, %v3208
  %v3210 = vpop.f32.mrf.mxu0
  %3211 = vmatprep.mubr.bf16.mxu0 %v2515
  %3212 = vmatmul.mubr.bf16.gmra.mxu0 %v2514
  %v3213 = vpop.f32.mrf.mxu0
  %v3214 = vadd.f32 %v3117, %v3213
  %v3215 = vpop.f32.mrf.mxu0
  %v3216 = vpop.f32.mrf.mxu0
  %v3217 = vadd.f32 %v3120, %v3216
  %v3218 = vpop.f32.mrf.mxu0
  %3219 = vmatprep.mubr.bf16.mxu0 %v2524
  %3220 = vmatmul.mubr.bf16.gmra.mxu0 %v2523
  %v3221 = vpop.f32.mrf.mxu0
  %v3222 = vadd.f32 %v3125, %v3221
  %v3223 = vpop.f32.mrf.mxu0
  %v3224 = vpop.f32.mrf.mxu0
  %v3225 = vadd.f32 %v3128, %v3224
  %v3226 = vpop.f32.mrf.mxu0
  %3227 = vdwg.mxu0
  %3228 = vmatprep.subr.bf16.mxu0 0
  %3229 = vmatpush1.bf16.msra.mxu0 %v2929
  %3230 = vmatprep.subr.bf16.mxu0 0
  %3231 = vmatpush1.bf16.msra.mxu0 %v2928
  %3232 = vmatprep.subr.bf16.mxu0 0
  %3233 = vmatpush1.bf16.msra.mxu0 %v2927
  %3234 = vmatprep.subr.bf16.mxu0 0
  %3235 = vmatpush1.bf16.msra.mxu0 %v2926
  %3236 = vmatprep.subr.bf16.mxu0 0
  %3237 = vmatpush1.bf16.msra.mxu0 %v2925
  %3238 = vmatprep.subr.bf16.mxu0 0
  %3239 = vmatpush1.bf16.msra.mxu0 %v2924
  %3240 = vmatprep.subr.bf16.mxu0 0
  %3241 = vmatpush1.bf16.msra.mxu0 %v2923
  %3242 = vmatprep.subr.bf16.mxu0 0
  %3243 = vmatpush1.bf16.msra.mxu0 %v2922
  %3244 = vmatprep.subr.bf16.mxu0 0
  %3245 = vmatpush2.bf16.msra.mxu0 %v2937
  %3246 = vmatprep.subr.bf16.mxu0 0
  %3247 = vmatpush2.bf16.msra.mxu0 %v2936
  %3248 = vmatprep.subr.bf16.mxu0 0
  %3249 = vmatpush2.bf16.msra.mxu0 %v2935
  %3250 = vmatprep.subr.bf16.mxu0 0
  %3251 = vmatpush2.bf16.msra.mxu0 %v2934
  %3252 = vmatprep.subr.bf16.mxu0 0
  %3253 = vmatpush2.bf16.msra.mxu0 %v2933
  %3254 = vmatprep.subr.bf16.mxu0 0
  %3255 = vmatpush2.bf16.msra.mxu0 %v2932
  %3256 = vmatprep.subr.bf16.mxu0 0
  %3257 = vmatpush2.bf16.msra.mxu0 %v2931
  %3258 = vmatprep.subr.bf16.mxu0 0
  %3259 = vmatpush2.bf16.msra.mxu0 %v2930
  %3260 = vmatprep.mubr.bf16.mxu0 %v2463
  %3261 = vmatmul.mubr.bf16.gmra.mxu0 %v2462
  %v3262 = vpop.f32.mrf.mxu0
  %v3263 = vadd.f32 %v3166, %v3262
  %v3264 = vpop.f32.mrf.mxu0
  %v3265 = vpop.f32.mrf.mxu0
  %v3266 = vadd.f32 %v3169, %v3265
  %v3267 = vpop.f32.mrf.mxu0
  %3268 = vmatprep.mubr.bf16.mxu0 %v2472
  %3269 = vmatmul.mubr.bf16.gmra.mxu0 %v2471
  %v3270 = vpop.f32.mrf.mxu0
  %v3271 = vadd.f32 %v3174, %v3270
  %v3272 = vpop.f32.mrf.mxu0
  %v3273 = vpop.f32.mrf.mxu0
  %v3274 = vadd.f32 %v3177, %v3273
  %v3275 = vpop.f32.mrf.mxu0
  %3276 = vmatprep.mubr.bf16.mxu0 %v2481
  %3277 = vmatmul.mubr.bf16.gmra.mxu0 %v2480
  %v3278 = vpop.f32.mrf.mxu0
  %v3279 = vadd.f32 %v3182, %v3278
  %v3280 = vpop.f32.mrf.mxu0
  %v3281 = vpop.f32.mrf.mxu0
  %v3282 = vadd.f32 %v3185, %v3281
  %v3283 = vpop.f32.mrf.mxu0
  %3284 = vmatprep.mubr.bf16.mxu0 %v2490
  %3285 = vmatmul.mubr.bf16.gmra.mxu0 %v2489
  %v3286 = vpop.f32.mrf.mxu0
  %v3287 = vadd.f32 %v3190, %v3286
  %v3288 = vpop.f32.mrf.mxu0
  %v3289 = vpop.f32.mrf.mxu0
  %v3290 = vadd.f32 %v3193, %v3289
  %v3291 = vpop.f32.mrf.mxu0
  %3292 = vmatprep.mubr.bf16.mxu0 %v2499
  %3293 = vmatmul.mubr.bf16.gmra.mxu0 %v2498
  %v3294 = vpop.f32.mrf.mxu0
  %v3295 = vadd.f32 %v3198, %v3294
  %v3296 = vpop.f32.mrf.mxu0
  %v3297 = vpop.f32.mrf.mxu0
  %v3298 = vadd.f32 %v3201, %v3297
  %v3299 = vpop.f32.mrf.mxu0
  %3300 = vmatprep.mubr.bf16.mxu0 %v2508
  %3301 = vmatmul.mubr.bf16.gmra.mxu0 %v2507
  %v3302 = vpop.f32.mrf.mxu0
  %v3303 = vadd.f32 %v3206, %v3302
  %v3304 = vpop.f32.mrf.mxu0
  %v3305 = vpop.f32.mrf.mxu0
  %v3306 = vadd.f32 %v3209, %v3305
  %v3307 = vpop.f32.mrf.mxu0
  %3308 = vmatprep.mubr.bf16.mxu0 %v2517
  %3309 = vmatmul.mubr.bf16.gmra.mxu0 %v2516
  %v3310 = vpop.f32.mrf.mxu0
  %v3311 = vadd.f32 %v3214, %v3310
  %v3312 = vpop.f32.mrf.mxu0
  %v3313 = vpop.f32.mrf.mxu0
  %v3314 = vadd.f32 %v3217, %v3313
  %v3315 = vpop.f32.mrf.mxu0
  %3316 = vmatprep.mubr.bf16.mxu0 %v2526
  %3317 = vmatmul.mubr.bf16.gmra.mxu0 %v2525
  %v3318 = vpop.f32.mrf.mxu0
  %v3319 = vadd.f32 %v3222, %v3318
  %v3320 = vpop.f32.mrf.mxu0
  %v3321 = vpop.f32.mrf.mxu0
  %v3322 = vadd.f32 %v3225, %v3321
  %v3323 = vpop.f32.mrf.mxu0
  %3324 = vdwg.mxu0
  %3325 = vmatprep.subr.bf16.mxu0 0
  %3326 = vmatpush1.bf16.msra.mxu0 %v2945
  %3327 = vmatprep.subr.bf16.mxu0 0
  %3328 = vmatpush1.bf16.msra.mxu0 %v2944
  %3329 = vmatprep.subr.bf16.mxu0 0
  %3330 = vmatpush1.bf16.msra.mxu0 %v2943
  %3331 = vmatprep.subr.bf16.mxu0 0
  %3332 = vmatpush1.bf16.msra.mxu0 %v2942
  %3333 = vmatprep.subr.bf16.mxu0 0
  %3334 = vmatpush1.bf16.msra.mxu0 %v2941
  %3335 = vmatprep.subr.bf16.mxu0 0
  %3336 = vmatpush1.bf16.msra.mxu0 %v2940
  %3337 = vmatprep.subr.bf16.mxu0 0
  %3338 = vmatpush1.bf16.msra.mxu0 %v2939
  %3339 = vmatprep.subr.bf16.mxu0 0
  %3340 = vmatpush1.bf16.msra.mxu0 %v2938
  %3341 = vmatprep.subr.bf16.mxu0 0
  %3342 = vmatpush2.bf16.msra.mxu0 %v2953
  %3343 = vmatprep.subr.bf16.mxu0 0
  %3344 = vmatpush2.bf16.msra.mxu0 %v2952
  %3345 = vmatprep.subr.bf16.mxu0 0
  %3346 = vmatpush2.bf16.msra.mxu0 %v2951
  %3347 = vmatprep.subr.bf16.mxu0 0
  %3348 = vmatpush2.bf16.msra.mxu0 %v2950
  %3349 = vmatprep.subr.bf16.mxu0 0
  %3350 = vmatpush2.bf16.msra.mxu0 %v2949
  %3351 = vmatprep.subr.bf16.mxu0 0
  %3352 = vmatpush2.bf16.msra.mxu0 %v2948
  %3353 = vmatprep.subr.bf16.mxu0 0
  %3354 = vmatpush2.bf16.msra.mxu0 %v2947
  %3355 = vmatprep.subr.bf16.mxu0 0
  %3356 = vmatpush2.bf16.msra.mxu0 %v2946
  %3357 = vmatprep.mubr.bf16.mxu0 %v2465
  %3358 = vmatmul.mubr.bf16.gmra.mxu0 %v2464
  %v3359 = vpop.f32.mrf.mxu0
  %v3360 = vadd.f32 %v3263, %v3359
  %v3361 = vpop.f32.mrf.mxu0
  %v3362 = vpop.f32.mrf.mxu0
  %v3363 = vadd.f32 %v3266, %v3362
  %v3364 = vpop.f32.mrf.mxu0
  %3365 = vmatprep.mubr.bf16.mxu0 %v2474
  %3366 = vmatmul.mubr.bf16.gmra.mxu0 %v2473
  %v3367 = vpop.f32.mrf.mxu0
  %v3368 = vadd.f32 %v3271, %v3367
  %v3369 = vpop.f32.mrf.mxu0
  %v3370 = vpop.f32.mrf.mxu0
  %v3371 = vadd.f32 %v3274, %v3370
  %v3372 = vpop.f32.mrf.mxu0
  %3373 = vmatprep.mubr.bf16.mxu0 %v2483
  %3374 = vmatmul.mubr.bf16.gmra.mxu0 %v2482
  %v3375 = vpop.f32.mrf.mxu0
  %v3376 = vadd.f32 %v3279, %v3375
  %v3377 = vpop.f32.mrf.mxu0
  %v3378 = vpop.f32.mrf.mxu0
  %v3379 = vadd.f32 %v3282, %v3378
  %v3380 = vpop.f32.mrf.mxu0
  %3381 = vmatprep.mubr.bf16.mxu0 %v2492
  %3382 = vmatmul.mubr.bf16.gmra.mxu0 %v2491
  %v3383 = vpop.f32.mrf.mxu0
  %v3384 = vadd.f32 %v3287, %v3383
  %v3385 = vpop.f32.mrf.mxu0
  %v3386 = vpop.f32.mrf.mxu0
  %v3387 = vadd.f32 %v3290, %v3386
  %v3388 = vpop.f32.mrf.mxu0
  %3389 = vmatprep.mubr.bf16.mxu0 %v2501
  %3390 = vmatmul.mubr.bf16.gmra.mxu0 %v2500
  %v3391 = vpop.f32.mrf.mxu0
  %v3392 = vadd.f32 %v3295, %v3391
  %v3393 = vpop.f32.mrf.mxu0
  %v3394 = vpop.f32.mrf.mxu0
  %v3395 = vadd.f32 %v3298, %v3394
  %v3396 = vpop.f32.mrf.mxu0
  %3397 = vmatprep.mubr.bf16.mxu0 %v2510
  %3398 = vmatmul.mubr.bf16.gmra.mxu0 %v2509
  %v3399 = vpop.f32.mrf.mxu0
  %v3400 = vadd.f32 %v3303, %v3399
  %v3401 = vpop.f32.mrf.mxu0
  %v3402 = vpop.f32.mrf.mxu0
  %v3403 = vadd.f32 %v3306, %v3402
  %v3404 = vpop.f32.mrf.mxu0
  %3405 = vmatprep.mubr.bf16.mxu0 %v2519
  %3406 = vmatmul.mubr.bf16.gmra.mxu0 %v2518
  %v3407 = vpop.f32.mrf.mxu0
  %v3408 = vadd.f32 %v3311, %v3407
  %v3409 = vpop.f32.mrf.mxu0
  %v3410 = vpop.f32.mrf.mxu0
  %v3411 = vadd.f32 %v3314, %v3410
  %v3412 = vpop.f32.mrf.mxu0
  %3413 = vmatprep.mubr.bf16.mxu0 %v2528
  %3414 = vmatmul.mubr.bf16.gmra.mxu0 %v2527
  %v3415 = vpop.f32.mrf.mxu0
  %v3416 = vadd.f32 %v3319, %v3415
  %v3417 = vpop.f32.mrf.mxu0
  %v3418 = vpop.f32.mrf.mxu0
  %v3419 = vadd.f32 %v3322, %v3418
  %v3420 = vpop.f32.mrf.mxu0
  %3421 = vdwg.mxu0
  %3422 = vmatprep.subr.bf16.mxu0 0
  %3423 = vmatpush1.bf16.msra.mxu0 %v2961
  %3424 = vmatprep.subr.bf16.mxu0 0
  %3425 = vmatpush1.bf16.msra.mxu0 %v2960
  %3426 = vmatprep.subr.bf16.mxu0 0
  %3427 = vmatpush1.bf16.msra.mxu0 %v2959
  %3428 = vmatprep.subr.bf16.mxu0 0
  %3429 = vmatpush1.bf16.msra.mxu0 %v2958
  %3430 = vmatprep.subr.bf16.mxu0 0
  %3431 = vmatpush1.bf16.msra.mxu0 %v2957
  %3432 = vmatprep.subr.bf16.mxu0 0
  %3433 = vmatpush1.bf16.msra.mxu0 %v2956
  %3434 = vmatprep.subr.bf16.mxu0 0
  %3435 = vmatpush1.bf16.msra.mxu0 %v2955
  %3436 = vmatprep.subr.bf16.mxu0 0
  %3437 = vmatpush1.bf16.msra.mxu0 %v2954
  %3438 = vmatprep.subr.bf16.mxu0 0
  %3439 = vmatpush2.bf16.msra.mxu0 0
  %3440 = vmatprep.subr.bf16.mxu0 0
  %3441 = vmatpush2.bf16.msra.mxu0 0
  %3442 = vmatprep.subr.bf16.mxu0 0
  %3443 = vmatpush2.bf16.msra.mxu0 0
  %3444 = vmatprep.subr.bf16.mxu0 0
  %3445 = vmatpush2.bf16.msra.mxu0 0
  %3446 = vmatprep.subr.bf16.mxu0 0
  %3447 = vmatpush2.bf16.msra.mxu0 0
  %3448 = vmatprep.subr.bf16.mxu0 0
  %3449 = vmatpush2.bf16.msra.mxu0 0
  %3450 = vmatprep.subr.bf16.mxu0 0
  %3451 = vmatpush2.bf16.msra.mxu0 0
  %3452 = vmatprep.subr.bf16.mxu0 0
  %3453 = vmatpush2.bf16.msra.mxu0 0
  %3454 = vmatprep.mubr.bf16.mxu0 0
  %3455 = vmatmul.mubr.bf16.gmra.mxu0 %v2466
  %v3456 = vpop.f32.mrf.mxu0
  %v3457 = vadd.f32 %v3360, %v3456
  %v3458 = vpop.f32.mrf.mxu0
  %v3459 = vpop.f32.mrf.mxu0
  %v3460 = vadd.f32 %v3363, %v3459
  %v3461 = vpop.f32.mrf.mxu0
  %3462 = vmatprep.mubr.bf16.mxu0 0
  %3463 = vmatmul.mubr.bf16.gmra.mxu0 %v2475
  %v3464 = vpop.f32.mrf.mxu0
  %v3465 = vadd.f32 %v3368, %v3464
  %v3466 = vpop.f32.mrf.mxu0
  %v3467 = vpop.f32.mrf.mxu0
  %v3468 = vadd.f32 %v3371, %v3467
  %v3469 = vpop.f32.mrf.mxu0
  %3470 = vmatprep.mubr.bf16.mxu0 0
  %3471 = vmatmul.mubr.bf16.gmra.mxu0 %v2484
  %v3472 = vpop.f32.mrf.mxu0
  %v3473 = vadd.f32 %v3376, %v3472
  %v3474 = vpop.f32.mrf.mxu0
  %v3475 = vpop.f32.mrf.mxu0
  %v3476 = vadd.f32 %v3379, %v3475
  %v3477 = vpop.f32.mrf.mxu0
  %3478 = vmatprep.mubr.bf16.mxu0 0
  %3479 = vmatmul.mubr.bf16.gmra.mxu0 %v2493
  %v3480 = vpop.f32.mrf.mxu0
  %v3481 = vadd.f32 %v3384, %v3480
  %v3482 = vpop.f32.mrf.mxu0
  %v3483 = vpop.f32.mrf.mxu0
  %v3484 = vadd.f32 %v3387, %v3483
  %v3485 = vpop.f32.mrf.mxu0
  %3486 = vmatprep.mubr.bf16.mxu0 0
  %3487 = vmatmul.mubr.bf16.gmra.mxu0 %v2502
  %v3488 = vpop.f32.mrf.mxu0
  %v3489 = vadd.f32 %v3392, %v3488
  %v3490 = vpop.f32.mrf.mxu0
  %v3491 = vpop.f32.mrf.mxu0
  %v3492 = vadd.f32 %v3395, %v3491
  %v3493 = vpop.f32.mrf.mxu0
  %3494 = vmatprep.mubr.bf16.mxu0 0
  %3495 = vmatmul.mubr.bf16.gmra.mxu0 %v2511
  %v3496 = vpop.f32.mrf.mxu0
  %v3497 = vadd.f32 %v3400, %v3496
  %v3498 = vpop.f32.mrf.mxu0
  %v3499 = vpop.f32.mrf.mxu0
  %v3500 = vadd.f32 %v3403, %v3499
  %v3501 = vpop.f32.mrf.mxu0
  %3502 = vmatprep.mubr.bf16.mxu0 0
  %3503 = vmatmul.mubr.bf16.gmra.mxu0 %v2520
  %v3504 = vpop.f32.mrf.mxu0
  %v3505 = vadd.f32 %v3408, %v3504
  %v3506 = vpop.f32.mrf.mxu0
  %v3507 = vpop.f32.mrf.mxu0
  %v3508 = vadd.f32 %v3411, %v3507
  %v3509 = vpop.f32.mrf.mxu0
  %3510 = vmatprep.mubr.bf16.mxu0 0
  %3511 = vmatmul.mubr.bf16.gmra.mxu0 %v2529
  %v3512 = vpop.f32.mrf.mxu0
  %v3513 = vadd.f32 %v3416, %v3512
  %v3514 = vpop.f32.mrf.mxu0
  %v3515 = vpop.f32.mrf.mxu0
  %v3516 = vadd.f32 %v3419, %v3515
  %v3517 = vpop.f32.mrf.mxu0
  %3518 = vdwg.mxu0
  %v3519 = vadd.f32 %v3457, %v3460
  %v3520 = vadd.f32 %v3519, %v3465
  %v3521 = vadd.f32 %v3520, %v3468
  %v3522 = vadd.f32 %v3521, %v3473
  %v3523 = vadd.f32 %v3522, %v3476
  %v3524 = vadd.f32 %v3523, %v3481
  %v3525 = vadd.f32 %v3524, %v3484
  %v3526 = vadd.f32 %v3525, %v3489
  %v3527 = vadd.f32 %v3526, %v3492
  %v3528 = vadd.f32 %v3527, %v3497
  %v3529 = vadd.f32 %v3528, %v3500
  %v3530 = vadd.f32 %v3529, %v3505
  %v3531 = vadd.f32 %v3530, %v3508
  %v3532 = vadd.f32 %v3531, %v3513
  %v3533 = vadd.f32 %v3532, %v3516
  %v3534 = vrot.slane %v3533, 4
  %v3535 = vadd.f32 %v3533, %v3534
  %v3536 = vrot.slane %v3535, 2
  %v3537 = vadd.f32 %v3535, %v3536
  %v3538 = vrot.slane %v3537, 1
  %v3539 = vadd.f32 %v3537, %v3538
  %3540 = vst [vmem:[%s5] sm:$0x1] %v3539
  %v3541 = vmul.f32 %v3457, %v3457
  %v3542 = vmul.f32 %v3460, %v3460
  %v3543 = vmul.f32 %v3465, %v3465
  %v3544 = vmul.f32 %v3468, %v3468
  %v3545 = vmul.f32 %v3473, %v3473
  %v3546 = vmul.f32 %v3476, %v3476
  %v3547 = vmul.f32 %v3481, %v3481
  %v3548 = vmul.f32 %v3484, %v3484
  %v3549 = vmul.f32 %v3489, %v3489
  %v3550 = vmul.f32 %v3492, %v3492
  %v3551 = vmul.f32 %v3497, %v3497
  %v3552 = vmul.f32 %v3500, %v3500
  %v3553 = vmul.f32 %v3505, %v3505
  %v3554 = vmul.f32 %v3508, %v3508
  %v3555 = vmul.f32 %v3513, %v3513
  %v3556 = vmul.f32 %v3516, %v3516
  %v3557 = vadd.f32 %v3541, %v3542
  %v3558 = vadd.f32 %v3557, %v3543
  %v3559 = vadd.f32 %v3558, %v3544
  %v3560 = vadd.f32 %v3559, %v3545
  %v3561 = vadd.f32 %v3560, %v3546
  %v3562 = vadd.f32 %v3561, %v3547
  %v3563 = vadd.f32 %v3562, %v3548
  %v3564 = vadd.f32 %v3563, %v3549
  %v3565 = vadd.f32 %v3564, %v3550
  %v3566 = vadd.f32 %v3565, %v3551
  %v3567 = vadd.f32 %v3566, %v3552
  %v3568 = vadd.f32 %v3567, %v3553
  %v3569 = vadd.f32 %v3568, %v3554
  %v3570 = vadd.f32 %v3569, %v3555
  %v3571 = vadd.f32 %v3570, %v3556
  %v3572 = vrot.slane %v3571, 4
  %v3573 = vadd.f32 %v3571, %v3572
  %v3574 = vrot.slane %v3573, 2
  %v3575 = vadd.f32 %v3573, %v3574
  %v3576 = vrot.slane %v3575, 1
  %v3577 = vadd.f32 %v3575, %v3576
  %3578 = vst [vmem:[%s5 + $0x1] sm:$0x1] %v3577
  %v3579 = vpack.c.bf16 %v3457, %v3457
  %v3580 = vpack.c.bf16 %v3460, %v3460
  %v3581 = vpack.c.bf16 %v3465, %v3465
  %v3582 = vpack.c.bf16 %v3468, %v3468
  %v3583 = vpack.c.bf16 %v3473, %v3473
  %v3584 = vpack.c.bf16 %v3476, %v3476
  %v3585 = vpack.c.bf16 %v3481, %v3481
  %v3586 = vpack.c.bf16 %v3484, %v3484
  %v3587 = vpack.c.bf16 %v3489, %v3489
  %v3588 = vpack.c.bf16 %v3492, %v3492
  %v3589 = vpack.c.bf16 %v3497, %v3497
  %v3590 = vpack.c.bf16 %v3500, %v3500
  %v3591 = vpack.c.bf16 %v3505, %v3505
  %v3592 = vpack.c.bf16 %v3508, %v3508
  %v3593 = vpack.c.bf16 %v3513, %v3513
  %v3594 = vpack.c.bf16 %v3516, %v3516
  %3595 = vst [vmem:[%s4] sm:$0xf] %v3579
  %3596 = vst [vmem:[%s4 + $0x4] sm:$0xf] %v3580
  %3597 = vst [vmem:[%s4 + $0x8] sm:$0xf] %v3581
  %3598 = vst [vmem:[%s4 + $0xc] sm:$0xf] %v3582
  %3599 = vst [vmem:[%s4 + $0x10] sm:$0xf] %v3583
  %3600 = vst [vmem:[%s4 + $0x14] sm:$0xf] %v3584
  %3601 = vst [vmem:[%s4 + $0x18] sm:$0xf] %v3585
  %3602 = vst [vmem:[%s4 + $0x1c] sm:$0xf] %v3586
  %3603 = vst [vmem:[%s4 + $0x20] sm:$0xf] %v3587
  %3604 = vst [vmem:[%s4 + $0x24] sm:$0xf] %v3588
  %3605 = vst [vmem:[%s4 + $0x28] sm:$0xf] %v3589
  %3606 = vst [vmem:[%s4 + $0x2c] sm:$0xf] %v3590
  %3607 = vst [vmem:[%s4 + $0x30] sm:$0xf] %v3591
  %3608 = vst [vmem:[%s4 + $0x34] sm:$0xf] %v3592
  %3609 = vst [vmem:[%s4 + $0x38] sm:$0xf] %v3593
  %3610 = vst [vmem:[%s4 + $0x3c] sm:$0xf] %v3594
  // Predicated region
  $region22: #{residual_layer.4} parent=0 // pred_check
    _
  $region23: #{residual_layer.4} parent=0 // pred_check_branch
    %3612 = sbr.rel (0) target = $region25
  $region24: #{residual_layer.4} parent=0 // pred_region
    _
  $region25: #{residual_layer.4} parent=0 // pred_fallthru
    _
  // Predicated region
  $region26: #{residual_layer.4} parent=0 // pred_check
    _
  $region27: #{residual_layer.4} parent=0 // pred_check_branch
    %3614 = sbr.rel (0) target = $region29
  $region28: #{residual_layer.4} parent=0 // pred_region
    _
  $region29: #{residual_layer.4} parent=0 // pred_fallthru
    _
  // Predicated region
  $region30: #{residual_layer.4} parent=0 // pred_check
    _
  $region31: #{residual_layer.4} parent=0 // pred_check_branch
    %3616 = sbr.rel (0) target = $region33
  $region32: #{residual_layer.4} parent=0 // pred_region
    _
  $region33: #{residual_layer.4} parent=0 // pred_fallthru
    _
  // Predicated region
  $region34: #{residual_layer.4} parent=0 // pred_check
    _
  $region35: #{residual_layer.4} parent=0 // pred_check_branch
    %3618 = sbr.rel (0) target = $region37
  $region36: #{residual_layer.4} parent=0 // pred_region
    _
  $region37: #{residual_layer.4} parent=0 // pred_fallthru
    _

</llo_original>
